<compile_context>
chip_gen: v7x
topology: tpu7x:2x2x1
jax: 0.10.0
libtpu: 0.0.40
codegen_flags: <defaults>
</compile_context>

<pallas_src>
import jax
import jax.numpy as jnp
from jax.experimental import pallas as pl
from jax.experimental.pallas import tpu as pltpu


# ---------------------------------------------------------------------------
# One PyTorch-convention GRU step.  Gate weights are stored stacked on a
# leading axis (index 0/1/2 = r/z/n), so each gate is its own lane-aligned
# (in_dim, R) matmul — no lane-offset slicing of a 3R-wide result.
# Biases: b_ref[0]=b_ir+b_hr, b_ref[1]=b_iz+b_hz, b_ref[2]=b_in, b_ref[3]=b_hn.
# ---------------------------------------------------------------------------
def _gru_step(x, h, wi_ref, wh_ref, b_ref):
    f32 = jnp.float32
    r = jax.nn.sigmoid(
        jnp.dot(x, wi_ref[0], preferred_element_type=f32)
        + jnp.dot(h, wh_ref[0], preferred_element_type=f32)
        + b_ref[0])
    z = jax.nn.sigmoid(
        jnp.dot(x, wi_ref[1], preferred_element_type=f32)
        + jnp.dot(h, wh_ref[1], preferred_element_type=f32)
        + b_ref[1])
    n = jnp.tanh(
        jnp.dot(x, wi_ref[2], preferred_element_type=f32)
        + b_ref[2]
        + r * (jnp.dot(h, wh_ref[2], preferred_element_type=f32) + b_ref[3]))
    return (1.0 - z) * n + z * h


# ---------------------------------------------------------------------------
# Fused forward-pass kernel (no grid — everything fits trivially in VMEM).
# ---------------------------------------------------------------------------
def make_naomi_kernel(T, bs, y_dim, R, levels, A):
    """levels: list of (step, dec_dim, Tk) with Tk > 0 (static Python values)."""
    n_levels = len(levels)
    imput_count = sum(tk for _, _, tk in levels)
    count = T  # one forward-GRU "count" increment per time step in the reference

    def kernel(*refs):
        (gt_ref, data_ref,
         fwi_ref, fwh_ref, fb_ref,
         bwi_ref, bwh_ref, bb_ref) = refs[:8]
        lvl_refs = refs[8:8 + 5 * n_levels]
        scale_ref = refs[8 + 5 * n_levels]
        psum_ref = refs[9 + 5 * n_levels]
        loss_ref = refs[10 + 5 * n_levels]
        pd_ref = refs[11 + 5 * n_levels]
        hfwd_ref = refs[12 + 5 * n_levels]   # (T, bs, R)     forward hidden history
        hb_ref = refs[13 + 5 * n_levels]     # (T+1, bs, R)   h_back_dict[j] at slot j

        # h_back_dict[T] is the zero initial backward state.
        hb_ref[T] = jnp.zeros((bs, R), jnp.float32)

        # ---- interleaved forward / backward recurrences (fully unrolled) ----
        # Forward step t = T-1 feeds no decoder level, so only T-1 steps needed.
        h_f = jnp.zeros((bs, R), jnp.float32)
        h_b = jnp.zeros((bs, R), jnp.float32)
        for i in range(T - 1):
            h_f = _gru_step(gt_ref[i], h_f, fwi_ref, fwh_ref, fb_ref)
            hfwd_ref[i] = h_f
            j = T - 1 - i                       # backward GRU consumes data[T-1 .. 1]
            h_b = _gru_step(data_ref[j], h_b, bwi_ref, bwh_ref, bb_ref)
            hb_ref[j] = h_b                     # == h_back_dict[j]

        # ---- decoder levels, batched over (Tk * bs) ----
        scale = scale_ref[...]                  # (1, y_dim) pitch scaling
        psum = psum_ref[...]                    # (y_dim, A) pairwise x^2+y^2 selector
        total_loss = jnp.float32(0.0)
        total_pd = jnp.float32(0.0)
        for li, (step, _dec_dim, Tk) in enumerate(levels):
            wdf = lvl_refs[5 * li + 0][...]     # (R, D)   dec weight, fwd-hidden half
            wdb = lvl_refs[5 * li + 1][...]     # (R, D)   dec weight, bwd-hidden half
            bd = lvl_refs[5 * li + 2][...]      # (1, D)
            wm = lvl_refs[5 * li + 3][...]      # (D, y_dim)
            bm = lvl_refs[5 * li + 4][...]      # (1, y_dim)

            hf = hfwd_ref[pl.ds(0, Tk)].reshape(Tk * bs, R)
            hb = hb_ref[pl.ds(2 * step, Tk)].reshape(Tk * bs, R)
            gtn = gt_ref[pl.ds(step, Tk)].reshape(Tk * bs, y_dim)

            dec = jnp.dot(hf, wdf, preferred_element_type=jnp.float32)
            dec = dec + jnp.dot(hb, wdb, preferred_element_type=jnp.float32)
            dec = jnp.maximum(dec + bd, 0.0)
            mean = jnp.dot(dec, wm, preferred_element_type=jnp.float32) + bm

            diff = mean - gtn                   # (Tk*bs, y_dim)
            # calc_mae_loss (n_features == 2): per-t mean(|diff|), summed over t.
            total_loss = total_loss + jnp.sum(jnp.abs(diff)) / float(bs * y_dim)
            # pos_dist: pitch-scaled per-agent Euclidean distance, mean over (bs, A), summed over t.
            sd = diff * scale
            pair = jnp.dot(sd * sd, psum, preferred_element_type=jnp.float32)  # (Tk*bs, A)
            total_pd = total_pd + jnp.sum(jnp.sqrt(pair)) / float(bs * A)

        loss_ref[0, 0] = total_loss / float(count * bs)
        pd_ref[0, 0] = total_pd / float(max(imput_count, 1))

    return kernel


# ---------------------------------------------------------------------------
# Wrapper (mirrors NAOMIImputer.forward, stochastic=False path)
# ---------------------------------------------------------------------------
def naomi_forward(params, weights, data, ground_truth):
    T, bs, _ = data.shape
    y_dim = ground_truth.shape[-1]
    R = params['rnn_dim']

    levels = []
    step = 1
    while step <= params['n_highest']:
        Tk = T - 2 * step + 1
        if Tk > 0:
            levels.append((step, params['dec' + str(step) + '_dim'], Tk))
        step *= 2

    A = y_dim // 2  # agents, each with (x, y)
    scale_vec = jnp.tile(jnp.array([[108.0, 72.0]], jnp.float32), (1, A))  # (1, y_dim)
    idx = jnp.arange(y_dim)
    psum = jnp.zeros((y_dim, A), jnp.float32).at[idx, idx // 2].set(1.0)   # x^2 + y^2 per agent

    args = [ground_truth, data,
            weights['fwd_wi'], weights['fwd_wh'], weights['fwd_b'],
            weights['back_wi'], weights['back_wh'], weights['back_b']]
    for (s, _d, _tk) in levels:
        lw = weights['levels'][str(s)]
        args += [lw['wdec_f'], lw['wdec_b'], lw['bdec'], lw['wmean'], lw['bmean']]
    args += [scale_vec, psum]

    kernel = make_naomi_kernel(T, bs, y_dim, R, levels, A)
    vmem = pl.BlockSpec(memory_space=pltpu.MemorySpace.VMEM)
    smem = pl.BlockSpec(memory_space=pltpu.MemorySpace.SMEM)

    loss, pd = pl.pallas_call(
        kernel,
        out_shape=(jax.ShapeDtypeStruct((1, 1), jnp.float32),
                   jax.ShapeDtypeStruct((1, 1), jnp.float32)),
        in_specs=[vmem] * len(args),
        out_specs=(smem, smem),
        scratch_shapes=[pltpu.VMEM((T, bs, R), jnp.float32),        # forward hidden history
                        pltpu.VMEM((T + 1, bs, R), jnp.float32)],   # h_back_dict
    )(*args)
    return loss[0, 0], pd[0, 0]


# ---------------------------------------------------------------------------
# Deterministic parameter init (shapes from NAOMIImputer.__init__), stored in
# the kernel-friendly packed layout: per-gate stacked, pre-transposed weights.
# ---------------------------------------------------------------------------
def init_weights(key, params, y_dim):
    R = params['rnn_dim']

    def uni(k, shape, fan_in):
        s = 1.0 / jnp.sqrt(jnp.float32(fan_in))
        return jax.random.uniform(k, shape, jnp.float32, -s, s)

    def gru_weights(ks, in_dim):
        wi = uni(ks[0], (3, in_dim, R), R)      # [r, z, n], pre-transposed
        wh = uni(ks[1], (3, R, R), R)
        bih = uni(ks[2], (3, 1, R), R)
        bhh = uni(ks[3], (3, 1, R), R)
        # fold: [b_ir + b_hr, b_iz + b_hz, b_in, b_hn]
        b = jnp.concatenate([bih[0:1] + bhh[0:1],
                             bih[1:2] + bhh[1:2],
                             bih[2:3],
                             bhh[2:3]], axis=0)  # (4, 1, R)
        return wi, wh, b

    keys = jax.random.split(key, 16)
    fwd_wi, fwd_wh, fwd_b = gru_weights(keys[0:4], y_dim)
    back_wi, back_wh, back_b = gru_weights(keys[4:8], y_dim + 1)

    w = {
        'fwd_wi': fwd_wi, 'fwd_wh': fwd_wh, 'fwd_b': fwd_b,
        'back_wi': back_wi, 'back_wh': back_wh, 'back_b': back_b,
        'levels': {},
    }
    kidx = 8
    step = 1
    while step <= params['n_highest']:
        D = params['dec' + str(step) + '_dim']
        lk = jax.random.split(keys[kidx], 5)
        w['levels'][str(step)] = {
            'wdec_f': uni(lk[0], (R, D), 2 * R),
            'wdec_b': uni(lk[1], (R, D), 2 * R),
            'bdec': uni(lk[2], (1, D), 2 * R),
            'wmean': uni(lk[3], (D, y_dim), D),
            'bmean': uni(lk[4], (1, y_dim), D),
        }
        kidx += 1
        step *= 2
    return w


if __name__ == "__main__":
    params = dict(
        n_features=2, n_players=4, stochastic=False, dataset='soccer',
        rnn_dim=32, n_layers=1, n_highest=2, batch_size=8, cuda=False,
        dec1_dim=48, dec2_dim=64,
    )
    # y_dim = n_players * 2 * n_features (soccer)
    y_dim = params['n_players'] * 2 * params['n_features']   # 16
    T, bs = 8, params['batch_size']

    key = jax.random.PRNGKey(0)
    k_w, k_gt = jax.random.split(key)
    weights = init_weights(k_w, params, y_dim)

    ground_truth = jax.random.normal(k_gt, (T, bs, y_dim), jnp.float32)
    has_value = jnp.ones((T, bs, 1), jnp.float32)
    data = jnp.concatenate([has_value, ground_truth], axis=-1)   # [T, bs, 1 + y_dim]

    loss, pos_dist = naomi_forward(params, weights, data, ground_truth)
    jax.block_until_ready(loss)
    jax.block_until_ready(pos_dist)
    pos_dist = float(pos_dist)  # mirrors pos_dist.item()
    print("KERNEL_OK")
</pallas_src>

<mosaic_0001>
module attributes {stable_mosaic.version = 11 : i64} {
  func.func @kernel(%arg0: memref<8x8x16xf32, #tpu.memory_space<vmem>>, %arg1: memref<8x8x17xf32, #tpu.memory_space<vmem>>, %arg2: memref<3x16x32xf32, #tpu.memory_space<vmem>>, %arg3: memref<3x32x32xf32, #tpu.memory_space<vmem>>, %arg4: memref<4x1x32xf32, #tpu.memory_space<vmem>>, %arg5: memref<3x17x32xf32, #tpu.memory_space<vmem>>, %arg6: memref<3x32x32xf32, #tpu.memory_space<vmem>>, %arg7: memref<4x1x32xf32, #tpu.memory_space<vmem>>, %arg8: memref<32x48xf32, #tpu.memory_space<vmem>>, %arg9: memref<32x48xf32, #tpu.memory_space<vmem>>, %arg10: memref<1x48xf32, #tpu.memory_space<vmem>>, %arg11: memref<48x16xf32, #tpu.memory_space<vmem>>, %arg12: memref<1x16xf32, #tpu.memory_space<vmem>>, %arg13: memref<32x64xf32, #tpu.memory_space<vmem>>, %arg14: memref<32x64xf32, #tpu.memory_space<vmem>>, %arg15: memref<1x64xf32, #tpu.memory_space<vmem>>, %arg16: memref<64x16xf32, #tpu.memory_space<vmem>>, %arg17: memref<1x16xf32, #tpu.memory_space<vmem>>, %arg18: memref<1x16xf32, #tpu.memory_space<vmem>>, %arg19: memref<16x8xf32, #tpu.memory_space<vmem>>, %arg20: memref<1x1xf32, #tpu.memory_space<smem>>, %arg21: memref<1x1xf32, #tpu.memory_space<smem>>, %arg22: memref<8x8x32xf32, #tpu.memory_space<vmem>>, %arg23: memref<9x8x32xf32, #tpu.memory_space<vmem>>) attributes {dimension_semantics = [], scalar_prefetch = 0 : i64, scratch_operands = 2 : i64, tpu.core_type = #tpu.core_type<tc>} {
    %cst = arith.constant 0.000000e+00 : f32
    %0 = vector.broadcast %cst : f32 to vector<8x32xf32>
    %c8 = arith.constant 8 : index
    %c0 = arith.constant 0 : index
    %c0_0 = arith.constant 0 : index
    %1 = vector.load %arg23[%c8, %c0, %c0_0] : memref<9x8x32xf32, #tpu.memory_space<vmem>>, vector<1x8x32xf32>
    %2 = vector.shape_cast %1 : vector<1x8x32xf32> to vector<8x32xf32>
    %3 = vector.shape_cast %0 : vector<8x32xf32> to vector<1x8x32xf32>
    tpu.vector_store %arg23[%c8, %c0, %c0_0], %3 {strides = array<i32>} : memref<9x8x32xf32, #tpu.memory_space<vmem>>, vector<1x8x32xf32>,
    %cst_1 = arith.constant 0.000000e+00 : f32
    %4 = vector.broadcast %cst_1 : f32 to vector<8x32xf32>
    %cst_2 = arith.constant 0.000000e+00 : f32
    %5 = vector.broadcast %cst_2 : f32 to vector<8x32xf32>
    %c0_3 = arith.constant 0 : index
    %c0_4 = arith.constant 0 : index
    %c0_5 = arith.constant 0 : index
    %6 = vector.load %arg0[%c0_3, %c0_4, %c0_5] : memref<8x8x16xf32, #tpu.memory_space<vmem>>, vector<1x8x16xf32>
    %7 = vector.shape_cast %6 : vector<1x8x16xf32> to vector<8x16xf32>
    %c0_6 = arith.constant 0 : index
    %c0_7 = arith.constant 0 : index
    %c0_8 = arith.constant 0 : index
    %8 = vector.load %arg2[%c0_6, %c0_7, %c0_8] : memref<3x16x32xf32, #tpu.memory_space<vmem>>, vector<1x16x32xf32>
    %9 = vector.shape_cast %8 : vector<1x16x32xf32> to vector<16x32xf32>
    %cst_9 = arith.constant dense<0.000000e+00> : vector<8x32xf32>
    %10 = tpu.matmul %7, %9, %cst_9 {dimension_numbers = #tpu.dot_dimension_numbers<[1], [0], [0], [1], [0, 0, 1, 1], [], []>} : vector<8x16xf32>, vector<16x32xf32>, vector<8x32xf32> -> vector<8x32xf32>
    %c0_10 = arith.constant 0 : index
    %c0_11 = arith.constant 0 : index
    %c0_12 = arith.constant 0 : index
    %11 = vector.load %arg3[%c0_10, %c0_11, %c0_12] : memref<3x32x32xf32, #tpu.memory_space<vmem>>, vector<1x32x32xf32>
    %12 = vector.shape_cast %11 : vector<1x32x32xf32> to vector<32x32xf32>
    %cst_13 = arith.constant dense<0.000000e+00> : vector<8x32xf32>
    %13 = tpu.matmul %4, %12, %cst_13 {dimension_numbers = #tpu.dot_dimension_numbers<[1], [0], [0], [1], [0, 0, 1, 1], [], []>} : vector<8x32xf32>, vector<32x32xf32>, vector<8x32xf32> -> vector<8x32xf32>
    %14 = arith.addf %10, %13 : vector<8x32xf32>
    %c0_14 = arith.constant 0 : index
    %c0_15 = arith.constant 0 : index
    %c0_16 = arith.constant 0 : index
    %15 = vector.load %arg4[%c0_14, %c0_15, %c0_16] : memref<4x1x32xf32, #tpu.memory_space<vmem>>, vector<1x1x32xf32>
    %16 = vector.shape_cast %15 : vector<1x1x32xf32> to vector<1x32xf32>
    %17 = vector.broadcast %16 : vector<1x32xf32> to vector<8x32xf32>
    %18 = arith.addf %14, %17 : vector<8x32xf32>
    %19 = arith.negf %18 : vector<8x32xf32>
    %20 = math.exp %19 : vector<8x32xf32>
    %cst_17 = arith.constant 1.000000e+00 : f32
    %21 = vector.broadcast %cst_17 : f32 to vector<8x32xf32>
    %22 = arith.addf %21, %20 : vector<8x32xf32>
    %23 = arith.divf %21, %22 : vector<8x32xf32>
    %c1 = arith.constant 1 : index
    %c0_18 = arith.constant 0 : index
    %c0_19 = arith.constant 0 : index
    %24 = vector.load %arg2[%c1, %c0_18, %c0_19] : memref<3x16x32xf32, #tpu.memory_space<vmem>>, vector<1x16x32xf32>
    %25 = vector.shape_cast %24 : vector<1x16x32xf32> to vector<16x32xf32>
    %cst_20 = arith.constant dense<0.000000e+00> : vector<8x32xf32>
    %26 = tpu.matmul %7, %25, %cst_20 {dimension_numbers = #tpu.dot_dimension_numbers<[1], [0], [0], [1], [0, 0, 1, 1], [], []>} : vector<8x16xf32>, vector<16x32xf32>, vector<8x32xf32> -> vector<8x32xf32>
    %c1_21 = arith.constant 1 : index
    %c0_22 = arith.constant 0 : index
    %c0_23 = arith.constant 0 : index
    %27 = vector.load %arg3[%c1_21, %c0_22, %c0_23] : memref<3x32x32xf32, #tpu.memory_space<vmem>>, vector<1x32x32xf32>
    %28 = vector.shape_cast %27 : vector<1x32x32xf32> to vector<32x32xf32>
    %cst_24 = arith.constant dense<0.000000e+00> : vector<8x32xf32>
    %29 = tpu.matmul %4, %28, %cst_24 {dimension_numbers = #tpu.dot_dimension_numbers<[1], [0], [0], [1], [0, 0, 1, 1], [], []>} : vector<8x32xf32>, vector<32x32xf32>, vector<8x32xf32> -> vector<8x32xf32>
    %30 = arith.addf %26, %29 : vector<8x32xf32>
    %c1_25 = arith.constant 1 : index
    %c0_26 = arith.constant 0 : index
    %c0_27 = arith.constant 0 : index
    %31 = vector.load %arg4[%c1_25, %c0_26, %c0_27] : memref<4x1x32xf32, #tpu.memory_space<vmem>>, vector<1x1x32xf32>
    %32 = vector.shape_cast %31 : vector<1x1x32xf32> to vector<1x32xf32>
    %33 = vector.broadcast %32 : vector<1x32xf32> to vector<8x32xf32>
    %34 = arith.addf %30, %33 : vector<8x32xf32>
    %35 = arith.negf %34 : vector<8x32xf32>
    %36 = math.exp %35 : vector<8x32xf32>
    %cst_28 = arith.constant 1.000000e+00 : f32
    %37 = vector.broadcast %cst_28 : f32 to vector<8x32xf32>
    %38 = arith.addf %37, %36 : vector<8x32xf32>
    %39 = arith.divf %37, %38 : vector<8x32xf32>
    %c2 = arith.constant 2 : index
    %c0_29 = arith.constant 0 : index
    %c0_30 = arith.constant 0 : index
    %40 = vector.load %arg2[%c2, %c0_29, %c0_30] : memref<3x16x32xf32, #tpu.memory_space<vmem>>, vector<1x16x32xf32>
    %41 = vector.shape_cast %40 : vector<1x16x32xf32> to vector<16x32xf32>
    %cst_31 = arith.constant dense<0.000000e+00> : vector<8x32xf32>
    %42 = tpu.matmul %7, %41, %cst_31 {dimension_numbers = #tpu.dot_dimension_numbers<[1], [0], [0], [1], [0, 0, 1, 1], [], []>} : vector<8x16xf32>, vector<16x32xf32>, vector<8x32xf32> -> vector<8x32xf32>
    %c2_32 = arith.constant 2 : index
    %c0_33 = arith.constant 0 : index
    %c0_34 = arith.constant 0 : index
    %43 = vector.load %arg4[%c2_32, %c0_33, %c0_34] : memref<4x1x32xf32, #tpu.memory_space<vmem>>, vector<1x1x32xf32>
    %44 = vector.shape_cast %43 : vector<1x1x32xf32> to vector<1x32xf32>
    %45 = vector.broadcast %44 : vector<1x32xf32> to vector<8x32xf32>
    %46 = arith.addf %42, %45 : vector<8x32xf32>
    %c2_35 = arith.constant 2 : index
    %c0_36 = arith.constant 0 : index
    %c0_37 = arith.constant 0 : index
    %47 = vector.load %arg3[%c2_35, %c0_36, %c0_37] : memref<3x32x32xf32, #tpu.memory_space<vmem>>, vector<1x32x32xf32>
    %48 = vector.shape_cast %47 : vector<1x32x32xf32> to vector<32x32xf32>
    %cst_38 = arith.constant dense<0.000000e+00> : vector<8x32xf32>
    %49 = tpu.matmul %4, %48, %cst_38 {dimension_numbers = #tpu.dot_dimension_numbers<[1], [0], [0], [1], [0, 0, 1, 1], [], []>} : vector<8x32xf32>, vector<32x32xf32>, vector<8x32xf32> -> vector<8x32xf32>
    %c3 = arith.constant 3 : index
    %c0_39 = arith.constant 0 : index
    %c0_40 = arith.constant 0 : index
    %50 = vector.load %arg4[%c3, %c0_39, %c0_40] : memref<4x1x32xf32, #tpu.memory_space<vmem>>, vector<1x1x32xf32>
    %51 = vector.shape_cast %50 : vector<1x1x32xf32> to vector<1x32xf32>
    %52 = vector.broadcast %51 : vector<1x32xf32> to vector<8x32xf32>
    %53 = arith.addf %49, %52 : vector<8x32xf32>
    %54 = arith.mulf %23, %53 : vector<8x32xf32>
    %55 = arith.addf %46, %54 : vector<8x32xf32>
    %56 = math.tanh %55 : vector<8x32xf32>
    %cst_41 = arith.constant 1.000000e+00 : f32
    %57 = vector.broadcast %cst_41 : f32 to vector<8x32xf32>
    %58 = arith.subf %57, %39 : vector<8x32xf32>
    %59 = arith.mulf %58, %56 : vector<8x32xf32>
    %60 = arith.mulf %39, %4 : vector<8x32xf32>
    %61 = arith.addf %59, %60 : vector<8x32xf32>
    %c0_42 = arith.constant 0 : index
    %c0_43 = arith.constant 0 : index
    %c0_44 = arith.constant 0 : index
    %62 = vector.load %arg22[%c0_42, %c0_43, %c0_44] : memref<8x8x32xf32, #tpu.memory_space<vmem>>, vector<1x8x32xf32>
    %63 = vector.shape_cast %62 : vector<1x8x32xf32> to vector<8x32xf32>
    %64 = vector.shape_cast %61 : vector<8x32xf32> to vector<1x8x32xf32>
    tpu.vector_store %arg22[%c0_42, %c0_43, %c0_44], %64 {strides = array<i32>} : memref<8x8x32xf32, #tpu.memory_space<vmem>>, vector<1x8x32xf32>,
    %c7 = arith.constant 7 : index
    %c0_45 = arith.constant 0 : index
    %c0_46 = arith.constant 0 : index
    %65 = vector.load %arg1[%c7, %c0_45, %c0_46] : memref<8x8x17xf32, #tpu.memory_space<vmem>>, vector<1x8x17xf32>
    %66 = vector.shape_cast %65 : vector<1x8x17xf32> to vector<8x17xf32>
    %c0_47 = arith.constant 0 : index
    %c0_48 = arith.constant 0 : index
    %c0_49 = arith.constant 0 : index
    %67 = vector.load %arg5[%c0_47, %c0_48, %c0_49] : memref<3x17x32xf32, #tpu.memory_space<vmem>>, vector<1x17x32xf32>
    %68 = vector.shape_cast %67 : vector<1x17x32xf32> to vector<17x32xf32>
    %cst_50 = arith.constant dense<0.000000e+00> : vector<8x32xf32>
    %69 = tpu.matmul %66, %68, %cst_50 {dimension_numbers = #tpu.dot_dimension_numbers<[1], [0], [0], [1], [0, 0, 1, 1], [], []>} : vector<8x17xf32>, vector<17x32xf32>, vector<8x32xf32> -> vector<8x32xf32>
    %c0_51 = arith.constant 0 : index
    %c0_52 = arith.constant 0 : index
    %c0_53 = arith.constant 0 : index
    %70 = vector.load %arg6[%c0_51, %c0_52, %c0_53] : memref<3x32x32xf32, #tpu.memory_space<vmem>>, vector<1x32x32xf32>
    %71 = vector.shape_cast %70 : vector<1x32x32xf32> to vector<32x32xf32>
    %cst_54 = arith.constant dense<0.000000e+00> : vector<8x32xf32>
    %72 = tpu.matmul %5, %71, %cst_54 {dimension_numbers = #tpu.dot_dimension_numbers<[1], [0], [0], [1], [0, 0, 1, 1], [], []>} : vector<8x32xf32>, vector<32x32xf32>, vector<8x32xf32> -> vector<8x32xf32>
    %73 = arith.addf %69, %72 : vector<8x32xf32>
    %c0_55 = arith.constant 0 : index
    %c0_56 = arith.constant 0 : index
    %c0_57 = arith.constant 0 : index
    %74 = vector.load %arg7[%c0_55, %c0_56, %c0_57] : memref<4x1x32xf32, #tpu.memory_space<vmem>>, vector<1x1x32xf32>
    %75 = vector.shape_cast %74 : vector<1x1x32xf32> to vector<1x32xf32>
    %76 = vector.broadcast %75 : vector<1x32xf32> to vector<8x32xf32>
    %77 = arith.addf %73, %76 : vector<8x32xf32>
    %78 = arith.negf %77 : vector<8x32xf32>
    %79 = math.exp %78 : vector<8x32xf32>
    %cst_58 = arith.constant 1.000000e+00 : f32
    %80 = vector.broadcast %cst_58 : f32 to vector<8x32xf32>
    %81 = arith.addf %80, %79 : vector<8x32xf32>
    %82 = arith.divf %80, %81 : vector<8x32xf32>
    %c1_59 = arith.constant 1 : index
    %c0_60 = arith.constant 0 : index
    %c0_61 = arith.constant 0 : index
    %83 = vector.load %arg5[%c1_59, %c0_60, %c0_61] : memref<3x17x32xf32, #tpu.memory_space<vmem>>, vector<1x17x32xf32>
    %84 = vector.shape_cast %83 : vector<1x17x32xf32> to vector<17x32xf32>
    %cst_62 = arith.constant dense<0.000000e+00> : vector<8x32xf32>
    %85 = tpu.matmul %66, %84, %cst_62 {dimension_numbers = #tpu.dot_dimension_numbers<[1], [0], [0], [1], [0, 0, 1, 1], [], []>} : vector<8x17xf32>, vector<17x32xf32>, vector<8x32xf32> -> vector<8x32xf32>
    %c1_63 = arith.constant 1 : index
    %c0_64 = arith.constant 0 : index
    %c0_65 = arith.constant 0 : index
    %86 = vector.load %arg6[%c1_63, %c0_64, %c0_65] : memref<3x32x32xf32, #tpu.memory_space<vmem>>, vector<1x32x32xf32>
    %87 = vector.shape_cast %86 : vector<1x32x32xf32> to vector<32x32xf32>
    %cst_66 = arith.constant dense<0.000000e+00> : vector<8x32xf32>
    %88 = tpu.matmul %5, %87, %cst_66 {dimension_numbers = #tpu.dot_dimension_numbers<[1], [0], [0], [1], [0, 0, 1, 1], [], []>} : vector<8x32xf32>, vector<32x32xf32>, vector<8x32xf32> -> vector<8x32xf32>
    %89 = arith.addf %85, %88 : vector<8x32xf32>
    %c1_67 = arith.constant 1 : index
    %c0_68 = arith.constant 0 : index
    %c0_69 = arith.constant 0 : index
    %90 = vector.load %arg7[%c1_67, %c0_68, %c0_69] : memref<4x1x32xf32, #tpu.memory_space<vmem>>, vector<1x1x32xf32>
    %91 = vector.shape_cast %90 : vector<1x1x32xf32> to vector<1x32xf32>
    %92 = vector.broadcast %91 : vector<1x32xf32> to vector<8x32xf32>
    %93 = arith.addf %89, %92 : vector<8x32xf32>
    %94 = arith.negf %93 : vector<8x32xf32>
    %95 = math.exp %94 : vector<8x32xf32>
    %cst_70 = arith.constant 1.000000e+00 : f32
    %96 = vector.broadcast %cst_70 : f32 to vector<8x32xf32>
    %97 = arith.addf %96, %95 : vector<8x32xf32>
    %98 = arith.divf %96, %97 : vector<8x32xf32>
    %c2_71 = arith.constant 2 : index
    %c0_72 = arith.constant 0 : index
    %c0_73 = arith.constant 0 : index
    %99 = vector.load %arg5[%c2_71, %c0_72, %c0_73] : memref<3x17x32xf32, #tpu.memory_space<vmem>>, vector<1x17x32xf32>
    %100 = vector.shape_cast %99 : vector<1x17x32xf32> to vector<17x32xf32>
    %cst_74 = arith.constant dense<0.000000e+00> : vector<8x32xf32>
    %101 = tpu.matmul %66, %100, %cst_74 {dimension_numbers = #tpu.dot_dimension_numbers<[1], [0], [0], [1], [0, 0, 1, 1], [], []>} : vector<8x17xf32>, vector<17x32xf32>, vector<8x32xf32> -> vector<8x32xf32>
    %c2_75 = arith.constant 2 : index
    %c0_76 = arith.constant 0 : index
    %c0_77 = arith.constant 0 : index
    %102 = vector.load %arg7[%c2_75, %c0_76, %c0_77] : memref<4x1x32xf32, #tpu.memory_space<vmem>>, vector<1x1x32xf32>
    %103 = vector.shape_cast %102 : vector<1x1x32xf32> to vector<1x32xf32>
    %104 = vector.broadcast %103 : vector<1x32xf32> to vector<8x32xf32>
    %105 = arith.addf %101, %104 : vector<8x32xf32>
    %c2_78 = arith.constant 2 : index
    %c0_79 = arith.constant 0 : index
    %c0_80 = arith.constant 0 : index
    %106 = vector.load %arg6[%c2_78, %c0_79, %c0_80] : memref<3x32x32xf32, #tpu.memory_space<vmem>>, vector<1x32x32xf32>
    %107 = vector.shape_cast %106 : vector<1x32x32xf32> to vector<32x32xf32>
    %cst_81 = arith.constant dense<0.000000e+00> : vector<8x32xf32>
    %108 = tpu.matmul %5, %107, %cst_81 {dimension_numbers = #tpu.dot_dimension_numbers<[1], [0], [0], [1], [0, 0, 1, 1], [], []>} : vector<8x32xf32>, vector<32x32xf32>, vector<8x32xf32> -> vector<8x32xf32>
    %c3_82 = arith.constant 3 : index
    %c0_83 = arith.constant 0 : index
    %c0_84 = arith.constant 0 : index
    %109 = vector.load %arg7[%c3_82, %c0_83, %c0_84] : memref<4x1x32xf32, #tpu.memory_space<vmem>>, vector<1x1x32xf32>
    %110 = vector.shape_cast %109 : vector<1x1x32xf32> to vector<1x32xf32>
    %111 = vector.broadcast %110 : vector<1x32xf32> to vector<8x32xf32>
    %112 = arith.addf %108, %111 : vector<8x32xf32>
    %113 = arith.mulf %82, %112 : vector<8x32xf32>
    %114 = arith.addf %105, %113 : vector<8x32xf32>
    %115 = math.tanh %114 : vector<8x32xf32>
    %cst_85 = arith.constant 1.000000e+00 : f32
    %116 = vector.broadcast %cst_85 : f32 to vector<8x32xf32>
    %117 = arith.subf %116, %98 : vector<8x32xf32>
    %118 = arith.mulf %117, %115 : vector<8x32xf32>
    %119 = arith.mulf %98, %5 : vector<8x32xf32>
    %120 = arith.addf %118, %119 : vector<8x32xf32>
    %c7_86 = arith.constant 7 : index
    %c0_87 = arith.constant 0 : index
    %c0_88 = arith.constant 0 : index
    %121 = vector.load %arg23[%c7_86, %c0_87, %c0_88] : memref<9x8x32xf32, #tpu.memory_space<vmem>>, vector<1x8x32xf32>
    %122 = vector.shape_cast %121 : vector<1x8x32xf32> to vector<8x32xf32>
    %123 = vector.shape_cast %120 : vector<8x32xf32> to vector<1x8x32xf32>
    tpu.vector_store %arg23[%c7_86, %c0_87, %c0_88], %123 {strides = array<i32>} : memref<9x8x32xf32, #tpu.memory_space<vmem>>, vector<1x8x32xf32>,
    %c1_89 = arith.constant 1 : index
    %c0_90 = arith.constant 0 : index
    %c0_91 = arith.constant 0 : index
    %124 = vector.load %arg0[%c1_89, %c0_90, %c0_91] : memref<8x8x16xf32, #tpu.memory_space<vmem>>, vector<1x8x16xf32>
    %125 = vector.shape_cast %124 : vector<1x8x16xf32> to vector<8x16xf32>
    %c0_92 = arith.constant 0 : index
    %c0_93 = arith.constant 0 : index
    %c0_94 = arith.constant 0 : index
    %126 = vector.load %arg2[%c0_92, %c0_93, %c0_94] : memref<3x16x32xf32, #tpu.memory_space<vmem>>, vector<1x16x32xf32>
    %127 = vector.shape_cast %126 : vector<1x16x32xf32> to vector<16x32xf32>
    %cst_95 = arith.constant dense<0.000000e+00> : vector<8x32xf32>
    %128 = tpu.matmul %125, %127, %cst_95 {dimension_numbers = #tpu.dot_dimension_numbers<[1], [0], [0], [1], [0, 0, 1, 1], [], []>} : vector<8x16xf32>, vector<16x32xf32>, vector<8x32xf32> -> vector<8x32xf32>
    %c0_96 = arith.constant 0 : index
    %c0_97 = arith.constant 0 : index
    %c0_98 = arith.constant 0 : index
    %129 = vector.load %arg3[%c0_96, %c0_97, %c0_98] : memref<3x32x32xf32, #tpu.memory_space<vmem>>, vector<1x32x32xf32>
    %130 = vector.shape_cast %129 : vector<1x32x32xf32> to vector<32x32xf32>
    %cst_99 = arith.constant dense<0.000000e+00> : vector<8x32xf32>
    %131 = tpu.matmul %61, %130, %cst_99 {dimension_numbers = #tpu.dot_dimension_numbers<[1], [0], [0], [1], [0, 0, 1, 1], [], []>} : vector<8x32xf32>, vector<32x32xf32>, vector<8x32xf32> -> vector<8x32xf32>
    %132 = arith.addf %128, %131 : vector<8x32xf32>
    %c0_100 = arith.constant 0 : index
    %c0_101 = arith.constant 0 : index
    %c0_102 = arith.constant 0 : index
    %133 = vector.load %arg4[%c0_100, %c0_101, %c0_102] : memref<4x1x32xf32, #tpu.memory_space<vmem>>, vector<1x1x32xf32>
    %134 = vector.shape_cast %133 : vector<1x1x32xf32> to vector<1x32xf32>
    %135 = vector.broadcast %134 : vector<1x32xf32> to vector<8x32xf32>
    %136 = arith.addf %132, %135 : vector<8x32xf32>
    %137 = arith.negf %136 : vector<8x32xf32>
    %138 = math.exp %137 : vector<8x32xf32>
    %cst_103 = arith.constant 1.000000e+00 : f32
    %139 = vector.broadcast %cst_103 : f32 to vector<8x32xf32>
    %140 = arith.addf %139, %138 : vector<8x32xf32>
    %141 = arith.divf %139, %140 : vector<8x32xf32>
    %c1_104 = arith.constant 1 : index
    %c0_105 = arith.constant 0 : index
    %c0_106 = arith.constant 0 : index
    %142 = vector.load %arg2[%c1_104, %c0_105, %c0_106] : memref<3x16x32xf32, #tpu.memory_space<vmem>>, vector<1x16x32xf32>
    %143 = vector.shape_cast %142 : vector<1x16x32xf32> to vector<16x32xf32>
    %cst_107 = arith.constant dense<0.000000e+00> : vector<8x32xf32>
    %144 = tpu.matmul %125, %143, %cst_107 {dimension_numbers = #tpu.dot_dimension_numbers<[1], [0], [0], [1], [0, 0, 1, 1], [], []>} : vector<8x16xf32>, vector<16x32xf32>, vector<8x32xf32> -> vector<8x32xf32>
    %c1_108 = arith.constant 1 : index
    %c0_109 = arith.constant 0 : index
    %c0_110 = arith.constant 0 : index
    %145 = vector.load %arg3[%c1_108, %c0_109, %c0_110] : memref<3x32x32xf32, #tpu.memory_space<vmem>>, vector<1x32x32xf32>
    %146 = vector.shape_cast %145 : vector<1x32x32xf32> to vector<32x32xf32>
    %cst_111 = arith.constant dense<0.000000e+00> : vector<8x32xf32>
    %147 = tpu.matmul %61, %146, %cst_111 {dimension_numbers = #tpu.dot_dimension_numbers<[1], [0], [0], [1], [0, 0, 1, 1], [], []>} : vector<8x32xf32>, vector<32x32xf32>, vector<8x32xf32> -> vector<8x32xf32>
    %148 = arith.addf %144, %147 : vector<8x32xf32>
    %c1_112 = arith.constant 1 : index
    %c0_113 = arith.constant 0 : index
    %c0_114 = arith.constant 0 : index
    %149 = vector.load %arg4[%c1_112, %c0_113, %c0_114] : memref<4x1x32xf32, #tpu.memory_space<vmem>>, vector<1x1x32xf32>
    %150 = vector.shape_cast %149 : vector<1x1x32xf32> to vector<1x32xf32>
    %151 = vector.broadcast %150 : vector<1x32xf32> to vector<8x32xf32>
    %152 = arith.addf %148, %151 : vector<8x32xf32>
    %153 = arith.negf %152 : vector<8x32xf32>
    %154 = math.exp %153 : vector<8x32xf32>
    %cst_115 = arith.constant 1.000000e+00 : f32
    %155 = vector.broadcast %cst_115 : f32 to vector<8x32xf32>
    %156 = arith.addf %155, %154 : vector<8x32xf32>
    %157 = arith.divf %155, %156 : vector<8x32xf32>
    %c2_116 = arith.constant 2 : index
    %c0_117 = arith.constant 0 : index
    %c0_118 = arith.constant 0 : index
    %158 = vector.load %arg2[%c2_116, %c0_117, %c0_118] : memref<3x16x32xf32, #tpu.memory_space<vmem>>, vector<1x16x32xf32>
    %159 = vector.shape_cast %158 : vector<1x16x32xf32> to vector<16x32xf32>
    %cst_119 = arith.constant dense<0.000000e+00> : vector<8x32xf32>
    %160 = tpu.matmul %125, %159, %cst_119 {dimension_numbers = #tpu.dot_dimension_numbers<[1], [0], [0], [1], [0, 0, 1, 1], [], []>} : vector<8x16xf32>, vector<16x32xf32>, vector<8x32xf32> -> vector<8x32xf32>
    %c2_120 = arith.constant 2 : index
    %c0_121 = arith.constant 0 : index
    %c0_122 = arith.constant 0 : index
    %161 = vector.load %arg4[%c2_120, %c0_121, %c0_122] : memref<4x1x32xf32, #tpu.memory_space<vmem>>, vector<1x1x32xf32>
    %162 = vector.shape_cast %161 : vector<1x1x32xf32> to vector<1x32xf32>
    %163 = vector.broadcast %162 : vector<1x32xf32> to vector<8x32xf32>
    %164 = arith.addf %160, %163 : vector<8x32xf32>
    %c2_123 = arith.constant 2 : index
    %c0_124 = arith.constant 0 : index
    %c0_125 = arith.constant 0 : index
    %165 = vector.load %arg3[%c2_123, %c0_124, %c0_125] : memref<3x32x32xf32, #tpu.memory_space<vmem>>, vector<1x32x32xf32>
    %166 = vector.shape_cast %165 : vector<1x32x32xf32> to vector<32x32xf32>
    %cst_126 = arith.constant dense<0.000000e+00> : vector<8x32xf32>
    %167 = tpu.matmul %61, %166, %cst_126 {dimension_numbers = #tpu.dot_dimension_numbers<[1], [0], [0], [1], [0, 0, 1, 1], [], []>} : vector<8x32xf32>, vector<32x32xf32>, vector<8x32xf32> -> vector<8x32xf32>
    %c3_127 = arith.constant 3 : index
    %c0_128 = arith.constant 0 : index
    %c0_129 = arith.constant 0 : index
    %168 = vector.load %arg4[%c3_127, %c0_128, %c0_129] : memref<4x1x32xf32, #tpu.memory_space<vmem>>, vector<1x1x32xf32>
    %169 = vector.shape_cast %168 : vector<1x1x32xf32> to vector<1x32xf32>
    %170 = vector.broadcast %169 : vector<1x32xf32> to vector<8x32xf32>
    %171 = arith.addf %167, %170 : vector<8x32xf32>
    %172 = arith.mulf %141, %171 : vector<8x32xf32>
    %173 = arith.addf %164, %172 : vector<8x32xf32>
    %174 = math.tanh %173 : vector<8x32xf32>
    %cst_130 = arith.constant 1.000000e+00 : f32
    %175 = vector.broadcast %cst_130 : f32 to vector<8x32xf32>
    %176 = arith.subf %175, %157 : vector<8x32xf32>
    %177 = arith.mulf %176, %174 : vector<8x32xf32>
    %178 = arith.mulf %157, %61 : vector<8x32xf32>
    %179 = arith.addf %177, %178 : vector<8x32xf32>
    %c1_131 = arith.constant 1 : index
    %c0_132 = arith.constant 0 : index
    %c0_133 = arith.constant 0 : index
    %180 = vector.load %arg22[%c1_131, %c0_132, %c0_133] : memref<8x8x32xf32, #tpu.memory_space<vmem>>, vector<1x8x32xf32>
    %181 = vector.shape_cast %180 : vector<1x8x32xf32> to vector<8x32xf32>
    %182 = vector.shape_cast %179 : vector<8x32xf32> to vector<1x8x32xf32>
    tpu.vector_store %arg22[%c1_131, %c0_132, %c0_133], %182 {strides = array<i32>} : memref<8x8x32xf32, #tpu.memory_space<vmem>>, vector<1x8x32xf32>,
    %c6 = arith.constant 6 : index
    %c0_134 = arith.constant 0 : index
    %c0_135 = arith.constant 0 : index
    %183 = vector.load %arg1[%c6, %c0_134, %c0_135] : memref<8x8x17xf32, #tpu.memory_space<vmem>>, vector<1x8x17xf32>
    %184 = vector.shape_cast %183 : vector<1x8x17xf32> to vector<8x17xf32>
    %c0_136 = arith.constant 0 : index
    %c0_137 = arith.constant 0 : index
    %c0_138 = arith.constant 0 : index
    %185 = vector.load %arg5[%c0_136, %c0_137, %c0_138] : memref<3x17x32xf32, #tpu.memory_space<vmem>>, vector<1x17x32xf32>
    %186 = vector.shape_cast %185 : vector<1x17x32xf32> to vector<17x32xf32>
    %cst_139 = arith.constant dense<0.000000e+00> : vector<8x32xf32>
    %187 = tpu.matmul %184, %186, %cst_139 {dimension_numbers = #tpu.dot_dimension_numbers<[1], [0], [0], [1], [0, 0, 1, 1], [], []>} : vector<8x17xf32>, vector<17x32xf32>, vector<8x32xf32> -> vector<8x32xf32>
    %c0_140 = arith.constant 0 : index
    %c0_141 = arith.constant 0 : index
    %c0_142 = arith.constant 0 : index
    %188 = vector.load %arg6[%c0_140, %c0_141, %c0_142] : memref<3x32x32xf32, #tpu.memory_space<vmem>>, vector<1x32x32xf32>
    %189 = vector.shape_cast %188 : vector<1x32x32xf32> to vector<32x32xf32>
    %cst_143 = arith.constant dense<0.000000e+00> : vector<8x32xf32>
    %190 = tpu.matmul %120, %189, %cst_143 {dimension_numbers = #tpu.dot_dimension_numbers<[1], [0], [0], [1], [0, 0, 1, 1], [], []>} : vector<8x32xf32>, vector<32x32xf32>, vector<8x32xf32> -> vector<8x32xf32>
    %191 = arith.addf %187, %190 : vector<8x32xf32>
    %c0_144 = arith.constant 0 : index
    %c0_145 = arith.constant 0 : index
    %c0_146 = arith.constant 0 : index
    %192 = vector.load %arg7[%c0_144, %c0_145, %c0_146] : memref<4x1x32xf32, #tpu.memory_space<vmem>>, vector<1x1x32xf32>
    %193 = vector.shape_cast %192 : vector<1x1x32xf32> to vector<1x32xf32>
    %194 = vector.broadcast %193 : vector<1x32xf32> to vector<8x32xf32>
    %195 = arith.addf %191, %194 : vector<8x32xf32>
    %196 = arith.negf %195 : vector<8x32xf32>
    %197 = math.exp %196 : vector<8x32xf32>
    %cst_147 = arith.constant 1.000000e+00 : f32
    %198 = vector.broadcast %cst_147 : f32 to vector<8x32xf32>
    %199 = arith.addf %198, %197 : vector<8x32xf32>
    %200 = arith.divf %198, %199 : vector<8x32xf32>
    %c1_148 = arith.constant 1 : index
    %c0_149 = arith.constant 0 : index
    %c0_150 = arith.constant 0 : index
    %201 = vector.load %arg5[%c1_148, %c0_149, %c0_150] : memref<3x17x32xf32, #tpu.memory_space<vmem>>, vector<1x17x32xf32>
    %202 = vector.shape_cast %201 : vector<1x17x32xf32> to vector<17x32xf32>
    %cst_151 = arith.constant dense<0.000000e+00> : vector<8x32xf32>
    %203 = tpu.matmul %184, %202, %cst_151 {dimension_numbers = #tpu.dot_dimension_numbers<[1], [0], [0], [1], [0, 0, 1, 1], [], []>} : vector<8x17xf32>, vector<17x32xf32>, vector<8x32xf32> -> vector<8x32xf32>
    %c1_152 = arith.constant 1 : index
    %c0_153 = arith.constant 0 : index
    %c0_154 = arith.constant 0 : index
    %204 = vector.load %arg6[%c1_152, %c0_153, %c0_154] : memref<3x32x32xf32, #tpu.memory_space<vmem>>, vector<1x32x32xf32>
    %205 = vector.shape_cast %204 : vector<1x32x32xf32> to vector<32x32xf32>
    %cst_155 = arith.constant dense<0.000000e+00> : vector<8x32xf32>
    %206 = tpu.matmul %120, %205, %cst_155 {dimension_numbers = #tpu.dot_dimension_numbers<[1], [0], [0], [1], [0, 0, 1, 1], [], []>} : vector<8x32xf32>, vector<32x32xf32>, vector<8x32xf32> -> vector<8x32xf32>
    %207 = arith.addf %203, %206 : vector<8x32xf32>
    %c1_156 = arith.constant 1 : index
    %c0_157 = arith.constant 0 : index
    %c0_158 = arith.constant 0 : index
    %208 = vector.load %arg7[%c1_156, %c0_157, %c0_158] : memref<4x1x32xf32, #tpu.memory_space<vmem>>, vector<1x1x32xf32>
    %209 = vector.shape_cast %208 : vector<1x1x32xf32> to vector<1x32xf32>
    %210 = vector.broadcast %209 : vector<1x32xf32> to vector<8x32xf32>
    %211 = arith.addf %207, %210 : vector<8x32xf32>
    %212 = arith.negf %211 : vector<8x32xf32>
    %213 = math.exp %212 : vector<8x32xf32>
    %cst_159 = arith.constant 1.000000e+00 : f32
    %214 = vector.broadcast %cst_159 : f32 to vector<8x32xf32>
    %215 = arith.addf %214, %213 : vector<8x32xf32>
    %216 = arith.divf %214, %215 : vector<8x32xf32>
    %c2_160 = arith.constant 2 : index
    %c0_161 = arith.constant 0 : index
    %c0_162 = arith.constant 0 : index
    %217 = vector.load %arg5[%c2_160, %c0_161, %c0_162] : memref<3x17x32xf32, #tpu.memory_space<vmem>>, vector<1x17x32xf32>
    %218 = vector.shape_cast %217 : vector<1x17x32xf32> to vector<17x32xf32>
    %cst_163 = arith.constant dense<0.000000e+00> : vector<8x32xf32>
    %219 = tpu.matmul %184, %218, %cst_163 {dimension_numbers = #tpu.dot_dimension_numbers<[1], [0], [0], [1], [0, 0, 1, 1], [], []>} : vector<8x17xf32>, vector<17x32xf32>, vector<8x32xf32> -> vector<8x32xf32>
    %c2_164 = arith.constant 2 : index
    %c0_165 = arith.constant 0 : index
    %c0_166 = arith.constant 0 : index
    %220 = vector.load %arg7[%c2_164, %c0_165, %c0_166] : memref<4x1x32xf32, #tpu.memory_space<vmem>>, vector<1x1x32xf32>
    %221 = vector.shape_cast %220 : vector<1x1x32xf32> to vector<1x32xf32>
    %222 = vector.broadcast %221 : vector<1x32xf32> to vector<8x32xf32>
    %223 = arith.addf %219, %222 : vector<8x32xf32>
    %c2_167 = arith.constant 2 : index
    %c0_168 = arith.constant 0 : index
    %c0_169 = arith.constant 0 : index
    %224 = vector.load %arg6[%c2_167, %c0_168, %c0_169] : memref<3x32x32xf32, #tpu.memory_space<vmem>>, vector<1x32x32xf32>
    %225 = vector.shape_cast %224 : vector<1x32x32xf32> to vector<32x32xf32>
    %cst_170 = arith.constant dense<0.000000e+00> : vector<8x32xf32>
    %226 = tpu.matmul %120, %225, %cst_170 {dimension_numbers = #tpu.dot_dimension_numbers<[1], [0], [0], [1], [0, 0, 1, 1], [], []>} : vector<8x32xf32>, vector<32x32xf32>, vector<8x32xf32> -> vector<8x32xf32>
    %c3_171 = arith.constant 3 : index
    %c0_172 = arith.constant 0 : index
    %c0_173 = arith.constant 0 : index
    %227 = vector.load %arg7[%c3_171, %c0_172, %c0_173] : memref<4x1x32xf32, #tpu.memory_space<vmem>>, vector<1x1x32xf32>
    %228 = vector.shape_cast %227 : vector<1x1x32xf32> to vector<1x32xf32>
    %229 = vector.broadcast %228 : vector<1x32xf32> to vector<8x32xf32>
    %230 = arith.addf %226, %229 : vector<8x32xf32>
    %231 = arith.mulf %200, %230 : vector<8x32xf32>
    %232 = arith.addf %223, %231 : vector<8x32xf32>
    %233 = math.tanh %232 : vector<8x32xf32>
    %cst_174 = arith.constant 1.000000e+00 : f32
    %234 = vector.broadcast %cst_174 : f32 to vector<8x32xf32>
    %235 = arith.subf %234, %216 : vector<8x32xf32>
    %236 = arith.mulf %235, %233 : vector<8x32xf32>
    %237 = arith.mulf %216, %120 : vector<8x32xf32>
    %238 = arith.addf %236, %237 : vector<8x32xf32>
    %c6_175 = arith.constant 6 : index
    %c0_176 = arith.constant 0 : index
    %c0_177 = arith.constant 0 : index
    %239 = vector.load %arg23[%c6_175, %c0_176, %c0_177] : memref<9x8x32xf32, #tpu.memory_space<vmem>>, vector<1x8x32xf32>
    %240 = vector.shape_cast %239 : vector<1x8x32xf32> to vector<8x32xf32>
    %241 = vector.shape_cast %238 : vector<8x32xf32> to vector<1x8x32xf32>
    tpu.vector_store %arg23[%c6_175, %c0_176, %c0_177], %241 {strides = array<i32>} : memref<9x8x32xf32, #tpu.memory_space<vmem>>, vector<1x8x32xf32>,
    %c2_178 = arith.constant 2 : index
    %c0_179 = arith.constant 0 : index
    %c0_180 = arith.constant 0 : index
    %242 = vector.load %arg0[%c2_178, %c0_179, %c0_180] : memref<8x8x16xf32, #tpu.memory_space<vmem>>, vector<1x8x16xf32>
    %243 = vector.shape_cast %242 : vector<1x8x16xf32> to vector<8x16xf32>
    %c0_181 = arith.constant 0 : index
    %c0_182 = arith.constant 0 : index
    %c0_183 = arith.constant 0 : index
    %244 = vector.load %arg2[%c0_181, %c0_182, %c0_183] : memref<3x16x32xf32, #tpu.memory_space<vmem>>, vector<1x16x32xf32>
    %245 = vector.shape_cast %244 : vector<1x16x32xf32> to vector<16x32xf32>
    %cst_184 = arith.constant dense<0.000000e+00> : vector<8x32xf32>
    %246 = tpu.matmul %243, %245, %cst_184 {dimension_numbers = #tpu.dot_dimension_numbers<[1], [0], [0], [1], [0, 0, 1, 1], [], []>} : vector<8x16xf32>, vector<16x32xf32>, vector<8x32xf32> -> vector<8x32xf32>
    %c0_185 = arith.constant 0 : index
    %c0_186 = arith.constant 0 : index
    %c0_187 = arith.constant 0 : index
    %247 = vector.load %arg3[%c0_185, %c0_186, %c0_187] : memref<3x32x32xf32, #tpu.memory_space<vmem>>, vector<1x32x32xf32>
    %248 = vector.shape_cast %247 : vector<1x32x32xf32> to vector<32x32xf32>
    %cst_188 = arith.constant dense<0.000000e+00> : vector<8x32xf32>
    %249 = tpu.matmul %179, %248, %cst_188 {dimension_numbers = #tpu.dot_dimension_numbers<[1], [0], [0], [1], [0, 0, 1, 1], [], []>} : vector<8x32xf32>, vector<32x32xf32>, vector<8x32xf32> -> vector<8x32xf32>
    %250 = arith.addf %246, %249 : vector<8x32xf32>
    %c0_189 = arith.constant 0 : index
    %c0_190 = arith.constant 0 : index
    %c0_191 = arith.constant 0 : index
    %251 = vector.load %arg4[%c0_189, %c0_190, %c0_191] : memref<4x1x32xf32, #tpu.memory_space<vmem>>, vector<1x1x32xf32>
    %252 = vector.shape_cast %251 : vector<1x1x32xf32> to vector<1x32xf32>
    %253 = vector.broadcast %252 : vector<1x32xf32> to vector<8x32xf32>
    %254 = arith.addf %250, %253 : vector<8x32xf32>
    %255 = arith.negf %254 : vector<8x32xf32>
    %256 = math.exp %255 : vector<8x32xf32>
    %cst_192 = arith.constant 1.000000e+00 : f32
    %257 = vector.broadcast %cst_192 : f32 to vector<8x32xf32>
    %258 = arith.addf %257, %256 : vector<8x32xf32>
    %259 = arith.divf %257, %258 : vector<8x32xf32>
    %c1_193 = arith.constant 1 : index
    %c0_194 = arith.constant 0 : index
    %c0_195 = arith.constant 0 : index
    %260 = vector.load %arg2[%c1_193, %c0_194, %c0_195] : memref<3x16x32xf32, #tpu.memory_space<vmem>>, vector<1x16x32xf32>
    %261 = vector.shape_cast %260 : vector<1x16x32xf32> to vector<16x32xf32>
    %cst_196 = arith.constant dense<0.000000e+00> : vector<8x32xf32>
    %262 = tpu.matmul %243, %261, %cst_196 {dimension_numbers = #tpu.dot_dimension_numbers<[1], [0], [0], [1], [0, 0, 1, 1], [], []>} : vector<8x16xf32>, vector<16x32xf32>, vector<8x32xf32> -> vector<8x32xf32>
    %c1_197 = arith.constant 1 : index
    %c0_198 = arith.constant 0 : index
    %c0_199 = arith.constant 0 : index
    %263 = vector.load %arg3[%c1_197, %c0_198, %c0_199] : memref<3x32x32xf32, #tpu.memory_space<vmem>>, vector<1x32x32xf32>
    %264 = vector.shape_cast %263 : vector<1x32x32xf32> to vector<32x32xf32>
    %cst_200 = arith.constant dense<0.000000e+00> : vector<8x32xf32>
    %265 = tpu.matmul %179, %264, %cst_200 {dimension_numbers = #tpu.dot_dimension_numbers<[1], [0], [0], [1], [0, 0, 1, 1], [], []>} : vector<8x32xf32>, vector<32x32xf32>, vector<8x32xf32> -> vector<8x32xf32>
    %266 = arith.addf %262, %265 : vector<8x32xf32>
    %c1_201 = arith.constant 1 : index
    %c0_202 = arith.constant 0 : index
    %c0_203 = arith.constant 0 : index
    %267 = vector.load %arg4[%c1_201, %c0_202, %c0_203] : memref<4x1x32xf32, #tpu.memory_space<vmem>>, vector<1x1x32xf32>
    %268 = vector.shape_cast %267 : vector<1x1x32xf32> to vector<1x32xf32>
    %269 = vector.broadcast %268 : vector<1x32xf32> to vector<8x32xf32>
    %270 = arith.addf %266, %269 : vector<8x32xf32>
    %271 = arith.negf %270 : vector<8x32xf32>
    %272 = math.exp %271 : vector<8x32xf32>
    %cst_204 = arith.constant 1.000000e+00 : f32
    %273 = vector.broadcast %cst_204 : f32 to vector<8x32xf32>
    %274 = arith.addf %273, %272 : vector<8x32xf32>
    %275 = arith.divf %273, %274 : vector<8x32xf32>
    %c2_205 = arith.constant 2 : index
    %c0_206 = arith.constant 0 : index
    %c0_207 = arith.constant 0 : index
    %276 = vector.load %arg2[%c2_205, %c0_206, %c0_207] : memref<3x16x32xf32, #tpu.memory_space<vmem>>, vector<1x16x32xf32>
    %277 = vector.shape_cast %276 : vector<1x16x32xf32> to vector<16x32xf32>
    %cst_208 = arith.constant dense<0.000000e+00> : vector<8x32xf32>
    %278 = tpu.matmul %243, %277, %cst_208 {dimension_numbers = #tpu.dot_dimension_numbers<[1], [0], [0], [1], [0, 0, 1, 1], [], []>} : vector<8x16xf32>, vector<16x32xf32>, vector<8x32xf32> -> vector<8x32xf32>
    %c2_209 = arith.constant 2 : index
    %c0_210 = arith.constant 0 : index
    %c0_211 = arith.constant 0 : index
    %279 = vector.load %arg4[%c2_209, %c0_210, %c0_211] : memref<4x1x32xf32, #tpu.memory_space<vmem>>, vector<1x1x32xf32>
    %280 = vector.shape_cast %279 : vector<1x1x32xf32> to vector<1x32xf32>
    %281 = vector.broadcast %280 : vector<1x32xf32> to vector<8x32xf32>
    %282 = arith.addf %278, %281 : vector<8x32xf32>
    %c2_212 = arith.constant 2 : index
    %c0_213 = arith.constant 0 : index
    %c0_214 = arith.constant 0 : index
    %283 = vector.load %arg3[%c2_212, %c0_213, %c0_214] : memref<3x32x32xf32, #tpu.memory_space<vmem>>, vector<1x32x32xf32>
    %284 = vector.shape_cast %283 : vector<1x32x32xf32> to vector<32x32xf32>
    %cst_215 = arith.constant dense<0.000000e+00> : vector<8x32xf32>
    %285 = tpu.matmul %179, %284, %cst_215 {dimension_numbers = #tpu.dot_dimension_numbers<[1], [0], [0], [1], [0, 0, 1, 1], [], []>} : vector<8x32xf32>, vector<32x32xf32>, vector<8x32xf32> -> vector<8x32xf32>
    %c3_216 = arith.constant 3 : index
    %c0_217 = arith.constant 0 : index
    %c0_218 = arith.constant 0 : index
    %286 = vector.load %arg4[%c3_216, %c0_217, %c0_218] : memref<4x1x32xf32, #tpu.memory_space<vmem>>, vector<1x1x32xf32>
    %287 = vector.shape_cast %286 : vector<1x1x32xf32> to vector<1x32xf32>
    %288 = vector.broadcast %287 : vector<1x32xf32> to vector<8x32xf32>
    %289 = arith.addf %285, %288 : vector<8x32xf32>
    %290 = arith.mulf %259, %289 : vector<8x32xf32>
    %291 = arith.addf %282, %290 : vector<8x32xf32>
    %292 = math.tanh %291 : vector<8x32xf32>
    %cst_219 = arith.constant 1.000000e+00 : f32
    %293 = vector.broadcast %cst_219 : f32 to vector<8x32xf32>
    %294 = arith.subf %293, %275 : vector<8x32xf32>
    %295 = arith.mulf %294, %292 : vector<8x32xf32>
    %296 = arith.mulf %275, %179 : vector<8x32xf32>
    %297 = arith.addf %295, %296 : vector<8x32xf32>
    %c2_220 = arith.constant 2 : index
    %c0_221 = arith.constant 0 : index
    %c0_222 = arith.constant 0 : index
    %298 = vector.load %arg22[%c2_220, %c0_221, %c0_222] : memref<8x8x32xf32, #tpu.memory_space<vmem>>, vector<1x8x32xf32>
    %299 = vector.shape_cast %298 : vector<1x8x32xf32> to vector<8x32xf32>
    %300 = vector.shape_cast %297 : vector<8x32xf32> to vector<1x8x32xf32>
    tpu.vector_store %arg22[%c2_220, %c0_221, %c0_222], %300 {strides = array<i32>} : memref<8x8x32xf32, #tpu.memory_space<vmem>>, vector<1x8x32xf32>,
    %c5 = arith.constant 5 : index
    %c0_223 = arith.constant 0 : index
    %c0_224 = arith.constant 0 : index
    %301 = vector.load %arg1[%c5, %c0_223, %c0_224] : memref<8x8x17xf32, #tpu.memory_space<vmem>>, vector<1x8x17xf32>
    %302 = vector.shape_cast %301 : vector<1x8x17xf32> to vector<8x17xf32>
    %c0_225 = arith.constant 0 : index
    %c0_226 = arith.constant 0 : index
    %c0_227 = arith.constant 0 : index
    %303 = vector.load %arg5[%c0_225, %c0_226, %c0_227] : memref<3x17x32xf32, #tpu.memory_space<vmem>>, vector<1x17x32xf32>
    %304 = vector.shape_cast %303 : vector<1x17x32xf32> to vector<17x32xf32>
    %cst_228 = arith.constant dense<0.000000e+00> : vector<8x32xf32>
    %305 = tpu.matmul %302, %304, %cst_228 {dimension_numbers = #tpu.dot_dimension_numbers<[1], [0], [0], [1], [0, 0, 1, 1], [], []>} : vector<8x17xf32>, vector<17x32xf32>, vector<8x32xf32> -> vector<8x32xf32>
    %c0_229 = arith.constant 0 : index
    %c0_230 = arith.constant 0 : index
    %c0_231 = arith.constant 0 : index
    %306 = vector.load %arg6[%c0_229, %c0_230, %c0_231] : memref<3x32x32xf32, #tpu.memory_space<vmem>>, vector<1x32x32xf32>
    %307 = vector.shape_cast %306 : vector<1x32x32xf32> to vector<32x32xf32>
    %cst_232 = arith.constant dense<0.000000e+00> : vector<8x32xf32>
    %308 = tpu.matmul %238, %307, %cst_232 {dimension_numbers = #tpu.dot_dimension_numbers<[1], [0], [0], [1], [0, 0, 1, 1], [], []>} : vector<8x32xf32>, vector<32x32xf32>, vector<8x32xf32> -> vector<8x32xf32>
    %309 = arith.addf %305, %308 : vector<8x32xf32>
    %c0_233 = arith.constant 0 : index
    %c0_234 = arith.constant 0 : index
    %c0_235 = arith.constant 0 : index
    %310 = vector.load %arg7[%c0_233, %c0_234, %c0_235] : memref<4x1x32xf32, #tpu.memory_space<vmem>>, vector<1x1x32xf32>
    %311 = vector.shape_cast %310 : vector<1x1x32xf32> to vector<1x32xf32>
    %312 = vector.broadcast %311 : vector<1x32xf32> to vector<8x32xf32>
    %313 = arith.addf %309, %312 : vector<8x32xf32>
    %314 = arith.negf %313 : vector<8x32xf32>
    %315 = math.exp %314 : vector<8x32xf32>
    %cst_236 = arith.constant 1.000000e+00 : f32
    %316 = vector.broadcast %cst_236 : f32 to vector<8x32xf32>
    %317 = arith.addf %316, %315 : vector<8x32xf32>
    %318 = arith.divf %316, %317 : vector<8x32xf32>
    %c1_237 = arith.constant 1 : index
    %c0_238 = arith.constant 0 : index
    %c0_239 = arith.constant 0 : index
    %319 = vector.load %arg5[%c1_237, %c0_238, %c0_239] : memref<3x17x32xf32, #tpu.memory_space<vmem>>, vector<1x17x32xf32>
    %320 = vector.shape_cast %319 : vector<1x17x32xf32> to vector<17x32xf32>
    %cst_240 = arith.constant dense<0.000000e+00> : vector<8x32xf32>
    %321 = tpu.matmul %302, %320, %cst_240 {dimension_numbers = #tpu.dot_dimension_numbers<[1], [0], [0], [1], [0, 0, 1, 1], [], []>} : vector<8x17xf32>, vector<17x32xf32>, vector<8x32xf32> -> vector<8x32xf32>
    %c1_241 = arith.constant 1 : index
    %c0_242 = arith.constant 0 : index
    %c0_243 = arith.constant 0 : index
    %322 = vector.load %arg6[%c1_241, %c0_242, %c0_243] : memref<3x32x32xf32, #tpu.memory_space<vmem>>, vector<1x32x32xf32>
    %323 = vector.shape_cast %322 : vector<1x32x32xf32> to vector<32x32xf32>
    %cst_244 = arith.constant dense<0.000000e+00> : vector<8x32xf32>
    %324 = tpu.matmul %238, %323, %cst_244 {dimension_numbers = #tpu.dot_dimension_numbers<[1], [0], [0], [1], [0, 0, 1, 1], [], []>} : vector<8x32xf32>, vector<32x32xf32>, vector<8x32xf32> -> vector<8x32xf32>
    %325 = arith.addf %321, %324 : vector<8x32xf32>
    %c1_245 = arith.constant 1 : index
    %c0_246 = arith.constant 0 : index
    %c0_247 = arith.constant 0 : index
    %326 = vector.load %arg7[%c1_245, %c0_246, %c0_247] : memref<4x1x32xf32, #tpu.memory_space<vmem>>, vector<1x1x32xf32>
    %327 = vector.shape_cast %326 : vector<1x1x32xf32> to vector<1x32xf32>
    %328 = vector.broadcast %327 : vector<1x32xf32> to vector<8x32xf32>
    %329 = arith.addf %325, %328 : vector<8x32xf32>
    %330 = arith.negf %329 : vector<8x32xf32>
    %331 = math.exp %330 : vector<8x32xf32>
    %cst_248 = arith.constant 1.000000e+00 : f32
    %332 = vector.broadcast %cst_248 : f32 to vector<8x32xf32>
    %333 = arith.addf %332, %331 : vector<8x32xf32>
    %334 = arith.divf %332, %333 : vector<8x32xf32>
    %c2_249 = arith.constant 2 : index
    %c0_250 = arith.constant 0 : index
    %c0_251 = arith.constant 0 : index
    %335 = vector.load %arg5[%c2_249, %c0_250, %c0_251] : memref<3x17x32xf32, #tpu.memory_space<vmem>>, vector<1x17x32xf32>
    %336 = vector.shape_cast %335 : vector<1x17x32xf32> to vector<17x32xf32>
    %cst_252 = arith.constant dense<0.000000e+00> : vector<8x32xf32>
    %337 = tpu.matmul %302, %336, %cst_252 {dimension_numbers = #tpu.dot_dimension_numbers<[1], [0], [0], [1], [0, 0, 1, 1], [], []>} : vector<8x17xf32>, vector<17x32xf32>, vector<8x32xf32> -> vector<8x32xf32>
    %c2_253 = arith.constant 2 : index
    %c0_254 = arith.constant 0 : index
    %c0_255 = arith.constant 0 : index
    %338 = vector.load %arg7[%c2_253, %c0_254, %c0_255] : memref<4x1x32xf32, #tpu.memory_space<vmem>>, vector<1x1x32xf32>
    %339 = vector.shape_cast %338 : vector<1x1x32xf32> to vector<1x32xf32>
    %340 = vector.broadcast %339 : vector<1x32xf32> to vector<8x32xf32>
    %341 = arith.addf %337, %340 : vector<8x32xf32>
    %c2_256 = arith.constant 2 : index
    %c0_257 = arith.constant 0 : index
    %c0_258 = arith.constant 0 : index
    %342 = vector.load %arg6[%c2_256, %c0_257, %c0_258] : memref<3x32x32xf32, #tpu.memory_space<vmem>>, vector<1x32x32xf32>
    %343 = vector.shape_cast %342 : vector<1x32x32xf32> to vector<32x32xf32>
    %cst_259 = arith.constant dense<0.000000e+00> : vector<8x32xf32>
    %344 = tpu.matmul %238, %343, %cst_259 {dimension_numbers = #tpu.dot_dimension_numbers<[1], [0], [0], [1], [0, 0, 1, 1], [], []>} : vector<8x32xf32>, vector<32x32xf32>, vector<8x32xf32> -> vector<8x32xf32>
    %c3_260 = arith.constant 3 : index
    %c0_261 = arith.constant 0 : index
    %c0_262 = arith.constant 0 : index
    %345 = vector.load %arg7[%c3_260, %c0_261, %c0_262] : memref<4x1x32xf32, #tpu.memory_space<vmem>>, vector<1x1x32xf32>
    %346 = vector.shape_cast %345 : vector<1x1x32xf32> to vector<1x32xf32>
    %347 = vector.broadcast %346 : vector<1x32xf32> to vector<8x32xf32>
    %348 = arith.addf %344, %347 : vector<8x32xf32>
    %349 = arith.mulf %318, %348 : vector<8x32xf32>
    %350 = arith.addf %341, %349 : vector<8x32xf32>
    %351 = math.tanh %350 : vector<8x32xf32>
    %cst_263 = arith.constant 1.000000e+00 : f32
    %352 = vector.broadcast %cst_263 : f32 to vector<8x32xf32>
    %353 = arith.subf %352, %334 : vector<8x32xf32>
    %354 = arith.mulf %353, %351 : vector<8x32xf32>
    %355 = arith.mulf %334, %238 : vector<8x32xf32>
    %356 = arith.addf %354, %355 : vector<8x32xf32>
    %c5_264 = arith.constant 5 : index
    %c0_265 = arith.constant 0 : index
    %c0_266 = arith.constant 0 : index
    %357 = vector.load %arg23[%c5_264, %c0_265, %c0_266] : memref<9x8x32xf32, #tpu.memory_space<vmem>>, vector<1x8x32xf32>
    %358 = vector.shape_cast %357 : vector<1x8x32xf32> to vector<8x32xf32>
    %359 = vector.shape_cast %356 : vector<8x32xf32> to vector<1x8x32xf32>
    tpu.vector_store %arg23[%c5_264, %c0_265, %c0_266], %359 {strides = array<i32>} : memref<9x8x32xf32, #tpu.memory_space<vmem>>, vector<1x8x32xf32>,
    %c3_267 = arith.constant 3 : index
    %c0_268 = arith.constant 0 : index
    %c0_269 = arith.constant 0 : index
    %360 = vector.load %arg0[%c3_267, %c0_268, %c0_269] : memref<8x8x16xf32, #tpu.memory_space<vmem>>, vector<1x8x16xf32>
    %361 = vector.shape_cast %360 : vector<1x8x16xf32> to vector<8x16xf32>
    %c0_270 = arith.constant 0 : index
    %c0_271 = arith.constant 0 : index
    %c0_272 = arith.constant 0 : index
    %362 = vector.load %arg2[%c0_270, %c0_271, %c0_272] : memref<3x16x32xf32, #tpu.memory_space<vmem>>, vector<1x16x32xf32>
    %363 = vector.shape_cast %362 : vector<1x16x32xf32> to vector<16x32xf32>
    %cst_273 = arith.constant dense<0.000000e+00> : vector<8x32xf32>
    %364 = tpu.matmul %361, %363, %cst_273 {dimension_numbers = #tpu.dot_dimension_numbers<[1], [0], [0], [1], [0, 0, 1, 1], [], []>} : vector<8x16xf32>, vector<16x32xf32>, vector<8x32xf32> -> vector<8x32xf32>
    %c0_274 = arith.constant 0 : index
    %c0_275 = arith.constant 0 : index
    %c0_276 = arith.constant 0 : index
    %365 = vector.load %arg3[%c0_274, %c0_275, %c0_276] : memref<3x32x32xf32, #tpu.memory_space<vmem>>, vector<1x32x32xf32>
    %366 = vector.shape_cast %365 : vector<1x32x32xf32> to vector<32x32xf32>
    %cst_277 = arith.constant dense<0.000000e+00> : vector<8x32xf32>
    %367 = tpu.matmul %297, %366, %cst_277 {dimension_numbers = #tpu.dot_dimension_numbers<[1], [0], [0], [1], [0, 0, 1, 1], [], []>} : vector<8x32xf32>, vector<32x32xf32>, vector<8x32xf32> -> vector<8x32xf32>
    %368 = arith.addf %364, %367 : vector<8x32xf32>
    %c0_278 = arith.constant 0 : index
    %c0_279 = arith.constant 0 : index
    %c0_280 = arith.constant 0 : index
    %369 = vector.load %arg4[%c0_278, %c0_279, %c0_280] : memref<4x1x32xf32, #tpu.memory_space<vmem>>, vector<1x1x32xf32>
    %370 = vector.shape_cast %369 : vector<1x1x32xf32> to vector<1x32xf32>
    %371 = vector.broadcast %370 : vector<1x32xf32> to vector<8x32xf32>
    %372 = arith.addf %368, %371 : vector<8x32xf32>
    %373 = arith.negf %372 : vector<8x32xf32>
    %374 = math.exp %373 : vector<8x32xf32>
    %cst_281 = arith.constant 1.000000e+00 : f32
    %375 = vector.broadcast %cst_281 : f32 to vector<8x32xf32>
    %376 = arith.addf %375, %374 : vector<8x32xf32>
    %377 = arith.divf %375, %376 : vector<8x32xf32>
    %c1_282 = arith.constant 1 : index
    %c0_283 = arith.constant 0 : index
    %c0_284 = arith.constant 0 : index
    %378 = vector.load %arg2[%c1_282, %c0_283, %c0_284] : memref<3x16x32xf32, #tpu.memory_space<vmem>>, vector<1x16x32xf32>
    %379 = vector.shape_cast %378 : vector<1x16x32xf32> to vector<16x32xf32>
    %cst_285 = arith.constant dense<0.000000e+00> : vector<8x32xf32>
    %380 = tpu.matmul %361, %379, %cst_285 {dimension_numbers = #tpu.dot_dimension_numbers<[1], [0], [0], [1], [0, 0, 1, 1], [], []>} : vector<8x16xf32>, vector<16x32xf32>, vector<8x32xf32> -> vector<8x32xf32>
    %c1_286 = arith.constant 1 : index
    %c0_287 = arith.constant 0 : index
    %c0_288 = arith.constant 0 : index
    %381 = vector.load %arg3[%c1_286, %c0_287, %c0_288] : memref<3x32x32xf32, #tpu.memory_space<vmem>>, vector<1x32x32xf32>
    %382 = vector.shape_cast %381 : vector<1x32x32xf32> to vector<32x32xf32>
    %cst_289 = arith.constant dense<0.000000e+00> : vector<8x32xf32>
    %383 = tpu.matmul %297, %382, %cst_289 {dimension_numbers = #tpu.dot_dimension_numbers<[1], [0], [0], [1], [0, 0, 1, 1], [], []>} : vector<8x32xf32>, vector<32x32xf32>, vector<8x32xf32> -> vector<8x32xf32>
    %384 = arith.addf %380, %383 : vector<8x32xf32>
    %c1_290 = arith.constant 1 : index
    %c0_291 = arith.constant 0 : index
    %c0_292 = arith.constant 0 : index
    %385 = vector.load %arg4[%c1_290, %c0_291, %c0_292] : memref<4x1x32xf32, #tpu.memory_space<vmem>>, vector<1x1x32xf32>
    %386 = vector.shape_cast %385 : vector<1x1x32xf32> to vector<1x32xf32>
    %387 = vector.broadcast %386 : vector<1x32xf32> to vector<8x32xf32>
    %388 = arith.addf %384, %387 : vector<8x32xf32>
    %389 = arith.negf %388 : vector<8x32xf32>
    %390 = math.exp %389 : vector<8x32xf32>
    %cst_293 = arith.constant 1.000000e+00 : f32
    %391 = vector.broadcast %cst_293 : f32 to vector<8x32xf32>
    %392 = arith.addf %391, %390 : vector<8x32xf32>
    %393 = arith.divf %391, %392 : vector<8x32xf32>
    %c2_294 = arith.constant 2 : index
    %c0_295 = arith.constant 0 : index
    %c0_296 = arith.constant 0 : index
    %394 = vector.load %arg2[%c2_294, %c0_295, %c0_296] : memref<3x16x32xf32, #tpu.memory_space<vmem>>, vector<1x16x32xf32>
    %395 = vector.shape_cast %394 : vector<1x16x32xf32> to vector<16x32xf32>
    %cst_297 = arith.constant dense<0.000000e+00> : vector<8x32xf32>
    %396 = tpu.matmul %361, %395, %cst_297 {dimension_numbers = #tpu.dot_dimension_numbers<[1], [0], [0], [1], [0, 0, 1, 1], [], []>} : vector<8x16xf32>, vector<16x32xf32>, vector<8x32xf32> -> vector<8x32xf32>
    %c2_298 = arith.constant 2 : index
    %c0_299 = arith.constant 0 : index
    %c0_300 = arith.constant 0 : index
    %397 = vector.load %arg4[%c2_298, %c0_299, %c0_300] : memref<4x1x32xf32, #tpu.memory_space<vmem>>, vector<1x1x32xf32>
    %398 = vector.shape_cast %397 : vector<1x1x32xf32> to vector<1x32xf32>
    %399 = vector.broadcast %398 : vector<1x32xf32> to vector<8x32xf32>
    %400 = arith.addf %396, %399 : vector<8x32xf32>
    %c2_301 = arith.constant 2 : index
    %c0_302 = arith.constant 0 : index
    %c0_303 = arith.constant 0 : index
    %401 = vector.load %arg3[%c2_301, %c0_302, %c0_303] : memref<3x32x32xf32, #tpu.memory_space<vmem>>, vector<1x32x32xf32>
    %402 = vector.shape_cast %401 : vector<1x32x32xf32> to vector<32x32xf32>
    %cst_304 = arith.constant dense<0.000000e+00> : vector<8x32xf32>
    %403 = tpu.matmul %297, %402, %cst_304 {dimension_numbers = #tpu.dot_dimension_numbers<[1], [0], [0], [1], [0, 0, 1, 1], [], []>} : vector<8x32xf32>, vector<32x32xf32>, vector<8x32xf32> -> vector<8x32xf32>
    %c3_305 = arith.constant 3 : index
    %c0_306 = arith.constant 0 : index
    %c0_307 = arith.constant 0 : index
    %404 = vector.load %arg4[%c3_305, %c0_306, %c0_307] : memref<4x1x32xf32, #tpu.memory_space<vmem>>, vector<1x1x32xf32>
    %405 = vector.shape_cast %404 : vector<1x1x32xf32> to vector<1x32xf32>
    %406 = vector.broadcast %405 : vector<1x32xf32> to vector<8x32xf32>
    %407 = arith.addf %403, %406 : vector<8x32xf32>
    %408 = arith.mulf %377, %407 : vector<8x32xf32>
    %409 = arith.addf %400, %408 : vector<8x32xf32>
    %410 = math.tanh %409 : vector<8x32xf32>
    %cst_308 = arith.constant 1.000000e+00 : f32
    %411 = vector.broadcast %cst_308 : f32 to vector<8x32xf32>
    %412 = arith.subf %411, %393 : vector<8x32xf32>
    %413 = arith.mulf %412, %410 : vector<8x32xf32>
    %414 = arith.mulf %393, %297 : vector<8x32xf32>
    %415 = arith.addf %413, %414 : vector<8x32xf32>
    %c3_309 = arith.constant 3 : index
    %c0_310 = arith.constant 0 : index
    %c0_311 = arith.constant 0 : index
    %416 = vector.load %arg22[%c3_309, %c0_310, %c0_311] : memref<8x8x32xf32, #tpu.memory_space<vmem>>, vector<1x8x32xf32>
    %417 = vector.shape_cast %416 : vector<1x8x32xf32> to vector<8x32xf32>
    %418 = vector.shape_cast %415 : vector<8x32xf32> to vector<1x8x32xf32>
    tpu.vector_store %arg22[%c3_309, %c0_310, %c0_311], %418 {strides = array<i32>} : memref<8x8x32xf32, #tpu.memory_space<vmem>>, vector<1x8x32xf32>,
    %c4 = arith.constant 4 : index
    %c0_312 = arith.constant 0 : index
    %c0_313 = arith.constant 0 : index
    %419 = vector.load %arg1[%c4, %c0_312, %c0_313] : memref<8x8x17xf32, #tpu.memory_space<vmem>>, vector<1x8x17xf32>
    %420 = vector.shape_cast %419 : vector<1x8x17xf32> to vector<8x17xf32>
    %c0_314 = arith.constant 0 : index
    %c0_315 = arith.constant 0 : index
    %c0_316 = arith.constant 0 : index
    %421 = vector.load %arg5[%c0_314, %c0_315, %c0_316] : memref<3x17x32xf32, #tpu.memory_space<vmem>>, vector<1x17x32xf32>
    %422 = vector.shape_cast %421 : vector<1x17x32xf32> to vector<17x32xf32>
    %cst_317 = arith.constant dense<0.000000e+00> : vector<8x32xf32>
    %423 = tpu.matmul %420, %422, %cst_317 {dimension_numbers = #tpu.dot_dimension_numbers<[1], [0], [0], [1], [0, 0, 1, 1], [], []>} : vector<8x17xf32>, vector<17x32xf32>, vector<8x32xf32> -> vector<8x32xf32>
    %c0_318 = arith.constant 0 : index
    %c0_319 = arith.constant 0 : index
    %c0_320 = arith.constant 0 : index
    %424 = vector.load %arg6[%c0_318, %c0_319, %c0_320] : memref<3x32x32xf32, #tpu.memory_space<vmem>>, vector<1x32x32xf32>
    %425 = vector.shape_cast %424 : vector<1x32x32xf32> to vector<32x32xf32>
    %cst_321 = arith.constant dense<0.000000e+00> : vector<8x32xf32>
    %426 = tpu.matmul %356, %425, %cst_321 {dimension_numbers = #tpu.dot_dimension_numbers<[1], [0], [0], [1], [0, 0, 1, 1], [], []>} : vector<8x32xf32>, vector<32x32xf32>, vector<8x32xf32> -> vector<8x32xf32>
    %427 = arith.addf %423, %426 : vector<8x32xf32>
    %c0_322 = arith.constant 0 : index
    %c0_323 = arith.constant 0 : index
    %c0_324 = arith.constant 0 : index
    %428 = vector.load %arg7[%c0_322, %c0_323, %c0_324] : memref<4x1x32xf32, #tpu.memory_space<vmem>>, vector<1x1x32xf32>
    %429 = vector.shape_cast %428 : vector<1x1x32xf32> to vector<1x32xf32>
    %430 = vector.broadcast %429 : vector<1x32xf32> to vector<8x32xf32>
    %431 = arith.addf %427, %430 : vector<8x32xf32>
    %432 = arith.negf %431 : vector<8x32xf32>
    %433 = math.exp %432 : vector<8x32xf32>
    %cst_325 = arith.constant 1.000000e+00 : f32
    %434 = vector.broadcast %cst_325 : f32 to vector<8x32xf32>
    %435 = arith.addf %434, %433 : vector<8x32xf32>
    %436 = arith.divf %434, %435 : vector<8x32xf32>
    %c1_326 = arith.constant 1 : index
    %c0_327 = arith.constant 0 : index
    %c0_328 = arith.constant 0 : index
    %437 = vector.load %arg5[%c1_326, %c0_327, %c0_328] : memref<3x17x32xf32, #tpu.memory_space<vmem>>, vector<1x17x32xf32>
    %438 = vector.shape_cast %437 : vector<1x17x32xf32> to vector<17x32xf32>
    %cst_329 = arith.constant dense<0.000000e+00> : vector<8x32xf32>
    %439 = tpu.matmul %420, %438, %cst_329 {dimension_numbers = #tpu.dot_dimension_numbers<[1], [0], [0], [1], [0, 0, 1, 1], [], []>} : vector<8x17xf32>, vector<17x32xf32>, vector<8x32xf32> -> vector<8x32xf32>
    %c1_330 = arith.constant 1 : index
    %c0_331 = arith.constant 0 : index
    %c0_332 = arith.constant 0 : index
    %440 = vector.load %arg6[%c1_330, %c0_331, %c0_332] : memref<3x32x32xf32, #tpu.memory_space<vmem>>, vector<1x32x32xf32>
    %441 = vector.shape_cast %440 : vector<1x32x32xf32> to vector<32x32xf32>
    %cst_333 = arith.constant dense<0.000000e+00> : vector<8x32xf32>
    %442 = tpu.matmul %356, %441, %cst_333 {dimension_numbers = #tpu.dot_dimension_numbers<[1], [0], [0], [1], [0, 0, 1, 1], [], []>} : vector<8x32xf32>, vector<32x32xf32>, vector<8x32xf32> -> vector<8x32xf32>
    %443 = arith.addf %439, %442 : vector<8x32xf32>
    %c1_334 = arith.constant 1 : index
    %c0_335 = arith.constant 0 : index
    %c0_336 = arith.constant 0 : index
    %444 = vector.load %arg7[%c1_334, %c0_335, %c0_336] : memref<4x1x32xf32, #tpu.memory_space<vmem>>, vector<1x1x32xf32>
    %445 = vector.shape_cast %444 : vector<1x1x32xf32> to vector<1x32xf32>
    %446 = vector.broadcast %445 : vector<1x32xf32> to vector<8x32xf32>
    %447 = arith.addf %443, %446 : vector<8x32xf32>
    %448 = arith.negf %447 : vector<8x32xf32>
    %449 = math.exp %448 : vector<8x32xf32>
    %cst_337 = arith.constant 1.000000e+00 : f32
    %450 = vector.broadcast %cst_337 : f32 to vector<8x32xf32>
    %451 = arith.addf %450, %449 : vector<8x32xf32>
    %452 = arith.divf %450, %451 : vector<8x32xf32>
    %c2_338 = arith.constant 2 : index
    %c0_339 = arith.constant 0 : index
    %c0_340 = arith.constant 0 : index
    %453 = vector.load %arg5[%c2_338, %c0_339, %c0_340] : memref<3x17x32xf32, #tpu.memory_space<vmem>>, vector<1x17x32xf32>
    %454 = vector.shape_cast %453 : vector<1x17x32xf32> to vector<17x32xf32>
    %cst_341 = arith.constant dense<0.000000e+00> : vector<8x32xf32>
    %455 = tpu.matmul %420, %454, %cst_341 {dimension_numbers = #tpu.dot_dimension_numbers<[1], [0], [0], [1], [0, 0, 1, 1], [], []>} : vector<8x17xf32>, vector<17x32xf32>, vector<8x32xf32> -> vector<8x32xf32>
    %c2_342 = arith.constant 2 : index
    %c0_343 = arith.constant 0 : index
    %c0_344 = arith.constant 0 : index
    %456 = vector.load %arg7[%c2_342, %c0_343, %c0_344] : memref<4x1x32xf32, #tpu.memory_space<vmem>>, vector<1x1x32xf32>
    %457 = vector.shape_cast %456 : vector<1x1x32xf32> to vector<1x32xf32>
    %458 = vector.broadcast %457 : vector<1x32xf32> to vector<8x32xf32>
    %459 = arith.addf %455, %458 : vector<8x32xf32>
    %c2_345 = arith.constant 2 : index
    %c0_346 = arith.constant 0 : index
    %c0_347 = arith.constant 0 : index
    %460 = vector.load %arg6[%c2_345, %c0_346, %c0_347] : memref<3x32x32xf32, #tpu.memory_space<vmem>>, vector<1x32x32xf32>
    %461 = vector.shape_cast %460 : vector<1x32x32xf32> to vector<32x32xf32>
    %cst_348 = arith.constant dense<0.000000e+00> : vector<8x32xf32>
    %462 = tpu.matmul %356, %461, %cst_348 {dimension_numbers = #tpu.dot_dimension_numbers<[1], [0], [0], [1], [0, 0, 1, 1], [], []>} : vector<8x32xf32>, vector<32x32xf32>, vector<8x32xf32> -> vector<8x32xf32>
    %c3_349 = arith.constant 3 : index
    %c0_350 = arith.constant 0 : index
    %c0_351 = arith.constant 0 : index
    %463 = vector.load %arg7[%c3_349, %c0_350, %c0_351] : memref<4x1x32xf32, #tpu.memory_space<vmem>>, vector<1x1x32xf32>
    %464 = vector.shape_cast %463 : vector<1x1x32xf32> to vector<1x32xf32>
    %465 = vector.broadcast %464 : vector<1x32xf32> to vector<8x32xf32>
    %466 = arith.addf %462, %465 : vector<8x32xf32>
    %467 = arith.mulf %436, %466 : vector<8x32xf32>
    %468 = arith.addf %459, %467 : vector<8x32xf32>
    %469 = math.tanh %468 : vector<8x32xf32>
    %cst_352 = arith.constant 1.000000e+00 : f32
    %470 = vector.broadcast %cst_352 : f32 to vector<8x32xf32>
    %471 = arith.subf %470, %452 : vector<8x32xf32>
    %472 = arith.mulf %471, %469 : vector<8x32xf32>
    %473 = arith.mulf %452, %356 : vector<8x32xf32>
    %474 = arith.addf %472, %473 : vector<8x32xf32>
    %c4_353 = arith.constant 4 : index
    %c0_354 = arith.constant 0 : index
    %c0_355 = arith.constant 0 : index
    %475 = vector.load %arg23[%c4_353, %c0_354, %c0_355] : memref<9x8x32xf32, #tpu.memory_space<vmem>>, vector<1x8x32xf32>
    %476 = vector.shape_cast %475 : vector<1x8x32xf32> to vector<8x32xf32>
    %477 = vector.shape_cast %474 : vector<8x32xf32> to vector<1x8x32xf32>
    tpu.vector_store %arg23[%c4_353, %c0_354, %c0_355], %477 {strides = array<i32>} : memref<9x8x32xf32, #tpu.memory_space<vmem>>, vector<1x8x32xf32>,
    %c4_356 = arith.constant 4 : index
    %c0_357 = arith.constant 0 : index
    %c0_358 = arith.constant 0 : index
    %478 = vector.load %arg0[%c4_356, %c0_357, %c0_358] : memref<8x8x16xf32, #tpu.memory_space<vmem>>, vector<1x8x16xf32>
    %479 = vector.shape_cast %478 : vector<1x8x16xf32> to vector<8x16xf32>
    %c0_359 = arith.constant 0 : index
    %c0_360 = arith.constant 0 : index
    %c0_361 = arith.constant 0 : index
    %480 = vector.load %arg2[%c0_359, %c0_360, %c0_361] : memref<3x16x32xf32, #tpu.memory_space<vmem>>, vector<1x16x32xf32>
    %481 = vector.shape_cast %480 : vector<1x16x32xf32> to vector<16x32xf32>
    %cst_362 = arith.constant dense<0.000000e+00> : vector<8x32xf32>
    %482 = tpu.matmul %479, %481, %cst_362 {dimension_numbers = #tpu.dot_dimension_numbers<[1], [0], [0], [1], [0, 0, 1, 1], [], []>} : vector<8x16xf32>, vector<16x32xf32>, vector<8x32xf32> -> vector<8x32xf32>
    %c0_363 = arith.constant 0 : index
    %c0_364 = arith.constant 0 : index
    %c0_365 = arith.constant 0 : index
    %483 = vector.load %arg3[%c0_363, %c0_364, %c0_365] : memref<3x32x32xf32, #tpu.memory_space<vmem>>, vector<1x32x32xf32>
    %484 = vector.shape_cast %483 : vector<1x32x32xf32> to vector<32x32xf32>
    %cst_366 = arith.constant dense<0.000000e+00> : vector<8x32xf32>
    %485 = tpu.matmul %415, %484, %cst_366 {dimension_numbers = #tpu.dot_dimension_numbers<[1], [0], [0], [1], [0, 0, 1, 1], [], []>} : vector<8x32xf32>, vector<32x32xf32>, vector<8x32xf32> -> vector<8x32xf32>
    %486 = arith.addf %482, %485 : vector<8x32xf32>
    %c0_367 = arith.constant 0 : index
    %c0_368 = arith.constant 0 : index
    %c0_369 = arith.constant 0 : index
    %487 = vector.load %arg4[%c0_367, %c0_368, %c0_369] : memref<4x1x32xf32, #tpu.memory_space<vmem>>, vector<1x1x32xf32>
    %488 = vector.shape_cast %487 : vector<1x1x32xf32> to vector<1x32xf32>
    %489 = vector.broadcast %488 : vector<1x32xf32> to vector<8x32xf32>
    %490 = arith.addf %486, %489 : vector<8x32xf32>
    %491 = arith.negf %490 : vector<8x32xf32>
    %492 = math.exp %491 : vector<8x32xf32>
    %cst_370 = arith.constant 1.000000e+00 : f32
    %493 = vector.broadcast %cst_370 : f32 to vector<8x32xf32>
    %494 = arith.addf %493, %492 : vector<8x32xf32>
    %495 = arith.divf %493, %494 : vector<8x32xf32>
    %c1_371 = arith.constant 1 : index
    %c0_372 = arith.constant 0 : index
    %c0_373 = arith.constant 0 : index
    %496 = vector.load %arg2[%c1_371, %c0_372, %c0_373] : memref<3x16x32xf32, #tpu.memory_space<vmem>>, vector<1x16x32xf32>
    %497 = vector.shape_cast %496 : vector<1x16x32xf32> to vector<16x32xf32>
    %cst_374 = arith.constant dense<0.000000e+00> : vector<8x32xf32>
    %498 = tpu.matmul %479, %497, %cst_374 {dimension_numbers = #tpu.dot_dimension_numbers<[1], [0], [0], [1], [0, 0, 1, 1], [], []>} : vector<8x16xf32>, vector<16x32xf32>, vector<8x32xf32> -> vector<8x32xf32>
    %c1_375 = arith.constant 1 : index
    %c0_376 = arith.constant 0 : index
    %c0_377 = arith.constant 0 : index
    %499 = vector.load %arg3[%c1_375, %c0_376, %c0_377] : memref<3x32x32xf32, #tpu.memory_space<vmem>>, vector<1x32x32xf32>
    %500 = vector.shape_cast %499 : vector<1x32x32xf32> to vector<32x32xf32>
    %cst_378 = arith.constant dense<0.000000e+00> : vector<8x32xf32>
    %501 = tpu.matmul %415, %500, %cst_378 {dimension_numbers = #tpu.dot_dimension_numbers<[1], [0], [0], [1], [0, 0, 1, 1], [], []>} : vector<8x32xf32>, vector<32x32xf32>, vector<8x32xf32> -> vector<8x32xf32>
    %502 = arith.addf %498, %501 : vector<8x32xf32>
    %c1_379 = arith.constant 1 : index
    %c0_380 = arith.constant 0 : index
    %c0_381 = arith.constant 0 : index
    %503 = vector.load %arg4[%c1_379, %c0_380, %c0_381] : memref<4x1x32xf32, #tpu.memory_space<vmem>>, vector<1x1x32xf32>
    %504 = vector.shape_cast %503 : vector<1x1x32xf32> to vector<1x32xf32>
    %505 = vector.broadcast %504 : vector<1x32xf32> to vector<8x32xf32>
    %506 = arith.addf %502, %505 : vector<8x32xf32>
    %507 = arith.negf %506 : vector<8x32xf32>
    %508 = math.exp %507 : vector<8x32xf32>
    %cst_382 = arith.constant 1.000000e+00 : f32
    %509 = vector.broadcast %cst_382 : f32 to vector<8x32xf32>
    %510 = arith.addf %509, %508 : vector<8x32xf32>
    %511 = arith.divf %509, %510 : vector<8x32xf32>
    %c2_383 = arith.constant 2 : index
    %c0_384 = arith.constant 0 : index
    %c0_385 = arith.constant 0 : index
    %512 = vector.load %arg2[%c2_383, %c0_384, %c0_385] : memref<3x16x32xf32, #tpu.memory_space<vmem>>, vector<1x16x32xf32>
    %513 = vector.shape_cast %512 : vector<1x16x32xf32> to vector<16x32xf32>
    %cst_386 = arith.constant dense<0.000000e+00> : vector<8x32xf32>
    %514 = tpu.matmul %479, %513, %cst_386 {dimension_numbers = #tpu.dot_dimension_numbers<[1], [0], [0], [1], [0, 0, 1, 1], [], []>} : vector<8x16xf32>, vector<16x32xf32>, vector<8x32xf32> -> vector<8x32xf32>
    %c2_387 = arith.constant 2 : index
    %c0_388 = arith.constant 0 : index
    %c0_389 = arith.constant 0 : index
    %515 = vector.load %arg4[%c2_387, %c0_388, %c0_389] : memref<4x1x32xf32, #tpu.memory_space<vmem>>, vector<1x1x32xf32>
    %516 = vector.shape_cast %515 : vector<1x1x32xf32> to vector<1x32xf32>
    %517 = vector.broadcast %516 : vector<1x32xf32> to vector<8x32xf32>
    %518 = arith.addf %514, %517 : vector<8x32xf32>
    %c2_390 = arith.constant 2 : index
    %c0_391 = arith.constant 0 : index
    %c0_392 = arith.constant 0 : index
    %519 = vector.load %arg3[%c2_390, %c0_391, %c0_392] : memref<3x32x32xf32, #tpu.memory_space<vmem>>, vector<1x32x32xf32>
    %520 = vector.shape_cast %519 : vector<1x32x32xf32> to vector<32x32xf32>
    %cst_393 = arith.constant dense<0.000000e+00> : vector<8x32xf32>
    %521 = tpu.matmul %415, %520, %cst_393 {dimension_numbers = #tpu.dot_dimension_numbers<[1], [0], [0], [1], [0, 0, 1, 1], [], []>} : vector<8x32xf32>, vector<32x32xf32>, vector<8x32xf32> -> vector<8x32xf32>
    %c3_394 = arith.constant 3 : index
    %c0_395 = arith.constant 0 : index
    %c0_396 = arith.constant 0 : index
    %522 = vector.load %arg4[%c3_394, %c0_395, %c0_396] : memref<4x1x32xf32, #tpu.memory_space<vmem>>, vector<1x1x32xf32>
    %523 = vector.shape_cast %522 : vector<1x1x32xf32> to vector<1x32xf32>
    %524 = vector.broadcast %523 : vector<1x32xf32> to vector<8x32xf32>
    %525 = arith.addf %521, %524 : vector<8x32xf32>
    %526 = arith.mulf %495, %525 : vector<8x32xf32>
    %527 = arith.addf %518, %526 : vector<8x32xf32>
    %528 = math.tanh %527 : vector<8x32xf32>
    %cst_397 = arith.constant 1.000000e+00 : f32
    %529 = vector.broadcast %cst_397 : f32 to vector<8x32xf32>
    %530 = arith.subf %529, %511 : vector<8x32xf32>
    %531 = arith.mulf %530, %528 : vector<8x32xf32>
    %532 = arith.mulf %511, %415 : vector<8x32xf32>
    %533 = arith.addf %531, %532 : vector<8x32xf32>
    %c4_398 = arith.constant 4 : index
    %c0_399 = arith.constant 0 : index
    %c0_400 = arith.constant 0 : index
    %534 = vector.load %arg22[%c4_398, %c0_399, %c0_400] : memref<8x8x32xf32, #tpu.memory_space<vmem>>, vector<1x8x32xf32>
    %535 = vector.shape_cast %534 : vector<1x8x32xf32> to vector<8x32xf32>
    %536 = vector.shape_cast %533 : vector<8x32xf32> to vector<1x8x32xf32>
    tpu.vector_store %arg22[%c4_398, %c0_399, %c0_400], %536 {strides = array<i32>} : memref<8x8x32xf32, #tpu.memory_space<vmem>>, vector<1x8x32xf32>,
    %c3_401 = arith.constant 3 : index
    %c0_402 = arith.constant 0 : index
    %c0_403 = arith.constant 0 : index
    %537 = vector.load %arg1[%c3_401, %c0_402, %c0_403] : memref<8x8x17xf32, #tpu.memory_space<vmem>>, vector<1x8x17xf32>
    %538 = vector.shape_cast %537 : vector<1x8x17xf32> to vector<8x17xf32>
    %c0_404 = arith.constant 0 : index
    %c0_405 = arith.constant 0 : index
    %c0_406 = arith.constant 0 : index
    %539 = vector.load %arg5[%c0_404, %c0_405, %c0_406] : memref<3x17x32xf32, #tpu.memory_space<vmem>>, vector<1x17x32xf32>
    %540 = vector.shape_cast %539 : vector<1x17x32xf32> to vector<17x32xf32>
    %cst_407 = arith.constant dense<0.000000e+00> : vector<8x32xf32>
    %541 = tpu.matmul %538, %540, %cst_407 {dimension_numbers = #tpu.dot_dimension_numbers<[1], [0], [0], [1], [0, 0, 1, 1], [], []>} : vector<8x17xf32>, vector<17x32xf32>, vector<8x32xf32> -> vector<8x32xf32>
    %c0_408 = arith.constant 0 : index
    %c0_409 = arith.constant 0 : index
    %c0_410 = arith.constant 0 : index
    %542 = vector.load %arg6[%c0_408, %c0_409, %c0_410] : memref<3x32x32xf32, #tpu.memory_space<vmem>>, vector<1x32x32xf32>
    %543 = vector.shape_cast %542 : vector<1x32x32xf32> to vector<32x32xf32>
    %cst_411 = arith.constant dense<0.000000e+00> : vector<8x32xf32>
    %544 = tpu.matmul %474, %543, %cst_411 {dimension_numbers = #tpu.dot_dimension_numbers<[1], [0], [0], [1], [0, 0, 1, 1], [], []>} : vector<8x32xf32>, vector<32x32xf32>, vector<8x32xf32> -> vector<8x32xf32>
    %545 = arith.addf %541, %544 : vector<8x32xf32>
    %c0_412 = arith.constant 0 : index
    %c0_413 = arith.constant 0 : index
    %c0_414 = arith.constant 0 : index
    %546 = vector.load %arg7[%c0_412, %c0_413, %c0_414] : memref<4x1x32xf32, #tpu.memory_space<vmem>>, vector<1x1x32xf32>
    %547 = vector.shape_cast %546 : vector<1x1x32xf32> to vector<1x32xf32>
    %548 = vector.broadcast %547 : vector<1x32xf32> to vector<8x32xf32>
    %549 = arith.addf %545, %548 : vector<8x32xf32>
    %550 = arith.negf %549 : vector<8x32xf32>
    %551 = math.exp %550 : vector<8x32xf32>
    %cst_415 = arith.constant 1.000000e+00 : f32
    %552 = vector.broadcast %cst_415 : f32 to vector<8x32xf32>
    %553 = arith.addf %552, %551 : vector<8x32xf32>
    %554 = arith.divf %552, %553 : vector<8x32xf32>
    %c1_416 = arith.constant 1 : index
    %c0_417 = arith.constant 0 : index
    %c0_418 = arith.constant 0 : index
    %555 = vector.load %arg5[%c1_416, %c0_417, %c0_418] : memref<3x17x32xf32, #tpu.memory_space<vmem>>, vector<1x17x32xf32>
    %556 = vector.shape_cast %555 : vector<1x17x32xf32> to vector<17x32xf32>
    %cst_419 = arith.constant dense<0.000000e+00> : vector<8x32xf32>
    %557 = tpu.matmul %538, %556, %cst_419 {dimension_numbers = #tpu.dot_dimension_numbers<[1], [0], [0], [1], [0, 0, 1, 1], [], []>} : vector<8x17xf32>, vector<17x32xf32>, vector<8x32xf32> -> vector<8x32xf32>
    %c1_420 = arith.constant 1 : index
    %c0_421 = arith.constant 0 : index
    %c0_422 = arith.constant 0 : index
    %558 = vector.load %arg6[%c1_420, %c0_421, %c0_422] : memref<3x32x32xf32, #tpu.memory_space<vmem>>, vector<1x32x32xf32>
    %559 = vector.shape_cast %558 : vector<1x32x32xf32> to vector<32x32xf32>
    %cst_423 = arith.constant dense<0.000000e+00> : vector<8x32xf32>
    %560 = tpu.matmul %474, %559, %cst_423 {dimension_numbers = #tpu.dot_dimension_numbers<[1], [0], [0], [1], [0, 0, 1, 1], [], []>} : vector<8x32xf32>, vector<32x32xf32>, vector<8x32xf32> -> vector<8x32xf32>
    %561 = arith.addf %557, %560 : vector<8x32xf32>
    %c1_424 = arith.constant 1 : index
    %c0_425 = arith.constant 0 : index
    %c0_426 = arith.constant 0 : index
    %562 = vector.load %arg7[%c1_424, %c0_425, %c0_426] : memref<4x1x32xf32, #tpu.memory_space<vmem>>, vector<1x1x32xf32>
    %563 = vector.shape_cast %562 : vector<1x1x32xf32> to vector<1x32xf32>
    %564 = vector.broadcast %563 : vector<1x32xf32> to vector<8x32xf32>
    %565 = arith.addf %561, %564 : vector<8x32xf32>
    %566 = arith.negf %565 : vector<8x32xf32>
    %567 = math.exp %566 : vector<8x32xf32>
    %cst_427 = arith.constant 1.000000e+00 : f32
    %568 = vector.broadcast %cst_427 : f32 to vector<8x32xf32>
    %569 = arith.addf %568, %567 : vector<8x32xf32>
    %570 = arith.divf %568, %569 : vector<8x32xf32>
    %c2_428 = arith.constant 2 : index
    %c0_429 = arith.constant 0 : index
    %c0_430 = arith.constant 0 : index
    %571 = vector.load %arg5[%c2_428, %c0_429, %c0_430] : memref<3x17x32xf32, #tpu.memory_space<vmem>>, vector<1x17x32xf32>
    %572 = vector.shape_cast %571 : vector<1x17x32xf32> to vector<17x32xf32>
    %cst_431 = arith.constant dense<0.000000e+00> : vector<8x32xf32>
    %573 = tpu.matmul %538, %572, %cst_431 {dimension_numbers = #tpu.dot_dimension_numbers<[1], [0], [0], [1], [0, 0, 1, 1], [], []>} : vector<8x17xf32>, vector<17x32xf32>, vector<8x32xf32> -> vector<8x32xf32>
    %c2_432 = arith.constant 2 : index
    %c0_433 = arith.constant 0 : index
    %c0_434 = arith.constant 0 : index
    %574 = vector.load %arg7[%c2_432, %c0_433, %c0_434] : memref<4x1x32xf32, #tpu.memory_space<vmem>>, vector<1x1x32xf32>
    %575 = vector.shape_cast %574 : vector<1x1x32xf32> to vector<1x32xf32>
    %576 = vector.broadcast %575 : vector<1x32xf32> to vector<8x32xf32>
    %577 = arith.addf %573, %576 : vector<8x32xf32>
    %c2_435 = arith.constant 2 : index
    %c0_436 = arith.constant 0 : index
    %c0_437 = arith.constant 0 : index
    %578 = vector.load %arg6[%c2_435, %c0_436, %c0_437] : memref<3x32x32xf32, #tpu.memory_space<vmem>>, vector<1x32x32xf32>
    %579 = vector.shape_cast %578 : vector<1x32x32xf32> to vector<32x32xf32>
    %cst_438 = arith.constant dense<0.000000e+00> : vector<8x32xf32>
    %580 = tpu.matmul %474, %579, %cst_438 {dimension_numbers = #tpu.dot_dimension_numbers<[1], [0], [0], [1], [0, 0, 1, 1], [], []>} : vector<8x32xf32>, vector<32x32xf32>, vector<8x32xf32> -> vector<8x32xf32>
    %c3_439 = arith.constant 3 : index
    %c0_440 = arith.constant 0 : index
    %c0_441 = arith.constant 0 : index
    %581 = vector.load %arg7[%c3_439, %c0_440, %c0_441] : memref<4x1x32xf32, #tpu.memory_space<vmem>>, vector<1x1x32xf32>
    %582 = vector.shape_cast %581 : vector<1x1x32xf32> to vector<1x32xf32>
    %583 = vector.broadcast %582 : vector<1x32xf32> to vector<8x32xf32>
    %584 = arith.addf %580, %583 : vector<8x32xf32>
    %585 = arith.mulf %554, %584 : vector<8x32xf32>
    %586 = arith.addf %577, %585 : vector<8x32xf32>
    %587 = math.tanh %586 : vector<8x32xf32>
    %cst_442 = arith.constant 1.000000e+00 : f32
    %588 = vector.broadcast %cst_442 : f32 to vector<8x32xf32>
    %589 = arith.subf %588, %570 : vector<8x32xf32>
    %590 = arith.mulf %589, %587 : vector<8x32xf32>
    %591 = arith.mulf %570, %474 : vector<8x32xf32>
    %592 = arith.addf %590, %591 : vector<8x32xf32>
    %c3_443 = arith.constant 3 : index
    %c0_444 = arith.constant 0 : index
    %c0_445 = arith.constant 0 : index
    %593 = vector.load %arg23[%c3_443, %c0_444, %c0_445] : memref<9x8x32xf32, #tpu.memory_space<vmem>>, vector<1x8x32xf32>
    %594 = vector.shape_cast %593 : vector<1x8x32xf32> to vector<8x32xf32>
    %595 = vector.shape_cast %592 : vector<8x32xf32> to vector<1x8x32xf32>
    tpu.vector_store %arg23[%c3_443, %c0_444, %c0_445], %595 {strides = array<i32>} : memref<9x8x32xf32, #tpu.memory_space<vmem>>, vector<1x8x32xf32>,
    %c5_446 = arith.constant 5 : index
    %c0_447 = arith.constant 0 : index
    %c0_448 = arith.constant 0 : index
    %596 = vector.load %arg0[%c5_446, %c0_447, %c0_448] : memref<8x8x16xf32, #tpu.memory_space<vmem>>, vector<1x8x16xf32>
    %597 = vector.shape_cast %596 : vector<1x8x16xf32> to vector<8x16xf32>
    %c0_449 = arith.constant 0 : index
    %c0_450 = arith.constant 0 : index
    %c0_451 = arith.constant 0 : index
    %598 = vector.load %arg2[%c0_449, %c0_450, %c0_451] : memref<3x16x32xf32, #tpu.memory_space<vmem>>, vector<1x16x32xf32>
    %599 = vector.shape_cast %598 : vector<1x16x32xf32> to vector<16x32xf32>
    %cst_452 = arith.constant dense<0.000000e+00> : vector<8x32xf32>
    %600 = tpu.matmul %597, %599, %cst_452 {dimension_numbers = #tpu.dot_dimension_numbers<[1], [0], [0], [1], [0, 0, 1, 1], [], []>} : vector<8x16xf32>, vector<16x32xf32>, vector<8x32xf32> -> vector<8x32xf32>
    %c0_453 = arith.constant 0 : index
    %c0_454 = arith.constant 0 : index
    %c0_455 = arith.constant 0 : index
    %601 = vector.load %arg3[%c0_453, %c0_454, %c0_455] : memref<3x32x32xf32, #tpu.memory_space<vmem>>, vector<1x32x32xf32>
    %602 = vector.shape_cast %601 : vector<1x32x32xf32> to vector<32x32xf32>
    %cst_456 = arith.constant dense<0.000000e+00> : vector<8x32xf32>
    %603 = tpu.matmul %533, %602, %cst_456 {dimension_numbers = #tpu.dot_dimension_numbers<[1], [0], [0], [1], [0, 0, 1, 1], [], []>} : vector<8x32xf32>, vector<32x32xf32>, vector<8x32xf32> -> vector<8x32xf32>
    %604 = arith.addf %600, %603 : vector<8x32xf32>
    %c0_457 = arith.constant 0 : index
    %c0_458 = arith.constant 0 : index
    %c0_459 = arith.constant 0 : index
    %605 = vector.load %arg4[%c0_457, %c0_458, %c0_459] : memref<4x1x32xf32, #tpu.memory_space<vmem>>, vector<1x1x32xf32>
    %606 = vector.shape_cast %605 : vector<1x1x32xf32> to vector<1x32xf32>
    %607 = vector.broadcast %606 : vector<1x32xf32> to vector<8x32xf32>
    %608 = arith.addf %604, %607 : vector<8x32xf32>
    %609 = arith.negf %608 : vector<8x32xf32>
    %610 = math.exp %609 : vector<8x32xf32>
    %cst_460 = arith.constant 1.000000e+00 : f32
    %611 = vector.broadcast %cst_460 : f32 to vector<8x32xf32>
    %612 = arith.addf %611, %610 : vector<8x32xf32>
    %613 = arith.divf %611, %612 : vector<8x32xf32>
    %c1_461 = arith.constant 1 : index
    %c0_462 = arith.constant 0 : index
    %c0_463 = arith.constant 0 : index
    %614 = vector.load %arg2[%c1_461, %c0_462, %c0_463] : memref<3x16x32xf32, #tpu.memory_space<vmem>>, vector<1x16x32xf32>
    %615 = vector.shape_cast %614 : vector<1x16x32xf32> to vector<16x32xf32>
    %cst_464 = arith.constant dense<0.000000e+00> : vector<8x32xf32>
    %616 = tpu.matmul %597, %615, %cst_464 {dimension_numbers = #tpu.dot_dimension_numbers<[1], [0], [0], [1], [0, 0, 1, 1], [], []>} : vector<8x16xf32>, vector<16x32xf32>, vector<8x32xf32> -> vector<8x32xf32>
    %c1_465 = arith.constant 1 : index
    %c0_466 = arith.constant 0 : index
    %c0_467 = arith.constant 0 : index
    %617 = vector.load %arg3[%c1_465, %c0_466, %c0_467] : memref<3x32x32xf32, #tpu.memory_space<vmem>>, vector<1x32x32xf32>
    %618 = vector.shape_cast %617 : vector<1x32x32xf32> to vector<32x32xf32>
    %cst_468 = arith.constant dense<0.000000e+00> : vector<8x32xf32>
    %619 = tpu.matmul %533, %618, %cst_468 {dimension_numbers = #tpu.dot_dimension_numbers<[1], [0], [0], [1], [0, 0, 1, 1], [], []>} : vector<8x32xf32>, vector<32x32xf32>, vector<8x32xf32> -> vector<8x32xf32>
    %620 = arith.addf %616, %619 : vector<8x32xf32>
    %c1_469 = arith.constant 1 : index
    %c0_470 = arith.constant 0 : index
    %c0_471 = arith.constant 0 : index
    %621 = vector.load %arg4[%c1_469, %c0_470, %c0_471] : memref<4x1x32xf32, #tpu.memory_space<vmem>>, vector<1x1x32xf32>
    %622 = vector.shape_cast %621 : vector<1x1x32xf32> to vector<1x32xf32>
    %623 = vector.broadcast %622 : vector<1x32xf32> to vector<8x32xf32>
    %624 = arith.addf %620, %623 : vector<8x32xf32>
    %625 = arith.negf %624 : vector<8x32xf32>
    %626 = math.exp %625 : vector<8x32xf32>
    %cst_472 = arith.constant 1.000000e+00 : f32
    %627 = vector.broadcast %cst_472 : f32 to vector<8x32xf32>
    %628 = arith.addf %627, %626 : vector<8x32xf32>
    %629 = arith.divf %627, %628 : vector<8x32xf32>
    %c2_473 = arith.constant 2 : index
    %c0_474 = arith.constant 0 : index
    %c0_475 = arith.constant 0 : index
    %630 = vector.load %arg2[%c2_473, %c0_474, %c0_475] : memref<3x16x32xf32, #tpu.memory_space<vmem>>, vector<1x16x32xf32>
    %631 = vector.shape_cast %630 : vector<1x16x32xf32> to vector<16x32xf32>
    %cst_476 = arith.constant dense<0.000000e+00> : vector<8x32xf32>
    %632 = tpu.matmul %597, %631, %cst_476 {dimension_numbers = #tpu.dot_dimension_numbers<[1], [0], [0], [1], [0, 0, 1, 1], [], []>} : vector<8x16xf32>, vector<16x32xf32>, vector<8x32xf32> -> vector<8x32xf32>
    %c2_477 = arith.constant 2 : index
    %c0_478 = arith.constant 0 : index
    %c0_479 = arith.constant 0 : index
    %633 = vector.load %arg4[%c2_477, %c0_478, %c0_479] : memref<4x1x32xf32, #tpu.memory_space<vmem>>, vector<1x1x32xf32>
    %634 = vector.shape_cast %633 : vector<1x1x32xf32> to vector<1x32xf32>
    %635 = vector.broadcast %634 : vector<1x32xf32> to vector<8x32xf32>
    %636 = arith.addf %632, %635 : vector<8x32xf32>
    %c2_480 = arith.constant 2 : index
    %c0_481 = arith.constant 0 : index
    %c0_482 = arith.constant 0 : index
    %637 = vector.load %arg3[%c2_480, %c0_481, %c0_482] : memref<3x32x32xf32, #tpu.memory_space<vmem>>, vector<1x32x32xf32>
    %638 = vector.shape_cast %637 : vector<1x32x32xf32> to vector<32x32xf32>
    %cst_483 = arith.constant dense<0.000000e+00> : vector<8x32xf32>
    %639 = tpu.matmul %533, %638, %cst_483 {dimension_numbers = #tpu.dot_dimension_numbers<[1], [0], [0], [1], [0, 0, 1, 1], [], []>} : vector<8x32xf32>, vector<32x32xf32>, vector<8x32xf32> -> vector<8x32xf32>
    %c3_484 = arith.constant 3 : index
    %c0_485 = arith.constant 0 : index
    %c0_486 = arith.constant 0 : index
    %640 = vector.load %arg4[%c3_484, %c0_485, %c0_486] : memref<4x1x32xf32, #tpu.memory_space<vmem>>, vector<1x1x32xf32>
    %641 = vector.shape_cast %640 : vector<1x1x32xf32> to vector<1x32xf32>
    %642 = vector.broadcast %641 : vector<1x32xf32> to vector<8x32xf32>
    %643 = arith.addf %639, %642 : vector<8x32xf32>
    %644 = arith.mulf %613, %643 : vector<8x32xf32>
    %645 = arith.addf %636, %644 : vector<8x32xf32>
    %646 = math.tanh %645 : vector<8x32xf32>
    %cst_487 = arith.constant 1.000000e+00 : f32
    %647 = vector.broadcast %cst_487 : f32 to vector<8x32xf32>
    %648 = arith.subf %647, %629 : vector<8x32xf32>
    %649 = arith.mulf %648, %646 : vector<8x32xf32>
    %650 = arith.mulf %629, %533 : vector<8x32xf32>
    %651 = arith.addf %649, %650 : vector<8x32xf32>
    %c5_488 = arith.constant 5 : index
    %c0_489 = arith.constant 0 : index
    %c0_490 = arith.constant 0 : index
    %652 = vector.load %arg22[%c5_488, %c0_489, %c0_490] : memref<8x8x32xf32, #tpu.memory_space<vmem>>, vector<1x8x32xf32>
    %653 = vector.shape_cast %652 : vector<1x8x32xf32> to vector<8x32xf32>
    %654 = vector.shape_cast %651 : vector<8x32xf32> to vector<1x8x32xf32>
    tpu.vector_store %arg22[%c5_488, %c0_489, %c0_490], %654 {strides = array<i32>} : memref<8x8x32xf32, #tpu.memory_space<vmem>>, vector<1x8x32xf32>,
    %c2_491 = arith.constant 2 : index
    %c0_492 = arith.constant 0 : index
    %c0_493 = arith.constant 0 : index
    %655 = vector.load %arg1[%c2_491, %c0_492, %c0_493] : memref<8x8x17xf32, #tpu.memory_space<vmem>>, vector<1x8x17xf32>
    %656 = vector.shape_cast %655 : vector<1x8x17xf32> to vector<8x17xf32>
    %c0_494 = arith.constant 0 : index
    %c0_495 = arith.constant 0 : index
    %c0_496 = arith.constant 0 : index
    %657 = vector.load %arg5[%c0_494, %c0_495, %c0_496] : memref<3x17x32xf32, #tpu.memory_space<vmem>>, vector<1x17x32xf32>
    %658 = vector.shape_cast %657 : vector<1x17x32xf32> to vector<17x32xf32>
    %cst_497 = arith.constant dense<0.000000e+00> : vector<8x32xf32>
    %659 = tpu.matmul %656, %658, %cst_497 {dimension_numbers = #tpu.dot_dimension_numbers<[1], [0], [0], [1], [0, 0, 1, 1], [], []>} : vector<8x17xf32>, vector<17x32xf32>, vector<8x32xf32> -> vector<8x32xf32>
    %c0_498 = arith.constant 0 : index
    %c0_499 = arith.constant 0 : index
    %c0_500 = arith.constant 0 : index
    %660 = vector.load %arg6[%c0_498, %c0_499, %c0_500] : memref<3x32x32xf32, #tpu.memory_space<vmem>>, vector<1x32x32xf32>
    %661 = vector.shape_cast %660 : vector<1x32x32xf32> to vector<32x32xf32>
    %cst_501 = arith.constant dense<0.000000e+00> : vector<8x32xf32>
    %662 = tpu.matmul %592, %661, %cst_501 {dimension_numbers = #tpu.dot_dimension_numbers<[1], [0], [0], [1], [0, 0, 1, 1], [], []>} : vector<8x32xf32>, vector<32x32xf32>, vector<8x32xf32> -> vector<8x32xf32>
    %663 = arith.addf %659, %662 : vector<8x32xf32>
    %c0_502 = arith.constant 0 : index
    %c0_503 = arith.constant 0 : index
    %c0_504 = arith.constant 0 : index
    %664 = vector.load %arg7[%c0_502, %c0_503, %c0_504] : memref<4x1x32xf32, #tpu.memory_space<vmem>>, vector<1x1x32xf32>
    %665 = vector.shape_cast %664 : vector<1x1x32xf32> to vector<1x32xf32>
    %666 = vector.broadcast %665 : vector<1x32xf32> to vector<8x32xf32>
    %667 = arith.addf %663, %666 : vector<8x32xf32>
    %668 = arith.negf %667 : vector<8x32xf32>
    %669 = math.exp %668 : vector<8x32xf32>
    %cst_505 = arith.constant 1.000000e+00 : f32
    %670 = vector.broadcast %cst_505 : f32 to vector<8x32xf32>
    %671 = arith.addf %670, %669 : vector<8x32xf32>
    %672 = arith.divf %670, %671 : vector<8x32xf32>
    %c1_506 = arith.constant 1 : index
    %c0_507 = arith.constant 0 : index
    %c0_508 = arith.constant 0 : index
    %673 = vector.load %arg5[%c1_506, %c0_507, %c0_508] : memref<3x17x32xf32, #tpu.memory_space<vmem>>, vector<1x17x32xf32>
    %674 = vector.shape_cast %673 : vector<1x17x32xf32> to vector<17x32xf32>
    %cst_509 = arith.constant dense<0.000000e+00> : vector<8x32xf32>
    %675 = tpu.matmul %656, %674, %cst_509 {dimension_numbers = #tpu.dot_dimension_numbers<[1], [0], [0], [1], [0, 0, 1, 1], [], []>} : vector<8x17xf32>, vector<17x32xf32>, vector<8x32xf32> -> vector<8x32xf32>
    %c1_510 = arith.constant 1 : index
    %c0_511 = arith.constant 0 : index
    %c0_512 = arith.constant 0 : index
    %676 = vector.load %arg6[%c1_510, %c0_511, %c0_512] : memref<3x32x32xf32, #tpu.memory_space<vmem>>, vector<1x32x32xf32>
    %677 = vector.shape_cast %676 : vector<1x32x32xf32> to vector<32x32xf32>
    %cst_513 = arith.constant dense<0.000000e+00> : vector<8x32xf32>
    %678 = tpu.matmul %592, %677, %cst_513 {dimension_numbers = #tpu.dot_dimension_numbers<[1], [0], [0], [1], [0, 0, 1, 1], [], []>} : vector<8x32xf32>, vector<32x32xf32>, vector<8x32xf32> -> vector<8x32xf32>
    %679 = arith.addf %675, %678 : vector<8x32xf32>
    %c1_514 = arith.constant 1 : index
    %c0_515 = arith.constant 0 : index
    %c0_516 = arith.constant 0 : index
    %680 = vector.load %arg7[%c1_514, %c0_515, %c0_516] : memref<4x1x32xf32, #tpu.memory_space<vmem>>, vector<1x1x32xf32>
    %681 = vector.shape_cast %680 : vector<1x1x32xf32> to vector<1x32xf32>
    %682 = vector.broadcast %681 : vector<1x32xf32> to vector<8x32xf32>
    %683 = arith.addf %679, %682 : vector<8x32xf32>
    %684 = arith.negf %683 : vector<8x32xf32>
    %685 = math.exp %684 : vector<8x32xf32>
    %cst_517 = arith.constant 1.000000e+00 : f32
    %686 = vector.broadcast %cst_517 : f32 to vector<8x32xf32>
    %687 = arith.addf %686, %685 : vector<8x32xf32>
    %688 = arith.divf %686, %687 : vector<8x32xf32>
    %c2_518 = arith.constant 2 : index
    %c0_519 = arith.constant 0 : index
    %c0_520 = arith.constant 0 : index
    %689 = vector.load %arg5[%c2_518, %c0_519, %c0_520] : memref<3x17x32xf32, #tpu.memory_space<vmem>>, vector<1x17x32xf32>
    %690 = vector.shape_cast %689 : vector<1x17x32xf32> to vector<17x32xf32>
    %cst_521 = arith.constant dense<0.000000e+00> : vector<8x32xf32>
    %691 = tpu.matmul %656, %690, %cst_521 {dimension_numbers = #tpu.dot_dimension_numbers<[1], [0], [0], [1], [0, 0, 1, 1], [], []>} : vector<8x17xf32>, vector<17x32xf32>, vector<8x32xf32> -> vector<8x32xf32>
    %c2_522 = arith.constant 2 : index
    %c0_523 = arith.constant 0 : index
    %c0_524 = arith.constant 0 : index
    %692 = vector.load %arg7[%c2_522, %c0_523, %c0_524] : memref<4x1x32xf32, #tpu.memory_space<vmem>>, vector<1x1x32xf32>
    %693 = vector.shape_cast %692 : vector<1x1x32xf32> to vector<1x32xf32>
    %694 = vector.broadcast %693 : vector<1x32xf32> to vector<8x32xf32>
    %695 = arith.addf %691, %694 : vector<8x32xf32>
    %c2_525 = arith.constant 2 : index
    %c0_526 = arith.constant 0 : index
    %c0_527 = arith.constant 0 : index
    %696 = vector.load %arg6[%c2_525, %c0_526, %c0_527] : memref<3x32x32xf32, #tpu.memory_space<vmem>>, vector<1x32x32xf32>
    %697 = vector.shape_cast %696 : vector<1x32x32xf32> to vector<32x32xf32>
    %cst_528 = arith.constant dense<0.000000e+00> : vector<8x32xf32>
    %698 = tpu.matmul %592, %697, %cst_528 {dimension_numbers = #tpu.dot_dimension_numbers<[1], [0], [0], [1], [0, 0, 1, 1], [], []>} : vector<8x32xf32>, vector<32x32xf32>, vector<8x32xf32> -> vector<8x32xf32>
    %c3_529 = arith.constant 3 : index
    %c0_530 = arith.constant 0 : index
    %c0_531 = arith.constant 0 : index
    %699 = vector.load %arg7[%c3_529, %c0_530, %c0_531] : memref<4x1x32xf32, #tpu.memory_space<vmem>>, vector<1x1x32xf32>
    %700 = vector.shape_cast %699 : vector<1x1x32xf32> to vector<1x32xf32>
    %701 = vector.broadcast %700 : vector<1x32xf32> to vector<8x32xf32>
    %702 = arith.addf %698, %701 : vector<8x32xf32>
    %703 = arith.mulf %672, %702 : vector<8x32xf32>
    %704 = arith.addf %695, %703 : vector<8x32xf32>
    %705 = math.tanh %704 : vector<8x32xf32>
    %cst_532 = arith.constant 1.000000e+00 : f32
    %706 = vector.broadcast %cst_532 : f32 to vector<8x32xf32>
    %707 = arith.subf %706, %688 : vector<8x32xf32>
    %708 = arith.mulf %707, %705 : vector<8x32xf32>
    %709 = arith.mulf %688, %592 : vector<8x32xf32>
    %710 = arith.addf %708, %709 : vector<8x32xf32>
    %c2_533 = arith.constant 2 : index
    %c0_534 = arith.constant 0 : index
    %c0_535 = arith.constant 0 : index
    %711 = vector.load %arg23[%c2_533, %c0_534, %c0_535] : memref<9x8x32xf32, #tpu.memory_space<vmem>>, vector<1x8x32xf32>
    %712 = vector.shape_cast %711 : vector<1x8x32xf32> to vector<8x32xf32>
    %713 = vector.shape_cast %710 : vector<8x32xf32> to vector<1x8x32xf32>
    tpu.vector_store %arg23[%c2_533, %c0_534, %c0_535], %713 {strides = array<i32>} : memref<9x8x32xf32, #tpu.memory_space<vmem>>, vector<1x8x32xf32>,
    %c6_536 = arith.constant 6 : index
    %c0_537 = arith.constant 0 : index
    %c0_538 = arith.constant 0 : index
    %714 = vector.load %arg0[%c6_536, %c0_537, %c0_538] : memref<8x8x16xf32, #tpu.memory_space<vmem>>, vector<1x8x16xf32>
    %715 = vector.shape_cast %714 : vector<1x8x16xf32> to vector<8x16xf32>
    %c0_539 = arith.constant 0 : index
    %c0_540 = arith.constant 0 : index
    %c0_541 = arith.constant 0 : index
    %716 = vector.load %arg2[%c0_539, %c0_540, %c0_541] : memref<3x16x32xf32, #tpu.memory_space<vmem>>, vector<1x16x32xf32>
    %717 = vector.shape_cast %716 : vector<1x16x32xf32> to vector<16x32xf32>
    %cst_542 = arith.constant dense<0.000000e+00> : vector<8x32xf32>
    %718 = tpu.matmul %715, %717, %cst_542 {dimension_numbers = #tpu.dot_dimension_numbers<[1], [0], [0], [1], [0, 0, 1, 1], [], []>} : vector<8x16xf32>, vector<16x32xf32>, vector<8x32xf32> -> vector<8x32xf32>
    %c0_543 = arith.constant 0 : index
    %c0_544 = arith.constant 0 : index
    %c0_545 = arith.constant 0 : index
    %719 = vector.load %arg3[%c0_543, %c0_544, %c0_545] : memref<3x32x32xf32, #tpu.memory_space<vmem>>, vector<1x32x32xf32>
    %720 = vector.shape_cast %719 : vector<1x32x32xf32> to vector<32x32xf32>
    %cst_546 = arith.constant dense<0.000000e+00> : vector<8x32xf32>
    %721 = tpu.matmul %651, %720, %cst_546 {dimension_numbers = #tpu.dot_dimension_numbers<[1], [0], [0], [1], [0, 0, 1, 1], [], []>} : vector<8x32xf32>, vector<32x32xf32>, vector<8x32xf32> -> vector<8x32xf32>
    %722 = arith.addf %718, %721 : vector<8x32xf32>
    %c0_547 = arith.constant 0 : index
    %c0_548 = arith.constant 0 : index
    %c0_549 = arith.constant 0 : index
    %723 = vector.load %arg4[%c0_547, %c0_548, %c0_549] : memref<4x1x32xf32, #tpu.memory_space<vmem>>, vector<1x1x32xf32>
    %724 = vector.shape_cast %723 : vector<1x1x32xf32> to vector<1x32xf32>
    %725 = vector.broadcast %724 : vector<1x32xf32> to vector<8x32xf32>
    %726 = arith.addf %722, %725 : vector<8x32xf32>
    %727 = arith.negf %726 : vector<8x32xf32>
    %728 = math.exp %727 : vector<8x32xf32>
    %cst_550 = arith.constant 1.000000e+00 : f32
    %729 = vector.broadcast %cst_550 : f32 to vector<8x32xf32>
    %730 = arith.addf %729, %728 : vector<8x32xf32>
    %731 = arith.divf %729, %730 : vector<8x32xf32>
    %c1_551 = arith.constant 1 : index
    %c0_552 = arith.constant 0 : index
    %c0_553 = arith.constant 0 : index
    %732 = vector.load %arg2[%c1_551, %c0_552, %c0_553] : memref<3x16x32xf32, #tpu.memory_space<vmem>>, vector<1x16x32xf32>
    %733 = vector.shape_cast %732 : vector<1x16x32xf32> to vector<16x32xf32>
    %cst_554 = arith.constant dense<0.000000e+00> : vector<8x32xf32>
    %734 = tpu.matmul %715, %733, %cst_554 {dimension_numbers = #tpu.dot_dimension_numbers<[1], [0], [0], [1], [0, 0, 1, 1], [], []>} : vector<8x16xf32>, vector<16x32xf32>, vector<8x32xf32> -> vector<8x32xf32>
    %c1_555 = arith.constant 1 : index
    %c0_556 = arith.constant 0 : index
    %c0_557 = arith.constant 0 : index
    %735 = vector.load %arg3[%c1_555, %c0_556, %c0_557] : memref<3x32x32xf32, #tpu.memory_space<vmem>>, vector<1x32x32xf32>
    %736 = vector.shape_cast %735 : vector<1x32x32xf32> to vector<32x32xf32>
    %cst_558 = arith.constant dense<0.000000e+00> : vector<8x32xf32>
    %737 = tpu.matmul %651, %736, %cst_558 {dimension_numbers = #tpu.dot_dimension_numbers<[1], [0], [0], [1], [0, 0, 1, 1], [], []>} : vector<8x32xf32>, vector<32x32xf32>, vector<8x32xf32> -> vector<8x32xf32>
    %738 = arith.addf %734, %737 : vector<8x32xf32>
    %c1_559 = arith.constant 1 : index
    %c0_560 = arith.constant 0 : index
    %c0_561 = arith.constant 0 : index
    %739 = vector.load %arg4[%c1_559, %c0_560, %c0_561] : memref<4x1x32xf32, #tpu.memory_space<vmem>>, vector<1x1x32xf32>
    %740 = vector.shape_cast %739 : vector<1x1x32xf32> to vector<1x32xf32>
    %741 = vector.broadcast %740 : vector<1x32xf32> to vector<8x32xf32>
    %742 = arith.addf %738, %741 : vector<8x32xf32>
    %743 = arith.negf %742 : vector<8x32xf32>
    %744 = math.exp %743 : vector<8x32xf32>
    %cst_562 = arith.constant 1.000000e+00 : f32
    %745 = vector.broadcast %cst_562 : f32 to vector<8x32xf32>
    %746 = arith.addf %745, %744 : vector<8x32xf32>
    %747 = arith.divf %745, %746 : vector<8x32xf32>
    %c2_563 = arith.constant 2 : index
    %c0_564 = arith.constant 0 : index
    %c0_565 = arith.constant 0 : index
    %748 = vector.load %arg2[%c2_563, %c0_564, %c0_565] : memref<3x16x32xf32, #tpu.memory_space<vmem>>, vector<1x16x32xf32>
    %749 = vector.shape_cast %748 : vector<1x16x32xf32> to vector<16x32xf32>
    %cst_566 = arith.constant dense<0.000000e+00> : vector<8x32xf32>
    %750 = tpu.matmul %715, %749, %cst_566 {dimension_numbers = #tpu.dot_dimension_numbers<[1], [0], [0], [1], [0, 0, 1, 1], [], []>} : vector<8x16xf32>, vector<16x32xf32>, vector<8x32xf32> -> vector<8x32xf32>
    %c2_567 = arith.constant 2 : index
    %c0_568 = arith.constant 0 : index
    %c0_569 = arith.constant 0 : index
    %751 = vector.load %arg4[%c2_567, %c0_568, %c0_569] : memref<4x1x32xf32, #tpu.memory_space<vmem>>, vector<1x1x32xf32>
    %752 = vector.shape_cast %751 : vector<1x1x32xf32> to vector<1x32xf32>
    %753 = vector.broadcast %752 : vector<1x32xf32> to vector<8x32xf32>
    %754 = arith.addf %750, %753 : vector<8x32xf32>
    %c2_570 = arith.constant 2 : index
    %c0_571 = arith.constant 0 : index
    %c0_572 = arith.constant 0 : index
    %755 = vector.load %arg3[%c2_570, %c0_571, %c0_572] : memref<3x32x32xf32, #tpu.memory_space<vmem>>, vector<1x32x32xf32>
    %756 = vector.shape_cast %755 : vector<1x32x32xf32> to vector<32x32xf32>
    %cst_573 = arith.constant dense<0.000000e+00> : vector<8x32xf32>
    %757 = tpu.matmul %651, %756, %cst_573 {dimension_numbers = #tpu.dot_dimension_numbers<[1], [0], [0], [1], [0, 0, 1, 1], [], []>} : vector<8x32xf32>, vector<32x32xf32>, vector<8x32xf32> -> vector<8x32xf32>
    %c3_574 = arith.constant 3 : index
    %c0_575 = arith.constant 0 : index
    %c0_576 = arith.constant 0 : index
    %758 = vector.load %arg4[%c3_574, %c0_575, %c0_576] : memref<4x1x32xf32, #tpu.memory_space<vmem>>, vector<1x1x32xf32>
    %759 = vector.shape_cast %758 : vector<1x1x32xf32> to vector<1x32xf32>
    %760 = vector.broadcast %759 : vector<1x32xf32> to vector<8x32xf32>
    %761 = arith.addf %757, %760 : vector<8x32xf32>
    %762 = arith.mulf %731, %761 : vector<8x32xf32>
    %763 = arith.addf %754, %762 : vector<8x32xf32>
    %764 = math.tanh %763 : vector<8x32xf32>
    %cst_577 = arith.constant 1.000000e+00 : f32
    %765 = vector.broadcast %cst_577 : f32 to vector<8x32xf32>
    %766 = arith.subf %765, %747 : vector<8x32xf32>
    %767 = arith.mulf %766, %764 : vector<8x32xf32>
    %768 = arith.mulf %747, %651 : vector<8x32xf32>
    %769 = arith.addf %767, %768 : vector<8x32xf32>
    %c6_578 = arith.constant 6 : index
    %c0_579 = arith.constant 0 : index
    %c0_580 = arith.constant 0 : index
    %770 = vector.load %arg22[%c6_578, %c0_579, %c0_580] : memref<8x8x32xf32, #tpu.memory_space<vmem>>, vector<1x8x32xf32>
    %771 = vector.shape_cast %770 : vector<1x8x32xf32> to vector<8x32xf32>
    %772 = vector.shape_cast %769 : vector<8x32xf32> to vector<1x8x32xf32>
    tpu.vector_store %arg22[%c6_578, %c0_579, %c0_580], %772 {strides = array<i32>} : memref<8x8x32xf32, #tpu.memory_space<vmem>>, vector<1x8x32xf32>,
    %c1_581 = arith.constant 1 : index
    %c0_582 = arith.constant 0 : index
    %c0_583 = arith.constant 0 : index
    %773 = vector.load %arg1[%c1_581, %c0_582, %c0_583] : memref<8x8x17xf32, #tpu.memory_space<vmem>>, vector<1x8x17xf32>
    %774 = vector.shape_cast %773 : vector<1x8x17xf32> to vector<8x17xf32>
    %c0_584 = arith.constant 0 : index
    %c0_585 = arith.constant 0 : index
    %c0_586 = arith.constant 0 : index
    %775 = vector.load %arg5[%c0_584, %c0_585, %c0_586] : memref<3x17x32xf32, #tpu.memory_space<vmem>>, vector<1x17x32xf32>
    %776 = vector.shape_cast %775 : vector<1x17x32xf32> to vector<17x32xf32>
    %cst_587 = arith.constant dense<0.000000e+00> : vector<8x32xf32>
    %777 = tpu.matmul %774, %776, %cst_587 {dimension_numbers = #tpu.dot_dimension_numbers<[1], [0], [0], [1], [0, 0, 1, 1], [], []>} : vector<8x17xf32>, vector<17x32xf32>, vector<8x32xf32> -> vector<8x32xf32>
    %c0_588 = arith.constant 0 : index
    %c0_589 = arith.constant 0 : index
    %c0_590 = arith.constant 0 : index
    %778 = vector.load %arg6[%c0_588, %c0_589, %c0_590] : memref<3x32x32xf32, #tpu.memory_space<vmem>>, vector<1x32x32xf32>
    %779 = vector.shape_cast %778 : vector<1x32x32xf32> to vector<32x32xf32>
    %cst_591 = arith.constant dense<0.000000e+00> : vector<8x32xf32>
    %780 = tpu.matmul %710, %779, %cst_591 {dimension_numbers = #tpu.dot_dimension_numbers<[1], [0], [0], [1], [0, 0, 1, 1], [], []>} : vector<8x32xf32>, vector<32x32xf32>, vector<8x32xf32> -> vector<8x32xf32>
    %781 = arith.addf %777, %780 : vector<8x32xf32>
    %c0_592 = arith.constant 0 : index
    %c0_593 = arith.constant 0 : index
    %c0_594 = arith.constant 0 : index
    %782 = vector.load %arg7[%c0_592, %c0_593, %c0_594] : memref<4x1x32xf32, #tpu.memory_space<vmem>>, vector<1x1x32xf32>
    %783 = vector.shape_cast %782 : vector<1x1x32xf32> to vector<1x32xf32>
    %784 = vector.broadcast %783 : vector<1x32xf32> to vector<8x32xf32>
    %785 = arith.addf %781, %784 : vector<8x32xf32>
    %786 = arith.negf %785 : vector<8x32xf32>
    %787 = math.exp %786 : vector<8x32xf32>
    %cst_595 = arith.constant 1.000000e+00 : f32
    %788 = vector.broadcast %cst_595 : f32 to vector<8x32xf32>
    %789 = arith.addf %788, %787 : vector<8x32xf32>
    %790 = arith.divf %788, %789 : vector<8x32xf32>
    %c1_596 = arith.constant 1 : index
    %c0_597 = arith.constant 0 : index
    %c0_598 = arith.constant 0 : index
    %791 = vector.load %arg5[%c1_596, %c0_597, %c0_598] : memref<3x17x32xf32, #tpu.memory_space<vmem>>, vector<1x17x32xf32>
    %792 = vector.shape_cast %791 : vector<1x17x32xf32> to vector<17x32xf32>
    %cst_599 = arith.constant dense<0.000000e+00> : vector<8x32xf32>
    %793 = tpu.matmul %774, %792, %cst_599 {dimension_numbers = #tpu.dot_dimension_numbers<[1], [0], [0], [1], [0, 0, 1, 1], [], []>} : vector<8x17xf32>, vector<17x32xf32>, vector<8x32xf32> -> vector<8x32xf32>
    %c1_600 = arith.constant 1 : index
    %c0_601 = arith.constant 0 : index
    %c0_602 = arith.constant 0 : index
    %794 = vector.load %arg6[%c1_600, %c0_601, %c0_602] : memref<3x32x32xf32, #tpu.memory_space<vmem>>, vector<1x32x32xf32>
    %795 = vector.shape_cast %794 : vector<1x32x32xf32> to vector<32x32xf32>
    %cst_603 = arith.constant dense<0.000000e+00> : vector<8x32xf32>
    %796 = tpu.matmul %710, %795, %cst_603 {dimension_numbers = #tpu.dot_dimension_numbers<[1], [0], [0], [1], [0, 0, 1, 1], [], []>} : vector<8x32xf32>, vector<32x32xf32>, vector<8x32xf32> -> vector<8x32xf32>
    %797 = arith.addf %793, %796 : vector<8x32xf32>
    %c1_604 = arith.constant 1 : index
    %c0_605 = arith.constant 0 : index
    %c0_606 = arith.constant 0 : index
    %798 = vector.load %arg7[%c1_604, %c0_605, %c0_606] : memref<4x1x32xf32, #tpu.memory_space<vmem>>, vector<1x1x32xf32>
    %799 = vector.shape_cast %798 : vector<1x1x32xf32> to vector<1x32xf32>
    %800 = vector.broadcast %799 : vector<1x32xf32> to vector<8x32xf32>
    %801 = arith.addf %797, %800 : vector<8x32xf32>
    %802 = arith.negf %801 : vector<8x32xf32>
    %803 = math.exp %802 : vector<8x32xf32>
    %cst_607 = arith.constant 1.000000e+00 : f32
    %804 = vector.broadcast %cst_607 : f32 to vector<8x32xf32>
    %805 = arith.addf %804, %803 : vector<8x32xf32>
    %806 = arith.divf %804, %805 : vector<8x32xf32>
    %c2_608 = arith.constant 2 : index
    %c0_609 = arith.constant 0 : index
    %c0_610 = arith.constant 0 : index
    %807 = vector.load %arg5[%c2_608, %c0_609, %c0_610] : memref<3x17x32xf32, #tpu.memory_space<vmem>>, vector<1x17x32xf32>
    %808 = vector.shape_cast %807 : vector<1x17x32xf32> to vector<17x32xf32>
    %cst_611 = arith.constant dense<0.000000e+00> : vector<8x32xf32>
    %809 = tpu.matmul %774, %808, %cst_611 {dimension_numbers = #tpu.dot_dimension_numbers<[1], [0], [0], [1], [0, 0, 1, 1], [], []>} : vector<8x17xf32>, vector<17x32xf32>, vector<8x32xf32> -> vector<8x32xf32>
    %c2_612 = arith.constant 2 : index
    %c0_613 = arith.constant 0 : index
    %c0_614 = arith.constant 0 : index
    %810 = vector.load %arg7[%c2_612, %c0_613, %c0_614] : memref<4x1x32xf32, #tpu.memory_space<vmem>>, vector<1x1x32xf32>
    %811 = vector.shape_cast %810 : vector<1x1x32xf32> to vector<1x32xf32>
    %812 = vector.broadcast %811 : vector<1x32xf32> to vector<8x32xf32>
    %813 = arith.addf %809, %812 : vector<8x32xf32>
    %c2_615 = arith.constant 2 : index
    %c0_616 = arith.constant 0 : index
    %c0_617 = arith.constant 0 : index
    %814 = vector.load %arg6[%c2_615, %c0_616, %c0_617] : memref<3x32x32xf32, #tpu.memory_space<vmem>>, vector<1x32x32xf32>
    %815 = vector.shape_cast %814 : vector<1x32x32xf32> to vector<32x32xf32>
    %cst_618 = arith.constant dense<0.000000e+00> : vector<8x32xf32>
    %816 = tpu.matmul %710, %815, %cst_618 {dimension_numbers = #tpu.dot_dimension_numbers<[1], [0], [0], [1], [0, 0, 1, 1], [], []>} : vector<8x32xf32>, vector<32x32xf32>, vector<8x32xf32> -> vector<8x32xf32>
    %c3_619 = arith.constant 3 : index
    %c0_620 = arith.constant 0 : index
    %c0_621 = arith.constant 0 : index
    %817 = vector.load %arg7[%c3_619, %c0_620, %c0_621] : memref<4x1x32xf32, #tpu.memory_space<vmem>>, vector<1x1x32xf32>
    %818 = vector.shape_cast %817 : vector<1x1x32xf32> to vector<1x32xf32>
    %819 = vector.broadcast %818 : vector<1x32xf32> to vector<8x32xf32>
    %820 = arith.addf %816, %819 : vector<8x32xf32>
    %821 = arith.mulf %790, %820 : vector<8x32xf32>
    %822 = arith.addf %813, %821 : vector<8x32xf32>
    %823 = math.tanh %822 : vector<8x32xf32>
    %cst_622 = arith.constant 1.000000e+00 : f32
    %824 = vector.broadcast %cst_622 : f32 to vector<8x32xf32>
    %825 = arith.subf %824, %806 : vector<8x32xf32>
    %826 = arith.mulf %825, %823 : vector<8x32xf32>
    %827 = arith.mulf %806, %710 : vector<8x32xf32>
    %828 = arith.addf %826, %827 : vector<8x32xf32>
    %c1_623 = arith.constant 1 : index
    %c0_624 = arith.constant 0 : index
    %c0_625 = arith.constant 0 : index
    %829 = vector.load %arg23[%c1_623, %c0_624, %c0_625] : memref<9x8x32xf32, #tpu.memory_space<vmem>>, vector<1x8x32xf32>
    %830 = vector.shape_cast %829 : vector<1x8x32xf32> to vector<8x32xf32>
    %831 = vector.shape_cast %828 : vector<8x32xf32> to vector<1x8x32xf32>
    tpu.vector_store %arg23[%c1_623, %c0_624, %c0_625], %831 {strides = array<i32>} : memref<9x8x32xf32, #tpu.memory_space<vmem>>, vector<1x8x32xf32>,
    %c0_626 = arith.constant 0 : index
    %c0_627 = arith.constant 0 : index
    %832 = vector.load %arg18[%c0_626, %c0_627] : memref<1x16xf32, #tpu.memory_space<vmem>>, vector<1x16xf32>
    %c0_628 = arith.constant 0 : index
    %c0_629 = arith.constant 0 : index
    %833 = vector.load %arg19[%c0_628, %c0_629] : memref<16x8xf32, #tpu.memory_space<vmem>>, vector<16x8xf32>
    %c0_630 = arith.constant 0 : index
    %c0_631 = arith.constant 0 : index
    %834 = vector.load %arg8[%c0_630, %c0_631] : memref<32x48xf32, #tpu.memory_space<vmem>>, vector<32x48xf32>
    %c0_632 = arith.constant 0 : index
    %c0_633 = arith.constant 0 : index
    %835 = vector.load %arg9[%c0_632, %c0_633] : memref<32x48xf32, #tpu.memory_space<vmem>>, vector<32x48xf32>
    %c0_634 = arith.constant 0 : index
    %c0_635 = arith.constant 0 : index
    %836 = vector.load %arg10[%c0_634, %c0_635] : memref<1x48xf32, #tpu.memory_space<vmem>>, vector<1x48xf32>
    %c0_636 = arith.constant 0 : index
    %c0_637 = arith.constant 0 : index
    %837 = vector.load %arg11[%c0_636, %c0_637] : memref<48x16xf32, #tpu.memory_space<vmem>>, vector<48x16xf32>
    %c0_638 = arith.constant 0 : index
    %c0_639 = arith.constant 0 : index
    %838 = vector.load %arg12[%c0_638, %c0_639] : memref<1x16xf32, #tpu.memory_space<vmem>>, vector<1x16xf32>
    %c0_640 = arith.constant 0 : index
    %c0_641 = arith.constant 0 : index
    %c0_642 = arith.constant 0 : index
    %839 = vector.load %arg22[%c0_640, %c0_641, %c0_642] : memref<8x8x32xf32, #tpu.memory_space<vmem>>, vector<7x8x32xf32>
    %840 = vector.shape_cast %839 : vector<7x8x32xf32> to vector<56x32xf32>
    %c2_643 = arith.constant 2 : index
    %c0_644 = arith.constant 0 : index
    %c0_645 = arith.constant 0 : index
    %841 = vector.load %arg23[%c2_643, %c0_644, %c0_645] : memref<9x8x32xf32, #tpu.memory_space<vmem>>, vector<7x8x32xf32>
    %842 = vector.shape_cast %841 : vector<7x8x32xf32> to vector<56x32xf32>
    %c1_646 = arith.constant 1 : index
    %c0_647 = arith.constant 0 : index
    %c0_648 = arith.constant 0 : index
    %843 = vector.load %arg0[%c1_646, %c0_647, %c0_648] : memref<8x8x16xf32, #tpu.memory_space<vmem>>, vector<7x8x16xf32>
    %844 = vector.shape_cast %843 : vector<7x8x16xf32> to vector<56x16xf32>
    %cst_649 = arith.constant dense<0.000000e+00> : vector<56x48xf32>
    %845 = tpu.matmul %840, %834, %cst_649 {dimension_numbers = #tpu.dot_dimension_numbers<[1], [0], [0], [1], [0, 0, 1, 1], [], []>} : vector<56x32xf32>, vector<32x48xf32>, vector<56x48xf32> -> vector<56x48xf32>
    %cst_650 = arith.constant dense<0.000000e+00> : vector<56x48xf32>
    %846 = tpu.matmul %842, %835, %cst_650 {dimension_numbers = #tpu.dot_dimension_numbers<[1], [0], [0], [1], [0, 0, 1, 1], [], []>} : vector<56x32xf32>, vector<32x48xf32>, vector<56x48xf32> -> vector<56x48xf32>
    %847 = arith.addf %845, %846 : vector<56x48xf32>
    %848 = vector.broadcast %836 : vector<1x48xf32> to vector<56x48xf32>
    %849 = arith.addf %847, %848 : vector<56x48xf32>
    %cst_651 = arith.constant 0.000000e+00 : f32
    %850 = vector.broadcast %cst_651 : f32 to vector<56x48xf32>
    %851 = arith.maximumf %849, %850 : vector<56x48xf32>
    %cst_652 = arith.constant dense<0.000000e+00> : vector<56x16xf32>
    %852 = tpu.matmul %851, %837, %cst_652 {dimension_numbers = #tpu.dot_dimension_numbers<[1], [0], [0], [1], [0, 0, 1, 1], [], []>} : vector<56x48xf32>, vector<48x16xf32>, vector<56x16xf32> -> vector<56x16xf32>
    %853 = vector.broadcast %838 : vector<1x16xf32> to vector<56x16xf32>
    %854 = arith.addf %852, %853 : vector<56x16xf32>
    %855 = arith.subf %854, %844 : vector<56x16xf32>
    %856 = math.absf %855 : vector<56x16xf32>
    %857 = vector.shape_cast %856 : vector<56x16xf32> to vector<1x56x16xf32>
    %cst_653 = arith.constant dense<0.000000e+00> : vector<1xf32>
    %858 = vector.multi_reduction <add>, %857, %cst_653 [1, 2] : vector<1x56x16xf32> to vector<1xf32>
    %859 = vector.shape_cast %858 : vector<1xf32> to vector<1x1x1xf32>
    %860 = vector.extract %859[0, 0, 0] : f32 from vector<1x1x1xf32>
    %cst_654 = arith.constant 1.280000e+02 : f32
    %861 = arith.divf %860, %cst_654 : f32
    %cst_655 = arith.constant 0.000000e+00 : f32
    %862 = arith.addf %cst_655, %861 : f32
    %863 = vector.broadcast %832 : vector<1x16xf32> to vector<56x16xf32>
    %864 = arith.mulf %855, %863 : vector<56x16xf32>
    %865 = arith.mulf %864, %864 : vector<56x16xf32>
    %cst_656 = arith.constant dense<0.000000e+00> : vector<56x8xf32>
    %866 = tpu.matmul %865, %833, %cst_656 {dimension_numbers = #tpu.dot_dimension_numbers<[1], [0], [0], [1], [0, 0, 1, 1], [], []>} : vector<56x16xf32>, vector<16x8xf32>, vector<56x8xf32> -> vector<56x8xf32>
    %867 = math.sqrt %866 : vector<56x8xf32>
    %868 = vector.shape_cast %867 : vector<56x8xf32> to vector<1x56x8xf32>
    %cst_657 = arith.constant dense<0.000000e+00> : vector<1xf32>
    %869 = vector.multi_reduction <add>, %868, %cst_657 [1, 2] : vector<1x56x8xf32> to vector<1xf32>
    %870 = vector.shape_cast %869 : vector<1xf32> to vector<1x1x1xf32>
    %871 = vector.extract %870[0, 0, 0] : f32 from vector<1x1x1xf32>
    %cst_658 = arith.constant 6.400000e+01 : f32
    %872 = arith.divf %871, %cst_658 : f32
    %cst_659 = arith.constant 0.000000e+00 : f32
    %873 = arith.addf %cst_659, %872 : f32
    %c0_660 = arith.constant 0 : index
    %c0_661 = arith.constant 0 : index
    %874 = vector.load %arg13[%c0_660, %c0_661] : memref<32x64xf32, #tpu.memory_space<vmem>>, vector<32x64xf32>
    %c0_662 = arith.constant 0 : index
    %c0_663 = arith.constant 0 : index
    %875 = vector.load %arg14[%c0_662, %c0_663] : memref<32x64xf32, #tpu.memory_space<vmem>>, vector<32x64xf32>
    %c0_664 = arith.constant 0 : index
    %c0_665 = arith.constant 0 : index
    %876 = vector.load %arg15[%c0_664, %c0_665] : memref<1x64xf32, #tpu.memory_space<vmem>>, vector<1x64xf32>
    %c0_666 = arith.constant 0 : index
    %c0_667 = arith.constant 0 : index
    %877 = vector.load %arg16[%c0_666, %c0_667] : memref<64x16xf32, #tpu.memory_space<vmem>>, vector<64x16xf32>
    %c0_668 = arith.constant 0 : index
    %c0_669 = arith.constant 0 : index
    %878 = vector.load %arg17[%c0_668, %c0_669] : memref<1x16xf32, #tpu.memory_space<vmem>>, vector<1x16xf32>
    %c0_670 = arith.constant 0 : index
    %c0_671 = arith.constant 0 : index
    %c0_672 = arith.constant 0 : index
    %879 = vector.load %arg22[%c0_670, %c0_671, %c0_672] : memref<8x8x32xf32, #tpu.memory_space<vmem>>, vector<5x8x32xf32>
    %880 = vector.shape_cast %879 : vector<5x8x32xf32> to vector<40x32xf32>
    %c4_673 = arith.constant 4 : index
    %c0_674 = arith.constant 0 : index
    %c0_675 = arith.constant 0 : index
    %881 = vector.load %arg23[%c4_673, %c0_674, %c0_675] : memref<9x8x32xf32, #tpu.memory_space<vmem>>, vector<5x8x32xf32>
    %882 = vector.shape_cast %881 : vector<5x8x32xf32> to vector<40x32xf32>
    %c2_676 = arith.constant 2 : index
    %c0_677 = arith.constant 0 : index
    %c0_678 = arith.constant 0 : index
    %883 = vector.load %arg0[%c2_676, %c0_677, %c0_678] : memref<8x8x16xf32, #tpu.memory_space<vmem>>, vector<5x8x16xf32>
    %884 = vector.shape_cast %883 : vector<5x8x16xf32> to vector<40x16xf32>
    %cst_679 = arith.constant dense<0.000000e+00> : vector<40x64xf32>
    %885 = tpu.matmul %880, %874, %cst_679 {dimension_numbers = #tpu.dot_dimension_numbers<[1], [0], [0], [1], [0, 0, 1, 1], [], []>} : vector<40x32xf32>, vector<32x64xf32>, vector<40x64xf32> -> vector<40x64xf32>
    %cst_680 = arith.constant dense<0.000000e+00> : vector<40x64xf32>
    %886 = tpu.matmul %882, %875, %cst_680 {dimension_numbers = #tpu.dot_dimension_numbers<[1], [0], [0], [1], [0, 0, 1, 1], [], []>} : vector<40x32xf32>, vector<32x64xf32>, vector<40x64xf32> -> vector<40x64xf32>
    %887 = arith.addf %885, %886 : vector<40x64xf32>
    %888 = vector.broadcast %876 : vector<1x64xf32> to vector<40x64xf32>
    %889 = arith.addf %887, %888 : vector<40x64xf32>
    %cst_681 = arith.constant 0.000000e+00 : f32
    %890 = vector.broadcast %cst_681 : f32 to vector<40x64xf32>
    %891 = arith.maximumf %889, %890 : vector<40x64xf32>
    %cst_682 = arith.constant dense<0.000000e+00> : vector<40x16xf32>
    %892 = tpu.matmul %891, %877, %cst_682 {dimension_numbers = #tpu.dot_dimension_numbers<[1], [0], [0], [1], [0, 0, 1, 1], [], []>} : vector<40x64xf32>, vector<64x16xf32>, vector<40x16xf32> -> vector<40x16xf32>
    %893 = vector.broadcast %878 : vector<1x16xf32> to vector<40x16xf32>
    %894 = arith.addf %892, %893 : vector<40x16xf32>
    %895 = arith.subf %894, %884 : vector<40x16xf32>
    %896 = math.absf %895 : vector<40x16xf32>
    %897 = vector.shape_cast %896 : vector<40x16xf32> to vector<1x40x16xf32>
    %cst_683 = arith.constant dense<0.000000e+00> : vector<1xf32>
    %898 = vector.multi_reduction <add>, %897, %cst_683 [1, 2] : vector<1x40x16xf32> to vector<1xf32>
    %899 = vector.shape_cast %898 : vector<1xf32> to vector<1x1x1xf32>
    %900 = vector.extract %899[0, 0, 0] : f32 from vector<1x1x1xf32>
    %cst_684 = arith.constant 1.280000e+02 : f32
    %901 = arith.divf %900, %cst_684 : f32
    %902 = arith.addf %862, %901 : f32
    %903 = vector.broadcast %832 : vector<1x16xf32> to vector<40x16xf32>
    %904 = arith.mulf %895, %903 : vector<40x16xf32>
    %905 = arith.mulf %904, %904 : vector<40x16xf32>
    %cst_685 = arith.constant dense<0.000000e+00> : vector<40x8xf32>
    %906 = tpu.matmul %905, %833, %cst_685 {dimension_numbers = #tpu.dot_dimension_numbers<[1], [0], [0], [1], [0, 0, 1, 1], [], []>} : vector<40x16xf32>, vector<16x8xf32>, vector<40x8xf32> -> vector<40x8xf32>
    %907 = math.sqrt %906 : vector<40x8xf32>
    %908 = vector.shape_cast %907 : vector<40x8xf32> to vector<1x40x8xf32>
    %cst_686 = arith.constant dense<0.000000e+00> : vector<1xf32>
    %909 = vector.multi_reduction <add>, %908, %cst_686 [1, 2] : vector<1x40x8xf32> to vector<1xf32>
    %910 = vector.shape_cast %909 : vector<1xf32> to vector<1x1x1xf32>
    %911 = vector.extract %910[0, 0, 0] : f32 from vector<1x1x1xf32>
    %cst_687 = arith.constant 6.400000e+01 : f32
    %912 = arith.divf %911, %cst_687 : f32
    %913 = arith.addf %873, %912 : f32
    %cst_688 = arith.constant 6.400000e+01 : f32
    %914 = arith.divf %902, %cst_688 : f32
    %c0_689 = arith.constant 0 : index
    %c0_690 = arith.constant 0 : index
    %915 = memref.load %arg20[%c0_689, %c0_690] : memref<1x1xf32, #tpu.memory_space<smem>>
    memref.store %914, %arg20[%c0_689, %c0_690] : memref<1x1xf32, #tpu.memory_space<smem>>
    %cst_691 = arith.constant 1.200000e+01 : f32
    %916 = arith.divf %913, %cst_691 : f32
    %c0_692 = arith.constant 0 : index
    %c0_693 = arith.constant 0 : index
    %917 = memref.load %arg21[%c0_692, %c0_693] : memref<1x1xf32, #tpu.memory_space<smem>>
    memref.store %916, %arg21[%c0_692, %c0_693] : memref<1x1xf32, #tpu.memory_space<smem>>
    return
  }
}

</mosaic_0001>

<llo_original>
// kernel: tpu_custom_call.1
$region0: #{tpu_custom_call.1}
  #allocation0 [shape = 'u32[]', space=smem, size = 0x4, offset = 0x4, fixed_abs, tag = 'smem constant byte address 0x4 - core index']
  #allocation1 [shape = 'u32[144,128]{1,0:T(1,128)}', space=vmem, size = 0x12000, scoped, tag = 'internal scratch']
  #allocation2 [shape = 'f32[8,8,32]{2,1,0:T(8,128)}', space=vmem, size = 0x8000, scoped, tag = 'scratch operand']
  #allocation3 [shape = 'f32[9,8,32]{2,1,0:T(8,128)}', space=vmem, size = 0x9000, scoped, tag = 'scratch operand']
  %s0 = inlined_call_operand.hbm [shape: f32[8,8,16], index: 0, kind: input, shape index: {}]
  %s1 = inlined_call_operand.hbm [shape: f32[8,8,17], index: 1, kind: input, shape index: {}]
  %s2 = inlined_call_operand.vmem [shape: f32[3,16,32], index: 2, kind: input, shape index: {}]
  %s3 = inlined_call_operand.vmem [shape: f32[3,32,32], index: 3, kind: input, shape index: {}]
  %s4 = inlined_call_operand.hbm [shape: f32[4,1,32], index: 4, kind: input, shape index: {}]
  %s5 = inlined_call_operand.vmem [shape: f32[3,17,32], index: 5, kind: input, shape index: {}]
  %s6 = inlined_call_operand.vmem [shape: f32[3,32,32], index: 6, kind: input, shape index: {}]
  %s7 = inlined_call_operand.hbm [shape: f32[4,1,32], index: 7, kind: input, shape index: {}]
  %s8 = inlined_call_operand.hbm [shape: f32[32,48], index: 8, kind: input, shape index: {}]
  %s9 = inlined_call_operand.vmem [shape: f32[32,48], index: 9, kind: input, shape index: {}]
  %s10 = inlined_call_operand.hbm [shape: f32[1,48], index: 10, kind: input, shape index: {}]
  %s11 = inlined_call_operand.vmem [shape: f32[48,16], index: 11, kind: input, shape index: {}]
  %s12 = inlined_call_operand.hbm [shape: f32[1,16], index: 12, kind: input, shape index: {}]
  %s13 = inlined_call_operand.hbm [shape: f32[32,64], index: 13, kind: input, shape index: {}]
  %s14 = inlined_call_operand.hbm [shape: f32[32,64], index: 14, kind: input, shape index: {}]
  %s15 = inlined_call_operand.hbm [shape: f32[1,64], index: 15, kind: input, shape index: {}]
  %s16 = inlined_call_operand.vmem [shape: f32[64,16], index: 16, kind: input, shape index: {}]
  %s17 = inlined_call_operand.vmem [shape: f32[1,16], index: 17, kind: input, shape index: {}]
  %s18 = inlined_call_operand.vmem [shape: f32[1,16], index: 18, kind: input, shape index: {}]
  %s19 = inlined_call_operand.vmem [shape: f32[16,8], index: 19, kind: input, shape index: {}]
  %s20 = inlined_call_operand.hbm [shape: f32[1,1], index: 20, kind: output, shape index: {0}]
  %s21 = inlined_call_operand.hbm [shape: f32[1,1], index: 21, kind: output, shape index: {1}]
  %22 = xla_tuple %s20, %s21
  %s23 = sld [smem:[#allocation0]]
  $region138: #{tpu_custom_call.1} parent=0
    _
  %s25 = ssub.s32 1, %s23
  %s26 = scalar_select 0, %s25, %s23
  $region1: #{tpu_custom_call.1} parent=0
    #allocation4 [shape = 'u8[32768]{0}', space=vmem, size = 0x8000, scoped, tag = 'input window, operand 0, single buffered']
    #allocation5 [shape = 's32[1]{0}', space=sflag, size = 0x4, scoped, tag = 'scoped memory for tpu_custom_call.1']
    #allocation6 [shape = 's32[1]{0}', space=sflag, size = 0x4, scoped, tag = 'scoped memory for tpu_custom_call.1']
    #allocation7 [shape = 'u8[32768]{0}', space=vmem, size = 0x8000, scoped, tag = 'input window, operand 1, single buffered']
    #allocation8 [shape = 's32[1]{0}', space=sflag, size = 0x4, scoped, tag = 'scoped memory for tpu_custom_call.1']
    #allocation9 [shape = 'u8[2048]{0}', space=vmem, size = 0x800, scoped, tag = 'input window, operand 4, single buffered']
    #allocation10 [shape = 'u8[2048]{0}', space=vmem, size = 0x800, scoped, tag = 'input window, operand 7, single buffered']
    #allocation11 [shape = 's32[1]{0}', space=sflag, size = 0x4, scoped, tag = 'scoped memory for tpu_custom_call.1']
    #allocation12 [shape = 'u8[16384]{0}', space=vmem, size = 0x4000, scoped, tag = 'input window, operand 8, single buffered']
    #allocation13 [shape = 'u8[512]{0}', space=vmem, size = 0x400, scoped, tag = 'input window, operand 10, single buffered']
    #allocation14 [shape = 's32[1]{0}', space=sflag, size = 0x4, scoped, tag = 'scoped memory for tpu_custom_call.1']
    #allocation15 [shape = 'u8[512]{0}', space=vmem, size = 0x400, scoped, tag = 'input window, operand 12, single buffered']
    #allocation16 [shape = 'u8[16384]{0}', space=vmem, size = 0x4000, scoped, tag = 'input window, operand 13, single buffered']
    #allocation17 [shape = 's32[1]{0}', space=sflag, size = 0x4, scoped, tag = 'scoped memory for tpu_custom_call.1']
    #allocation18 [shape = 'u8[16384]{0}', space=vmem, size = 0x4000, scoped, tag = 'input window, operand 14, single buffered']
    #allocation19 [shape = 'u8[512]{0}', space=vmem, size = 0x400, scoped, tag = 'input window, operand 15, single buffered']
    #allocation20 [shape = 's32[1]{0}', space=sflag, size = 0x4, scoped, tag = 'scoped memory for tpu_custom_call.1']
    #allocation21 [shape = 'u8[512]{0}', space=smem, size = 0x200, scoped, tag = 'output window, operand 0, single buffered']
    #allocation22 [shape = 'u8[512]{0}', space=smem, size = 0x200, scoped, tag = 'output window, operand 1, single buffered']
    #allocation23 [shape = 's32[1]{0}', space=sflag, size = 0x4, scoped, tag = 'scoped memory for tpu_custom_call.1']
    %27 = vsyncpa [#allocation5], 0
    %28 = vsyncpa [#allocation8], 0
    %29 = vsyncpa [#allocation11], 0
    %30 = vsyncpa [#allocation14], 0
    %31 = vsyncpa [#allocation17], 0
    %32 = vsyncpa [#allocation20], 0
    %33 = vsyncpa [#allocation6], 0
    %34 = vsyncpa [#allocation23], 0
    // Predicated region
    $region2: #{tpu_custom_call.1} parent=1 // pred_check
      _
    $region3: #{tpu_custom_call.1} parent=1 // pred_check_branch
      %36 = sbr.rel (0) target = $region5
    $region4: #{tpu_custom_call.1} parent=1 // pred_region
      %s38 = ssub.s32 1024, 1024
      %39 = vsyncadd [#allocation5], %s38
      %s40 = sshll.u32 [#allocation4], 4
      %s41 = int_to_ptr.vmem [resolvable:$true] %s40
      %46 = dma.hbm_to_vmem [thread:$0]  %s0, 1024, %s41, [#allocation5], 128, 128, 8
    $region5: #{tpu_custom_call.1} parent=1 // pred_fallthru
      _
    // Predicated region
    $region6: #{tpu_custom_call.1} parent=1 // pred_check
      _
    $region7: #{tpu_custom_call.1} parent=1 // pred_check_branch
      %48 = sbr.rel (0) target = $region9
    $region8: #{tpu_custom_call.1} parent=1 // pred_region
      %s50 = ssub.s32 1024, 1024
      %51 = vsyncadd [#allocation8], %s50
      %s52 = sshll.u32 [#allocation7], 4
      %s53 = int_to_ptr.vmem [resolvable:$true] %s52
      %58 = dma.hbm_to_vmem [thread:$0]  %s1, 1024, %s53, [#allocation8], 128, 128, 8
    $region9: #{tpu_custom_call.1} parent=1 // pred_fallthru
      _
    // Predicated region
    $region10: #{tpu_custom_call.1} parent=1 // pred_check
      _
    $region11: #{tpu_custom_call.1} parent=1 // pred_check_branch
      %60 = sbr.rel (0) target = $region13
    $region12: #{tpu_custom_call.1} parent=1 // pred_region
      _
    $region13: #{tpu_custom_call.1} parent=1 // pred_fallthru
      _
    // Predicated region
    $region14: #{tpu_custom_call.1} parent=1 // pred_check
      _
    $region15: #{tpu_custom_call.1} parent=1 // pred_check_branch
      %62 = sbr.rel (0) target = $region17
    $region16: #{tpu_custom_call.1} parent=1 // pred_region
      _
    $region17: #{tpu_custom_call.1} parent=1 // pred_fallthru
      _
    // Predicated region
    $region18: #{tpu_custom_call.1} parent=1 // pred_check
      _
    $region19: #{tpu_custom_call.1} parent=1 // pred_check_branch
      %64 = sbr.rel (0) target = $region21
    $region20: #{tpu_custom_call.1} parent=1 // pred_region
      %s66 = ssub.s32 64, 64
      %67 = vsyncadd [#allocation8], %s66
      %s68 = sshll.u32 [#allocation9], 4
      %s69 = int_to_ptr.vmem [resolvable:$true] %s68
      %74 = dma.hbm_to_vmem [thread:$0]  %s4, 64, %s69, [#allocation8], 16, 16, 1
    $region21: #{tpu_custom_call.1} parent=1 // pred_fallthru
      _
    // Predicated region
    $region22: #{tpu_custom_call.1} parent=1 // pred_check
      _
    $region23: #{tpu_custom_call.1} parent=1 // pred_check_branch
      %76 = sbr.rel (0) target = $region25
    $region24: #{tpu_custom_call.1} parent=1 // pred_region
      _
    $region25: #{tpu_custom_call.1} parent=1 // pred_fallthru
      _
    // Predicated region
    $region26: #{tpu_custom_call.1} parent=1 // pred_check
      _
    $region27: #{tpu_custom_call.1} parent=1 // pred_check_branch
      %78 = sbr.rel (0) target = $region29
    $region28: #{tpu_custom_call.1} parent=1 // pred_region
      _
    $region29: #{tpu_custom_call.1} parent=1 // pred_fallthru
      _
    // Predicated region
    $region30: #{tpu_custom_call.1} parent=1 // pred_check
      _
    $region31: #{tpu_custom_call.1} parent=1 // pred_check_branch
      %80 = sbr.rel (0) target = $region33
    $region32: #{tpu_custom_call.1} parent=1 // pred_region
      %s82 = ssub.s32 64, 64
      %83 = vsyncadd [#allocation11], %s82
      %s84 = sshll.u32 [#allocation10], 4
      %s85 = int_to_ptr.vmem [resolvable:$true] %s84
      %90 = dma.hbm_to_vmem [thread:$0]  %s7, 64, %s85, [#allocation11], 16, 16, 1
    $region33: #{tpu_custom_call.1} parent=1 // pred_fallthru
      _
    // Predicated region
    $region34: #{tpu_custom_call.1} parent=1 // pred_check
      _
    $region35: #{tpu_custom_call.1} parent=1 // pred_check_branch
      %92 = sbr.rel (0) target = $region37
    $region36: #{tpu_custom_call.1} parent=1 // pred_region
      %s94 = ssub.s32 512, 512
      %95 = vsyncadd [#allocation11], %s94
      %s96 = sshll.u32 [#allocation12], 4
      %s97 = int_to_ptr.vmem [resolvable:$true] %s96
      %102 = dma.hbm_to_vmem [thread:$0]  %s8, 512, %s97, [#allocation11], 128, 128, 8
    $region37: #{tpu_custom_call.1} parent=1 // pred_fallthru
      _
    // Predicated region
    $region38: #{tpu_custom_call.1} parent=1 // pred_check
      _
    $region39: #{tpu_custom_call.1} parent=1 // pred_check_branch
      %104 = sbr.rel (0) target = $region41
    $region40: #{tpu_custom_call.1} parent=1 // pred_region
      _
    $region41: #{tpu_custom_call.1} parent=1 // pred_fallthru
      _
    // Predicated region
    $region42: #{tpu_custom_call.1} parent=1 // pred_check
      _
    $region43: #{tpu_custom_call.1} parent=1 // pred_check_branch
      %106 = sbr.rel (0) target = $region45
    $region44: #{tpu_custom_call.1} parent=1 // pred_region
      %s108 = ssub.s32 16, 16
      %109 = vsyncadd [#allocation14], %s108
      %s111 = sshll.u32 [#allocation13], 4
      %s112 = int_to_ptr.vmem [resolvable:$true] %s111
      %114 = dma.hbm_to_vmem [thread:$0]  %s10, 16, %s112, [#allocation14]
    $region45: #{tpu_custom_call.1} parent=1 // pred_fallthru
      _
    // Predicated region
    $region46: #{tpu_custom_call.1} parent=1 // pred_check
      _
    $region47: #{tpu_custom_call.1} parent=1 // pred_check_branch
      %116 = sbr.rel (0) target = $region49
    $region48: #{tpu_custom_call.1} parent=1 // pred_region
      _
    $region49: #{tpu_custom_call.1} parent=1 // pred_fallthru
      _
    // Predicated region
    $region50: #{tpu_custom_call.1} parent=1 // pred_check
      _
    $region51: #{tpu_custom_call.1} parent=1 // pred_check_branch
      %118 = sbr.rel (0) target = $region53
    $region52: #{tpu_custom_call.1} parent=1 // pred_region
      %s120 = ssub.s32 16, 16
      %121 = vsyncadd [#allocation14], %s120
      %s123 = sshll.u32 [#allocation15], 4
      %s124 = int_to_ptr.vmem [resolvable:$true] %s123
      %126 = dma.hbm_to_vmem [thread:$0]  %s12, 16, %s124, [#allocation14]
    $region53: #{tpu_custom_call.1} parent=1 // pred_fallthru
      _
    // Predicated region
    $region54: #{tpu_custom_call.1} parent=1 // pred_check
      _
    $region55: #{tpu_custom_call.1} parent=1 // pred_check_branch
      %128 = sbr.rel (0) target = $region57
    $region56: #{tpu_custom_call.1} parent=1 // pred_region
      %s130 = ssub.s32 512, 512
      %131 = vsyncadd [#allocation17], %s130
      %s132 = sshll.u32 [#allocation16], 4
      %s133 = int_to_ptr.vmem [resolvable:$true] %s132
      %138 = dma.hbm_to_vmem [thread:$0]  %s13, 512, %s133, [#allocation17], 128, 128, 8
    $region57: #{tpu_custom_call.1} parent=1 // pred_fallthru
      _
    // Predicated region
    $region58: #{tpu_custom_call.1} parent=1 // pred_check
      _
    $region59: #{tpu_custom_call.1} parent=1 // pred_check_branch
      %140 = sbr.rel (0) target = $region61
    $region60: #{tpu_custom_call.1} parent=1 // pred_region
      %s142 = ssub.s32 512, 512
      %143 = vsyncadd [#allocation17], %s142
      %s144 = sshll.u32 [#allocation18], 4
      %s145 = int_to_ptr.vmem [resolvable:$true] %s144
      %150 = dma.hbm_to_vmem [thread:$0]  %s14, 512, %s145, [#allocation17], 128, 128, 8
    $region61: #{tpu_custom_call.1} parent=1 // pred_fallthru
      _
    // Predicated region
    $region62: #{tpu_custom_call.1} parent=1 // pred_check
      _
    $region63: #{tpu_custom_call.1} parent=1 // pred_check_branch
      %152 = sbr.rel (0) target = $region65
    $region64: #{tpu_custom_call.1} parent=1 // pred_region
      %s154 = ssub.s32 16, 16
      %155 = vsyncadd [#allocation20], %s154
      %s157 = sshll.u32 [#allocation19], 4
      %s158 = int_to_ptr.vmem [resolvable:$true] %s157
      %160 = dma.hbm_to_vmem [thread:$0]  %s15, 16, %s158, [#allocation20]
    $region65: #{tpu_custom_call.1} parent=1 // pred_fallthru
      _
    // Predicated region
    $region66: #{tpu_custom_call.1} parent=1 // pred_check
      _
    $region67: #{tpu_custom_call.1} parent=1 // pred_check_branch
      %162 = sbr.rel (0) target = $region69
    $region68: #{tpu_custom_call.1} parent=1 // pred_region
      _
    $region69: #{tpu_custom_call.1} parent=1 // pred_fallthru
      _
    // Predicated region
    $region70: #{tpu_custom_call.1} parent=1 // pred_check
      _
    $region71: #{tpu_custom_call.1} parent=1 // pred_check_branch
      %164 = sbr.rel (0) target = $region73
    $region72: #{tpu_custom_call.1} parent=1 // pred_region
      _
    $region73: #{tpu_custom_call.1} parent=1 // pred_fallthru
      _
    // Predicated region
    $region74: #{tpu_custom_call.1} parent=1 // pred_check
      _
    $region75: #{tpu_custom_call.1} parent=1 // pred_check_branch
      %166 = sbr.rel (0) target = $region77
    $region76: #{tpu_custom_call.1} parent=1 // pred_region
      _
    $region77: #{tpu_custom_call.1} parent=1 // pred_fallthru
      _
    // Predicated region
    $region78: #{tpu_custom_call.1} parent=1 // pred_check
      _
    $region79: #{tpu_custom_call.1} parent=1 // pred_check_branch
      %168 = sbr.rel (0) target = $region81
    $region80: #{tpu_custom_call.1} parent=1 // pred_region
      _
    $region81: #{tpu_custom_call.1} parent=1 // pred_fallthru
      _
    // Predicated region
    $region82: #{tpu_custom_call.1} parent=1 // pred_check
      _
    $region83: #{tpu_custom_call.1} parent=1 // pred_check_branch
      %170 = sbr.rel (0) target = $region85
    $region84: #{tpu_custom_call.1} parent=1 // pred_region
      %171 = dma.done [#allocation5], 1024
    $region85: #{tpu_custom_call.1} parent=1 // pred_fallthru
      _
    // Predicated region
    $region86: #{tpu_custom_call.1} parent=1 // pred_check
      _
    $region87: #{tpu_custom_call.1} parent=1 // pred_check_branch
      %173 = sbr.rel (0) target = $region89
    $region88: #{tpu_custom_call.1} parent=1 // pred_region
      %174 = dma.done [#allocation8], 1024
    $region89: #{tpu_custom_call.1} parent=1 // pred_fallthru
      _
    // Predicated region
    $region90: #{tpu_custom_call.1} parent=1 // pred_check
      _
    $region91: #{tpu_custom_call.1} parent=1 // pred_check_branch
      %176 = sbr.rel (0) target = $region93
    $region92: #{tpu_custom_call.1} parent=1 // pred_region
      %177 = dma.done [#allocation8], 64
    $region93: #{tpu_custom_call.1} parent=1 // pred_fallthru
      _
    // Predicated region
    $region94: #{tpu_custom_call.1} parent=1 // pred_check
      _
    $region95: #{tpu_custom_call.1} parent=1 // pred_check_branch
      %179 = sbr.rel (0) target = $region97
    $region96: #{tpu_custom_call.1} parent=1 // pred_region
      %180 = dma.done [#allocation11], 64
    $region97: #{tpu_custom_call.1} parent=1 // pred_fallthru
      _
    // Predicated region
    $region98: #{tpu_custom_call.1} parent=1 // pred_check
      _
    $region99: #{tpu_custom_call.1} parent=1 // pred_check_branch
      %182 = sbr.rel (0) target = $region101
    $region100: #{tpu_custom_call.1} parent=1 // pred_region
      %183 = dma.done [#allocation11], 512
    $region101: #{tpu_custom_call.1} parent=1 // pred_fallthru
      _
    // Predicated region
    $region102: #{tpu_custom_call.1} parent=1 // pred_check
      _
    $region103: #{tpu_custom_call.1} parent=1 // pred_check_branch
      %185 = sbr.rel (0) target = $region105
    $region104: #{tpu_custom_call.1} parent=1 // pred_region
      %186 = dma.done [#allocation14], 16
    $region105: #{tpu_custom_call.1} parent=1 // pred_fallthru
      _
    // Predicated region
    $region106: #{tpu_custom_call.1} parent=1 // pred_check
      _
    $region107: #{tpu_custom_call.1} parent=1 // pred_check_branch
      %188 = sbr.rel (0) target = $region109
    $region108: #{tpu_custom_call.1} parent=1 // pred_region
      %189 = dma.done [#allocation14], 16
    $region109: #{tpu_custom_call.1} parent=1 // pred_fallthru
      _
    // Predicated region
    $region110: #{tpu_custom_call.1} parent=1 // pred_check
      _
    $region111: #{tpu_custom_call.1} parent=1 // pred_check_branch
      %191 = sbr.rel (0) target = $region113
    $region112: #{tpu_custom_call.1} parent=1 // pred_region
      %192 = dma.done [#allocation17], 512
    $region113: #{tpu_custom_call.1} parent=1 // pred_fallthru
      _
    // Predicated region
    $region114: #{tpu_custom_call.1} parent=1 // pred_check
      _
    $region115: #{tpu_custom_call.1} parent=1 // pred_check_branch
      %194 = sbr.rel (0) target = $region117
    $region116: #{tpu_custom_call.1} parent=1 // pred_region
      %195 = dma.done [#allocation17], 512
    $region117: #{tpu_custom_call.1} parent=1 // pred_fallthru
      _
    // Predicated region
    $region118: #{tpu_custom_call.1} parent=1 // pred_check
      _
    $region119: #{tpu_custom_call.1} parent=1 // pred_check_branch
      %197 = sbr.rel (0) target = $region121
    $region120: #{tpu_custom_call.1} parent=1 // pred_region
      %198 = dma.done [#allocation20], 16
    $region121: #{tpu_custom_call.1} parent=1 // pred_fallthru
      _
    %s199 = scalar_lea.vmem [#allocation3], 64
    %vm200 = vcmask 261120
    %201 = vst.msk [vmem:[%s199] sm:$0xff] %vm200, 0.0
    %v202 = vld [vmem:[#allocation4] sm:$0xff]
    %v203 = vld [vmem:[%s2] sm:$0xff]
    %v204 = vld [vmem:[%s2 + $0x8] sm:$0xff]
    %v205 = vld [vmem:[%s3] sm:$0xff]
    %v206 = vld [vmem:[%s3 + $0x8] sm:$0xff]
    %v207 = vld [vmem:[%s3 + $0x10] sm:$0xff]
    %v208 = vld [vmem:[%s3 + $0x18] sm:$0xff]
    %v210 = vsel %vm200, 0.0, 0
    %212 = vmatprep.subr.mxu0 0.0
    %213 = vmatpush1.msra.mxu0 %v205
    %214 = vmatprep.subr.mxu0 0.0
    %215 = vmatpush1.msra.mxu0 %v206
    %216 = vmatprep.subr.mxu0 0.0
    %217 = vmatpush1.msra.mxu0 %v207
    %218 = vmatprep.subr.mxu0 0.0
    %219 = vmatpush1.msra.mxu0 %v208
    %220 = vmatprep.subr.mxu0 0.0
    %221 = vmatpush1.msra.mxu0 0.0
    %222 = vmatprep.subr.mxu0 0.0
    %223 = vmatpush1.msra.mxu0 0.0
    %224 = vmatprep.subr.mxu0 0.0
    %225 = vmatpush1.msra.mxu0 0.0
    %226 = vmatprep.subr.mxu0 0.0
    %227 = vmatpush1.msra.mxu0 0.0
    %228 = vmatprep.subr.mxu0 0.0
    %229 = vmatpush1.msra.mxu0 0.0
    %230 = vmatprep.subr.mxu0 0.0
    %231 = vmatpush1.msra.mxu0 0.0
    %232 = vmatprep.subr.mxu0 0.0
    %233 = vmatpush1.msra.mxu0 0.0
    %234 = vmatprep.subr.mxu0 0.0
    %235 = vmatpush1.msra.mxu0 0.0
    %236 = vmatprep.subr.mxu0 0.0
    %237 = vmatpush1.msra.mxu0 0.0
    %238 = vmatprep.subr.mxu0 0.0
    %239 = vmatpush1.msra.mxu0 0.0
    %240 = vmatprep.subr.mxu0 0.0
    %241 = vmatpush1.msra.mxu0 0.0
    %242 = vmatprep.subr.mxu0 0.0
    %243 = vmatpush1.msra.mxu0 0.0
    %244 = vmatprep.subr.mxu0 0.0
    %245 = vmatpush1.msra.mxu0 0.0
    %246 = vmatprep.subr.mxu0 0.0
    %247 = vmatpush1.msra.mxu0 0.0
    %248 = vmatprep.subr.mxu0 0.0
    %249 = vmatpush1.msra.mxu0 0.0
    %250 = vmatprep.subr.mxu0 0.0
    %251 = vmatpush1.msra.mxu0 0.0
    %252 = vmatprep.subr.mxu0 0.0
    %253 = vmatpush1.msra.mxu0 0.0
    %254 = vmatprep.subr.mxu0 0.0
    %255 = vmatpush1.msra.mxu0 0.0
    %256 = vmatprep.subr.mxu0 0.0
    %257 = vmatpush1.msra.mxu0 0.0
    %258 = vmatprep.subr.mxu0 0.0
    %259 = vmatpush1.msra.mxu0 0.0
    %260 = vmatprep.subr.mxu0 0.0
    %261 = vmatpush1.msra.mxu0 0.0
    %262 = vmatprep.subr.mxu0 0.0
    %263 = vmatpush1.msra.mxu0 0.0
    %264 = vmatprep.subr.mxu0 0.0
    %265 = vmatpush1.msra.mxu0 0.0
    %266 = vmatprep.subr.mxu0 0.0
    %267 = vmatpush1.msra.mxu0 0.0
    %268 = vmatprep.subr.mxu0 0.0
    %269 = vmatpush1.msra.mxu0 0.0
    %270 = vmatprep.subr.mxu0 0.0
    %271 = vmatpush1.msra.mxu0 0.0
    %272 = vmatprep.subr.mxu0 0.0
    %273 = vmatpush1.msra.mxu0 0.0
    %274 = vmatprep.subr.mxu0 0.0
    %275 = vmatpush1.msra.mxu0 0.0
    %276 = vmatprep.mubr.f32.mxu0 0.0
    %277 = vmatmul.mubr.f32.gmra.mrb[0].mxu0 %v210
    %v278 = vpop.f32.mrb[0].mxu0
    %v279 = vadd.f32 0.0, %v278
    %v280 = vpop.f32.mrb[0].mxu0
    %281 = vdwg.mxu0
    %vm282 = vcmask 130048
    %v284 = vsel %vm282, %v202, 0
    %286 = vmatprep.subr.mxu0 0.0
    %287 = vmatpush1.msra.mxu0 %v203
    %288 = vmatprep.subr.mxu0 0.0
    %289 = vmatpush1.msra.mxu0 %v204
    %290 = vmatprep.subr.mxu0 0.0
    %291 = vmatpush1.msra.mxu0 0.0
    %292 = vmatprep.subr.mxu0 0.0
    %293 = vmatpush1.msra.mxu0 0.0
    %294 = vmatprep.subr.mxu0 0.0
    %295 = vmatpush1.msra.mxu0 0.0
    %296 = vmatprep.subr.mxu0 0.0
    %297 = vmatpush1.msra.mxu0 0.0
    %298 = vmatprep.subr.mxu0 0.0
    %299 = vmatpush1.msra.mxu0 0.0
    %300 = vmatprep.subr.mxu0 0.0
    %301 = vmatpush1.msra.mxu0 0.0
    %302 = vmatprep.subr.mxu0 0.0
    %303 = vmatpush1.msra.mxu0 0.0
    %304 = vmatprep.subr.mxu0 0.0
    %305 = vmatpush1.msra.mxu0 0.0
    %306 = vmatprep.subr.mxu0 0.0
    %307 = vmatpush1.msra.mxu0 0.0
    %308 = vmatprep.subr.mxu0 0.0
    %309 = vmatpush1.msra.mxu0 0.0
    %310 = vmatprep.subr.mxu0 0.0
    %311 = vmatpush1.msra.mxu0 0.0
    %312 = vmatprep.subr.mxu0 0.0
    %313 = vmatpush1.msra.mxu0 0.0
    %314 = vmatprep.subr.mxu0 0.0
    %315 = vmatpush1.msra.mxu0 0.0
    %316 = vmatprep.subr.mxu0 0.0
    %317 = vmatpush1.msra.mxu0 0.0
    %318 = vmatprep.subr.mxu0 0.0
    %319 = vmatpush1.msra.mxu0 0.0
    %320 = vmatprep.subr.mxu0 0.0
    %321 = vmatpush1.msra.mxu0 0.0
    %322 = vmatprep.subr.mxu0 0.0
    %323 = vmatpush1.msra.mxu0 0.0
    %324 = vmatprep.subr.mxu0 0.0
    %325 = vmatpush1.msra.mxu0 0.0
    %326 = vmatprep.subr.mxu0 0.0
    %327 = vmatpush1.msra.mxu0 0.0
    %328 = vmatprep.subr.mxu0 0.0
    %329 = vmatpush1.msra.mxu0 0.0
    %330 = vmatprep.subr.mxu0 0.0
    %331 = vmatpush1.msra.mxu0 0.0
    %332 = vmatprep.subr.mxu0 0.0
    %333 = vmatpush1.msra.mxu0 0.0
    %334 = vmatprep.subr.mxu0 0.0
    %335 = vmatpush1.msra.mxu0 0.0
    %336 = vmatprep.subr.mxu0 0.0
    %337 = vmatpush1.msra.mxu0 0.0
    %338 = vmatprep.subr.mxu0 0.0
    %339 = vmatpush1.msra.mxu0 0.0
    %340 = vmatprep.subr.mxu0 0.0
    %341 = vmatpush1.msra.mxu0 0.0
    %342 = vmatprep.subr.mxu0 0.0
    %343 = vmatpush1.msra.mxu0 0.0
    %344 = vmatprep.subr.mxu0 0.0
    %345 = vmatpush1.msra.mxu0 0.0
    %346 = vmatprep.subr.mxu0 0.0
    %347 = vmatpush1.msra.mxu0 0.0
    %348 = vmatprep.subr.mxu0 0.0
    %349 = vmatpush1.msra.mxu0 0.0
    %350 = vmatprep.mubr.f32.mxu0 0.0
    %351 = vmatmul.mubr.f32.gmra.mrb[0].mxu0 %v284
    %v352 = vpop.f32.mrb[0].mxu0
    %v353 = vadd.f32 %v279, %v352
    %v354 = vpop.f32.mrb[0].mxu0
    %355 = vdwg.mxu0
    %v356 = vld [vmem:[#allocation9] sm:$0x1]
    %v358 = vlaneseq
    %v359 = vshrl.u32 %v358, 7
    %v360 = vsub.s32 0, %v359
    %v361 = vrot.slane %v356, %v360
    %v363 = vadd.f32 %v353, %v361
    %v364 = vxor.u32 %v363, 2147483648
    %v365 = vmul.f32 %v364, 1.442695
    %v366 = vpow.pop %v365
    %v367 = vadd.f32 %v366, 1.0
    %v368 = vrcp.pop %v367
    %v369 = vmul.f32 1.0, %v368
    %s370 = scalar_lea.vmem %s2, 16
    %v371 = vld [vmem:[%s370] sm:$0xff]
    %v372 = vld [vmem:[%s370 + $0x8] sm:$0xff]
    %s373 = scalar_lea.vmem %s3, 32
    %v374 = vld [vmem:[%s373] sm:$0xff]
    %v375 = vld [vmem:[%s373 + $0x8] sm:$0xff]
    %v376 = vld [vmem:[%s373 + $0x10] sm:$0xff]
    %v377 = vld [vmem:[%s373 + $0x18] sm:$0xff]
    %378 = vmatprep.subr.mxu0 0.0
    %379 = vmatpush1.msra.mxu0 %v374
    %380 = vmatprep.subr.mxu0 0.0
    %381 = vmatpush1.msra.mxu0 %v375
    %382 = vmatprep.subr.mxu0 0.0
    %383 = vmatpush1.msra.mxu0 %v376
    %384 = vmatprep.subr.mxu0 0.0
    %385 = vmatpush1.msra.mxu0 %v377
    %386 = vmatprep.subr.mxu0 0.0
    %387 = vmatpush1.msra.mxu0 0.0
    %388 = vmatprep.subr.mxu0 0.0
    %389 = vmatpush1.msra.mxu0 0.0
    %390 = vmatprep.subr.mxu0 0.0
    %391 = vmatpush1.msra.mxu0 0.0
    %392 = vmatprep.subr.mxu0 0.0
    %393 = vmatpush1.msra.mxu0 0.0
    %394 = vmatprep.subr.mxu0 0.0
    %395 = vmatpush1.msra.mxu0 0.0
    %396 = vmatprep.subr.mxu0 0.0
    %397 = vmatpush1.msra.mxu0 0.0
    %398 = vmatprep.subr.mxu0 0.0
    %399 = vmatpush1.msra.mxu0 0.0
    %400 = vmatprep.subr.mxu0 0.0
    %401 = vmatpush1.msra.mxu0 0.0
    %402 = vmatprep.subr.mxu0 0.0
    %403 = vmatpush1.msra.mxu0 0.0
    %404 = vmatprep.subr.mxu0 0.0
    %405 = vmatpush1.msra.mxu0 0.0
    %406 = vmatprep.subr.mxu0 0.0
    %407 = vmatpush1.msra.mxu0 0.0
    %408 = vmatprep.subr.mxu0 0.0
    %409 = vmatpush1.msra.mxu0 0.0
    %410 = vmatprep.subr.mxu0 0.0
    %411 = vmatpush1.msra.mxu0 0.0
    %412 = vmatprep.subr.mxu0 0.0
    %413 = vmatpush1.msra.mxu0 0.0
    %414 = vmatprep.subr.mxu0 0.0
    %415 = vmatpush1.msra.mxu0 0.0
    %416 = vmatprep.subr.mxu0 0.0
    %417 = vmatpush1.msra.mxu0 0.0
    %418 = vmatprep.subr.mxu0 0.0
    %419 = vmatpush1.msra.mxu0 0.0
    %420 = vmatprep.subr.mxu0 0.0
    %421 = vmatpush1.msra.mxu0 0.0
    %422 = vmatprep.subr.mxu0 0.0
    %423 = vmatpush1.msra.mxu0 0.0
    %424 = vmatprep.subr.mxu0 0.0
    %425 = vmatpush1.msra.mxu0 0.0
    %426 = vmatprep.subr.mxu0 0.0
    %427 = vmatpush1.msra.mxu0 0.0
    %428 = vmatprep.subr.mxu0 0.0
    %429 = vmatpush1.msra.mxu0 0.0
    %430 = vmatprep.subr.mxu0 0.0
    %431 = vmatpush1.msra.mxu0 0.0
    %432 = vmatprep.subr.mxu0 0.0
    %433 = vmatpush1.msra.mxu0 0.0
    %434 = vmatprep.subr.mxu0 0.0
    %435 = vmatpush1.msra.mxu0 0.0
    %436 = vmatprep.subr.mxu0 0.0
    %437 = vmatpush1.msra.mxu0 0.0
    %438 = vmatprep.subr.mxu0 0.0
    %439 = vmatpush1.msra.mxu0 0.0
    %440 = vmatprep.subr.mxu0 0.0
    %441 = vmatpush1.msra.mxu0 0.0
    %442 = vmatprep.mubr.f32.mxu0 0.0
    %443 = vmatmul.mubr.f32.gmra.mrb[0].mxu0 %v210
    %v444 = vpop.f32.mrb[0].mxu0
    %v445 = vadd.f32 0.0, %v444
    %v446 = vpop.f32.mrb[0].mxu0
    %447 = vdwg.mxu0
    %448 = vmatprep.subr.mxu0 0.0
    %449 = vmatpush1.msra.mxu0 %v371
    %450 = vmatprep.subr.mxu0 0.0
    %451 = vmatpush1.msra.mxu0 %v372
    %452 = vmatprep.subr.mxu0 0.0
    %453 = vmatpush1.msra.mxu0 0.0
    %454 = vmatprep.subr.mxu0 0.0
    %455 = vmatpush1.msra.mxu0 0.0
    %456 = vmatprep.subr.mxu0 0.0
    %457 = vmatpush1.msra.mxu0 0.0
    %458 = vmatprep.subr.mxu0 0.0
    %459 = vmatpush1.msra.mxu0 0.0
    %460 = vmatprep.subr.mxu0 0.0
    %461 = vmatpush1.msra.mxu0 0.0
    %462 = vmatprep.subr.mxu0 0.0
    %463 = vmatpush1.msra.mxu0 0.0
    %464 = vmatprep.subr.mxu0 0.0
    %465 = vmatpush1.msra.mxu0 0.0
    %466 = vmatprep.subr.mxu0 0.0
    %467 = vmatpush1.msra.mxu0 0.0
    %468 = vmatprep.subr.mxu0 0.0
    %469 = vmatpush1.msra.mxu0 0.0
    %470 = vmatprep.subr.mxu0 0.0
    %471 = vmatpush1.msra.mxu0 0.0
    %472 = vmatprep.subr.mxu0 0.0
    %473 = vmatpush1.msra.mxu0 0.0
    %474 = vmatprep.subr.mxu0 0.0
    %475 = vmatpush1.msra.mxu0 0.0
    %476 = vmatprep.subr.mxu0 0.0
    %477 = vmatpush1.msra.mxu0 0.0
    %478 = vmatprep.subr.mxu0 0.0
    %479 = vmatpush1.msra.mxu0 0.0
    %480 = vmatprep.subr.mxu0 0.0
    %481 = vmatpush1.msra.mxu0 0.0
    %482 = vmatprep.subr.mxu0 0.0
    %483 = vmatpush1.msra.mxu0 0.0
    %484 = vmatprep.subr.mxu0 0.0
    %485 = vmatpush1.msra.mxu0 0.0
    %486 = vmatprep.subr.mxu0 0.0
    %487 = vmatpush1.msra.mxu0 0.0
    %488 = vmatprep.subr.mxu0 0.0
    %489 = vmatpush1.msra.mxu0 0.0
    %490 = vmatprep.subr.mxu0 0.0
    %491 = vmatpush1.msra.mxu0 0.0
    %492 = vmatprep.subr.mxu0 0.0
    %493 = vmatpush1.msra.mxu0 0.0
    %494 = vmatprep.subr.mxu0 0.0
    %495 = vmatpush1.msra.mxu0 0.0
    %496 = vmatprep.subr.mxu0 0.0
    %497 = vmatpush1.msra.mxu0 0.0
    %498 = vmatprep.subr.mxu0 0.0
    %499 = vmatpush1.msra.mxu0 0.0
    %500 = vmatprep.subr.mxu0 0.0
    %501 = vmatpush1.msra.mxu0 0.0
    %502 = vmatprep.subr.mxu0 0.0
    %503 = vmatpush1.msra.mxu0 0.0
    %504 = vmatprep.subr.mxu0 0.0
    %505 = vmatpush1.msra.mxu0 0.0
    %506 = vmatprep.subr.mxu0 0.0
    %507 = vmatpush1.msra.mxu0 0.0
    %508 = vmatprep.subr.mxu0 0.0
    %509 = vmatpush1.msra.mxu0 0.0
    %510 = vmatprep.subr.mxu0 0.0
    %511 = vmatpush1.msra.mxu0 0.0
    %512 = vmatprep.mubr.f32.mxu0 0.0
    %513 = vmatmul.mubr.f32.gmra.mrb[0].mxu0 %v284
    %v514 = vpop.f32.mrb[0].mxu0
    %v515 = vadd.f32 %v445, %v514
    %v516 = vpop.f32.mrb[0].mxu0
    %517 = vdwg.mxu0
    %s518 = scalar_lea.vmem [#allocation9], 1
    %v519 = vld [vmem:[%s518] sm:$0x1]
    %v521 = vlaneseq
    %v522 = vshrl.u32 %v521, 7
    %v523 = vsub.s32 0, %v522
    %v524 = vrot.slane %v519, %v523
    %v526 = vadd.f32 %v515, %v524
    %v527 = vxor.u32 %v526, 2147483648
    %v528 = vmul.f32 %v527, 1.442695
    %v529 = vpow.pop %v528
    %v530 = vadd.f32 %v529, 1.0
    %v531 = vrcp.pop %v530
    %v532 = vmul.f32 1.0, %v531
    %s533 = scalar_lea.vmem %s2, 32
    %v534 = vld [vmem:[%s533] sm:$0xff]
    %v535 = vld [vmem:[%s533 + $0x8] sm:$0xff]
    %s536 = scalar_lea.vmem [#allocation9], 2
    %v537 = vld [vmem:[%s536] sm:$0x1]
    %v539 = vlaneseq
    %v540 = vshrl.u32 %v539, 7
    %v541 = vsub.s32 0, %v540
    %v542 = vrot.slane %v537, %v541
    %544 = vmatprep.subr.mxu0 0.0
    %545 = vmatpush1.msra.mxu0 %v534
    %546 = vmatprep.subr.mxu0 0.0
    %547 = vmatpush1.msra.mxu0 %v535
    %548 = vmatprep.subr.mxu0 0.0
    %549 = vmatpush1.msra.mxu0 0.0
    %550 = vmatprep.subr.mxu0 0.0
    %551 = vmatpush1.msra.mxu0 0.0
    %552 = vmatprep.subr.mxu0 0.0
    %553 = vmatpush1.msra.mxu0 0.0
    %554 = vmatprep.subr.mxu0 0.0
    %555 = vmatpush1.msra.mxu0 0.0
    %556 = vmatprep.subr.mxu0 0.0
    %557 = vmatpush1.msra.mxu0 0.0
    %558 = vmatprep.subr.mxu0 0.0
    %559 = vmatpush1.msra.mxu0 0.0
    %560 = vmatprep.subr.mxu0 0.0
    %561 = vmatpush1.msra.mxu0 0.0
    %562 = vmatprep.subr.mxu0 0.0
    %563 = vmatpush1.msra.mxu0 0.0
    %564 = vmatprep.subr.mxu0 0.0
    %565 = vmatpush1.msra.mxu0 0.0
    %566 = vmatprep.subr.mxu0 0.0
    %567 = vmatpush1.msra.mxu0 0.0
    %568 = vmatprep.subr.mxu0 0.0
    %569 = vmatpush1.msra.mxu0 0.0
    %570 = vmatprep.subr.mxu0 0.0
    %571 = vmatpush1.msra.mxu0 0.0
    %572 = vmatprep.subr.mxu0 0.0
    %573 = vmatpush1.msra.mxu0 0.0
    %574 = vmatprep.subr.mxu0 0.0
    %575 = vmatpush1.msra.mxu0 0.0
    %576 = vmatprep.subr.mxu0 0.0
    %577 = vmatpush1.msra.mxu0 0.0
    %578 = vmatprep.subr.mxu0 0.0
    %579 = vmatpush1.msra.mxu0 0.0
    %580 = vmatprep.subr.mxu0 0.0
    %581 = vmatpush1.msra.mxu0 0.0
    %582 = vmatprep.subr.mxu0 0.0
    %583 = vmatpush1.msra.mxu0 0.0
    %584 = vmatprep.subr.mxu0 0.0
    %585 = vmatpush1.msra.mxu0 0.0
    %586 = vmatprep.subr.mxu0 0.0
    %587 = vmatpush1.msra.mxu0 0.0
    %588 = vmatprep.subr.mxu0 0.0
    %589 = vmatpush1.msra.mxu0 0.0
    %590 = vmatprep.subr.mxu0 0.0
    %591 = vmatpush1.msra.mxu0 0.0
    %592 = vmatprep.subr.mxu0 0.0
    %593 = vmatpush1.msra.mxu0 0.0
    %594 = vmatprep.subr.mxu0 0.0
    %595 = vmatpush1.msra.mxu0 0.0
    %596 = vmatprep.subr.mxu0 0.0
    %597 = vmatpush1.msra.mxu0 0.0
    %598 = vmatprep.subr.mxu0 0.0
    %599 = vmatpush1.msra.mxu0 0.0
    %600 = vmatprep.subr.mxu0 0.0
    %601 = vmatpush1.msra.mxu0 0.0
    %602 = vmatprep.subr.mxu0 0.0
    %603 = vmatpush1.msra.mxu0 0.0
    %604 = vmatprep.subr.mxu0 0.0
    %605 = vmatpush1.msra.mxu0 0.0
    %606 = vmatprep.subr.mxu0 0.0
    %607 = vmatpush1.msra.mxu0 0.0
    %608 = vmatprep.mubr.f32.mxu0 0.0
    %609 = vmatmul.mubr.f32.gmra.mrb[0].mxu0 %v284
    %v610 = vpop.f32.mrb[0].mxu0
    %v611 = vadd.f32 %v542, %v610
    %v612 = vpop.f32.mrb[0].mxu0
    %613 = vdwg.mxu0
    %s614 = scalar_lea.vmem %s3, 64
    %v615 = vld [vmem:[%s614] sm:$0xff]
    %v616 = vld [vmem:[%s614 + $0x8] sm:$0xff]
    %v617 = vld [vmem:[%s614 + $0x10] sm:$0xff]
    %v618 = vld [vmem:[%s614 + $0x18] sm:$0xff]
    %s619 = scalar_lea.vmem [#allocation9], 3
    %v620 = vld [vmem:[%s619] sm:$0x1]
    %v622 = vlaneseq
    %v623 = vshrl.u32 %v622, 7
    %v624 = vsub.s32 0, %v623
    %v625 = vrot.slane %v620, %v624
    %627 = vmatprep.subr.mxu0 0.0
    %628 = vmatpush1.msra.mxu0 %v615
    %629 = vmatprep.subr.mxu0 0.0
    %630 = vmatpush1.msra.mxu0 %v616
    %631 = vmatprep.subr.mxu0 0.0
    %632 = vmatpush1.msra.mxu0 %v617
    %633 = vmatprep.subr.mxu0 0.0
    %634 = vmatpush1.msra.mxu0 %v618
    %635 = vmatprep.subr.mxu0 0.0
    %636 = vmatpush1.msra.mxu0 0.0
    %637 = vmatprep.subr.mxu0 0.0
    %638 = vmatpush1.msra.mxu0 0.0
    %639 = vmatprep.subr.mxu0 0.0
    %640 = vmatpush1.msra.mxu0 0.0
    %641 = vmatprep.subr.mxu0 0.0
    %642 = vmatpush1.msra.mxu0 0.0
    %643 = vmatprep.subr.mxu0 0.0
    %644 = vmatpush1.msra.mxu0 0.0
    %645 = vmatprep.subr.mxu0 0.0
    %646 = vmatpush1.msra.mxu0 0.0
    %647 = vmatprep.subr.mxu0 0.0
    %648 = vmatpush1.msra.mxu0 0.0
    %649 = vmatprep.subr.mxu0 0.0
    %650 = vmatpush1.msra.mxu0 0.0
    %651 = vmatprep.subr.mxu0 0.0
    %652 = vmatpush1.msra.mxu0 0.0
    %653 = vmatprep.subr.mxu0 0.0
    %654 = vmatpush1.msra.mxu0 0.0
    %655 = vmatprep.subr.mxu0 0.0
    %656 = vmatpush1.msra.mxu0 0.0
    %657 = vmatprep.subr.mxu0 0.0
    %658 = vmatpush1.msra.mxu0 0.0
    %659 = vmatprep.subr.mxu0 0.0
    %660 = vmatpush1.msra.mxu0 0.0
    %661 = vmatprep.subr.mxu0 0.0
    %662 = vmatpush1.msra.mxu0 0.0
    %663 = vmatprep.subr.mxu0 0.0
    %664 = vmatpush1.msra.mxu0 0.0
    %665 = vmatprep.subr.mxu0 0.0
    %666 = vmatpush1.msra.mxu0 0.0
    %667 = vmatprep.subr.mxu0 0.0
    %668 = vmatpush1.msra.mxu0 0.0
    %669 = vmatprep.subr.mxu0 0.0
    %670 = vmatpush1.msra.mxu0 0.0
    %671 = vmatprep.subr.mxu0 0.0
    %672 = vmatpush1.msra.mxu0 0.0
    %673 = vmatprep.subr.mxu0 0.0
    %674 = vmatpush1.msra.mxu0 0.0
    %675 = vmatprep.subr.mxu0 0.0
    %676 = vmatpush1.msra.mxu0 0.0
    %677 = vmatprep.subr.mxu0 0.0
    %678 = vmatpush1.msra.mxu0 0.0
    %679 = vmatprep.subr.mxu0 0.0
    %680 = vmatpush1.msra.mxu0 0.0
    %681 = vmatprep.subr.mxu0 0.0
    %682 = vmatpush1.msra.mxu0 0.0
    %683 = vmatprep.subr.mxu0 0.0
    %684 = vmatpush1.msra.mxu0 0.0
    %685 = vmatprep.subr.mxu0 0.0
    %686 = vmatpush1.msra.mxu0 0.0
    %687 = vmatprep.subr.mxu0 0.0
    %688 = vmatpush1.msra.mxu0 0.0
    %689 = vmatprep.subr.mxu0 0.0
    %690 = vmatpush1.msra.mxu0 0.0
    %691 = vmatprep.mubr.f32.mxu0 0.0
    %692 = vmatmul.mubr.f32.gmra.mrb[0].mxu0 %v210
    %v693 = vpop.f32.mrb[0].mxu0
    %v694 = vadd.f32 %v625, %v693
    %v695 = vpop.f32.mrb[0].mxu0
    %696 = vdwg.mxu0
    %v697 = vmul.f32 %v369, %v694
    %v698 = vadd.f32 %v611, %v697
    %v699 = vtanh.pop %v698
    %v700 = vsub.f32 1.0, %v532
    %v701 = vmul.f32 %v700, %v699
    %v702 = vmul.f32 %v532, 0.0
    %v703 = vadd.f32 %v701, %v702
    %704 = vst.msk [vmem:[#allocation2] sm:$0xff] %vm200, %v703
    %s705 = scalar_lea.vmem [#allocation7], 56
    %v706 = vld [vmem:[%s705] sm:$0xff]
    %v707 = vld [vmem:[%s5] sm:$0xff]
    %v708 = vld [vmem:[%s5 + $0x8] sm:$0xff]
    %v709 = vld [vmem:[%s5 + $0x10] sm:$0x1]
    %v710 = vld [vmem:[%s6] sm:$0xff]
    %v711 = vld [vmem:[%s6 + $0x8] sm:$0xff]
    %v712 = vld [vmem:[%s6 + $0x10] sm:$0xff]
    %v713 = vld [vmem:[%s6 + $0x18] sm:$0xff]
    %714 = vmatprep.subr.mxu0 0.0
    %715 = vmatpush1.msra.mxu0 %v710
    %716 = vmatprep.subr.mxu0 0.0
    %717 = vmatpush1.msra.mxu0 %v711
    %718 = vmatprep.subr.mxu0 0.0
    %719 = vmatpush1.msra.mxu0 %v712
    %720 = vmatprep.subr.mxu0 0.0
    %721 = vmatpush1.msra.mxu0 %v713
    %722 = vmatprep.subr.mxu0 0.0
    %723 = vmatpush1.msra.mxu0 0.0
    %724 = vmatprep.subr.mxu0 0.0
    %725 = vmatpush1.msra.mxu0 0.0
    %726 = vmatprep.subr.mxu0 0.0
    %727 = vmatpush1.msra.mxu0 0.0
    %728 = vmatprep.subr.mxu0 0.0
    %729 = vmatpush1.msra.mxu0 0.0
    %730 = vmatprep.subr.mxu0 0.0
    %731 = vmatpush1.msra.mxu0 0.0
    %732 = vmatprep.subr.mxu0 0.0
    %733 = vmatpush1.msra.mxu0 0.0
    %734 = vmatprep.subr.mxu0 0.0
    %735 = vmatpush1.msra.mxu0 0.0
    %736 = vmatprep.subr.mxu0 0.0
    %737 = vmatpush1.msra.mxu0 0.0
    %738 = vmatprep.subr.mxu0 0.0
    %739 = vmatpush1.msra.mxu0 0.0
    %740 = vmatprep.subr.mxu0 0.0
    %741 = vmatpush1.msra.mxu0 0.0
    %742 = vmatprep.subr.mxu0 0.0
    %743 = vmatpush1.msra.mxu0 0.0
    %744 = vmatprep.subr.mxu0 0.0
    %745 = vmatpush1.msra.mxu0 0.0
    %746 = vmatprep.subr.mxu0 0.0
    %747 = vmatpush1.msra.mxu0 0.0
    %748 = vmatprep.subr.mxu0 0.0
    %749 = vmatpush1.msra.mxu0 0.0
    %750 = vmatprep.subr.mxu0 0.0
    %751 = vmatpush1.msra.mxu0 0.0
    %752 = vmatprep.subr.mxu0 0.0
    %753 = vmatpush1.msra.mxu0 0.0
    %754 = vmatprep.subr.mxu0 0.0
    %755 = vmatpush1.msra.mxu0 0.0
    %756 = vmatprep.subr.mxu0 0.0
    %757 = vmatpush1.msra.mxu0 0.0
    %758 = vmatprep.subr.mxu0 0.0
    %759 = vmatpush1.msra.mxu0 0.0
    %760 = vmatprep.subr.mxu0 0.0
    %761 = vmatpush1.msra.mxu0 0.0
    %762 = vmatprep.subr.mxu0 0.0
    %763 = vmatpush1.msra.mxu0 0.0
    %764 = vmatprep.subr.mxu0 0.0
    %765 = vmatpush1.msra.mxu0 0.0
    %766 = vmatprep.subr.mxu0 0.0
    %767 = vmatpush1.msra.mxu0 0.0
    %768 = vmatprep.subr.mxu0 0.0
    %769 = vmatpush1.msra.mxu0 0.0
    %770 = vmatprep.subr.mxu0 0.0
    %771 = vmatpush1.msra.mxu0 0.0
    %772 = vmatprep.subr.mxu0 0.0
    %773 = vmatpush1.msra.mxu0 0.0
    %774 = vmatprep.subr.mxu0 0.0
    %775 = vmatpush1.msra.mxu0 0.0
    %776 = vmatprep.subr.mxu0 0.0
    %777 = vmatpush1.msra.mxu0 0.0
    %778 = vmatprep.mubr.f32.mxu0 0.0
    %779 = vmatmul.mubr.f32.gmra.mrb[0].mxu0 %v210
    %v780 = vpop.f32.mrb[0].mxu0
    %v781 = vadd.f32 0.0, %v780
    %v782 = vpop.f32.mrb[0].mxu0
    %783 = vdwg.mxu0
    %vm784 = vcmask 138240
    %v786 = vsel %vm784, %v706, 0
    %vm788 = vcmask 1040384
    %v790 = vsel %vm788, %v709, 0
    %792 = vmatprep.subr.mxu0 0.0
    %793 = vmatpush1.msra.mxu0 %v707
    %794 = vmatprep.subr.mxu0 0.0
    %795 = vmatpush1.msra.mxu0 %v708
    %796 = vmatprep.subr.mxu0 0.0
    %797 = vmatpush1.msra.mxu0 %v790
    %798 = vmatprep.subr.mxu0 0.0
    %799 = vmatpush1.msra.mxu0 0.0
    %800 = vmatprep.subr.mxu0 0.0
    %801 = vmatpush1.msra.mxu0 0.0
    %802 = vmatprep.subr.mxu0 0.0
    %803 = vmatpush1.msra.mxu0 0.0
    %804 = vmatprep.subr.mxu0 0.0
    %805 = vmatpush1.msra.mxu0 0.0
    %806 = vmatprep.subr.mxu0 0.0
    %807 = vmatpush1.msra.mxu0 0.0
    %808 = vmatprep.subr.mxu0 0.0
    %809 = vmatpush1.msra.mxu0 0.0
    %810 = vmatprep.subr.mxu0 0.0
    %811 = vmatpush1.msra.mxu0 0.0
    %812 = vmatprep.subr.mxu0 0.0
    %813 = vmatpush1.msra.mxu0 0.0
    %814 = vmatprep.subr.mxu0 0.0
    %815 = vmatpush1.msra.mxu0 0.0
    %816 = vmatprep.subr.mxu0 0.0
    %817 = vmatpush1.msra.mxu0 0.0
    %818 = vmatprep.subr.mxu0 0.0
    %819 = vmatpush1.msra.mxu0 0.0
    %820 = vmatprep.subr.mxu0 0.0
    %821 = vmatpush1.msra.mxu0 0.0
    %822 = vmatprep.subr.mxu0 0.0
    %823 = vmatpush1.msra.mxu0 0.0
    %824 = vmatprep.subr.mxu0 0.0
    %825 = vmatpush1.msra.mxu0 0.0
    %826 = vmatprep.subr.mxu0 0.0
    %827 = vmatpush1.msra.mxu0 0.0
    %828 = vmatprep.subr.mxu0 0.0
    %829 = vmatpush1.msra.mxu0 0.0
    %830 = vmatprep.subr.mxu0 0.0
    %831 = vmatpush1.msra.mxu0 0.0
    %832 = vmatprep.subr.mxu0 0.0
    %833 = vmatpush1.msra.mxu0 0.0
    %834 = vmatprep.subr.mxu0 0.0
    %835 = vmatpush1.msra.mxu0 0.0
    %836 = vmatprep.subr.mxu0 0.0
    %837 = vmatpush1.msra.mxu0 0.0
    %838 = vmatprep.subr.mxu0 0.0
    %839 = vmatpush1.msra.mxu0 0.0
    %840 = vmatprep.subr.mxu0 0.0
    %841 = vmatpush1.msra.mxu0 0.0
    %842 = vmatprep.subr.mxu0 0.0
    %843 = vmatpush1.msra.mxu0 0.0
    %844 = vmatprep.subr.mxu0 0.0
    %845 = vmatpush1.msra.mxu0 0.0
    %846 = vmatprep.subr.mxu0 0.0
    %847 = vmatpush1.msra.mxu0 0.0
    %848 = vmatprep.subr.mxu0 0.0
    %849 = vmatpush1.msra.mxu0 0.0
    %850 = vmatprep.subr.mxu0 0.0
    %851 = vmatpush1.msra.mxu0 0.0
    %852 = vmatprep.subr.mxu0 0.0
    %853 = vmatpush1.msra.mxu0 0.0
    %854 = vmatprep.subr.mxu0 0.0
    %855 = vmatpush1.msra.mxu0 0.0
    %856 = vmatprep.mubr.f32.mxu0 0.0
    %857 = vmatmul.mubr.f32.gmra.mrb[0].mxu0 %v786
    %v858 = vpop.f32.mrb[0].mxu0
    %v859 = vadd.f32 %v781, %v858
    %v860 = vpop.f32.mrb[0].mxu0
    %861 = vdwg.mxu0
    %v862 = vld [vmem:[#allocation10] sm:$0x1]
    %v864 = vlaneseq
    %v865 = vshrl.u32 %v864, 7
    %v866 = vsub.s32 0, %v865
    %v867 = vrot.slane %v862, %v866
    %v869 = vadd.f32 %v859, %v867
    %v870 = vxor.u32 %v869, 2147483648
    %v871 = vmul.f32 %v870, 1.442695
    %v872 = vpow.pop %v871
    %v873 = vadd.f32 %v872, 1.0
    %v874 = vrcp.pop %v873
    %v875 = vmul.f32 1.0, %v874
    %s876 = scalar_lea.vmem %s5, 24
    %v877 = vld [vmem:[%s876] sm:$0xff]
    %v878 = vld [vmem:[%s876 + $0x8] sm:$0xff]
    %v879 = vld [vmem:[%s876 + $0x10] sm:$0x1]
    %s880 = scalar_lea.vmem %s6, 32
    %v881 = vld [vmem:[%s880] sm:$0xff]
    %v882 = vld [vmem:[%s880 + $0x8] sm:$0xff]
    %v883 = vld [vmem:[%s880 + $0x10] sm:$0xff]
    %v884 = vld [vmem:[%s880 + $0x18] sm:$0xff]
    %885 = vmatprep.subr.mxu0 0.0
    %886 = vmatpush1.msra.mxu0 %v881
    %887 = vmatprep.subr.mxu0 0.0
    %888 = vmatpush1.msra.mxu0 %v882
    %889 = vmatprep.subr.mxu0 0.0
    %890 = vmatpush1.msra.mxu0 %v883
    %891 = vmatprep.subr.mxu0 0.0
    %892 = vmatpush1.msra.mxu0 %v884
    %893 = vmatprep.subr.mxu0 0.0
    %894 = vmatpush1.msra.mxu0 0.0
    %895 = vmatprep.subr.mxu0 0.0
    %896 = vmatpush1.msra.mxu0 0.0
    %897 = vmatprep.subr.mxu0 0.0
    %898 = vmatpush1.msra.mxu0 0.0
    %899 = vmatprep.subr.mxu0 0.0
    %900 = vmatpush1.msra.mxu0 0.0
    %901 = vmatprep.subr.mxu0 0.0
    %902 = vmatpush1.msra.mxu0 0.0
    %903 = vmatprep.subr.mxu0 0.0
    %904 = vmatpush1.msra.mxu0 0.0
    %905 = vmatprep.subr.mxu0 0.0
    %906 = vmatpush1.msra.mxu0 0.0
    %907 = vmatprep.subr.mxu0 0.0
    %908 = vmatpush1.msra.mxu0 0.0
    %909 = vmatprep.subr.mxu0 0.0
    %910 = vmatpush1.msra.mxu0 0.0
    %911 = vmatprep.subr.mxu0 0.0
    %912 = vmatpush1.msra.mxu0 0.0
    %913 = vmatprep.subr.mxu0 0.0
    %914 = vmatpush1.msra.mxu0 0.0
    %915 = vmatprep.subr.mxu0 0.0
    %916 = vmatpush1.msra.mxu0 0.0
    %917 = vmatprep.subr.mxu0 0.0
    %918 = vmatpush1.msra.mxu0 0.0
    %919 = vmatprep.subr.mxu0 0.0
    %920 = vmatpush1.msra.mxu0 0.0
    %921 = vmatprep.subr.mxu0 0.0
    %922 = vmatpush1.msra.mxu0 0.0
    %923 = vmatprep.subr.mxu0 0.0
    %924 = vmatpush1.msra.mxu0 0.0
    %925 = vmatprep.subr.mxu0 0.0
    %926 = vmatpush1.msra.mxu0 0.0
    %927 = vmatprep.subr.mxu0 0.0
    %928 = vmatpush1.msra.mxu0 0.0
    %929 = vmatprep.subr.mxu0 0.0
    %930 = vmatpush1.msra.mxu0 0.0
    %931 = vmatprep.subr.mxu0 0.0
    %932 = vmatpush1.msra.mxu0 0.0
    %933 = vmatprep.subr.mxu0 0.0
    %934 = vmatpush1.msra.mxu0 0.0
    %935 = vmatprep.subr.mxu0 0.0
    %936 = vmatpush1.msra.mxu0 0.0
    %937 = vmatprep.subr.mxu0 0.0
    %938 = vmatpush1.msra.mxu0 0.0
    %939 = vmatprep.subr.mxu0 0.0
    %940 = vmatpush1.msra.mxu0 0.0
    %941 = vmatprep.subr.mxu0 0.0
    %942 = vmatpush1.msra.mxu0 0.0
    %943 = vmatprep.subr.mxu0 0.0
    %944 = vmatpush1.msra.mxu0 0.0
    %945 = vmatprep.subr.mxu0 0.0
    %946 = vmatpush1.msra.mxu0 0.0
    %947 = vmatprep.subr.mxu0 0.0
    %948 = vmatpush1.msra.mxu0 0.0
    %949 = vmatprep.mubr.f32.mxu0 0.0
    %950 = vmatmul.mubr.f32.gmra.mrb[0].mxu0 %v210
    %v951 = vpop.f32.mrb[0].mxu0
    %v952 = vadd.f32 0.0, %v951
    %v953 = vpop.f32.mrb[0].mxu0
    %954 = vdwg.mxu0
    %v956 = vsel %vm788, %v879, 0
    %958 = vmatprep.subr.mxu0 0.0
    %959 = vmatpush1.msra.mxu0 %v877
    %960 = vmatprep.subr.mxu0 0.0
    %961 = vmatpush1.msra.mxu0 %v878
    %962 = vmatprep.subr.mxu0 0.0
    %963 = vmatpush1.msra.mxu0 %v956
    %964 = vmatprep.subr.mxu0 0.0
    %965 = vmatpush1.msra.mxu0 0.0
    %966 = vmatprep.subr.mxu0 0.0
    %967 = vmatpush1.msra.mxu0 0.0
    %968 = vmatprep.subr.mxu0 0.0
    %969 = vmatpush1.msra.mxu0 0.0
    %970 = vmatprep.subr.mxu0 0.0
    %971 = vmatpush1.msra.mxu0 0.0
    %972 = vmatprep.subr.mxu0 0.0
    %973 = vmatpush1.msra.mxu0 0.0
    %974 = vmatprep.subr.mxu0 0.0
    %975 = vmatpush1.msra.mxu0 0.0
    %976 = vmatprep.subr.mxu0 0.0
    %977 = vmatpush1.msra.mxu0 0.0
    %978 = vmatprep.subr.mxu0 0.0
    %979 = vmatpush1.msra.mxu0 0.0
    %980 = vmatprep.subr.mxu0 0.0
    %981 = vmatpush1.msra.mxu0 0.0
    %982 = vmatprep.subr.mxu0 0.0
    %983 = vmatpush1.msra.mxu0 0.0
    %984 = vmatprep.subr.mxu0 0.0
    %985 = vmatpush1.msra.mxu0 0.0
    %986 = vmatprep.subr.mxu0 0.0
    %987 = vmatpush1.msra.mxu0 0.0
    %988 = vmatprep.subr.mxu0 0.0
    %989 = vmatpush1.msra.mxu0 0.0
    %990 = vmatprep.subr.mxu0 0.0
    %991 = vmatpush1.msra.mxu0 0.0
    %992 = vmatprep.subr.mxu0 0.0
    %993 = vmatpush1.msra.mxu0 0.0
    %994 = vmatprep.subr.mxu0 0.0
    %995 = vmatpush1.msra.mxu0 0.0
    %996 = vmatprep.subr.mxu0 0.0
    %997 = vmatpush1.msra.mxu0 0.0
    %998 = vmatprep.subr.mxu0 0.0
    %999 = vmatpush1.msra.mxu0 0.0
    %1000 = vmatprep.subr.mxu0 0.0
    %1001 = vmatpush1.msra.mxu0 0.0
    %1002 = vmatprep.subr.mxu0 0.0
    %1003 = vmatpush1.msra.mxu0 0.0
    %1004 = vmatprep.subr.mxu0 0.0
    %1005 = vmatpush1.msra.mxu0 0.0
    %1006 = vmatprep.subr.mxu0 0.0
    %1007 = vmatpush1.msra.mxu0 0.0
    %1008 = vmatprep.subr.mxu0 0.0
    %1009 = vmatpush1.msra.mxu0 0.0
    %1010 = vmatprep.subr.mxu0 0.0
    %1011 = vmatpush1.msra.mxu0 0.0
    %1012 = vmatprep.subr.mxu0 0.0
    %1013 = vmatpush1.msra.mxu0 0.0
    %1014 = vmatprep.subr.mxu0 0.0
    %1015 = vmatpush1.msra.mxu0 0.0
    %1016 = vmatprep.subr.mxu0 0.0
    %1017 = vmatpush1.msra.mxu0 0.0
    %1018 = vmatprep.subr.mxu0 0.0
    %1019 = vmatpush1.msra.mxu0 0.0
    %1020 = vmatprep.subr.mxu0 0.0
    %1021 = vmatpush1.msra.mxu0 0.0
    %1022 = vmatprep.mubr.f32.mxu0 0.0
    %1023 = vmatmul.mubr.f32.gmra.mrb[0].mxu0 %v786
    %v1024 = vpop.f32.mrb[0].mxu0
    %v1025 = vadd.f32 %v952, %v1024
    %v1026 = vpop.f32.mrb[0].mxu0
    %1027 = vdwg.mxu0
    %s1028 = scalar_lea.vmem [#allocation10], 1
    %v1029 = vld [vmem:[%s1028] sm:$0x1]
    %v1031 = vlaneseq
    %v1032 = vshrl.u32 %v1031, 7
    %v1033 = vsub.s32 0, %v1032
    %v1034 = vrot.slane %v1029, %v1033
    %v1036 = vadd.f32 %v1025, %v1034
    %v1037 = vxor.u32 %v1036, 2147483648
    %v1038 = vmul.f32 %v1037, 1.442695
    %v1039 = vpow.pop %v1038
    %v1040 = vadd.f32 %v1039, 1.0
    %v1041 = vrcp.pop %v1040
    %v1042 = vmul.f32 1.0, %v1041
    %s1043 = scalar_lea.vmem %s5, 48
    %v1044 = vld [vmem:[%s1043] sm:$0xff]
    %v1045 = vld [vmem:[%s1043 + $0x8] sm:$0xff]
    %v1046 = vld [vmem:[%s1043 + $0x10] sm:$0x1]
    %s1047 = scalar_lea.vmem [#allocation10], 2
    %v1048 = vld [vmem:[%s1047] sm:$0x1]
    %v1050 = vlaneseq
    %v1051 = vshrl.u32 %v1050, 7
    %v1052 = vsub.s32 0, %v1051
    %v1053 = vrot.slane %v1048, %v1052
    %v1056 = vsel %vm788, %v1046, 0
    %1058 = vmatprep.subr.mxu0 0.0
    %1059 = vmatpush1.msra.mxu0 %v1044
    %1060 = vmatprep.subr.mxu0 0.0
    %1061 = vmatpush1.msra.mxu0 %v1045
    %1062 = vmatprep.subr.mxu0 0.0
    %1063 = vmatpush1.msra.mxu0 %v1056
    %1064 = vmatprep.subr.mxu0 0.0
    %1065 = vmatpush1.msra.mxu0 0.0
    %1066 = vmatprep.subr.mxu0 0.0
    %1067 = vmatpush1.msra.mxu0 0.0
    %1068 = vmatprep.subr.mxu0 0.0
    %1069 = vmatpush1.msra.mxu0 0.0
    %1070 = vmatprep.subr.mxu0 0.0
    %1071 = vmatpush1.msra.mxu0 0.0
    %1072 = vmatprep.subr.mxu0 0.0
    %1073 = vmatpush1.msra.mxu0 0.0
    %1074 = vmatprep.subr.mxu0 0.0
    %1075 = vmatpush1.msra.mxu0 0.0
    %1076 = vmatprep.subr.mxu0 0.0
    %1077 = vmatpush1.msra.mxu0 0.0
    %1078 = vmatprep.subr.mxu0 0.0
    %1079 = vmatpush1.msra.mxu0 0.0
    %1080 = vmatprep.subr.mxu0 0.0
    %1081 = vmatpush1.msra.mxu0 0.0
    %1082 = vmatprep.subr.mxu0 0.0
    %1083 = vmatpush1.msra.mxu0 0.0
    %1084 = vmatprep.subr.mxu0 0.0
    %1085 = vmatpush1.msra.mxu0 0.0
    %1086 = vmatprep.subr.mxu0 0.0
    %1087 = vmatpush1.msra.mxu0 0.0
    %1088 = vmatprep.subr.mxu0 0.0
    %1089 = vmatpush1.msra.mxu0 0.0
    %1090 = vmatprep.subr.mxu0 0.0
    %1091 = vmatpush1.msra.mxu0 0.0
    %1092 = vmatprep.subr.mxu0 0.0
    %1093 = vmatpush1.msra.mxu0 0.0
    %1094 = vmatprep.subr.mxu0 0.0
    %1095 = vmatpush1.msra.mxu0 0.0
    %1096 = vmatprep.subr.mxu0 0.0
    %1097 = vmatpush1.msra.mxu0 0.0
    %1098 = vmatprep.subr.mxu0 0.0
    %1099 = vmatpush1.msra.mxu0 0.0
    %1100 = vmatprep.subr.mxu0 0.0
    %1101 = vmatpush1.msra.mxu0 0.0
    %1102 = vmatprep.subr.mxu0 0.0
    %1103 = vmatpush1.msra.mxu0 0.0
    %1104 = vmatprep.subr.mxu0 0.0
    %1105 = vmatpush1.msra.mxu0 0.0
    %1106 = vmatprep.subr.mxu0 0.0
    %1107 = vmatpush1.msra.mxu0 0.0
    %1108 = vmatprep.subr.mxu0 0.0
    %1109 = vmatpush1.msra.mxu0 0.0
    %1110 = vmatprep.subr.mxu0 0.0
    %1111 = vmatpush1.msra.mxu0 0.0
    %1112 = vmatprep.subr.mxu0 0.0
    %1113 = vmatpush1.msra.mxu0 0.0
    %1114 = vmatprep.subr.mxu0 0.0
    %1115 = vmatpush1.msra.mxu0 0.0
    %1116 = vmatprep.subr.mxu0 0.0
    %1117 = vmatpush1.msra.mxu0 0.0
    %1118 = vmatprep.subr.mxu0 0.0
    %1119 = vmatpush1.msra.mxu0 0.0
    %1120 = vmatprep.subr.mxu0 0.0
    %1121 = vmatpush1.msra.mxu0 0.0
    %1122 = vmatprep.mubr.f32.mxu0 0.0
    %1123 = vmatmul.mubr.f32.gmra.mrb[0].mxu0 %v786
    %v1124 = vpop.f32.mrb[0].mxu0
    %v1125 = vadd.f32 %v1053, %v1124
    %v1126 = vpop.f32.mrb[0].mxu0
    %1127 = vdwg.mxu0
    %s1128 = scalar_lea.vmem %s6, 64
    %v1129 = vld [vmem:[%s1128] sm:$0xff]
    %v1130 = vld [vmem:[%s1128 + $0x8] sm:$0xff]
    %v1131 = vld [vmem:[%s1128 + $0x10] sm:$0xff]
    %v1132 = vld [vmem:[%s1128 + $0x18] sm:$0xff]
    %s1133 = scalar_lea.vmem [#allocation10], 3
    %v1134 = vld [vmem:[%s1133] sm:$0x1]
    %v1136 = vlaneseq
    %v1137 = vshrl.u32 %v1136, 7
    %v1138 = vsub.s32 0, %v1137
    %v1139 = vrot.slane %v1134, %v1138
    %1141 = vmatprep.subr.mxu0 0.0
    %1142 = vmatpush1.msra.mxu0 %v1129
    %1143 = vmatprep.subr.mxu0 0.0
    %1144 = vmatpush1.msra.mxu0 %v1130
    %1145 = vmatprep.subr.mxu0 0.0
    %1146 = vmatpush1.msra.mxu0 %v1131
    %1147 = vmatprep.subr.mxu0 0.0
    %1148 = vmatpush1.msra.mxu0 %v1132
    %1149 = vmatprep.subr.mxu0 0.0
    %1150 = vmatpush1.msra.mxu0 0.0
    %1151 = vmatprep.subr.mxu0 0.0
    %1152 = vmatpush1.msra.mxu0 0.0
    %1153 = vmatprep.subr.mxu0 0.0
    %1154 = vmatpush1.msra.mxu0 0.0
    %1155 = vmatprep.subr.mxu0 0.0
    %1156 = vmatpush1.msra.mxu0 0.0
    %1157 = vmatprep.subr.mxu0 0.0
    %1158 = vmatpush1.msra.mxu0 0.0
    %1159 = vmatprep.subr.mxu0 0.0
    %1160 = vmatpush1.msra.mxu0 0.0
    %1161 = vmatprep.subr.mxu0 0.0
    %1162 = vmatpush1.msra.mxu0 0.0
    %1163 = vmatprep.subr.mxu0 0.0
    %1164 = vmatpush1.msra.mxu0 0.0
    %1165 = vmatprep.subr.mxu0 0.0
    %1166 = vmatpush1.msra.mxu0 0.0
    %1167 = vmatprep.subr.mxu0 0.0
    %1168 = vmatpush1.msra.mxu0 0.0
    %1169 = vmatprep.subr.mxu0 0.0
    %1170 = vmatpush1.msra.mxu0 0.0
    %1171 = vmatprep.subr.mxu0 0.0
    %1172 = vmatpush1.msra.mxu0 0.0
    %1173 = vmatprep.subr.mxu0 0.0
    %1174 = vmatpush1.msra.mxu0 0.0
    %1175 = vmatprep.subr.mxu0 0.0
    %1176 = vmatpush1.msra.mxu0 0.0
    %1177 = vmatprep.subr.mxu0 0.0
    %1178 = vmatpush1.msra.mxu0 0.0
    %1179 = vmatprep.subr.mxu0 0.0
    %1180 = vmatpush1.msra.mxu0 0.0
    %1181 = vmatprep.subr.mxu0 0.0
    %1182 = vmatpush1.msra.mxu0 0.0
    %1183 = vmatprep.subr.mxu0 0.0
    %1184 = vmatpush1.msra.mxu0 0.0
    %1185 = vmatprep.subr.mxu0 0.0
    %1186 = vmatpush1.msra.mxu0 0.0
    %1187 = vmatprep.subr.mxu0 0.0
    %1188 = vmatpush1.msra.mxu0 0.0
    %1189 = vmatprep.subr.mxu0 0.0
    %1190 = vmatpush1.msra.mxu0 0.0
    %1191 = vmatprep.subr.mxu0 0.0
    %1192 = vmatpush1.msra.mxu0 0.0
    %1193 = vmatprep.subr.mxu0 0.0
    %1194 = vmatpush1.msra.mxu0 0.0
    %1195 = vmatprep.subr.mxu0 0.0
    %1196 = vmatpush1.msra.mxu0 0.0
    %1197 = vmatprep.subr.mxu0 0.0
    %1198 = vmatpush1.msra.mxu0 0.0
    %1199 = vmatprep.subr.mxu0 0.0
    %1200 = vmatpush1.msra.mxu0 0.0
    %1201 = vmatprep.subr.mxu0 0.0
    %1202 = vmatpush1.msra.mxu0 0.0
    %1203 = vmatprep.subr.mxu0 0.0
    %1204 = vmatpush1.msra.mxu0 0.0
    %1205 = vmatprep.mubr.f32.mxu0 0.0
    %1206 = vmatmul.mubr.f32.gmra.mrb[0].mxu0 %v210
    %v1207 = vpop.f32.mrb[0].mxu0
    %v1208 = vadd.f32 %v1139, %v1207
    %v1209 = vpop.f32.mrb[0].mxu0
    %1210 = vdwg.mxu0
    %v1211 = vmul.f32 %v875, %v1208
    %v1212 = vadd.f32 %v1125, %v1211
    %v1213 = vtanh.pop %v1212
    %v1214 = vsub.f32 1.0, %v1042
    %v1215 = vmul.f32 %v1214, %v1213
    %v1216 = vmul.f32 %v1042, 0.0
    %v1217 = vadd.f32 %v1215, %v1216
    %s1218 = scalar_lea.vmem [#allocation3], 56
    %1219 = vst.msk [vmem:[%s1218] sm:$0xff] %vm200, %v1217
    %s1220 = scalar_lea.vmem [#allocation4], 8
    %v1221 = vld [vmem:[%s1220] sm:$0xff]
    %v1222 = vld [vmem:[%s2] sm:$0xff]
    %v1223 = vld [vmem:[%s2 + $0x8] sm:$0xff]
    %v1224 = vld [vmem:[%s3] sm:$0xff]
    %v1225 = vld [vmem:[%s3 + $0x8] sm:$0xff]
    %v1226 = vld [vmem:[%s3 + $0x10] sm:$0xff]
    %v1227 = vld [vmem:[%s3 + $0x18] sm:$0xff]
    %v1229 = vsel %vm200, %v703, 0
    %1231 = vmatprep.subr.mxu0 0.0
    %1232 = vmatpush1.msra.mxu0 %v1224
    %1233 = vmatprep.subr.mxu0 0.0
    %1234 = vmatpush1.msra.mxu0 %v1225
    %1235 = vmatprep.subr.mxu0 0.0
    %1236 = vmatpush1.msra.mxu0 %v1226
    %1237 = vmatprep.subr.mxu0 0.0
    %1238 = vmatpush1.msra.mxu0 %v1227
    %1239 = vmatprep.subr.mxu0 0.0
    %1240 = vmatpush1.msra.mxu0 0.0
    %1241 = vmatprep.subr.mxu0 0.0
    %1242 = vmatpush1.msra.mxu0 0.0
    %1243 = vmatprep.subr.mxu0 0.0
    %1244 = vmatpush1.msra.mxu0 0.0
    %1245 = vmatprep.subr.mxu0 0.0
    %1246 = vmatpush1.msra.mxu0 0.0
    %1247 = vmatprep.subr.mxu0 0.0
    %1248 = vmatpush1.msra.mxu0 0.0
    %1249 = vmatprep.subr.mxu0 0.0
    %1250 = vmatpush1.msra.mxu0 0.0
    %1251 = vmatprep.subr.mxu0 0.0
    %1252 = vmatpush1.msra.mxu0 0.0
    %1253 = vmatprep.subr.mxu0 0.0
    %1254 = vmatpush1.msra.mxu0 0.0
    %1255 = vmatprep.subr.mxu0 0.0
    %1256 = vmatpush1.msra.mxu0 0.0
    %1257 = vmatprep.subr.mxu0 0.0
    %1258 = vmatpush1.msra.mxu0 0.0
    %1259 = vmatprep.subr.mxu0 0.0
    %1260 = vmatpush1.msra.mxu0 0.0
    %1261 = vmatprep.subr.mxu0 0.0
    %1262 = vmatpush1.msra.mxu0 0.0
    %1263 = vmatprep.subr.mxu0 0.0
    %1264 = vmatpush1.msra.mxu0 0.0
    %1265 = vmatprep.subr.mxu0 0.0
    %1266 = vmatpush1.msra.mxu0 0.0
    %1267 = vmatprep.subr.mxu0 0.0
    %1268 = vmatpush1.msra.mxu0 0.0
    %1269 = vmatprep.subr.mxu0 0.0
    %1270 = vmatpush1.msra.mxu0 0.0
    %1271 = vmatprep.subr.mxu0 0.0
    %1272 = vmatpush1.msra.mxu0 0.0
    %1273 = vmatprep.subr.mxu0 0.0
    %1274 = vmatpush1.msra.mxu0 0.0
    %1275 = vmatprep.subr.mxu0 0.0
    %1276 = vmatpush1.msra.mxu0 0.0
    %1277 = vmatprep.subr.mxu0 0.0
    %1278 = vmatpush1.msra.mxu0 0.0
    %1279 = vmatprep.subr.mxu0 0.0
    %1280 = vmatpush1.msra.mxu0 0.0
    %1281 = vmatprep.subr.mxu0 0.0
    %1282 = vmatpush1.msra.mxu0 0.0
    %1283 = vmatprep.subr.mxu0 0.0
    %1284 = vmatpush1.msra.mxu0 0.0
    %1285 = vmatprep.subr.mxu0 0.0
    %1286 = vmatpush1.msra.mxu0 0.0
    %1287 = vmatprep.subr.mxu0 0.0
    %1288 = vmatpush1.msra.mxu0 0.0
    %1289 = vmatprep.subr.mxu0 0.0
    %1290 = vmatpush1.msra.mxu0 0.0
    %1291 = vmatprep.subr.mxu0 0.0
    %1292 = vmatpush1.msra.mxu0 0.0
    %1293 = vmatprep.subr.mxu0 0.0
    %1294 = vmatpush1.msra.mxu0 0.0
    %1295 = vmatprep.mubr.f32.mxu0 0.0
    %1296 = vmatmul.mubr.f32.gmra.mrb[0].mxu0 %v1229
    %v1297 = vpop.f32.mrb[0].mxu0
    %v1298 = vadd.f32 0.0, %v1297
    %v1299 = vpop.f32.mrb[0].mxu0
    %1300 = vdwg.mxu0
    %v1302 = vsel %vm282, %v1221, 0
    %1304 = vmatprep.subr.mxu0 0.0
    %1305 = vmatpush1.msra.mxu0 %v1222
    %1306 = vmatprep.subr.mxu0 0.0
    %1307 = vmatpush1.msra.mxu0 %v1223
    %1308 = vmatprep.subr.mxu0 0.0
    %1309 = vmatpush1.msra.mxu0 0.0
    %1310 = vmatprep.subr.mxu0 0.0
    %1311 = vmatpush1.msra.mxu0 0.0
    %1312 = vmatprep.subr.mxu0 0.0
    %1313 = vmatpush1.msra.mxu0 0.0
    %1314 = vmatprep.subr.mxu0 0.0
    %1315 = vmatpush1.msra.mxu0 0.0
    %1316 = vmatprep.subr.mxu0 0.0
    %1317 = vmatpush1.msra.mxu0 0.0
    %1318 = vmatprep.subr.mxu0 0.0
    %1319 = vmatpush1.msra.mxu0 0.0
    %1320 = vmatprep.subr.mxu0 0.0
    %1321 = vmatpush1.msra.mxu0 0.0
    %1322 = vmatprep.subr.mxu0 0.0
    %1323 = vmatpush1.msra.mxu0 0.0
    %1324 = vmatprep.subr.mxu0 0.0
    %1325 = vmatpush1.msra.mxu0 0.0
    %1326 = vmatprep.subr.mxu0 0.0
    %1327 = vmatpush1.msra.mxu0 0.0
    %1328 = vmatprep.subr.mxu0 0.0
    %1329 = vmatpush1.msra.mxu0 0.0
    %1330 = vmatprep.subr.mxu0 0.0
    %1331 = vmatpush1.msra.mxu0 0.0
    %1332 = vmatprep.subr.mxu0 0.0
    %1333 = vmatpush1.msra.mxu0 0.0
    %1334 = vmatprep.subr.mxu0 0.0
    %1335 = vmatpush1.msra.mxu0 0.0
    %1336 = vmatprep.subr.mxu0 0.0
    %1337 = vmatpush1.msra.mxu0 0.0
    %1338 = vmatprep.subr.mxu0 0.0
    %1339 = vmatpush1.msra.mxu0 0.0
    %1340 = vmatprep.subr.mxu0 0.0
    %1341 = vmatpush1.msra.mxu0 0.0
    %1342 = vmatprep.subr.mxu0 0.0
    %1343 = vmatpush1.msra.mxu0 0.0
    %1344 = vmatprep.subr.mxu0 0.0
    %1345 = vmatpush1.msra.mxu0 0.0
    %1346 = vmatprep.subr.mxu0 0.0
    %1347 = vmatpush1.msra.mxu0 0.0
    %1348 = vmatprep.subr.mxu0 0.0
    %1349 = vmatpush1.msra.mxu0 0.0
    %1350 = vmatprep.subr.mxu0 0.0
    %1351 = vmatpush1.msra.mxu0 0.0
    %1352 = vmatprep.subr.mxu0 0.0
    %1353 = vmatpush1.msra.mxu0 0.0
    %1354 = vmatprep.subr.mxu0 0.0
    %1355 = vmatpush1.msra.mxu0 0.0
    %1356 = vmatprep.subr.mxu0 0.0
    %1357 = vmatpush1.msra.mxu0 0.0
    %1358 = vmatprep.subr.mxu0 0.0
    %1359 = vmatpush1.msra.mxu0 0.0
    %1360 = vmatprep.subr.mxu0 0.0
    %1361 = vmatpush1.msra.mxu0 0.0
    %1362 = vmatprep.subr.mxu0 0.0
    %1363 = vmatpush1.msra.mxu0 0.0
    %1364 = vmatprep.subr.mxu0 0.0
    %1365 = vmatpush1.msra.mxu0 0.0
    %1366 = vmatprep.subr.mxu0 0.0
    %1367 = vmatpush1.msra.mxu0 0.0
    %1368 = vmatprep.mubr.f32.mxu0 0.0
    %1369 = vmatmul.mubr.f32.gmra.mrb[0].mxu0 %v1302
    %v1370 = vpop.f32.mrb[0].mxu0
    %v1371 = vadd.f32 %v1298, %v1370
    %v1372 = vpop.f32.mrb[0].mxu0
    %1373 = vdwg.mxu0
    %v1374 = vld [vmem:[#allocation9] sm:$0x1]
    %v1376 = vlaneseq
    %v1377 = vshrl.u32 %v1376, 7
    %v1378 = vsub.s32 0, %v1377
    %v1379 = vrot.slane %v1374, %v1378
    %v1381 = vadd.f32 %v1371, %v1379
    %v1382 = vxor.u32 %v1381, 2147483648
    %v1383 = vmul.f32 %v1382, 1.442695
    %v1384 = vpow.pop %v1383
    %v1385 = vadd.f32 %v1384, 1.0
    %v1386 = vrcp.pop %v1385
    %v1387 = vmul.f32 1.0, %v1386
    %v1388 = vld [vmem:[%s370] sm:$0xff]
    %v1389 = vld [vmem:[%s370 + $0x8] sm:$0xff]
    %v1390 = vld [vmem:[%s373] sm:$0xff]
    %v1391 = vld [vmem:[%s373 + $0x8] sm:$0xff]
    %v1392 = vld [vmem:[%s373 + $0x10] sm:$0xff]
    %v1393 = vld [vmem:[%s373 + $0x18] sm:$0xff]
    %1394 = vmatprep.subr.mxu0 0.0
    %1395 = vmatpush1.msra.mxu0 %v1390
    %1396 = vmatprep.subr.mxu0 0.0
    %1397 = vmatpush1.msra.mxu0 %v1391
    %1398 = vmatprep.subr.mxu0 0.0
    %1399 = vmatpush1.msra.mxu0 %v1392
    %1400 = vmatprep.subr.mxu0 0.0
    %1401 = vmatpush1.msra.mxu0 %v1393
    %1402 = vmatprep.subr.mxu0 0.0
    %1403 = vmatpush1.msra.mxu0 0.0
    %1404 = vmatprep.subr.mxu0 0.0
    %1405 = vmatpush1.msra.mxu0 0.0
    %1406 = vmatprep.subr.mxu0 0.0
    %1407 = vmatpush1.msra.mxu0 0.0
    %1408 = vmatprep.subr.mxu0 0.0
    %1409 = vmatpush1.msra.mxu0 0.0
    %1410 = vmatprep.subr.mxu0 0.0
    %1411 = vmatpush1.msra.mxu0 0.0
    %1412 = vmatprep.subr.mxu0 0.0
    %1413 = vmatpush1.msra.mxu0 0.0
    %1414 = vmatprep.subr.mxu0 0.0
    %1415 = vmatpush1.msra.mxu0 0.0
    %1416 = vmatprep.subr.mxu0 0.0
    %1417 = vmatpush1.msra.mxu0 0.0
    %1418 = vmatprep.subr.mxu0 0.0
    %1419 = vmatpush1.msra.mxu0 0.0
    %1420 = vmatprep.subr.mxu0 0.0
    %1421 = vmatpush1.msra.mxu0 0.0
    %1422 = vmatprep.subr.mxu0 0.0
    %1423 = vmatpush1.msra.mxu0 0.0
    %1424 = vmatprep.subr.mxu0 0.0
    %1425 = vmatpush1.msra.mxu0 0.0
    %1426 = vmatprep.subr.mxu0 0.0
    %1427 = vmatpush1.msra.mxu0 0.0
    %1428 = vmatprep.subr.mxu0 0.0
    %1429 = vmatpush1.msra.mxu0 0.0
    %1430 = vmatprep.subr.mxu0 0.0
    %1431 = vmatpush1.msra.mxu0 0.0
    %1432 = vmatprep.subr.mxu0 0.0
    %1433 = vmatpush1.msra.mxu0 0.0
    %1434 = vmatprep.subr.mxu0 0.0
    %1435 = vmatpush1.msra.mxu0 0.0
    %1436 = vmatprep.subr.mxu0 0.0
    %1437 = vmatpush1.msra.mxu0 0.0
    %1438 = vmatprep.subr.mxu0 0.0
    %1439 = vmatpush1.msra.mxu0 0.0
    %1440 = vmatprep.subr.mxu0 0.0
    %1441 = vmatpush1.msra.mxu0 0.0
    %1442 = vmatprep.subr.mxu0 0.0
    %1443 = vmatpush1.msra.mxu0 0.0
    %1444 = vmatprep.subr.mxu0 0.0
    %1445 = vmatpush1.msra.mxu0 0.0
    %1446 = vmatprep.subr.mxu0 0.0
    %1447 = vmatpush1.msra.mxu0 0.0
    %1448 = vmatprep.subr.mxu0 0.0
    %1449 = vmatpush1.msra.mxu0 0.0
    %1450 = vmatprep.subr.mxu0 0.0
    %1451 = vmatpush1.msra.mxu0 0.0
    %1452 = vmatprep.subr.mxu0 0.0
    %1453 = vmatpush1.msra.mxu0 0.0
    %1454 = vmatprep.subr.mxu0 0.0
    %1455 = vmatpush1.msra.mxu0 0.0
    %1456 = vmatprep.subr.mxu0 0.0
    %1457 = vmatpush1.msra.mxu0 0.0
    %1458 = vmatprep.mubr.f32.mxu0 0.0
    %1459 = vmatmul.mubr.f32.gmra.mrb[0].mxu0 %v1229
    %v1460 = vpop.f32.mrb[0].mxu0
    %v1461 = vadd.f32 0.0, %v1460
    %v1462 = vpop.f32.mrb[0].mxu0
    %1463 = vdwg.mxu0
    %1464 = vmatprep.subr.mxu0 0.0
    %1465 = vmatpush1.msra.mxu0 %v1388
    %1466 = vmatprep.subr.mxu0 0.0
    %1467 = vmatpush1.msra.mxu0 %v1389
    %1468 = vmatprep.subr.mxu0 0.0
    %1469 = vmatpush1.msra.mxu0 0.0
    %1470 = vmatprep.subr.mxu0 0.0
    %1471 = vmatpush1.msra.mxu0 0.0
    %1472 = vmatprep.subr.mxu0 0.0
    %1473 = vmatpush1.msra.mxu0 0.0
    %1474 = vmatprep.subr.mxu0 0.0
    %1475 = vmatpush1.msra.mxu0 0.0
    %1476 = vmatprep.subr.mxu0 0.0
    %1477 = vmatpush1.msra.mxu0 0.0
    %1478 = vmatprep.subr.mxu0 0.0
    %1479 = vmatpush1.msra.mxu0 0.0
    %1480 = vmatprep.subr.mxu0 0.0
    %1481 = vmatpush1.msra.mxu0 0.0
    %1482 = vmatprep.subr.mxu0 0.0
    %1483 = vmatpush1.msra.mxu0 0.0
    %1484 = vmatprep.subr.mxu0 0.0
    %1485 = vmatpush1.msra.mxu0 0.0
    %1486 = vmatprep.subr.mxu0 0.0
    %1487 = vmatpush1.msra.mxu0 0.0
    %1488 = vmatprep.subr.mxu0 0.0
    %1489 = vmatpush1.msra.mxu0 0.0
    %1490 = vmatprep.subr.mxu0 0.0
    %1491 = vmatpush1.msra.mxu0 0.0
    %1492 = vmatprep.subr.mxu0 0.0
    %1493 = vmatpush1.msra.mxu0 0.0
    %1494 = vmatprep.subr.mxu0 0.0
    %1495 = vmatpush1.msra.mxu0 0.0
    %1496 = vmatprep.subr.mxu0 0.0
    %1497 = vmatpush1.msra.mxu0 0.0
    %1498 = vmatprep.subr.mxu0 0.0
    %1499 = vmatpush1.msra.mxu0 0.0
    %1500 = vmatprep.subr.mxu0 0.0
    %1501 = vmatpush1.msra.mxu0 0.0
    %1502 = vmatprep.subr.mxu0 0.0
    %1503 = vmatpush1.msra.mxu0 0.0
    %1504 = vmatprep.subr.mxu0 0.0
    %1505 = vmatpush1.msra.mxu0 0.0
    %1506 = vmatprep.subr.mxu0 0.0
    %1507 = vmatpush1.msra.mxu0 0.0
    %1508 = vmatprep.subr.mxu0 0.0
    %1509 = vmatpush1.msra.mxu0 0.0
    %1510 = vmatprep.subr.mxu0 0.0
    %1511 = vmatpush1.msra.mxu0 0.0
    %1512 = vmatprep.subr.mxu0 0.0
    %1513 = vmatpush1.msra.mxu0 0.0
    %1514 = vmatprep.subr.mxu0 0.0
    %1515 = vmatpush1.msra.mxu0 0.0
    %1516 = vmatprep.subr.mxu0 0.0
    %1517 = vmatpush1.msra.mxu0 0.0
    %1518 = vmatprep.subr.mxu0 0.0
    %1519 = vmatpush1.msra.mxu0 0.0
    %1520 = vmatprep.subr.mxu0 0.0
    %1521 = vmatpush1.msra.mxu0 0.0
    %1522 = vmatprep.subr.mxu0 0.0
    %1523 = vmatpush1.msra.mxu0 0.0
    %1524 = vmatprep.subr.mxu0 0.0
    %1525 = vmatpush1.msra.mxu0 0.0
    %1526 = vmatprep.subr.mxu0 0.0
    %1527 = vmatpush1.msra.mxu0 0.0
    %1528 = vmatprep.mubr.f32.mxu0 0.0
    %1529 = vmatmul.mubr.f32.gmra.mrb[0].mxu0 %v1302
    %v1530 = vpop.f32.mrb[0].mxu0
    %v1531 = vadd.f32 %v1461, %v1530
    %v1532 = vpop.f32.mrb[0].mxu0
    %1533 = vdwg.mxu0
    %v1534 = vld [vmem:[%s518] sm:$0x1]
    %v1536 = vlaneseq
    %v1537 = vshrl.u32 %v1536, 7
    %v1538 = vsub.s32 0, %v1537
    %v1539 = vrot.slane %v1534, %v1538
    %v1541 = vadd.f32 %v1531, %v1539
    %v1542 = vxor.u32 %v1541, 2147483648
    %v1543 = vmul.f32 %v1542, 1.442695
    %v1544 = vpow.pop %v1543
    %v1545 = vadd.f32 %v1544, 1.0
    %v1546 = vrcp.pop %v1545
    %v1547 = vmul.f32 1.0, %v1546
    %v1548 = vld [vmem:[%s533] sm:$0xff]
    %v1549 = vld [vmem:[%s533 + $0x8] sm:$0xff]
    %v1550 = vld [vmem:[%s536] sm:$0x1]
    %v1552 = vlaneseq
    %v1553 = vshrl.u32 %v1552, 7
    %v1554 = vsub.s32 0, %v1553
    %v1555 = vrot.slane %v1550, %v1554
    %1557 = vmatprep.subr.mxu0 0.0
    %1558 = vmatpush1.msra.mxu0 %v1548
    %1559 = vmatprep.subr.mxu0 0.0
    %1560 = vmatpush1.msra.mxu0 %v1549
    %1561 = vmatprep.subr.mxu0 0.0
    %1562 = vmatpush1.msra.mxu0 0.0
    %1563 = vmatprep.subr.mxu0 0.0
    %1564 = vmatpush1.msra.mxu0 0.0
    %1565 = vmatprep.subr.mxu0 0.0
    %1566 = vmatpush1.msra.mxu0 0.0
    %1567 = vmatprep.subr.mxu0 0.0
    %1568 = vmatpush1.msra.mxu0 0.0
    %1569 = vmatprep.subr.mxu0 0.0
    %1570 = vmatpush1.msra.mxu0 0.0
    %1571 = vmatprep.subr.mxu0 0.0
    %1572 = vmatpush1.msra.mxu0 0.0
    %1573 = vmatprep.subr.mxu0 0.0
    %1574 = vmatpush1.msra.mxu0 0.0
    %1575 = vmatprep.subr.mxu0 0.0
    %1576 = vmatpush1.msra.mxu0 0.0
    %1577 = vmatprep.subr.mxu0 0.0
    %1578 = vmatpush1.msra.mxu0 0.0
    %1579 = vmatprep.subr.mxu0 0.0
    %1580 = vmatpush1.msra.mxu0 0.0
    %1581 = vmatprep.subr.mxu0 0.0
    %1582 = vmatpush1.msra.mxu0 0.0
    %1583 = vmatprep.subr.mxu0 0.0
    %1584 = vmatpush1.msra.mxu0 0.0
    %1585 = vmatprep.subr.mxu0 0.0
    %1586 = vmatpush1.msra.mxu0 0.0
    %1587 = vmatprep.subr.mxu0 0.0
    %1588 = vmatpush1.msra.mxu0 0.0
    %1589 = vmatprep.subr.mxu0 0.0
    %1590 = vmatpush1.msra.mxu0 0.0
    %1591 = vmatprep.subr.mxu0 0.0
    %1592 = vmatpush1.msra.mxu0 0.0
    %1593 = vmatprep.subr.mxu0 0.0
    %1594 = vmatpush1.msra.mxu0 0.0
    %1595 = vmatprep.subr.mxu0 0.0
    %1596 = vmatpush1.msra.mxu0 0.0
    %1597 = vmatprep.subr.mxu0 0.0
    %1598 = vmatpush1.msra.mxu0 0.0
    %1599 = vmatprep.subr.mxu0 0.0
    %1600 = vmatpush1.msra.mxu0 0.0
    %1601 = vmatprep.subr.mxu0 0.0
    %1602 = vmatpush1.msra.mxu0 0.0
    %1603 = vmatprep.subr.mxu0 0.0
    %1604 = vmatpush1.msra.mxu0 0.0
    %1605 = vmatprep.subr.mxu0 0.0
    %1606 = vmatpush1.msra.mxu0 0.0
    %1607 = vmatprep.subr.mxu0 0.0
    %1608 = vmatpush1.msra.mxu0 0.0
    %1609 = vmatprep.subr.mxu0 0.0
    %1610 = vmatpush1.msra.mxu0 0.0
    %1611 = vmatprep.subr.mxu0 0.0
    %1612 = vmatpush1.msra.mxu0 0.0
    %1613 = vmatprep.subr.mxu0 0.0
    %1614 = vmatpush1.msra.mxu0 0.0
    %1615 = vmatprep.subr.mxu0 0.0
    %1616 = vmatpush1.msra.mxu0 0.0
    %1617 = vmatprep.subr.mxu0 0.0
    %1618 = vmatpush1.msra.mxu0 0.0
    %1619 = vmatprep.subr.mxu0 0.0
    %1620 = vmatpush1.msra.mxu0 0.0
    %1621 = vmatprep.mubr.f32.mxu0 0.0
    %1622 = vmatmul.mubr.f32.gmra.mrb[0].mxu0 %v1302
    %v1623 = vpop.f32.mrb[0].mxu0
    %v1624 = vadd.f32 %v1555, %v1623
    %v1625 = vpop.f32.mrb[0].mxu0
    %1626 = vdwg.mxu0
    %v1627 = vld [vmem:[%s614] sm:$0xff]
    %v1628 = vld [vmem:[%s614 + $0x8] sm:$0xff]
    %v1629 = vld [vmem:[%s614 + $0x10] sm:$0xff]
    %v1630 = vld [vmem:[%s614 + $0x18] sm:$0xff]
    %v1631 = vld [vmem:[%s619] sm:$0x1]
    %v1633 = vlaneseq
    %v1634 = vshrl.u32 %v1633, 7
    %v1635 = vsub.s32 0, %v1634
    %v1636 = vrot.slane %v1631, %v1635
    %1638 = vmatprep.subr.mxu0 0.0
    %1639 = vmatpush1.msra.mxu0 %v1627
    %1640 = vmatprep.subr.mxu0 0.0
    %1641 = vmatpush1.msra.mxu0 %v1628
    %1642 = vmatprep.subr.mxu0 0.0
    %1643 = vmatpush1.msra.mxu0 %v1629
    %1644 = vmatprep.subr.mxu0 0.0
    %1645 = vmatpush1.msra.mxu0 %v1630
    %1646 = vmatprep.subr.mxu0 0.0
    %1647 = vmatpush1.msra.mxu0 0.0
    %1648 = vmatprep.subr.mxu0 0.0
    %1649 = vmatpush1.msra.mxu0 0.0
    %1650 = vmatprep.subr.mxu0 0.0
    %1651 = vmatpush1.msra.mxu0 0.0
    %1652 = vmatprep.subr.mxu0 0.0
    %1653 = vmatpush1.msra.mxu0 0.0
    %1654 = vmatprep.subr.mxu0 0.0
    %1655 = vmatpush1.msra.mxu0 0.0
    %1656 = vmatprep.subr.mxu0 0.0
    %1657 = vmatpush1.msra.mxu0 0.0
    %1658 = vmatprep.subr.mxu0 0.0
    %1659 = vmatpush1.msra.mxu0 0.0
    %1660 = vmatprep.subr.mxu0 0.0
    %1661 = vmatpush1.msra.mxu0 0.0
    %1662 = vmatprep.subr.mxu0 0.0
    %1663 = vmatpush1.msra.mxu0 0.0
    %1664 = vmatprep.subr.mxu0 0.0
    %1665 = vmatpush1.msra.mxu0 0.0
    %1666 = vmatprep.subr.mxu0 0.0
    %1667 = vmatpush1.msra.mxu0 0.0
    %1668 = vmatprep.subr.mxu0 0.0
    %1669 = vmatpush1.msra.mxu0 0.0
    %1670 = vmatprep.subr.mxu0 0.0
    %1671 = vmatpush1.msra.mxu0 0.0
    %1672 = vmatprep.subr.mxu0 0.0
    %1673 = vmatpush1.msra.mxu0 0.0
    %1674 = vmatprep.subr.mxu0 0.0
    %1675 = vmatpush1.msra.mxu0 0.0
    %1676 = vmatprep.subr.mxu0 0.0
    %1677 = vmatpush1.msra.mxu0 0.0
    %1678 = vmatprep.subr.mxu0 0.0
    %1679 = vmatpush1.msra.mxu0 0.0
    %1680 = vmatprep.subr.mxu0 0.0
    %1681 = vmatpush1.msra.mxu0 0.0
    %1682 = vmatprep.subr.mxu0 0.0
    %1683 = vmatpush1.msra.mxu0 0.0
    %1684 = vmatprep.subr.mxu0 0.0
    %1685 = vmatpush1.msra.mxu0 0.0
    %1686 = vmatprep.subr.mxu0 0.0
    %1687 = vmatpush1.msra.mxu0 0.0
    %1688 = vmatprep.subr.mxu0 0.0
    %1689 = vmatpush1.msra.mxu0 0.0
    %1690 = vmatprep.subr.mxu0 0.0
    %1691 = vmatpush1.msra.mxu0 0.0
    %1692 = vmatprep.subr.mxu0 0.0
    %1693 = vmatpush1.msra.mxu0 0.0
    %1694 = vmatprep.subr.mxu0 0.0
    %1695 = vmatpush1.msra.mxu0 0.0
    %1696 = vmatprep.subr.mxu0 0.0
    %1697 = vmatpush1.msra.mxu0 0.0
    %1698 = vmatprep.subr.mxu0 0.0
    %1699 = vmatpush1.msra.mxu0 0.0
    %1700 = vmatprep.subr.mxu0 0.0
    %1701 = vmatpush1.msra.mxu0 0.0
    %1702 = vmatprep.mubr.f32.mxu0 0.0
    %1703 = vmatmul.mubr.f32.gmra.mrb[0].mxu0 %v1229
    %v1704 = vpop.f32.mrb[0].mxu0
    %v1705 = vadd.f32 %v1636, %v1704
    %v1706 = vpop.f32.mrb[0].mxu0
    %1707 = vdwg.mxu0
    %v1708 = vmul.f32 %v1387, %v1705
    %v1709 = vadd.f32 %v1624, %v1708
    %v1710 = vtanh.pop %v1709
    %v1711 = vsub.f32 1.0, %v1547
    %v1712 = vmul.f32 %v1711, %v1710
    %v1713 = vmul.f32 %v1547, %v703
    %v1714 = vadd.f32 %v1712, %v1713
    %s1715 = scalar_lea.vmem [#allocation2], 8
    %1716 = vst.msk [vmem:[%s1715] sm:$0xff] %vm200, %v1714
    %s1717 = scalar_lea.vmem [#allocation7], 48
    %v1718 = vld [vmem:[%s1717] sm:$0xff]
    %v1719 = vld [vmem:[%s5] sm:$0xff]
    %v1720 = vld [vmem:[%s5 + $0x8] sm:$0xff]
    %v1721 = vld [vmem:[%s5 + $0x10] sm:$0x1]
    %v1722 = vld [vmem:[%s6] sm:$0xff]
    %v1723 = vld [vmem:[%s6 + $0x8] sm:$0xff]
    %v1724 = vld [vmem:[%s6 + $0x10] sm:$0xff]
    %v1725 = vld [vmem:[%s6 + $0x18] sm:$0xff]
    %v1727 = vsel %vm200, %v1217, 0
    %1729 = vmatprep.subr.mxu0 0.0
    %1730 = vmatpush1.msra.mxu0 %v1722
    %1731 = vmatprep.subr.mxu0 0.0
    %1732 = vmatpush1.msra.mxu0 %v1723
    %1733 = vmatprep.subr.mxu0 0.0
    %1734 = vmatpush1.msra.mxu0 %v1724
    %1735 = vmatprep.subr.mxu0 0.0
    %1736 = vmatpush1.msra.mxu0 %v1725
    %1737 = vmatprep.subr.mxu0 0.0
    %1738 = vmatpush1.msra.mxu0 0.0
    %1739 = vmatprep.subr.mxu0 0.0
    %1740 = vmatpush1.msra.mxu0 0.0
    %1741 = vmatprep.subr.mxu0 0.0
    %1742 = vmatpush1.msra.mxu0 0.0
    %1743 = vmatprep.subr.mxu0 0.0
    %1744 = vmatpush1.msra.mxu0 0.0
    %1745 = vmatprep.subr.mxu0 0.0
    %1746 = vmatpush1.msra.mxu0 0.0
    %1747 = vmatprep.subr.mxu0 0.0
    %1748 = vmatpush1.msra.mxu0 0.0
    %1749 = vmatprep.subr.mxu0 0.0
    %1750 = vmatpush1.msra.mxu0 0.0
    %1751 = vmatprep.subr.mxu0 0.0
    %1752 = vmatpush1.msra.mxu0 0.0
    %1753 = vmatprep.subr.mxu0 0.0
    %1754 = vmatpush1.msra.mxu0 0.0
    %1755 = vmatprep.subr.mxu0 0.0
    %1756 = vmatpush1.msra.mxu0 0.0
    %1757 = vmatprep.subr.mxu0 0.0
    %1758 = vmatpush1.msra.mxu0 0.0
    %1759 = vmatprep.subr.mxu0 0.0
    %1760 = vmatpush1.msra.mxu0 0.0
    %1761 = vmatprep.subr.mxu0 0.0
    %1762 = vmatpush1.msra.mxu0 0.0
    %1763 = vmatprep.subr.mxu0 0.0
    %1764 = vmatpush1.msra.mxu0 0.0
    %1765 = vmatprep.subr.mxu0 0.0
    %1766 = vmatpush1.msra.mxu0 0.0
    %1767 = vmatprep.subr.mxu0 0.0
    %1768 = vmatpush1.msra.mxu0 0.0
    %1769 = vmatprep.subr.mxu0 0.0
    %1770 = vmatpush1.msra.mxu0 0.0
    %1771 = vmatprep.subr.mxu0 0.0
    %1772 = vmatpush1.msra.mxu0 0.0
    %1773 = vmatprep.subr.mxu0 0.0
    %1774 = vmatpush1.msra.mxu0 0.0
    %1775 = vmatprep.subr.mxu0 0.0
    %1776 = vmatpush1.msra.mxu0 0.0
    %1777 = vmatprep.subr.mxu0 0.0
    %1778 = vmatpush1.msra.mxu0 0.0
    %1779 = vmatprep.subr.mxu0 0.0
    %1780 = vmatpush1.msra.mxu0 0.0
    %1781 = vmatprep.subr.mxu0 0.0
    %1782 = vmatpush1.msra.mxu0 0.0
    %1783 = vmatprep.subr.mxu0 0.0
    %1784 = vmatpush1.msra.mxu0 0.0
    %1785 = vmatprep.subr.mxu0 0.0
    %1786 = vmatpush1.msra.mxu0 0.0
    %1787 = vmatprep.subr.mxu0 0.0
    %1788 = vmatpush1.msra.mxu0 0.0
    %1789 = vmatprep.subr.mxu0 0.0
    %1790 = vmatpush1.msra.mxu0 0.0
    %1791 = vmatprep.subr.mxu0 0.0
    %1792 = vmatpush1.msra.mxu0 0.0
    %1793 = vmatprep.mubr.f32.mxu0 0.0
    %1794 = vmatmul.mubr.f32.gmra.mrb[0].mxu0 %v1727
    %v1795 = vpop.f32.mrb[0].mxu0
    %v1796 = vadd.f32 0.0, %v1795
    %v1797 = vpop.f32.mrb[0].mxu0
    %1798 = vdwg.mxu0
    %v1800 = vsel %vm784, %v1718, 0
    %v1803 = vsel %vm788, %v1721, 0
    %1805 = vmatprep.subr.mxu0 0.0
    %1806 = vmatpush1.msra.mxu0 %v1719
    %1807 = vmatprep.subr.mxu0 0.0
    %1808 = vmatpush1.msra.mxu0 %v1720
    %1809 = vmatprep.subr.mxu0 0.0
    %1810 = vmatpush1.msra.mxu0 %v1803
    %1811 = vmatprep.subr.mxu0 0.0
    %1812 = vmatpush1.msra.mxu0 0.0
    %1813 = vmatprep.subr.mxu0 0.0
    %1814 = vmatpush1.msra.mxu0 0.0
    %1815 = vmatprep.subr.mxu0 0.0
    %1816 = vmatpush1.msra.mxu0 0.0
    %1817 = vmatprep.subr.mxu0 0.0
    %1818 = vmatpush1.msra.mxu0 0.0
    %1819 = vmatprep.subr.mxu0 0.0
    %1820 = vmatpush1.msra.mxu0 0.0
    %1821 = vmatprep.subr.mxu0 0.0
    %1822 = vmatpush1.msra.mxu0 0.0
    %1823 = vmatprep.subr.mxu0 0.0
    %1824 = vmatpush1.msra.mxu0 0.0
    %1825 = vmatprep.subr.mxu0 0.0
    %1826 = vmatpush1.msra.mxu0 0.0
    %1827 = vmatprep.subr.mxu0 0.0
    %1828 = vmatpush1.msra.mxu0 0.0
    %1829 = vmatprep.subr.mxu0 0.0
    %1830 = vmatpush1.msra.mxu0 0.0
    %1831 = vmatprep.subr.mxu0 0.0
    %1832 = vmatpush1.msra.mxu0 0.0
    %1833 = vmatprep.subr.mxu0 0.0
    %1834 = vmatpush1.msra.mxu0 0.0
    %1835 = vmatprep.subr.mxu0 0.0
    %1836 = vmatpush1.msra.mxu0 0.0
    %1837 = vmatprep.subr.mxu0 0.0
    %1838 = vmatpush1.msra.mxu0 0.0
    %1839 = vmatprep.subr.mxu0 0.0
    %1840 = vmatpush1.msra.mxu0 0.0
    %1841 = vmatprep.subr.mxu0 0.0
    %1842 = vmatpush1.msra.mxu0 0.0
    %1843 = vmatprep.subr.mxu0 0.0
    %1844 = vmatpush1.msra.mxu0 0.0
    %1845 = vmatprep.subr.mxu0 0.0
    %1846 = vmatpush1.msra.mxu0 0.0
    %1847 = vmatprep.subr.mxu0 0.0
    %1848 = vmatpush1.msra.mxu0 0.0
    %1849 = vmatprep.subr.mxu0 0.0
    %1850 = vmatpush1.msra.mxu0 0.0
    %1851 = vmatprep.subr.mxu0 0.0
    %1852 = vmatpush1.msra.mxu0 0.0
    %1853 = vmatprep.subr.mxu0 0.0
    %1854 = vmatpush1.msra.mxu0 0.0
    %1855 = vmatprep.subr.mxu0 0.0
    %1856 = vmatpush1.msra.mxu0 0.0
    %1857 = vmatprep.subr.mxu0 0.0
    %1858 = vmatpush1.msra.mxu0 0.0
    %1859 = vmatprep.subr.mxu0 0.0
    %1860 = vmatpush1.msra.mxu0 0.0
    %1861 = vmatprep.subr.mxu0 0.0
    %1862 = vmatpush1.msra.mxu0 0.0
    %1863 = vmatprep.subr.mxu0 0.0
    %1864 = vmatpush1.msra.mxu0 0.0
    %1865 = vmatprep.subr.mxu0 0.0
    %1866 = vmatpush1.msra.mxu0 0.0
    %1867 = vmatprep.subr.mxu0 0.0
    %1868 = vmatpush1.msra.mxu0 0.0
    %1869 = vmatprep.mubr.f32.mxu0 0.0
    %1870 = vmatmul.mubr.f32.gmra.mrb[0].mxu0 %v1800
    %v1871 = vpop.f32.mrb[0].mxu0
    %v1872 = vadd.f32 %v1796, %v1871
    %v1873 = vpop.f32.mrb[0].mxu0
    %1874 = vdwg.mxu0
    %v1875 = vld [vmem:[#allocation10] sm:$0x1]
    %v1877 = vlaneseq
    %v1878 = vshrl.u32 %v1877, 7
    %v1879 = vsub.s32 0, %v1878
    %v1880 = vrot.slane %v1875, %v1879
    %v1882 = vadd.f32 %v1872, %v1880
    %v1883 = vxor.u32 %v1882, 2147483648
    %v1884 = vmul.f32 %v1883, 1.442695
    %v1885 = vpow.pop %v1884
    %v1886 = vadd.f32 %v1885, 1.0
    %v1887 = vrcp.pop %v1886
    %v1888 = vmul.f32 1.0, %v1887
    %v1889 = vld [vmem:[%s876] sm:$0xff]
    %v1890 = vld [vmem:[%s876 + $0x8] sm:$0xff]
    %v1891 = vld [vmem:[%s876 + $0x10] sm:$0x1]
    %v1892 = vld [vmem:[%s880] sm:$0xff]
    %v1893 = vld [vmem:[%s880 + $0x8] sm:$0xff]
    %v1894 = vld [vmem:[%s880 + $0x10] sm:$0xff]
    %v1895 = vld [vmem:[%s880 + $0x18] sm:$0xff]
    %1896 = vmatprep.subr.mxu0 0.0
    %1897 = vmatpush1.msra.mxu0 %v1892
    %1898 = vmatprep.subr.mxu0 0.0
    %1899 = vmatpush1.msra.mxu0 %v1893
    %1900 = vmatprep.subr.mxu0 0.0
    %1901 = vmatpush1.msra.mxu0 %v1894
    %1902 = vmatprep.subr.mxu0 0.0
    %1903 = vmatpush1.msra.mxu0 %v1895
    %1904 = vmatprep.subr.mxu0 0.0
    %1905 = vmatpush1.msra.mxu0 0.0
    %1906 = vmatprep.subr.mxu0 0.0
    %1907 = vmatpush1.msra.mxu0 0.0
    %1908 = vmatprep.subr.mxu0 0.0
    %1909 = vmatpush1.msra.mxu0 0.0
    %1910 = vmatprep.subr.mxu0 0.0
    %1911 = vmatpush1.msra.mxu0 0.0
    %1912 = vmatprep.subr.mxu0 0.0
    %1913 = vmatpush1.msra.mxu0 0.0
    %1914 = vmatprep.subr.mxu0 0.0
    %1915 = vmatpush1.msra.mxu0 0.0
    %1916 = vmatprep.subr.mxu0 0.0
    %1917 = vmatpush1.msra.mxu0 0.0
    %1918 = vmatprep.subr.mxu0 0.0
    %1919 = vmatpush1.msra.mxu0 0.0
    %1920 = vmatprep.subr.mxu0 0.0
    %1921 = vmatpush1.msra.mxu0 0.0
    %1922 = vmatprep.subr.mxu0 0.0
    %1923 = vmatpush1.msra.mxu0 0.0
    %1924 = vmatprep.subr.mxu0 0.0
    %1925 = vmatpush1.msra.mxu0 0.0
    %1926 = vmatprep.subr.mxu0 0.0
    %1927 = vmatpush1.msra.mxu0 0.0
    %1928 = vmatprep.subr.mxu0 0.0
    %1929 = vmatpush1.msra.mxu0 0.0
    %1930 = vmatprep.subr.mxu0 0.0
    %1931 = vmatpush1.msra.mxu0 0.0
    %1932 = vmatprep.subr.mxu0 0.0
    %1933 = vmatpush1.msra.mxu0 0.0
    %1934 = vmatprep.subr.mxu0 0.0
    %1935 = vmatpush1.msra.mxu0 0.0
    %1936 = vmatprep.subr.mxu0 0.0
    %1937 = vmatpush1.msra.mxu0 0.0
    %1938 = vmatprep.subr.mxu0 0.0
    %1939 = vmatpush1.msra.mxu0 0.0
    %1940 = vmatprep.subr.mxu0 0.0
    %1941 = vmatpush1.msra.mxu0 0.0
    %1942 = vmatprep.subr.mxu0 0.0
    %1943 = vmatpush1.msra.mxu0 0.0
    %1944 = vmatprep.subr.mxu0 0.0
    %1945 = vmatpush1.msra.mxu0 0.0
    %1946 = vmatprep.subr.mxu0 0.0
    %1947 = vmatpush1.msra.mxu0 0.0
    %1948 = vmatprep.subr.mxu0 0.0
    %1949 = vmatpush1.msra.mxu0 0.0
    %1950 = vmatprep.subr.mxu0 0.0
    %1951 = vmatpush1.msra.mxu0 0.0
    %1952 = vmatprep.subr.mxu0 0.0
    %1953 = vmatpush1.msra.mxu0 0.0
    %1954 = vmatprep.subr.mxu0 0.0
    %1955 = vmatpush1.msra.mxu0 0.0
    %1956 = vmatprep.subr.mxu0 0.0
    %1957 = vmatpush1.msra.mxu0 0.0
    %1958 = vmatprep.subr.mxu0 0.0
    %1959 = vmatpush1.msra.mxu0 0.0
    %1960 = vmatprep.mubr.f32.mxu0 0.0
    %1961 = vmatmul.mubr.f32.gmra.mrb[0].mxu0 %v1727
    %v1962 = vpop.f32.mrb[0].mxu0
    %v1963 = vadd.f32 0.0, %v1962
    %v1964 = vpop.f32.mrb[0].mxu0
    %1965 = vdwg.mxu0
    %v1967 = vsel %vm788, %v1891, 0
    %1969 = vmatprep.subr.mxu0 0.0
    %1970 = vmatpush1.msra.mxu0 %v1889
    %1971 = vmatprep.subr.mxu0 0.0
    %1972 = vmatpush1.msra.mxu0 %v1890
    %1973 = vmatprep.subr.mxu0 0.0
    %1974 = vmatpush1.msra.mxu0 %v1967
    %1975 = vmatprep.subr.mxu0 0.0
    %1976 = vmatpush1.msra.mxu0 0.0
    %1977 = vmatprep.subr.mxu0 0.0
    %1978 = vmatpush1.msra.mxu0 0.0
    %1979 = vmatprep.subr.mxu0 0.0
    %1980 = vmatpush1.msra.mxu0 0.0
    %1981 = vmatprep.subr.mxu0 0.0
    %1982 = vmatpush1.msra.mxu0 0.0
    %1983 = vmatprep.subr.mxu0 0.0
    %1984 = vmatpush1.msra.mxu0 0.0
    %1985 = vmatprep.subr.mxu0 0.0
    %1986 = vmatpush1.msra.mxu0 0.0
    %1987 = vmatprep.subr.mxu0 0.0
    %1988 = vmatpush1.msra.mxu0 0.0
    %1989 = vmatprep.subr.mxu0 0.0
    %1990 = vmatpush1.msra.mxu0 0.0
    %1991 = vmatprep.subr.mxu0 0.0
    %1992 = vmatpush1.msra.mxu0 0.0
    %1993 = vmatprep.subr.mxu0 0.0
    %1994 = vmatpush1.msra.mxu0 0.0
    %1995 = vmatprep.subr.mxu0 0.0
    %1996 = vmatpush1.msra.mxu0 0.0
    %1997 = vmatprep.subr.mxu0 0.0
    %1998 = vmatpush1.msra.mxu0 0.0
    %1999 = vmatprep.subr.mxu0 0.0
    %2000 = vmatpush1.msra.mxu0 0.0
    %2001 = vmatprep.subr.mxu0 0.0
    %2002 = vmatpush1.msra.mxu0 0.0
    %2003 = vmatprep.subr.mxu0 0.0
    %2004 = vmatpush1.msra.mxu0 0.0
    %2005 = vmatprep.subr.mxu0 0.0
    %2006 = vmatpush1.msra.mxu0 0.0
    %2007 = vmatprep.subr.mxu0 0.0
    %2008 = vmatpush1.msra.mxu0 0.0
    %2009 = vmatprep.subr.mxu0 0.0
    %2010 = vmatpush1.msra.mxu0 0.0
    %2011 = vmatprep.subr.mxu0 0.0
    %2012 = vmatpush1.msra.mxu0 0.0
    %2013 = vmatprep.subr.mxu0 0.0
    %2014 = vmatpush1.msra.mxu0 0.0
    %2015 = vmatprep.subr.mxu0 0.0
    %2016 = vmatpush1.msra.mxu0 0.0
    %2017 = vmatprep.subr.mxu0 0.0
    %2018 = vmatpush1.msra.mxu0 0.0
    %2019 = vmatprep.subr.mxu0 0.0
    %2020 = vmatpush1.msra.mxu0 0.0
    %2021 = vmatprep.subr.mxu0 0.0
    %2022 = vmatpush1.msra.mxu0 0.0
    %2023 = vmatprep.subr.mxu0 0.0
    %2024 = vmatpush1.msra.mxu0 0.0
    %2025 = vmatprep.subr.mxu0 0.0
    %2026 = vmatpush1.msra.mxu0 0.0
    %2027 = vmatprep.subr.mxu0 0.0
    %2028 = vmatpush1.msra.mxu0 0.0
    %2029 = vmatprep.subr.mxu0 0.0
    %2030 = vmatpush1.msra.mxu0 0.0
    %2031 = vmatprep.subr.mxu0 0.0
    %2032 = vmatpush1.msra.mxu0 0.0
    %2033 = vmatprep.mubr.f32.mxu0 0.0
    %2034 = vmatmul.mubr.f32.gmra.mrb[0].mxu0 %v1800
    %v2035 = vpop.f32.mrb[0].mxu0
    %v2036 = vadd.f32 %v1963, %v2035
    %v2037 = vpop.f32.mrb[0].mxu0
    %2038 = vdwg.mxu0
    %v2039 = vld [vmem:[%s1028] sm:$0x1]
    %v2041 = vlaneseq
    %v2042 = vshrl.u32 %v2041, 7
    %v2043 = vsub.s32 0, %v2042
    %v2044 = vrot.slane %v2039, %v2043
    %v2046 = vadd.f32 %v2036, %v2044
    %v2047 = vxor.u32 %v2046, 2147483648
    %v2048 = vmul.f32 %v2047, 1.442695
    %v2049 = vpow.pop %v2048
    %v2050 = vadd.f32 %v2049, 1.0
    %v2051 = vrcp.pop %v2050
    %v2052 = vmul.f32 1.0, %v2051
    %v2053 = vld [vmem:[%s1043] sm:$0xff]
    %v2054 = vld [vmem:[%s1043 + $0x8] sm:$0xff]
    %v2055 = vld [vmem:[%s1043 + $0x10] sm:$0x1]
    %v2056 = vld [vmem:[%s1047] sm:$0x1]
    %v2058 = vlaneseq
    %v2059 = vshrl.u32 %v2058, 7
    %v2060 = vsub.s32 0, %v2059
    %v2061 = vrot.slane %v2056, %v2060
    %v2064 = vsel %vm788, %v2055, 0
    %2066 = vmatprep.subr.mxu0 0.0
    %2067 = vmatpush1.msra.mxu0 %v2053
    %2068 = vmatprep.subr.mxu0 0.0
    %2069 = vmatpush1.msra.mxu0 %v2054
    %2070 = vmatprep.subr.mxu0 0.0
    %2071 = vmatpush1.msra.mxu0 %v2064
    %2072 = vmatprep.subr.mxu0 0.0
    %2073 = vmatpush1.msra.mxu0 0.0
    %2074 = vmatprep.subr.mxu0 0.0
    %2075 = vmatpush1.msra.mxu0 0.0
    %2076 = vmatprep.subr.mxu0 0.0
    %2077 = vmatpush1.msra.mxu0 0.0
    %2078 = vmatprep.subr.mxu0 0.0
    %2079 = vmatpush1.msra.mxu0 0.0
    %2080 = vmatprep.subr.mxu0 0.0
    %2081 = vmatpush1.msra.mxu0 0.0
    %2082 = vmatprep.subr.mxu0 0.0
    %2083 = vmatpush1.msra.mxu0 0.0
    %2084 = vmatprep.subr.mxu0 0.0
    %2085 = vmatpush1.msra.mxu0 0.0
    %2086 = vmatprep.subr.mxu0 0.0
    %2087 = vmatpush1.msra.mxu0 0.0
    %2088 = vmatprep.subr.mxu0 0.0
    %2089 = vmatpush1.msra.mxu0 0.0
    %2090 = vmatprep.subr.mxu0 0.0
    %2091 = vmatpush1.msra.mxu0 0.0
    %2092 = vmatprep.subr.mxu0 0.0
    %2093 = vmatpush1.msra.mxu0 0.0
    %2094 = vmatprep.subr.mxu0 0.0
    %2095 = vmatpush1.msra.mxu0 0.0
    %2096 = vmatprep.subr.mxu0 0.0
    %2097 = vmatpush1.msra.mxu0 0.0
    %2098 = vmatprep.subr.mxu0 0.0
    %2099 = vmatpush1.msra.mxu0 0.0
    %2100 = vmatprep.subr.mxu0 0.0
    %2101 = vmatpush1.msra.mxu0 0.0
    %2102 = vmatprep.subr.mxu0 0.0
    %2103 = vmatpush1.msra.mxu0 0.0
    %2104 = vmatprep.subr.mxu0 0.0
    %2105 = vmatpush1.msra.mxu0 0.0
    %2106 = vmatprep.subr.mxu0 0.0
    %2107 = vmatpush1.msra.mxu0 0.0
    %2108 = vmatprep.subr.mxu0 0.0
    %2109 = vmatpush1.msra.mxu0 0.0
    %2110 = vmatprep.subr.mxu0 0.0
    %2111 = vmatpush1.msra.mxu0 0.0
    %2112 = vmatprep.subr.mxu0 0.0
    %2113 = vmatpush1.msra.mxu0 0.0
    %2114 = vmatprep.subr.mxu0 0.0
    %2115 = vmatpush1.msra.mxu0 0.0
    %2116 = vmatprep.subr.mxu0 0.0
    %2117 = vmatpush1.msra.mxu0 0.0
    %2118 = vmatprep.subr.mxu0 0.0
    %2119 = vmatpush1.msra.mxu0 0.0
    %2120 = vmatprep.subr.mxu0 0.0
    %2121 = vmatpush1.msra.mxu0 0.0
    %2122 = vmatprep.subr.mxu0 0.0
    %2123 = vmatpush1.msra.mxu0 0.0
    %2124 = vmatprep.subr.mxu0 0.0
    %2125 = vmatpush1.msra.mxu0 0.0
    %2126 = vmatprep.subr.mxu0 0.0
    %2127 = vmatpush1.msra.mxu0 0.0
    %2128 = vmatprep.subr.mxu0 0.0
    %2129 = vmatpush1.msra.mxu0 0.0
    %2130 = vmatprep.mubr.f32.mxu0 0.0
    %2131 = vmatmul.mubr.f32.gmra.mrb[0].mxu0 %v1800
    %v2132 = vpop.f32.mrb[0].mxu0
    %v2133 = vadd.f32 %v2061, %v2132
    %v2134 = vpop.f32.mrb[0].mxu0
    %2135 = vdwg.mxu0
    %v2136 = vld [vmem:[%s1128] sm:$0xff]
    %v2137 = vld [vmem:[%s1128 + $0x8] sm:$0xff]
    %v2138 = vld [vmem:[%s1128 + $0x10] sm:$0xff]
    %v2139 = vld [vmem:[%s1128 + $0x18] sm:$0xff]
    %v2140 = vld [vmem:[%s1133] sm:$0x1]
    %v2142 = vlaneseq
    %v2143 = vshrl.u32 %v2142, 7
    %v2144 = vsub.s32 0, %v2143
    %v2145 = vrot.slane %v2140, %v2144
    %2147 = vmatprep.subr.mxu0 0.0
    %2148 = vmatpush1.msra.mxu0 %v2136
    %2149 = vmatprep.subr.mxu0 0.0
    %2150 = vmatpush1.msra.mxu0 %v2137
    %2151 = vmatprep.subr.mxu0 0.0
    %2152 = vmatpush1.msra.mxu0 %v2138
    %2153 = vmatprep.subr.mxu0 0.0
    %2154 = vmatpush1.msra.mxu0 %v2139
    %2155 = vmatprep.subr.mxu0 0.0
    %2156 = vmatpush1.msra.mxu0 0.0
    %2157 = vmatprep.subr.mxu0 0.0
    %2158 = vmatpush1.msra.mxu0 0.0
    %2159 = vmatprep.subr.mxu0 0.0
    %2160 = vmatpush1.msra.mxu0 0.0
    %2161 = vmatprep.subr.mxu0 0.0
    %2162 = vmatpush1.msra.mxu0 0.0
    %2163 = vmatprep.subr.mxu0 0.0
    %2164 = vmatpush1.msra.mxu0 0.0
    %2165 = vmatprep.subr.mxu0 0.0
    %2166 = vmatpush1.msra.mxu0 0.0
    %2167 = vmatprep.subr.mxu0 0.0
    %2168 = vmatpush1.msra.mxu0 0.0
    %2169 = vmatprep.subr.mxu0 0.0
    %2170 = vmatpush1.msra.mxu0 0.0
    %2171 = vmatprep.subr.mxu0 0.0
    %2172 = vmatpush1.msra.mxu0 0.0
    %2173 = vmatprep.subr.mxu0 0.0
    %2174 = vmatpush1.msra.mxu0 0.0
    %2175 = vmatprep.subr.mxu0 0.0
    %2176 = vmatpush1.msra.mxu0 0.0
    %2177 = vmatprep.subr.mxu0 0.0
    %2178 = vmatpush1.msra.mxu0 0.0
    %2179 = vmatprep.subr.mxu0 0.0
    %2180 = vmatpush1.msra.mxu0 0.0
    %2181 = vmatprep.subr.mxu0 0.0
    %2182 = vmatpush1.msra.mxu0 0.0
    %2183 = vmatprep.subr.mxu0 0.0
    %2184 = vmatpush1.msra.mxu0 0.0
    %2185 = vmatprep.subr.mxu0 0.0
    %2186 = vmatpush1.msra.mxu0 0.0
    %2187 = vmatprep.subr.mxu0 0.0
    %2188 = vmatpush1.msra.mxu0 0.0
    %2189 = vmatprep.subr.mxu0 0.0
    %2190 = vmatpush1.msra.mxu0 0.0
    %2191 = vmatprep.subr.mxu0 0.0
    %2192 = vmatpush1.msra.mxu0 0.0
    %2193 = vmatprep.subr.mxu0 0.0
    %2194 = vmatpush1.msra.mxu0 0.0
    %2195 = vmatprep.subr.mxu0 0.0
    %2196 = vmatpush1.msra.mxu0 0.0
    %2197 = vmatprep.subr.mxu0 0.0
    %2198 = vmatpush1.msra.mxu0 0.0
    %2199 = vmatprep.subr.mxu0 0.0
    %2200 = vmatpush1.msra.mxu0 0.0
    %2201 = vmatprep.subr.mxu0 0.0
    %2202 = vmatpush1.msra.mxu0 0.0
    %2203 = vmatprep.subr.mxu0 0.0
    %2204 = vmatpush1.msra.mxu0 0.0
    %2205 = vmatprep.subr.mxu0 0.0
    %2206 = vmatpush1.msra.mxu0 0.0
    %2207 = vmatprep.subr.mxu0 0.0
    %2208 = vmatpush1.msra.mxu0 0.0
    %2209 = vmatprep.subr.mxu0 0.0
    %2210 = vmatpush1.msra.mxu0 0.0
    %2211 = vmatprep.mubr.f32.mxu0 0.0
    %2212 = vmatmul.mubr.f32.gmra.mrb[0].mxu0 %v1727
    %v2213 = vpop.f32.mrb[0].mxu0
    %v2214 = vadd.f32 %v2145, %v2213
    %v2215 = vpop.f32.mrb[0].mxu0
    %2216 = vdwg.mxu0
    %v2217 = vmul.f32 %v1888, %v2214
    %v2218 = vadd.f32 %v2133, %v2217
    %v2219 = vtanh.pop %v2218
    %v2220 = vsub.f32 1.0, %v2052
    %v2221 = vmul.f32 %v2220, %v2219
    %v2222 = vmul.f32 %v2052, %v1217
    %v2223 = vadd.f32 %v2221, %v2222
    %s2224 = scalar_lea.vmem [#allocation3], 48
    %2225 = vst.msk [vmem:[%s2224] sm:$0xff] %vm200, %v2223
    %s2226 = scalar_lea.vmem [#allocation4], 16
    %v2227 = vld [vmem:[%s2226] sm:$0xff]
    %v2228 = vld [vmem:[%s2] sm:$0xff]
    %v2229 = vld [vmem:[%s2 + $0x8] sm:$0xff]
    %v2230 = vld [vmem:[%s3] sm:$0xff]
    %v2231 = vld [vmem:[%s3 + $0x8] sm:$0xff]
    %v2232 = vld [vmem:[%s3 + $0x10] sm:$0xff]
    %v2233 = vld [vmem:[%s3 + $0x18] sm:$0xff]
    %v2235 = vsel %vm200, %v1714, 0
    %2237 = vmatprep.subr.mxu0 0.0
    %2238 = vmatpush1.msra.mxu0 %v2230
    %2239 = vmatprep.subr.mxu0 0.0
    %2240 = vmatpush1.msra.mxu0 %v2231
    %2241 = vmatprep.subr.mxu0 0.0
    %2242 = vmatpush1.msra.mxu0 %v2232
    %2243 = vmatprep.subr.mxu0 0.0
    %2244 = vmatpush1.msra.mxu0 %v2233
    %2245 = vmatprep.subr.mxu0 0.0
    %2246 = vmatpush1.msra.mxu0 0.0
    %2247 = vmatprep.subr.mxu0 0.0
    %2248 = vmatpush1.msra.mxu0 0.0
    %2249 = vmatprep.subr.mxu0 0.0
    %2250 = vmatpush1.msra.mxu0 0.0
    %2251 = vmatprep.subr.mxu0 0.0
    %2252 = vmatpush1.msra.mxu0 0.0
    %2253 = vmatprep.subr.mxu0 0.0
    %2254 = vmatpush1.msra.mxu0 0.0
    %2255 = vmatprep.subr.mxu0 0.0
    %2256 = vmatpush1.msra.mxu0 0.0
    %2257 = vmatprep.subr.mxu0 0.0
    %2258 = vmatpush1.msra.mxu0 0.0
    %2259 = vmatprep.subr.mxu0 0.0
    %2260 = vmatpush1.msra.mxu0 0.0
    %2261 = vmatprep.subr.mxu0 0.0
    %2262 = vmatpush1.msra.mxu0 0.0
    %2263 = vmatprep.subr.mxu0 0.0
    %2264 = vmatpush1.msra.mxu0 0.0
    %2265 = vmatprep.subr.mxu0 0.0
    %2266 = vmatpush1.msra.mxu0 0.0
    %2267 = vmatprep.subr.mxu0 0.0
    %2268 = vmatpush1.msra.mxu0 0.0
    %2269 = vmatprep.subr.mxu0 0.0
    %2270 = vmatpush1.msra.mxu0 0.0
    %2271 = vmatprep.subr.mxu0 0.0
    %2272 = vmatpush1.msra.mxu0 0.0
    %2273 = vmatprep.subr.mxu0 0.0
    %2274 = vmatpush1.msra.mxu0 0.0
    %2275 = vmatprep.subr.mxu0 0.0
    %2276 = vmatpush1.msra.mxu0 0.0
    %2277 = vmatprep.subr.mxu0 0.0
    %2278 = vmatpush1.msra.mxu0 0.0
    %2279 = vmatprep.subr.mxu0 0.0
    %2280 = vmatpush1.msra.mxu0 0.0
    %2281 = vmatprep.subr.mxu0 0.0
    %2282 = vmatpush1.msra.mxu0 0.0
    %2283 = vmatprep.subr.mxu0 0.0
    %2284 = vmatpush1.msra.mxu0 0.0
    %2285 = vmatprep.subr.mxu0 0.0
    %2286 = vmatpush1.msra.mxu0 0.0
    %2287 = vmatprep.subr.mxu0 0.0
    %2288 = vmatpush1.msra.mxu0 0.0
    %2289 = vmatprep.subr.mxu0 0.0
    %2290 = vmatpush1.msra.mxu0 0.0
    %2291 = vmatprep.subr.mxu0 0.0
    %2292 = vmatpush1.msra.mxu0 0.0
    %2293 = vmatprep.subr.mxu0 0.0
    %2294 = vmatpush1.msra.mxu0 0.0
    %2295 = vmatprep.subr.mxu0 0.0
    %2296 = vmatpush1.msra.mxu0 0.0
    %2297 = vmatprep.subr.mxu0 0.0
    %2298 = vmatpush1.msra.mxu0 0.0
    %2299 = vmatprep.subr.mxu0 0.0
    %2300 = vmatpush1.msra.mxu0 0.0
    %2301 = vmatprep.mubr.f32.mxu0 0.0
    %2302 = vmatmul.mubr.f32.gmra.mrb[0].mxu0 %v2235
    %v2303 = vpop.f32.mrb[0].mxu0
    %v2304 = vadd.f32 0.0, %v2303
    %v2305 = vpop.f32.mrb[0].mxu0
    %2306 = vdwg.mxu0
    %v2308 = vsel %vm282, %v2227, 0
    %2310 = vmatprep.subr.mxu0 0.0
    %2311 = vmatpush1.msra.mxu0 %v2228
    %2312 = vmatprep.subr.mxu0 0.0
    %2313 = vmatpush1.msra.mxu0 %v2229
    %2314 = vmatprep.subr.mxu0 0.0
    %2315 = vmatpush1.msra.mxu0 0.0
    %2316 = vmatprep.subr.mxu0 0.0
    %2317 = vmatpush1.msra.mxu0 0.0
    %2318 = vmatprep.subr.mxu0 0.0
    %2319 = vmatpush1.msra.mxu0 0.0
    %2320 = vmatprep.subr.mxu0 0.0
    %2321 = vmatpush1.msra.mxu0 0.0
    %2322 = vmatprep.subr.mxu0 0.0
    %2323 = vmatpush1.msra.mxu0 0.0
    %2324 = vmatprep.subr.mxu0 0.0
    %2325 = vmatpush1.msra.mxu0 0.0
    %2326 = vmatprep.subr.mxu0 0.0
    %2327 = vmatpush1.msra.mxu0 0.0
    %2328 = vmatprep.subr.mxu0 0.0
    %2329 = vmatpush1.msra.mxu0 0.0
    %2330 = vmatprep.subr.mxu0 0.0
    %2331 = vmatpush1.msra.mxu0 0.0
    %2332 = vmatprep.subr.mxu0 0.0
    %2333 = vmatpush1.msra.mxu0 0.0
    %2334 = vmatprep.subr.mxu0 0.0
    %2335 = vmatpush1.msra.mxu0 0.0
    %2336 = vmatprep.subr.mxu0 0.0
    %2337 = vmatpush1.msra.mxu0 0.0
    %2338 = vmatprep.subr.mxu0 0.0
    %2339 = vmatpush1.msra.mxu0 0.0
    %2340 = vmatprep.subr.mxu0 0.0
    %2341 = vmatpush1.msra.mxu0 0.0
    %2342 = vmatprep.subr.mxu0 0.0
    %2343 = vmatpush1.msra.mxu0 0.0
    %2344 = vmatprep.subr.mxu0 0.0
    %2345 = vmatpush1.msra.mxu0 0.0
    %2346 = vmatprep.subr.mxu0 0.0
    %2347 = vmatpush1.msra.mxu0 0.0
    %2348 = vmatprep.subr.mxu0 0.0
    %2349 = vmatpush1.msra.mxu0 0.0
    %2350 = vmatprep.subr.mxu0 0.0
    %2351 = vmatpush1.msra.mxu0 0.0
    %2352 = vmatprep.subr.mxu0 0.0
    %2353 = vmatpush1.msra.mxu0 0.0
    %2354 = vmatprep.subr.mxu0 0.0
    %2355 = vmatpush1.msra.mxu0 0.0
    %2356 = vmatprep.subr.mxu0 0.0
    %2357 = vmatpush1.msra.mxu0 0.0
    %2358 = vmatprep.subr.mxu0 0.0
    %2359 = vmatpush1.msra.mxu0 0.0
    %2360 = vmatprep.subr.mxu0 0.0
    %2361 = vmatpush1.msra.mxu0 0.0
    %2362 = vmatprep.subr.mxu0 0.0
    %2363 = vmatpush1.msra.mxu0 0.0
    %2364 = vmatprep.subr.mxu0 0.0
    %2365 = vmatpush1.msra.mxu0 0.0
    %2366 = vmatprep.subr.mxu0 0.0
    %2367 = vmatpush1.msra.mxu0 0.0
    %2368 = vmatprep.subr.mxu0 0.0
    %2369 = vmatpush1.msra.mxu0 0.0
    %2370 = vmatprep.subr.mxu0 0.0
    %2371 = vmatpush1.msra.mxu0 0.0
    %2372 = vmatprep.subr.mxu0 0.0
    %2373 = vmatpush1.msra.mxu0 0.0
    %2374 = vmatprep.mubr.f32.mxu0 0.0
    %2375 = vmatmul.mubr.f32.gmra.mrb[0].mxu0 %v2308
    %v2376 = vpop.f32.mrb[0].mxu0
    %v2377 = vadd.f32 %v2304, %v2376
    %v2378 = vpop.f32.mrb[0].mxu0
    %2379 = vdwg.mxu0
    %v2380 = vld [vmem:[#allocation9] sm:$0x1]
    %v2382 = vlaneseq
    %v2383 = vshrl.u32 %v2382, 7
    %v2384 = vsub.s32 0, %v2383
    %v2385 = vrot.slane %v2380, %v2384
    %v2387 = vadd.f32 %v2377, %v2385
    %v2388 = vxor.u32 %v2387, 2147483648
    %v2389 = vmul.f32 %v2388, 1.442695
    %v2390 = vpow.pop %v2389
    %v2391 = vadd.f32 %v2390, 1.0
    %v2392 = vrcp.pop %v2391
    %v2393 = vmul.f32 1.0, %v2392
    %v2394 = vld [vmem:[%s370] sm:$0xff]
    %v2395 = vld [vmem:[%s370 + $0x8] sm:$0xff]
    %v2396 = vld [vmem:[%s373] sm:$0xff]
    %v2397 = vld [vmem:[%s373 + $0x8] sm:$0xff]
    %v2398 = vld [vmem:[%s373 + $0x10] sm:$0xff]
    %v2399 = vld [vmem:[%s373 + $0x18] sm:$0xff]
    %2400 = vmatprep.subr.mxu0 0.0
    %2401 = vmatpush1.msra.mxu0 %v2396
    %2402 = vmatprep.subr.mxu0 0.0
    %2403 = vmatpush1.msra.mxu0 %v2397
    %2404 = vmatprep.subr.mxu0 0.0
    %2405 = vmatpush1.msra.mxu0 %v2398
    %2406 = vmatprep.subr.mxu0 0.0
    %2407 = vmatpush1.msra.mxu0 %v2399
    %2408 = vmatprep.subr.mxu0 0.0
    %2409 = vmatpush1.msra.mxu0 0.0
    %2410 = vmatprep.subr.mxu0 0.0
    %2411 = vmatpush1.msra.mxu0 0.0
    %2412 = vmatprep.subr.mxu0 0.0
    %2413 = vmatpush1.msra.mxu0 0.0
    %2414 = vmatprep.subr.mxu0 0.0
    %2415 = vmatpush1.msra.mxu0 0.0
    %2416 = vmatprep.subr.mxu0 0.0
    %2417 = vmatpush1.msra.mxu0 0.0
    %2418 = vmatprep.subr.mxu0 0.0
    %2419 = vmatpush1.msra.mxu0 0.0
    %2420 = vmatprep.subr.mxu0 0.0
    %2421 = vmatpush1.msra.mxu0 0.0
    %2422 = vmatprep.subr.mxu0 0.0
    %2423 = vmatpush1.msra.mxu0 0.0
    %2424 = vmatprep.subr.mxu0 0.0
    %2425 = vmatpush1.msra.mxu0 0.0
    %2426 = vmatprep.subr.mxu0 0.0
    %2427 = vmatpush1.msra.mxu0 0.0
    %2428 = vmatprep.subr.mxu0 0.0
    %2429 = vmatpush1.msra.mxu0 0.0
    %2430 = vmatprep.subr.mxu0 0.0
    %2431 = vmatpush1.msra.mxu0 0.0
    %2432 = vmatprep.subr.mxu0 0.0
    %2433 = vmatpush1.msra.mxu0 0.0
    %2434 = vmatprep.subr.mxu0 0.0
    %2435 = vmatpush1.msra.mxu0 0.0
    %2436 = vmatprep.subr.mxu0 0.0
    %2437 = vmatpush1.msra.mxu0 0.0
    %2438 = vmatprep.subr.mxu0 0.0
    %2439 = vmatpush1.msra.mxu0 0.0
    %2440 = vmatprep.subr.mxu0 0.0
    %2441 = vmatpush1.msra.mxu0 0.0
    %2442 = vmatprep.subr.mxu0 0.0
    %2443 = vmatpush1.msra.mxu0 0.0
    %2444 = vmatprep.subr.mxu0 0.0
    %2445 = vmatpush1.msra.mxu0 0.0
    %2446 = vmatprep.subr.mxu0 0.0
    %2447 = vmatpush1.msra.mxu0 0.0
    %2448 = vmatprep.subr.mxu0 0.0
    %2449 = vmatpush1.msra.mxu0 0.0
    %2450 = vmatprep.subr.mxu0 0.0
    %2451 = vmatpush1.msra.mxu0 0.0
    %2452 = vmatprep.subr.mxu0 0.0
    %2453 = vmatpush1.msra.mxu0 0.0
    %2454 = vmatprep.subr.mxu0 0.0
    %2455 = vmatpush1.msra.mxu0 0.0
    %2456 = vmatprep.subr.mxu0 0.0
    %2457 = vmatpush1.msra.mxu0 0.0
    %2458 = vmatprep.subr.mxu0 0.0
    %2459 = vmatpush1.msra.mxu0 0.0
    %2460 = vmatprep.subr.mxu0 0.0
    %2461 = vmatpush1.msra.mxu0 0.0
    %2462 = vmatprep.subr.mxu0 0.0
    %2463 = vmatpush1.msra.mxu0 0.0
    %2464 = vmatprep.mubr.f32.mxu0 0.0
    %2465 = vmatmul.mubr.f32.gmra.mrb[0].mxu0 %v2235
    %v2466 = vpop.f32.mrb[0].mxu0
    %v2467 = vadd.f32 0.0, %v2466
    %v2468 = vpop.f32.mrb[0].mxu0
    %2469 = vdwg.mxu0
    %2470 = vmatprep.subr.mxu0 0.0
    %2471 = vmatpush1.msra.mxu0 %v2394
    %2472 = vmatprep.subr.mxu0 0.0
    %2473 = vmatpush1.msra.mxu0 %v2395
    %2474 = vmatprep.subr.mxu0 0.0
    %2475 = vmatpush1.msra.mxu0 0.0
    %2476 = vmatprep.subr.mxu0 0.0
    %2477 = vmatpush1.msra.mxu0 0.0
    %2478 = vmatprep.subr.mxu0 0.0
    %2479 = vmatpush1.msra.mxu0 0.0
    %2480 = vmatprep.subr.mxu0 0.0
    %2481 = vmatpush1.msra.mxu0 0.0
    %2482 = vmatprep.subr.mxu0 0.0
    %2483 = vmatpush1.msra.mxu0 0.0
    %2484 = vmatprep.subr.mxu0 0.0
    %2485 = vmatpush1.msra.mxu0 0.0
    %2486 = vmatprep.subr.mxu0 0.0
    %2487 = vmatpush1.msra.mxu0 0.0
    %2488 = vmatprep.subr.mxu0 0.0
    %2489 = vmatpush1.msra.mxu0 0.0
    %2490 = vmatprep.subr.mxu0 0.0
    %2491 = vmatpush1.msra.mxu0 0.0
    %2492 = vmatprep.subr.mxu0 0.0
    %2493 = vmatpush1.msra.mxu0 0.0
    %2494 = vmatprep.subr.mxu0 0.0
    %2495 = vmatpush1.msra.mxu0 0.0
    %2496 = vmatprep.subr.mxu0 0.0
    %2497 = vmatpush1.msra.mxu0 0.0
    %2498 = vmatprep.subr.mxu0 0.0
    %2499 = vmatpush1.msra.mxu0 0.0
    %2500 = vmatprep.subr.mxu0 0.0
    %2501 = vmatpush1.msra.mxu0 0.0
    %2502 = vmatprep.subr.mxu0 0.0
    %2503 = vmatpush1.msra.mxu0 0.0
    %2504 = vmatprep.subr.mxu0 0.0
    %2505 = vmatpush1.msra.mxu0 0.0
    %2506 = vmatprep.subr.mxu0 0.0
    %2507 = vmatpush1.msra.mxu0 0.0
    %2508 = vmatprep.subr.mxu0 0.0
    %2509 = vmatpush1.msra.mxu0 0.0
    %2510 = vmatprep.subr.mxu0 0.0
    %2511 = vmatpush1.msra.mxu0 0.0
    %2512 = vmatprep.subr.mxu0 0.0
    %2513 = vmatpush1.msra.mxu0 0.0
    %2514 = vmatprep.subr.mxu0 0.0
    %2515 = vmatpush1.msra.mxu0 0.0
    %2516 = vmatprep.subr.mxu0 0.0
    %2517 = vmatpush1.msra.mxu0 0.0
    %2518 = vmatprep.subr.mxu0 0.0
    %2519 = vmatpush1.msra.mxu0 0.0
    %2520 = vmatprep.subr.mxu0 0.0
    %2521 = vmatpush1.msra.mxu0 0.0
    %2522 = vmatprep.subr.mxu0 0.0
    %2523 = vmatpush1.msra.mxu0 0.0
    %2524 = vmatprep.subr.mxu0 0.0
    %2525 = vmatpush1.msra.mxu0 0.0
    %2526 = vmatprep.subr.mxu0 0.0
    %2527 = vmatpush1.msra.mxu0 0.0
    %2528 = vmatprep.subr.mxu0 0.0
    %2529 = vmatpush1.msra.mxu0 0.0
    %2530 = vmatprep.subr.mxu0 0.0
    %2531 = vmatpush1.msra.mxu0 0.0
    %2532 = vmatprep.subr.mxu0 0.0
    %2533 = vmatpush1.msra.mxu0 0.0
    %2534 = vmatprep.mubr.f32.mxu0 0.0
    %2535 = vmatmul.mubr.f32.gmra.mrb[0].mxu0 %v2308
    %v2536 = vpop.f32.mrb[0].mxu0
    %v2537 = vadd.f32 %v2467, %v2536
    %v2538 = vpop.f32.mrb[0].mxu0
    %2539 = vdwg.mxu0
    %v2540 = vld [vmem:[%s518] sm:$0x1]
    %v2542 = vlaneseq
    %v2543 = vshrl.u32 %v2542, 7
    %v2544 = vsub.s32 0, %v2543
    %v2545 = vrot.slane %v2540, %v2544
    %v2547 = vadd.f32 %v2537, %v2545
    %v2548 = vxor.u32 %v2547, 2147483648
    %v2549 = vmul.f32 %v2548, 1.442695
    %v2550 = vpow.pop %v2549
    %v2551 = vadd.f32 %v2550, 1.0
    %v2552 = vrcp.pop %v2551
    %v2553 = vmul.f32 1.0, %v2552
    %v2554 = vld [vmem:[%s533] sm:$0xff]
    %v2555 = vld [vmem:[%s533 + $0x8] sm:$0xff]
    %v2556 = vld [vmem:[%s536] sm:$0x1]
    %v2558 = vlaneseq
    %v2559 = vshrl.u32 %v2558, 7
    %v2560 = vsub.s32 0, %v2559
    %v2561 = vrot.slane %v2556, %v2560
    %2563 = vmatprep.subr.mxu0 0.0
    %2564 = vmatpush1.msra.mxu0 %v2554
    %2565 = vmatprep.subr.mxu0 0.0
    %2566 = vmatpush1.msra.mxu0 %v2555
    %2567 = vmatprep.subr.mxu0 0.0
    %2568 = vmatpush1.msra.mxu0 0.0
    %2569 = vmatprep.subr.mxu0 0.0
    %2570 = vmatpush1.msra.mxu0 0.0
    %2571 = vmatprep.subr.mxu0 0.0
    %2572 = vmatpush1.msra.mxu0 0.0
    %2573 = vmatprep.subr.mxu0 0.0
    %2574 = vmatpush1.msra.mxu0 0.0
    %2575 = vmatprep.subr.mxu0 0.0
    %2576 = vmatpush1.msra.mxu0 0.0
    %2577 = vmatprep.subr.mxu0 0.0
    %2578 = vmatpush1.msra.mxu0 0.0
    %2579 = vmatprep.subr.mxu0 0.0
    %2580 = vmatpush1.msra.mxu0 0.0
    %2581 = vmatprep.subr.mxu0 0.0
    %2582 = vmatpush1.msra.mxu0 0.0
    %2583 = vmatprep.subr.mxu0 0.0
    %2584 = vmatpush1.msra.mxu0 0.0
    %2585 = vmatprep.subr.mxu0 0.0
    %2586 = vmatpush1.msra.mxu0 0.0
    %2587 = vmatprep.subr.mxu0 0.0
    %2588 = vmatpush1.msra.mxu0 0.0
    %2589 = vmatprep.subr.mxu0 0.0
    %2590 = vmatpush1.msra.mxu0 0.0
    %2591 = vmatprep.subr.mxu0 0.0
    %2592 = vmatpush1.msra.mxu0 0.0
    %2593 = vmatprep.subr.mxu0 0.0
    %2594 = vmatpush1.msra.mxu0 0.0
    %2595 = vmatprep.subr.mxu0 0.0
    %2596 = vmatpush1.msra.mxu0 0.0
    %2597 = vmatprep.subr.mxu0 0.0
    %2598 = vmatpush1.msra.mxu0 0.0
    %2599 = vmatprep.subr.mxu0 0.0
    %2600 = vmatpush1.msra.mxu0 0.0
    %2601 = vmatprep.subr.mxu0 0.0
    %2602 = vmatpush1.msra.mxu0 0.0
    %2603 = vmatprep.subr.mxu0 0.0
    %2604 = vmatpush1.msra.mxu0 0.0
    %2605 = vmatprep.subr.mxu0 0.0
    %2606 = vmatpush1.msra.mxu0 0.0
    %2607 = vmatprep.subr.mxu0 0.0
    %2608 = vmatpush1.msra.mxu0 0.0
    %2609 = vmatprep.subr.mxu0 0.0
    %2610 = vmatpush1.msra.mxu0 0.0
    %2611 = vmatprep.subr.mxu0 0.0
    %2612 = vmatpush1.msra.mxu0 0.0
    %2613 = vmatprep.subr.mxu0 0.0
    %2614 = vmatpush1.msra.mxu0 0.0
    %2615 = vmatprep.subr.mxu0 0.0
    %2616 = vmatpush1.msra.mxu0 0.0
    %2617 = vmatprep.subr.mxu0 0.0
    %2618 = vmatpush1.msra.mxu0 0.0
    %2619 = vmatprep.subr.mxu0 0.0
    %2620 = vmatpush1.msra.mxu0 0.0
    %2621 = vmatprep.subr.mxu0 0.0
    %2622 = vmatpush1.msra.mxu0 0.0
    %2623 = vmatprep.subr.mxu0 0.0
    %2624 = vmatpush1.msra.mxu0 0.0
    %2625 = vmatprep.subr.mxu0 0.0
    %2626 = vmatpush1.msra.mxu0 0.0
    %2627 = vmatprep.mubr.f32.mxu0 0.0
    %2628 = vmatmul.mubr.f32.gmra.mrb[0].mxu0 %v2308
    %v2629 = vpop.f32.mrb[0].mxu0
    %v2630 = vadd.f32 %v2561, %v2629
    %v2631 = vpop.f32.mrb[0].mxu0
    %2632 = vdwg.mxu0
    %v2633 = vld [vmem:[%s614] sm:$0xff]
    %v2634 = vld [vmem:[%s614 + $0x8] sm:$0xff]
    %v2635 = vld [vmem:[%s614 + $0x10] sm:$0xff]
    %v2636 = vld [vmem:[%s614 + $0x18] sm:$0xff]
    %v2637 = vld [vmem:[%s619] sm:$0x1]
    %v2639 = vlaneseq
    %v2640 = vshrl.u32 %v2639, 7
    %v2641 = vsub.s32 0, %v2640
    %v2642 = vrot.slane %v2637, %v2641
    %2644 = vmatprep.subr.mxu0 0.0
    %2645 = vmatpush1.msra.mxu0 %v2633
    %2646 = vmatprep.subr.mxu0 0.0
    %2647 = vmatpush1.msra.mxu0 %v2634
    %2648 = vmatprep.subr.mxu0 0.0
    %2649 = vmatpush1.msra.mxu0 %v2635
    %2650 = vmatprep.subr.mxu0 0.0
    %2651 = vmatpush1.msra.mxu0 %v2636
    %2652 = vmatprep.subr.mxu0 0.0
    %2653 = vmatpush1.msra.mxu0 0.0
    %2654 = vmatprep.subr.mxu0 0.0
    %2655 = vmatpush1.msra.mxu0 0.0
    %2656 = vmatprep.subr.mxu0 0.0
    %2657 = vmatpush1.msra.mxu0 0.0
    %2658 = vmatprep.subr.mxu0 0.0
    %2659 = vmatpush1.msra.mxu0 0.0
    %2660 = vmatprep.subr.mxu0 0.0
    %2661 = vmatpush1.msra.mxu0 0.0
    %2662 = vmatprep.subr.mxu0 0.0
    %2663 = vmatpush1.msra.mxu0 0.0
    %2664 = vmatprep.subr.mxu0 0.0
    %2665 = vmatpush1.msra.mxu0 0.0
    %2666 = vmatprep.subr.mxu0 0.0
    %2667 = vmatpush1.msra.mxu0 0.0
    %2668 = vmatprep.subr.mxu0 0.0
    %2669 = vmatpush1.msra.mxu0 0.0
    %2670 = vmatprep.subr.mxu0 0.0
    %2671 = vmatpush1.msra.mxu0 0.0
    %2672 = vmatprep.subr.mxu0 0.0
    %2673 = vmatpush1.msra.mxu0 0.0
    %2674 = vmatprep.subr.mxu0 0.0
    %2675 = vmatpush1.msra.mxu0 0.0
    %2676 = vmatprep.subr.mxu0 0.0
    %2677 = vmatpush1.msra.mxu0 0.0
    %2678 = vmatprep.subr.mxu0 0.0
    %2679 = vmatpush1.msra.mxu0 0.0
    %2680 = vmatprep.subr.mxu0 0.0
    %2681 = vmatpush1.msra.mxu0 0.0
    %2682 = vmatprep.subr.mxu0 0.0
    %2683 = vmatpush1.msra.mxu0 0.0
    %2684 = vmatprep.subr.mxu0 0.0
    %2685 = vmatpush1.msra.mxu0 0.0
    %2686 = vmatprep.subr.mxu0 0.0
    %2687 = vmatpush1.msra.mxu0 0.0
    %2688 = vmatprep.subr.mxu0 0.0
    %2689 = vmatpush1.msra.mxu0 0.0
    %2690 = vmatprep.subr.mxu0 0.0
    %2691 = vmatpush1.msra.mxu0 0.0
    %2692 = vmatprep.subr.mxu0 0.0
    %2693 = vmatpush1.msra.mxu0 0.0
    %2694 = vmatprep.subr.mxu0 0.0
    %2695 = vmatpush1.msra.mxu0 0.0
    %2696 = vmatprep.subr.mxu0 0.0
    %2697 = vmatpush1.msra.mxu0 0.0
    %2698 = vmatprep.subr.mxu0 0.0
    %2699 = vmatpush1.msra.mxu0 0.0
    %2700 = vmatprep.subr.mxu0 0.0
    %2701 = vmatpush1.msra.mxu0 0.0
    %2702 = vmatprep.subr.mxu0 0.0
    %2703 = vmatpush1.msra.mxu0 0.0
    %2704 = vmatprep.subr.mxu0 0.0
    %2705 = vmatpush1.msra.mxu0 0.0
    %2706 = vmatprep.subr.mxu0 0.0
    %2707 = vmatpush1.msra.mxu0 0.0
    %2708 = vmatprep.mubr.f32.mxu0 0.0
    %2709 = vmatmul.mubr.f32.gmra.mrb[0].mxu0 %v2235
    %v2710 = vpop.f32.mrb[0].mxu0
    %v2711 = vadd.f32 %v2642, %v2710
    %v2712 = vpop.f32.mrb[0].mxu0
    %2713 = vdwg.mxu0
    %v2714 = vmul.f32 %v2393, %v2711
    %v2715 = vadd.f32 %v2630, %v2714
    %v2716 = vtanh.pop %v2715
    %v2717 = vsub.f32 1.0, %v2553
    %v2718 = vmul.f32 %v2717, %v2716
    %v2719 = vmul.f32 %v2553, %v1714
    %v2720 = vadd.f32 %v2718, %v2719
    %s2721 = scalar_lea.vmem [#allocation2], 16
    %2722 = vst.msk [vmem:[%s2721] sm:$0xff] %vm200, %v2720
    %s2723 = scalar_lea.vmem [#allocation7], 40
    %v2724 = vld [vmem:[%s2723] sm:$0xff]
    %v2725 = vld [vmem:[%s5] sm:$0xff]
    %v2726 = vld [vmem:[%s5 + $0x8] sm:$0xff]
    %v2727 = vld [vmem:[%s5 + $0x10] sm:$0x1]
    %v2728 = vld [vmem:[%s6] sm:$0xff]
    %v2729 = vld [vmem:[%s6 + $0x8] sm:$0xff]
    %v2730 = vld [vmem:[%s6 + $0x10] sm:$0xff]
    %v2731 = vld [vmem:[%s6 + $0x18] sm:$0xff]
    %v2733 = vsel %vm200, %v2223, 0
    %2735 = vmatprep.subr.mxu0 0.0
    %2736 = vmatpush1.msra.mxu0 %v2728
    %2737 = vmatprep.subr.mxu0 0.0
    %2738 = vmatpush1.msra.mxu0 %v2729
    %2739 = vmatprep.subr.mxu0 0.0
    %2740 = vmatpush1.msra.mxu0 %v2730
    %2741 = vmatprep.subr.mxu0 0.0
    %2742 = vmatpush1.msra.mxu0 %v2731
    %2743 = vmatprep.subr.mxu0 0.0
    %2744 = vmatpush1.msra.mxu0 0.0
    %2745 = vmatprep.subr.mxu0 0.0
    %2746 = vmatpush1.msra.mxu0 0.0
    %2747 = vmatprep.subr.mxu0 0.0
    %2748 = vmatpush1.msra.mxu0 0.0
    %2749 = vmatprep.subr.mxu0 0.0
    %2750 = vmatpush1.msra.mxu0 0.0
    %2751 = vmatprep.subr.mxu0 0.0
    %2752 = vmatpush1.msra.mxu0 0.0
    %2753 = vmatprep.subr.mxu0 0.0
    %2754 = vmatpush1.msra.mxu0 0.0
    %2755 = vmatprep.subr.mxu0 0.0
    %2756 = vmatpush1.msra.mxu0 0.0
    %2757 = vmatprep.subr.mxu0 0.0
    %2758 = vmatpush1.msra.mxu0 0.0
    %2759 = vmatprep.subr.mxu0 0.0
    %2760 = vmatpush1.msra.mxu0 0.0
    %2761 = vmatprep.subr.mxu0 0.0
    %2762 = vmatpush1.msra.mxu0 0.0
    %2763 = vmatprep.subr.mxu0 0.0
    %2764 = vmatpush1.msra.mxu0 0.0
    %2765 = vmatprep.subr.mxu0 0.0
    %2766 = vmatpush1.msra.mxu0 0.0
    %2767 = vmatprep.subr.mxu0 0.0
    %2768 = vmatpush1.msra.mxu0 0.0
    %2769 = vmatprep.subr.mxu0 0.0
    %2770 = vmatpush1.msra.mxu0 0.0
    %2771 = vmatprep.subr.mxu0 0.0
    %2772 = vmatpush1.msra.mxu0 0.0
    %2773 = vmatprep.subr.mxu0 0.0
    %2774 = vmatpush1.msra.mxu0 0.0
    %2775 = vmatprep.subr.mxu0 0.0
    %2776 = vmatpush1.msra.mxu0 0.0
    %2777 = vmatprep.subr.mxu0 0.0
    %2778 = vmatpush1.msra.mxu0 0.0
    %2779 = vmatprep.subr.mxu0 0.0
    %2780 = vmatpush1.msra.mxu0 0.0
    %2781 = vmatprep.subr.mxu0 0.0
    %2782 = vmatpush1.msra.mxu0 0.0
    %2783 = vmatprep.subr.mxu0 0.0
    %2784 = vmatpush1.msra.mxu0 0.0
    %2785 = vmatprep.subr.mxu0 0.0
    %2786 = vmatpush1.msra.mxu0 0.0
    %2787 = vmatprep.subr.mxu0 0.0
    %2788 = vmatpush1.msra.mxu0 0.0
    %2789 = vmatprep.subr.mxu0 0.0
    %2790 = vmatpush1.msra.mxu0 0.0
    %2791 = vmatprep.subr.mxu0 0.0
    %2792 = vmatpush1.msra.mxu0 0.0
    %2793 = vmatprep.subr.mxu0 0.0
    %2794 = vmatpush1.msra.mxu0 0.0
    %2795 = vmatprep.subr.mxu0 0.0
    %2796 = vmatpush1.msra.mxu0 0.0
    %2797 = vmatprep.subr.mxu0 0.0
    %2798 = vmatpush1.msra.mxu0 0.0
    %2799 = vmatprep.mubr.f32.mxu0 0.0
    %2800 = vmatmul.mubr.f32.gmra.mrb[0].mxu0 %v2733
    %v2801 = vpop.f32.mrb[0].mxu0
    %v2802 = vadd.f32 0.0, %v2801
    %v2803 = vpop.f32.mrb[0].mxu0
    %2804 = vdwg.mxu0
    %v2806 = vsel %vm784, %v2724, 0
    %v2809 = vsel %vm788, %v2727, 0
    %2811 = vmatprep.subr.mxu0 0.0
    %2812 = vmatpush1.msra.mxu0 %v2725
    %2813 = vmatprep.subr.mxu0 0.0
    %2814 = vmatpush1.msra.mxu0 %v2726
    %2815 = vmatprep.subr.mxu0 0.0
    %2816 = vmatpush1.msra.mxu0 %v2809
    %2817 = vmatprep.subr.mxu0 0.0
    %2818 = vmatpush1.msra.mxu0 0.0
    %2819 = vmatprep.subr.mxu0 0.0
    %2820 = vmatpush1.msra.mxu0 0.0
    %2821 = vmatprep.subr.mxu0 0.0
    %2822 = vmatpush1.msra.mxu0 0.0
    %2823 = vmatprep.subr.mxu0 0.0
    %2824 = vmatpush1.msra.mxu0 0.0
    %2825 = vmatprep.subr.mxu0 0.0
    %2826 = vmatpush1.msra.mxu0 0.0
    %2827 = vmatprep.subr.mxu0 0.0
    %2828 = vmatpush1.msra.mxu0 0.0
    %2829 = vmatprep.subr.mxu0 0.0
    %2830 = vmatpush1.msra.mxu0 0.0
    %2831 = vmatprep.subr.mxu0 0.0
    %2832 = vmatpush1.msra.mxu0 0.0
    %2833 = vmatprep.subr.mxu0 0.0
    %2834 = vmatpush1.msra.mxu0 0.0
    %2835 = vmatprep.subr.mxu0 0.0
    %2836 = vmatpush1.msra.mxu0 0.0
    %2837 = vmatprep.subr.mxu0 0.0
    %2838 = vmatpush1.msra.mxu0 0.0
    %2839 = vmatprep.subr.mxu0 0.0
    %2840 = vmatpush1.msra.mxu0 0.0
    %2841 = vmatprep.subr.mxu0 0.0
    %2842 = vmatpush1.msra.mxu0 0.0
    %2843 = vmatprep.subr.mxu0 0.0
    %2844 = vmatpush1.msra.mxu0 0.0
    %2845 = vmatprep.subr.mxu0 0.0
    %2846 = vmatpush1.msra.mxu0 0.0
    %2847 = vmatprep.subr.mxu0 0.0
    %2848 = vmatpush1.msra.mxu0 0.0
    %2849 = vmatprep.subr.mxu0 0.0
    %2850 = vmatpush1.msra.mxu0 0.0
    %2851 = vmatprep.subr.mxu0 0.0
    %2852 = vmatpush1.msra.mxu0 0.0
    %2853 = vmatprep.subr.mxu0 0.0
    %2854 = vmatpush1.msra.mxu0 0.0
    %2855 = vmatprep.subr.mxu0 0.0
    %2856 = vmatpush1.msra.mxu0 0.0
    %2857 = vmatprep.subr.mxu0 0.0
    %2858 = vmatpush1.msra.mxu0 0.0
    %2859 = vmatprep.subr.mxu0 0.0
    %2860 = vmatpush1.msra.mxu0 0.0
    %2861 = vmatprep.subr.mxu0 0.0
    %2862 = vmatpush1.msra.mxu0 0.0
    %2863 = vmatprep.subr.mxu0 0.0
    %2864 = vmatpush1.msra.mxu0 0.0
    %2865 = vmatprep.subr.mxu0 0.0
    %2866 = vmatpush1.msra.mxu0 0.0
    %2867 = vmatprep.subr.mxu0 0.0
    %2868 = vmatpush1.msra.mxu0 0.0
    %2869 = vmatprep.subr.mxu0 0.0
    %2870 = vmatpush1.msra.mxu0 0.0
    %2871 = vmatprep.subr.mxu0 0.0
    %2872 = vmatpush1.msra.mxu0 0.0
    %2873 = vmatprep.subr.mxu0 0.0
    %2874 = vmatpush1.msra.mxu0 0.0
    %2875 = vmatprep.mubr.f32.mxu0 0.0
    %2876 = vmatmul.mubr.f32.gmra.mrb[0].mxu0 %v2806
    %v2877 = vpop.f32.mrb[0].mxu0
    %v2878 = vadd.f32 %v2802, %v2877
    %v2879 = vpop.f32.mrb[0].mxu0
    %2880 = vdwg.mxu0
    %v2881 = vld [vmem:[#allocation10] sm:$0x1]
    %v2883 = vlaneseq
    %v2884 = vshrl.u32 %v2883, 7
    %v2885 = vsub.s32 0, %v2884
    %v2886 = vrot.slane %v2881, %v2885
    %v2888 = vadd.f32 %v2878, %v2886
    %v2889 = vxor.u32 %v2888, 2147483648
    %v2890 = vmul.f32 %v2889, 1.442695
    %v2891 = vpow.pop %v2890
    %v2892 = vadd.f32 %v2891, 1.0
    %v2893 = vrcp.pop %v2892
    %v2894 = vmul.f32 1.0, %v2893
    %v2895 = vld [vmem:[%s876] sm:$0xff]
    %v2896 = vld [vmem:[%s876 + $0x8] sm:$0xff]
    %v2897 = vld [vmem:[%s876 + $0x10] sm:$0x1]
    %v2898 = vld [vmem:[%s880] sm:$0xff]
    %v2899 = vld [vmem:[%s880 + $0x8] sm:$0xff]
    %v2900 = vld [vmem:[%s880 + $0x10] sm:$0xff]
    %v2901 = vld [vmem:[%s880 + $0x18] sm:$0xff]
    %2902 = vmatprep.subr.mxu0 0.0
    %2903 = vmatpush1.msra.mxu0 %v2898
    %2904 = vmatprep.subr.mxu0 0.0
    %2905 = vmatpush1.msra.mxu0 %v2899
    %2906 = vmatprep.subr.mxu0 0.0
    %2907 = vmatpush1.msra.mxu0 %v2900
    %2908 = vmatprep.subr.mxu0 0.0
    %2909 = vmatpush1.msra.mxu0 %v2901
    %2910 = vmatprep.subr.mxu0 0.0
    %2911 = vmatpush1.msra.mxu0 0.0
    %2912 = vmatprep.subr.mxu0 0.0
    %2913 = vmatpush1.msra.mxu0 0.0
    %2914 = vmatprep.subr.mxu0 0.0
    %2915 = vmatpush1.msra.mxu0 0.0
    %2916 = vmatprep.subr.mxu0 0.0
    %2917 = vmatpush1.msra.mxu0 0.0
    %2918 = vmatprep.subr.mxu0 0.0
    %2919 = vmatpush1.msra.mxu0 0.0
    %2920 = vmatprep.subr.mxu0 0.0
    %2921 = vmatpush1.msra.mxu0 0.0
    %2922 = vmatprep.subr.mxu0 0.0
    %2923 = vmatpush1.msra.mxu0 0.0
    %2924 = vmatprep.subr.mxu0 0.0
    %2925 = vmatpush1.msra.mxu0 0.0
    %2926 = vmatprep.subr.mxu0 0.0
    %2927 = vmatpush1.msra.mxu0 0.0
    %2928 = vmatprep.subr.mxu0 0.0
    %2929 = vmatpush1.msra.mxu0 0.0
    %2930 = vmatprep.subr.mxu0 0.0
    %2931 = vmatpush1.msra.mxu0 0.0
    %2932 = vmatprep.subr.mxu0 0.0
    %2933 = vmatpush1.msra.mxu0 0.0
    %2934 = vmatprep.subr.mxu0 0.0
    %2935 = vmatpush1.msra.mxu0 0.0
    %2936 = vmatprep.subr.mxu0 0.0
    %2937 = vmatpush1.msra.mxu0 0.0
    %2938 = vmatprep.subr.mxu0 0.0
    %2939 = vmatpush1.msra.mxu0 0.0
    %2940 = vmatprep.subr.mxu0 0.0
    %2941 = vmatpush1.msra.mxu0 0.0
    %2942 = vmatprep.subr.mxu0 0.0
    %2943 = vmatpush1.msra.mxu0 0.0
    %2944 = vmatprep.subr.mxu0 0.0
    %2945 = vmatpush1.msra.mxu0 0.0
    %2946 = vmatprep.subr.mxu0 0.0
    %2947 = vmatpush1.msra.mxu0 0.0
    %2948 = vmatprep.subr.mxu0 0.0
    %2949 = vmatpush1.msra.mxu0 0.0
    %2950 = vmatprep.subr.mxu0 0.0
    %2951 = vmatpush1.msra.mxu0 0.0
    %2952 = vmatprep.subr.mxu0 0.0
    %2953 = vmatpush1.msra.mxu0 0.0
    %2954 = vmatprep.subr.mxu0 0.0
    %2955 = vmatpush1.msra.mxu0 0.0
    %2956 = vmatprep.subr.mxu0 0.0
    %2957 = vmatpush1.msra.mxu0 0.0
    %2958 = vmatprep.subr.mxu0 0.0
    %2959 = vmatpush1.msra.mxu0 0.0
    %2960 = vmatprep.subr.mxu0 0.0
    %2961 = vmatpush1.msra.mxu0 0.0
    %2962 = vmatprep.subr.mxu0 0.0
    %2963 = vmatpush1.msra.mxu0 0.0
    %2964 = vmatprep.subr.mxu0 0.0
    %2965 = vmatpush1.msra.mxu0 0.0
    %2966 = vmatprep.mubr.f32.mxu0 0.0
    %2967 = vmatmul.mubr.f32.gmra.mrb[0].mxu0 %v2733
    %v2968 = vpop.f32.mrb[0].mxu0
    %v2969 = vadd.f32 0.0, %v2968
    %v2970 = vpop.f32.mrb[0].mxu0
    %2971 = vdwg.mxu0
    %v2973 = vsel %vm788, %v2897, 0
    %2975 = vmatprep.subr.mxu0 0.0
    %2976 = vmatpush1.msra.mxu0 %v2895
    %2977 = vmatprep.subr.mxu0 0.0
    %2978 = vmatpush1.msra.mxu0 %v2896
    %2979 = vmatprep.subr.mxu0 0.0
    %2980 = vmatpush1.msra.mxu0 %v2973
    %2981 = vmatprep.subr.mxu0 0.0
    %2982 = vmatpush1.msra.mxu0 0.0
    %2983 = vmatprep.subr.mxu0 0.0
    %2984 = vmatpush1.msra.mxu0 0.0
    %2985 = vmatprep.subr.mxu0 0.0
    %2986 = vmatpush1.msra.mxu0 0.0
    %2987 = vmatprep.subr.mxu0 0.0
    %2988 = vmatpush1.msra.mxu0 0.0
    %2989 = vmatprep.subr.mxu0 0.0
    %2990 = vmatpush1.msra.mxu0 0.0
    %2991 = vmatprep.subr.mxu0 0.0
    %2992 = vmatpush1.msra.mxu0 0.0
    %2993 = vmatprep.subr.mxu0 0.0
    %2994 = vmatpush1.msra.mxu0 0.0
    %2995 = vmatprep.subr.mxu0 0.0
    %2996 = vmatpush1.msra.mxu0 0.0
    %2997 = vmatprep.subr.mxu0 0.0
    %2998 = vmatpush1.msra.mxu0 0.0
    %2999 = vmatprep.subr.mxu0 0.0
    %3000 = vmatpush1.msra.mxu0 0.0
    %3001 = vmatprep.subr.mxu0 0.0
    %3002 = vmatpush1.msra.mxu0 0.0
    %3003 = vmatprep.subr.mxu0 0.0
    %3004 = vmatpush1.msra.mxu0 0.0
    %3005 = vmatprep.subr.mxu0 0.0
    %3006 = vmatpush1.msra.mxu0 0.0
    %3007 = vmatprep.subr.mxu0 0.0
    %3008 = vmatpush1.msra.mxu0 0.0
    %3009 = vmatprep.subr.mxu0 0.0
    %3010 = vmatpush1.msra.mxu0 0.0
    %3011 = vmatprep.subr.mxu0 0.0
    %3012 = vmatpush1.msra.mxu0 0.0
    %3013 = vmatprep.subr.mxu0 0.0
    %3014 = vmatpush1.msra.mxu0 0.0
    %3015 = vmatprep.subr.mxu0 0.0
    %3016 = vmatpush1.msra.mxu0 0.0
    %3017 = vmatprep.subr.mxu0 0.0
    %3018 = vmatpush1.msra.mxu0 0.0
    %3019 = vmatprep.subr.mxu0 0.0
    %3020 = vmatpush1.msra.mxu0 0.0
    %3021 = vmatprep.subr.mxu0 0.0
    %3022 = vmatpush1.msra.mxu0 0.0
    %3023 = vmatprep.subr.mxu0 0.0
    %3024 = vmatpush1.msra.mxu0 0.0
    %3025 = vmatprep.subr.mxu0 0.0
    %3026 = vmatpush1.msra.mxu0 0.0
    %3027 = vmatprep.subr.mxu0 0.0
    %3028 = vmatpush1.msra.mxu0 0.0
    %3029 = vmatprep.subr.mxu0 0.0
    %3030 = vmatpush1.msra.mxu0 0.0
    %3031 = vmatprep.subr.mxu0 0.0
    %3032 = vmatpush1.msra.mxu0 0.0
    %3033 = vmatprep.subr.mxu0 0.0
    %3034 = vmatpush1.msra.mxu0 0.0
    %3035 = vmatprep.subr.mxu0 0.0
    %3036 = vmatpush1.msra.mxu0 0.0
    %3037 = vmatprep.subr.mxu0 0.0
    %3038 = vmatpush1.msra.mxu0 0.0
    %3039 = vmatprep.mubr.f32.mxu0 0.0
    %3040 = vmatmul.mubr.f32.gmra.mrb[0].mxu0 %v2806
    %v3041 = vpop.f32.mrb[0].mxu0
    %v3042 = vadd.f32 %v2969, %v3041
    %v3043 = vpop.f32.mrb[0].mxu0
    %3044 = vdwg.mxu0
    %v3045 = vld [vmem:[%s1028] sm:$0x1]
    %v3047 = vlaneseq
    %v3048 = vshrl.u32 %v3047, 7
    %v3049 = vsub.s32 0, %v3048
    %v3050 = vrot.slane %v3045, %v3049
    %v3052 = vadd.f32 %v3042, %v3050
    %v3053 = vxor.u32 %v3052, 2147483648
    %v3054 = vmul.f32 %v3053, 1.442695
    %v3055 = vpow.pop %v3054
    %v3056 = vadd.f32 %v3055, 1.0
    %v3057 = vrcp.pop %v3056
    %v3058 = vmul.f32 1.0, %v3057
    %v3059 = vld [vmem:[%s1043] sm:$0xff]
    %v3060 = vld [vmem:[%s1043 + $0x8] sm:$0xff]
    %v3061 = vld [vmem:[%s1043 + $0x10] sm:$0x1]
    %v3062 = vld [vmem:[%s1047] sm:$0x1]
    %v3064 = vlaneseq
    %v3065 = vshrl.u32 %v3064, 7
    %v3066 = vsub.s32 0, %v3065
    %v3067 = vrot.slane %v3062, %v3066
    %v3070 = vsel %vm788, %v3061, 0
    %3072 = vmatprep.subr.mxu0 0.0
    %3073 = vmatpush1.msra.mxu0 %v3059
    %3074 = vmatprep.subr.mxu0 0.0
    %3075 = vmatpush1.msra.mxu0 %v3060
    %3076 = vmatprep.subr.mxu0 0.0
    %3077 = vmatpush1.msra.mxu0 %v3070
    %3078 = vmatprep.subr.mxu0 0.0
    %3079 = vmatpush1.msra.mxu0 0.0
    %3080 = vmatprep.subr.mxu0 0.0
    %3081 = vmatpush1.msra.mxu0 0.0
    %3082 = vmatprep.subr.mxu0 0.0
    %3083 = vmatpush1.msra.mxu0 0.0
    %3084 = vmatprep.subr.mxu0 0.0
    %3085 = vmatpush1.msra.mxu0 0.0
    %3086 = vmatprep.subr.mxu0 0.0
    %3087 = vmatpush1.msra.mxu0 0.0
    %3088 = vmatprep.subr.mxu0 0.0
    %3089 = vmatpush1.msra.mxu0 0.0
    %3090 = vmatprep.subr.mxu0 0.0
    %3091 = vmatpush1.msra.mxu0 0.0
    %3092 = vmatprep.subr.mxu0 0.0
    %3093 = vmatpush1.msra.mxu0 0.0
    %3094 = vmatprep.subr.mxu0 0.0
    %3095 = vmatpush1.msra.mxu0 0.0
    %3096 = vmatprep.subr.mxu0 0.0
    %3097 = vmatpush1.msra.mxu0 0.0
    %3098 = vmatprep.subr.mxu0 0.0
    %3099 = vmatpush1.msra.mxu0 0.0
    %3100 = vmatprep.subr.mxu0 0.0
    %3101 = vmatpush1.msra.mxu0 0.0
    %3102 = vmatprep.subr.mxu0 0.0
    %3103 = vmatpush1.msra.mxu0 0.0
    %3104 = vmatprep.subr.mxu0 0.0
    %3105 = vmatpush1.msra.mxu0 0.0
    %3106 = vmatprep.subr.mxu0 0.0
    %3107 = vmatpush1.msra.mxu0 0.0
    %3108 = vmatprep.subr.mxu0 0.0
    %3109 = vmatpush1.msra.mxu0 0.0
    %3110 = vmatprep.subr.mxu0 0.0
    %3111 = vmatpush1.msra.mxu0 0.0
    %3112 = vmatprep.subr.mxu0 0.0
    %3113 = vmatpush1.msra.mxu0 0.0
    %3114 = vmatprep.subr.mxu0 0.0
    %3115 = vmatpush1.msra.mxu0 0.0
    %3116 = vmatprep.subr.mxu0 0.0
    %3117 = vmatpush1.msra.mxu0 0.0
    %3118 = vmatprep.subr.mxu0 0.0
    %3119 = vmatpush1.msra.mxu0 0.0
    %3120 = vmatprep.subr.mxu0 0.0
    %3121 = vmatpush1.msra.mxu0 0.0
    %3122 = vmatprep.subr.mxu0 0.0
    %3123 = vmatpush1.msra.mxu0 0.0
    %3124 = vmatprep.subr.mxu0 0.0
    %3125 = vmatpush1.msra.mxu0 0.0
    %3126 = vmatprep.subr.mxu0 0.0
    %3127 = vmatpush1.msra.mxu0 0.0
    %3128 = vmatprep.subr.mxu0 0.0
    %3129 = vmatpush1.msra.mxu0 0.0
    %3130 = vmatprep.subr.mxu0 0.0
    %3131 = vmatpush1.msra.mxu0 0.0
    %3132 = vmatprep.subr.mxu0 0.0
    %3133 = vmatpush1.msra.mxu0 0.0
    %3134 = vmatprep.subr.mxu0 0.0
    %3135 = vmatpush1.msra.mxu0 0.0
    %3136 = vmatprep.mubr.f32.mxu0 0.0
    %3137 = vmatmul.mubr.f32.gmra.mrb[0].mxu0 %v2806
    %v3138 = vpop.f32.mrb[0].mxu0
    %v3139 = vadd.f32 %v3067, %v3138
    %v3140 = vpop.f32.mrb[0].mxu0
    %3141 = vdwg.mxu0
    %v3142 = vld [vmem:[%s1128] sm:$0xff]
    %v3143 = vld [vmem:[%s1128 + $0x8] sm:$0xff]
    %v3144 = vld [vmem:[%s1128 + $0x10] sm:$0xff]
    %v3145 = vld [vmem:[%s1128 + $0x18] sm:$0xff]
    %v3146 = vld [vmem:[%s1133] sm:$0x1]
    %v3148 = vlaneseq
    %v3149 = vshrl.u32 %v3148, 7
    %v3150 = vsub.s32 0, %v3149
    %v3151 = vrot.slane %v3146, %v3150
    %3153 = vmatprep.subr.mxu0 0.0
    %3154 = vmatpush1.msra.mxu0 %v3142
    %3155 = vmatprep.subr.mxu0 0.0
    %3156 = vmatpush1.msra.mxu0 %v3143
    %3157 = vmatprep.subr.mxu0 0.0
    %3158 = vmatpush1.msra.mxu0 %v3144
    %3159 = vmatprep.subr.mxu0 0.0
    %3160 = vmatpush1.msra.mxu0 %v3145
    %3161 = vmatprep.subr.mxu0 0.0
    %3162 = vmatpush1.msra.mxu0 0.0
    %3163 = vmatprep.subr.mxu0 0.0
    %3164 = vmatpush1.msra.mxu0 0.0
    %3165 = vmatprep.subr.mxu0 0.0
    %3166 = vmatpush1.msra.mxu0 0.0
    %3167 = vmatprep.subr.mxu0 0.0
    %3168 = vmatpush1.msra.mxu0 0.0
    %3169 = vmatprep.subr.mxu0 0.0
    %3170 = vmatpush1.msra.mxu0 0.0
    %3171 = vmatprep.subr.mxu0 0.0
    %3172 = vmatpush1.msra.mxu0 0.0
    %3173 = vmatprep.subr.mxu0 0.0
    %3174 = vmatpush1.msra.mxu0 0.0
    %3175 = vmatprep.subr.mxu0 0.0
    %3176 = vmatpush1.msra.mxu0 0.0
    %3177 = vmatprep.subr.mxu0 0.0
    %3178 = vmatpush1.msra.mxu0 0.0
    %3179 = vmatprep.subr.mxu0 0.0
    %3180 = vmatpush1.msra.mxu0 0.0
    %3181 = vmatprep.subr.mxu0 0.0
    %3182 = vmatpush1.msra.mxu0 0.0
    %3183 = vmatprep.subr.mxu0 0.0
    %3184 = vmatpush1.msra.mxu0 0.0
    %3185 = vmatprep.subr.mxu0 0.0
    %3186 = vmatpush1.msra.mxu0 0.0
    %3187 = vmatprep.subr.mxu0 0.0
    %3188 = vmatpush1.msra.mxu0 0.0
    %3189 = vmatprep.subr.mxu0 0.0
    %3190 = vmatpush1.msra.mxu0 0.0
    %3191 = vmatprep.subr.mxu0 0.0
    %3192 = vmatpush1.msra.mxu0 0.0
    %3193 = vmatprep.subr.mxu0 0.0
    %3194 = vmatpush1.msra.mxu0 0.0
    %3195 = vmatprep.subr.mxu0 0.0
    %3196 = vmatpush1.msra.mxu0 0.0
    %3197 = vmatprep.subr.mxu0 0.0
    %3198 = vmatpush1.msra.mxu0 0.0
    %3199 = vmatprep.subr.mxu0 0.0
    %3200 = vmatpush1.msra.mxu0 0.0
    %3201 = vmatprep.subr.mxu0 0.0
    %3202 = vmatpush1.msra.mxu0 0.0
    %3203 = vmatprep.subr.mxu0 0.0
    %3204 = vmatpush1.msra.mxu0 0.0
    %3205 = vmatprep.subr.mxu0 0.0
    %3206 = vmatpush1.msra.mxu0 0.0
    %3207 = vmatprep.subr.mxu0 0.0
    %3208 = vmatpush1.msra.mxu0 0.0
    %3209 = vmatprep.subr.mxu0 0.0
    %3210 = vmatpush1.msra.mxu0 0.0
    %3211 = vmatprep.subr.mxu0 0.0
    %3212 = vmatpush1.msra.mxu0 0.0
    %3213 = vmatprep.subr.mxu0 0.0
    %3214 = vmatpush1.msra.mxu0 0.0
    %3215 = vmatprep.subr.mxu0 0.0
    %3216 = vmatpush1.msra.mxu0 0.0
    %3217 = vmatprep.mubr.f32.mxu0 0.0
    %3218 = vmatmul.mubr.f32.gmra.mrb[0].mxu0 %v2733
    %v3219 = vpop.f32.mrb[0].mxu0
    %v3220 = vadd.f32 %v3151, %v3219
    %v3221 = vpop.f32.mrb[0].mxu0
    %3222 = vdwg.mxu0
    %v3223 = vmul.f32 %v2894, %v3220
    %v3224 = vadd.f32 %v3139, %v3223
    %v3225 = vtanh.pop %v3224
    %v3226 = vsub.f32 1.0, %v3058
    %v3227 = vmul.f32 %v3226, %v3225
    %v3228 = vmul.f32 %v3058, %v2223
    %v3229 = vadd.f32 %v3227, %v3228
    %s3230 = scalar_lea.vmem [#allocation3], 40
    %3231 = vst.msk [vmem:[%s3230] sm:$0xff] %vm200, %v3229
    %s3232 = scalar_lea.vmem [#allocation4], 24
    %v3233 = vld [vmem:[%s3232] sm:$0xff]
    %v3234 = vld [vmem:[%s2] sm:$0xff]
    %v3235 = vld [vmem:[%s2 + $0x8] sm:$0xff]
    %v3236 = vld [vmem:[%s3] sm:$0xff]
    %v3237 = vld [vmem:[%s3 + $0x8] sm:$0xff]
    %v3238 = vld [vmem:[%s3 + $0x10] sm:$0xff]
    %v3239 = vld [vmem:[%s3 + $0x18] sm:$0xff]
    %v3241 = vsel %vm200, %v2720, 0
    %3243 = vmatprep.subr.mxu0 0.0
    %3244 = vmatpush1.msra.mxu0 %v3236
    %3245 = vmatprep.subr.mxu0 0.0
    %3246 = vmatpush1.msra.mxu0 %v3237
    %3247 = vmatprep.subr.mxu0 0.0
    %3248 = vmatpush1.msra.mxu0 %v3238
    %3249 = vmatprep.subr.mxu0 0.0
    %3250 = vmatpush1.msra.mxu0 %v3239
    %3251 = vmatprep.subr.mxu0 0.0
    %3252 = vmatpush1.msra.mxu0 0.0
    %3253 = vmatprep.subr.mxu0 0.0
    %3254 = vmatpush1.msra.mxu0 0.0
    %3255 = vmatprep.subr.mxu0 0.0
    %3256 = vmatpush1.msra.mxu0 0.0
    %3257 = vmatprep.subr.mxu0 0.0
    %3258 = vmatpush1.msra.mxu0 0.0
    %3259 = vmatprep.subr.mxu0 0.0
    %3260 = vmatpush1.msra.mxu0 0.0
    %3261 = vmatprep.subr.mxu0 0.0
    %3262 = vmatpush1.msra.mxu0 0.0
    %3263 = vmatprep.subr.mxu0 0.0
    %3264 = vmatpush1.msra.mxu0 0.0
    %3265 = vmatprep.subr.mxu0 0.0
    %3266 = vmatpush1.msra.mxu0 0.0
    %3267 = vmatprep.subr.mxu0 0.0
    %3268 = vmatpush1.msra.mxu0 0.0
    %3269 = vmatprep.subr.mxu0 0.0
    %3270 = vmatpush1.msra.mxu0 0.0
    %3271 = vmatprep.subr.mxu0 0.0
    %3272 = vmatpush1.msra.mxu0 0.0
    %3273 = vmatprep.subr.mxu0 0.0
    %3274 = vmatpush1.msra.mxu0 0.0
    %3275 = vmatprep.subr.mxu0 0.0
    %3276 = vmatpush1.msra.mxu0 0.0
    %3277 = vmatprep.subr.mxu0 0.0
    %3278 = vmatpush1.msra.mxu0 0.0
    %3279 = vmatprep.subr.mxu0 0.0
    %3280 = vmatpush1.msra.mxu0 0.0
    %3281 = vmatprep.subr.mxu0 0.0
    %3282 = vmatpush1.msra.mxu0 0.0
    %3283 = vmatprep.subr.mxu0 0.0
    %3284 = vmatpush1.msra.mxu0 0.0
    %3285 = vmatprep.subr.mxu0 0.0
    %3286 = vmatpush1.msra.mxu0 0.0
    %3287 = vmatprep.subr.mxu0 0.0
    %3288 = vmatpush1.msra.mxu0 0.0
    %3289 = vmatprep.subr.mxu0 0.0
    %3290 = vmatpush1.msra.mxu0 0.0
    %3291 = vmatprep.subr.mxu0 0.0
    %3292 = vmatpush1.msra.mxu0 0.0
    %3293 = vmatprep.subr.mxu0 0.0
    %3294 = vmatpush1.msra.mxu0 0.0
    %3295 = vmatprep.subr.mxu0 0.0
    %3296 = vmatpush1.msra.mxu0 0.0
    %3297 = vmatprep.subr.mxu0 0.0
    %3298 = vmatpush1.msra.mxu0 0.0
    %3299 = vmatprep.subr.mxu0 0.0
    %3300 = vmatpush1.msra.mxu0 0.0
    %3301 = vmatprep.subr.mxu0 0.0
    %3302 = vmatpush1.msra.mxu0 0.0
    %3303 = vmatprep.subr.mxu0 0.0
    %3304 = vmatpush1.msra.mxu0 0.0
    %3305 = vmatprep.subr.mxu0 0.0
    %3306 = vmatpush1.msra.mxu0 0.0
    %3307 = vmatprep.mubr.f32.mxu0 0.0
    %3308 = vmatmul.mubr.f32.gmra.mrb[0].mxu0 %v3241
    %v3309 = vpop.f32.mrb[0].mxu0
    %v3310 = vadd.f32 0.0, %v3309
    %v3311 = vpop.f32.mrb[0].mxu0
    %3312 = vdwg.mxu0
    %v3314 = vsel %vm282, %v3233, 0
    %3316 = vmatprep.subr.mxu0 0.0
    %3317 = vmatpush1.msra.mxu0 %v3234
    %3318 = vmatprep.subr.mxu0 0.0
    %3319 = vmatpush1.msra.mxu0 %v3235
    %3320 = vmatprep.subr.mxu0 0.0
    %3321 = vmatpush1.msra.mxu0 0.0
    %3322 = vmatprep.subr.mxu0 0.0
    %3323 = vmatpush1.msra.mxu0 0.0
    %3324 = vmatprep.subr.mxu0 0.0
    %3325 = vmatpush1.msra.mxu0 0.0
    %3326 = vmatprep.subr.mxu0 0.0
    %3327 = vmatpush1.msra.mxu0 0.0
    %3328 = vmatprep.subr.mxu0 0.0
    %3329 = vmatpush1.msra.mxu0 0.0
    %3330 = vmatprep.subr.mxu0 0.0
    %3331 = vmatpush1.msra.mxu0 0.0
    %3332 = vmatprep.subr.mxu0 0.0
    %3333 = vmatpush1.msra.mxu0 0.0
    %3334 = vmatprep.subr.mxu0 0.0
    %3335 = vmatpush1.msra.mxu0 0.0
    %3336 = vmatprep.subr.mxu0 0.0
    %3337 = vmatpush1.msra.mxu0 0.0
    %3338 = vmatprep.subr.mxu0 0.0
    %3339 = vmatpush1.msra.mxu0 0.0
    %3340 = vmatprep.subr.mxu0 0.0
    %3341 = vmatpush1.msra.mxu0 0.0
    %3342 = vmatprep.subr.mxu0 0.0
    %3343 = vmatpush1.msra.mxu0 0.0
    %3344 = vmatprep.subr.mxu0 0.0
    %3345 = vmatpush1.msra.mxu0 0.0
    %3346 = vmatprep.subr.mxu0 0.0
    %3347 = vmatpush1.msra.mxu0 0.0
    %3348 = vmatprep.subr.mxu0 0.0
    %3349 = vmatpush1.msra.mxu0 0.0
    %3350 = vmatprep.subr.mxu0 0.0
    %3351 = vmatpush1.msra.mxu0 0.0
    %3352 = vmatprep.subr.mxu0 0.0
    %3353 = vmatpush1.msra.mxu0 0.0
    %3354 = vmatprep.subr.mxu0 0.0
    %3355 = vmatpush1.msra.mxu0 0.0
    %3356 = vmatprep.subr.mxu0 0.0
    %3357 = vmatpush1.msra.mxu0 0.0
    %3358 = vmatprep.subr.mxu0 0.0
    %3359 = vmatpush1.msra.mxu0 0.0
    %3360 = vmatprep.subr.mxu0 0.0
    %3361 = vmatpush1.msra.mxu0 0.0
    %3362 = vmatprep.subr.mxu0 0.0
    %3363 = vmatpush1.msra.mxu0 0.0
    %3364 = vmatprep.subr.mxu0 0.0
    %3365 = vmatpush1.msra.mxu0 0.0
    %3366 = vmatprep.subr.mxu0 0.0
    %3367 = vmatpush1.msra.mxu0 0.0
    %3368 = vmatprep.subr.mxu0 0.0
    %3369 = vmatpush1.msra.mxu0 0.0
    %3370 = vmatprep.subr.mxu0 0.0
    %3371 = vmatpush1.msra.mxu0 0.0
    %3372 = vmatprep.subr.mxu0 0.0
    %3373 = vmatpush1.msra.mxu0 0.0
    %3374 = vmatprep.subr.mxu0 0.0
    %3375 = vmatpush1.msra.mxu0 0.0
    %3376 = vmatprep.subr.mxu0 0.0
    %3377 = vmatpush1.msra.mxu0 0.0
    %3378 = vmatprep.subr.mxu0 0.0
    %3379 = vmatpush1.msra.mxu0 0.0
    %3380 = vmatprep.mubr.f32.mxu0 0.0
    %3381 = vmatmul.mubr.f32.gmra.mrb[0].mxu0 %v3314
    %v3382 = vpop.f32.mrb[0].mxu0
    %v3383 = vadd.f32 %v3310, %v3382
    %v3384 = vpop.f32.mrb[0].mxu0
    %3385 = vdwg.mxu0
    %v3386 = vld [vmem:[#allocation9] sm:$0x1]
    %v3388 = vlaneseq
    %v3389 = vshrl.u32 %v3388, 7
    %v3390 = vsub.s32 0, %v3389
    %v3391 = vrot.slane %v3386, %v3390
    %v3393 = vadd.f32 %v3383, %v3391
    %v3394 = vxor.u32 %v3393, 2147483648
    %v3395 = vmul.f32 %v3394, 1.442695
    %v3396 = vpow.pop %v3395
    %v3397 = vadd.f32 %v3396, 1.0
    %v3398 = vrcp.pop %v3397
    %v3399 = vmul.f32 1.0, %v3398
    %v3400 = vld [vmem:[%s370] sm:$0xff]
    %v3401 = vld [vmem:[%s370 + $0x8] sm:$0xff]
    %v3402 = vld [vmem:[%s373] sm:$0xff]
    %v3403 = vld [vmem:[%s373 + $0x8] sm:$0xff]
    %v3404 = vld [vmem:[%s373 + $0x10] sm:$0xff]
    %v3405 = vld [vmem:[%s373 + $0x18] sm:$0xff]
    %3406 = vmatprep.subr.mxu0 0.0
    %3407 = vmatpush1.msra.mxu0 %v3402
    %3408 = vmatprep.subr.mxu0 0.0
    %3409 = vmatpush1.msra.mxu0 %v3403
    %3410 = vmatprep.subr.mxu0 0.0
    %3411 = vmatpush1.msra.mxu0 %v3404
    %3412 = vmatprep.subr.mxu0 0.0
    %3413 = vmatpush1.msra.mxu0 %v3405
    %3414 = vmatprep.subr.mxu0 0.0
    %3415 = vmatpush1.msra.mxu0 0.0
    %3416 = vmatprep.subr.mxu0 0.0
    %3417 = vmatpush1.msra.mxu0 0.0
    %3418 = vmatprep.subr.mxu0 0.0
    %3419 = vmatpush1.msra.mxu0 0.0
    %3420 = vmatprep.subr.mxu0 0.0
    %3421 = vmatpush1.msra.mxu0 0.0
    %3422 = vmatprep.subr.mxu0 0.0
    %3423 = vmatpush1.msra.mxu0 0.0
    %3424 = vmatprep.subr.mxu0 0.0
    %3425 = vmatpush1.msra.mxu0 0.0
    %3426 = vmatprep.subr.mxu0 0.0
    %3427 = vmatpush1.msra.mxu0 0.0
    %3428 = vmatprep.subr.mxu0 0.0
    %3429 = vmatpush1.msra.mxu0 0.0
    %3430 = vmatprep.subr.mxu0 0.0
    %3431 = vmatpush1.msra.mxu0 0.0
    %3432 = vmatprep.subr.mxu0 0.0
    %3433 = vmatpush1.msra.mxu0 0.0
    %3434 = vmatprep.subr.mxu0 0.0
    %3435 = vmatpush1.msra.mxu0 0.0
    %3436 = vmatprep.subr.mxu0 0.0
    %3437 = vmatpush1.msra.mxu0 0.0
    %3438 = vmatprep.subr.mxu0 0.0
    %3439 = vmatpush1.msra.mxu0 0.0
    %3440 = vmatprep.subr.mxu0 0.0
    %3441 = vmatpush1.msra.mxu0 0.0
    %3442 = vmatprep.subr.mxu0 0.0
    %3443 = vmatpush1.msra.mxu0 0.0
    %3444 = vmatprep.subr.mxu0 0.0
    %3445 = vmatpush1.msra.mxu0 0.0
    %3446 = vmatprep.subr.mxu0 0.0
    %3447 = vmatpush1.msra.mxu0 0.0
    %3448 = vmatprep.subr.mxu0 0.0
    %3449 = vmatpush1.msra.mxu0 0.0
    %3450 = vmatprep.subr.mxu0 0.0
    %3451 = vmatpush1.msra.mxu0 0.0
    %3452 = vmatprep.subr.mxu0 0.0
    %3453 = vmatpush1.msra.mxu0 0.0
    %3454 = vmatprep.subr.mxu0 0.0
    %3455 = vmatpush1.msra.mxu0 0.0
    %3456 = vmatprep.subr.mxu0 0.0
    %3457 = vmatpush1.msra.mxu0 0.0
    %3458 = vmatprep.subr.mxu0 0.0
    %3459 = vmatpush1.msra.mxu0 0.0
    %3460 = vmatprep.subr.mxu0 0.0
    %3461 = vmatpush1.msra.mxu0 0.0
    %3462 = vmatprep.subr.mxu0 0.0
    %3463 = vmatpush1.msra.mxu0 0.0
    %3464 = vmatprep.subr.mxu0 0.0
    %3465 = vmatpush1.msra.mxu0 0.0
    %3466 = vmatprep.subr.mxu0 0.0
    %3467 = vmatpush1.msra.mxu0 0.0
    %3468 = vmatprep.subr.mxu0 0.0
    %3469 = vmatpush1.msra.mxu0 0.0
    %3470 = vmatprep.mubr.f32.mxu0 0.0
    %3471 = vmatmul.mubr.f32.gmra.mrb[0].mxu0 %v3241
    %v3472 = vpop.f32.mrb[0].mxu0
    %v3473 = vadd.f32 0.0, %v3472
    %v3474 = vpop.f32.mrb[0].mxu0
    %3475 = vdwg.mxu0
    %3476 = vmatprep.subr.mxu0 0.0
    %3477 = vmatpush1.msra.mxu0 %v3400
    %3478 = vmatprep.subr.mxu0 0.0
    %3479 = vmatpush1.msra.mxu0 %v3401
    %3480 = vmatprep.subr.mxu0 0.0
    %3481 = vmatpush1.msra.mxu0 0.0
    %3482 = vmatprep.subr.mxu0 0.0
    %3483 = vmatpush1.msra.mxu0 0.0
    %3484 = vmatprep.subr.mxu0 0.0
    %3485 = vmatpush1.msra.mxu0 0.0
    %3486 = vmatprep.subr.mxu0 0.0
    %3487 = vmatpush1.msra.mxu0 0.0
    %3488 = vmatprep.subr.mxu0 0.0
    %3489 = vmatpush1.msra.mxu0 0.0
    %3490 = vmatprep.subr.mxu0 0.0
    %3491 = vmatpush1.msra.mxu0 0.0
    %3492 = vmatprep.subr.mxu0 0.0
    %3493 = vmatpush1.msra.mxu0 0.0
    %3494 = vmatprep.subr.mxu0 0.0
    %3495 = vmatpush1.msra.mxu0 0.0
    %3496 = vmatprep.subr.mxu0 0.0
    %3497 = vmatpush1.msra.mxu0 0.0
    %3498 = vmatprep.subr.mxu0 0.0
    %3499 = vmatpush1.msra.mxu0 0.0
    %3500 = vmatprep.subr.mxu0 0.0
    %3501 = vmatpush1.msra.mxu0 0.0
    %3502 = vmatprep.subr.mxu0 0.0
    %3503 = vmatpush1.msra.mxu0 0.0
    %3504 = vmatprep.subr.mxu0 0.0
    %3505 = vmatpush1.msra.mxu0 0.0
    %3506 = vmatprep.subr.mxu0 0.0
    %3507 = vmatpush1.msra.mxu0 0.0
    %3508 = vmatprep.subr.mxu0 0.0
    %3509 = vmatpush1.msra.mxu0 0.0
    %3510 = vmatprep.subr.mxu0 0.0
    %3511 = vmatpush1.msra.mxu0 0.0
    %3512 = vmatprep.subr.mxu0 0.0
    %3513 = vmatpush1.msra.mxu0 0.0
    %3514 = vmatprep.subr.mxu0 0.0
    %3515 = vmatpush1.msra.mxu0 0.0
    %3516 = vmatprep.subr.mxu0 0.0
    %3517 = vmatpush1.msra.mxu0 0.0
    %3518 = vmatprep.subr.mxu0 0.0
    %3519 = vmatpush1.msra.mxu0 0.0
    %3520 = vmatprep.subr.mxu0 0.0
    %3521 = vmatpush1.msra.mxu0 0.0
    %3522 = vmatprep.subr.mxu0 0.0
    %3523 = vmatpush1.msra.mxu0 0.0
    %3524 = vmatprep.subr.mxu0 0.0
    %3525 = vmatpush1.msra.mxu0 0.0
    %3526 = vmatprep.subr.mxu0 0.0
    %3527 = vmatpush1.msra.mxu0 0.0
    %3528 = vmatprep.subr.mxu0 0.0
    %3529 = vmatpush1.msra.mxu0 0.0
    %3530 = vmatprep.subr.mxu0 0.0
    %3531 = vmatpush1.msra.mxu0 0.0
    %3532 = vmatprep.subr.mxu0 0.0
    %3533 = vmatpush1.msra.mxu0 0.0
    %3534 = vmatprep.subr.mxu0 0.0
    %3535 = vmatpush1.msra.mxu0 0.0
    %3536 = vmatprep.subr.mxu0 0.0
    %3537 = vmatpush1.msra.mxu0 0.0
    %3538 = vmatprep.subr.mxu0 0.0
    %3539 = vmatpush1.msra.mxu0 0.0
    %3540 = vmatprep.mubr.f32.mxu0 0.0
    %3541 = vmatmul.mubr.f32.gmra.mrb[0].mxu0 %v3314
    %v3542 = vpop.f32.mrb[0].mxu0
    %v3543 = vadd.f32 %v3473, %v3542
    %v3544 = vpop.f32.mrb[0].mxu0
    %3545 = vdwg.mxu0
    %v3546 = vld [vmem:[%s518] sm:$0x1]
    %v3548 = vlaneseq
    %v3549 = vshrl.u32 %v3548, 7
    %v3550 = vsub.s32 0, %v3549
    %v3551 = vrot.slane %v3546, %v3550
    %v3553 = vadd.f32 %v3543, %v3551
    %v3554 = vxor.u32 %v3553, 2147483648
    %v3555 = vmul.f32 %v3554, 1.442695
    %v3556 = vpow.pop %v3555
    %v3557 = vadd.f32 %v3556, 1.0
    %v3558 = vrcp.pop %v3557
    %v3559 = vmul.f32 1.0, %v3558
    %v3560 = vld [vmem:[%s533] sm:$0xff]
    %v3561 = vld [vmem:[%s533 + $0x8] sm:$0xff]
    %v3562 = vld [vmem:[%s536] sm:$0x1]
    %v3564 = vlaneseq
    %v3565 = vshrl.u32 %v3564, 7
    %v3566 = vsub.s32 0, %v3565
    %v3567 = vrot.slane %v3562, %v3566
    %3569 = vmatprep.subr.mxu0 0.0
    %3570 = vmatpush1.msra.mxu0 %v3560
    %3571 = vmatprep.subr.mxu0 0.0
    %3572 = vmatpush1.msra.mxu0 %v3561
    %3573 = vmatprep.subr.mxu0 0.0
    %3574 = vmatpush1.msra.mxu0 0.0
    %3575 = vmatprep.subr.mxu0 0.0
    %3576 = vmatpush1.msra.mxu0 0.0
    %3577 = vmatprep.subr.mxu0 0.0
    %3578 = vmatpush1.msra.mxu0 0.0
    %3579 = vmatprep.subr.mxu0 0.0
    %3580 = vmatpush1.msra.mxu0 0.0
    %3581 = vmatprep.subr.mxu0 0.0
    %3582 = vmatpush1.msra.mxu0 0.0
    %3583 = vmatprep.subr.mxu0 0.0
    %3584 = vmatpush1.msra.mxu0 0.0
    %3585 = vmatprep.subr.mxu0 0.0
    %3586 = vmatpush1.msra.mxu0 0.0
    %3587 = vmatprep.subr.mxu0 0.0
    %3588 = vmatpush1.msra.mxu0 0.0
    %3589 = vmatprep.subr.mxu0 0.0
    %3590 = vmatpush1.msra.mxu0 0.0
    %3591 = vmatprep.subr.mxu0 0.0
    %3592 = vmatpush1.msra.mxu0 0.0
    %3593 = vmatprep.subr.mxu0 0.0
    %3594 = vmatpush1.msra.mxu0 0.0
    %3595 = vmatprep.subr.mxu0 0.0
    %3596 = vmatpush1.msra.mxu0 0.0
    %3597 = vmatprep.subr.mxu0 0.0
    %3598 = vmatpush1.msra.mxu0 0.0
    %3599 = vmatprep.subr.mxu0 0.0
    %3600 = vmatpush1.msra.mxu0 0.0
    %3601 = vmatprep.subr.mxu0 0.0
    %3602 = vmatpush1.msra.mxu0 0.0
    %3603 = vmatprep.subr.mxu0 0.0
    %3604 = vmatpush1.msra.mxu0 0.0
    %3605 = vmatprep.subr.mxu0 0.0
    %3606 = vmatpush1.msra.mxu0 0.0
    %3607 = vmatprep.subr.mxu0 0.0
    %3608 = vmatpush1.msra.mxu0 0.0
    %3609 = vmatprep.subr.mxu0 0.0
    %3610 = vmatpush1.msra.mxu0 0.0
    %3611 = vmatprep.subr.mxu0 0.0
    %3612 = vmatpush1.msra.mxu0 0.0
    %3613 = vmatprep.subr.mxu0 0.0
    %3614 = vmatpush1.msra.mxu0 0.0
    %3615 = vmatprep.subr.mxu0 0.0
    %3616 = vmatpush1.msra.mxu0 0.0
    %3617 = vmatprep.subr.mxu0 0.0
    %3618 = vmatpush1.msra.mxu0 0.0
    %3619 = vmatprep.subr.mxu0 0.0
    %3620 = vmatpush1.msra.mxu0 0.0
    %3621 = vmatprep.subr.mxu0 0.0
    %3622 = vmatpush1.msra.mxu0 0.0
    %3623 = vmatprep.subr.mxu0 0.0
    %3624 = vmatpush1.msra.mxu0 0.0
    %3625 = vmatprep.subr.mxu0 0.0
    %3626 = vmatpush1.msra.mxu0 0.0
    %3627 = vmatprep.subr.mxu0 0.0
    %3628 = vmatpush1.msra.mxu0 0.0
    %3629 = vmatprep.subr.mxu0 0.0
    %3630 = vmatpush1.msra.mxu0 0.0
    %3631 = vmatprep.subr.mxu0 0.0
    %3632 = vmatpush1.msra.mxu0 0.0
    %3633 = vmatprep.mubr.f32.mxu0 0.0
    %3634 = vmatmul.mubr.f32.gmra.mrb[0].mxu0 %v3314
    %v3635 = vpop.f32.mrb[0].mxu0
    %v3636 = vadd.f32 %v3567, %v3635
    %v3637 = vpop.f32.mrb[0].mxu0
    %3638 = vdwg.mxu0
    %v3639 = vld [vmem:[%s614] sm:$0xff]
    %v3640 = vld [vmem:[%s614 + $0x8] sm:$0xff]
    %v3641 = vld [vmem:[%s614 + $0x10] sm:$0xff]
    %v3642 = vld [vmem:[%s614 + $0x18] sm:$0xff]
    %v3643 = vld [vmem:[%s619] sm:$0x1]
    %v3645 = vlaneseq
    %v3646 = vshrl.u32 %v3645, 7
    %v3647 = vsub.s32 0, %v3646
    %v3648 = vrot.slane %v3643, %v3647
    %3650 = vmatprep.subr.mxu0 0.0
    %3651 = vmatpush1.msra.mxu0 %v3639
    %3652 = vmatprep.subr.mxu0 0.0
    %3653 = vmatpush1.msra.mxu0 %v3640
    %3654 = vmatprep.subr.mxu0 0.0
    %3655 = vmatpush1.msra.mxu0 %v3641
    %3656 = vmatprep.subr.mxu0 0.0
    %3657 = vmatpush1.msra.mxu0 %v3642
    %3658 = vmatprep.subr.mxu0 0.0
    %3659 = vmatpush1.msra.mxu0 0.0
    %3660 = vmatprep.subr.mxu0 0.0
    %3661 = vmatpush1.msra.mxu0 0.0
    %3662 = vmatprep.subr.mxu0 0.0
    %3663 = vmatpush1.msra.mxu0 0.0
    %3664 = vmatprep.subr.mxu0 0.0
    %3665 = vmatpush1.msra.mxu0 0.0
    %3666 = vmatprep.subr.mxu0 0.0
    %3667 = vmatpush1.msra.mxu0 0.0
    %3668 = vmatprep.subr.mxu0 0.0
    %3669 = vmatpush1.msra.mxu0 0.0
    %3670 = vmatprep.subr.mxu0 0.0
    %3671 = vmatpush1.msra.mxu0 0.0
    %3672 = vmatprep.subr.mxu0 0.0
    %3673 = vmatpush1.msra.mxu0 0.0
    %3674 = vmatprep.subr.mxu0 0.0
    %3675 = vmatpush1.msra.mxu0 0.0
    %3676 = vmatprep.subr.mxu0 0.0
    %3677 = vmatpush1.msra.mxu0 0.0
    %3678 = vmatprep.subr.mxu0 0.0
    %3679 = vmatpush1.msra.mxu0 0.0
    %3680 = vmatprep.subr.mxu0 0.0
    %3681 = vmatpush1.msra.mxu0 0.0
    %3682 = vmatprep.subr.mxu0 0.0
    %3683 = vmatpush1.msra.mxu0 0.0
    %3684 = vmatprep.subr.mxu0 0.0
    %3685 = vmatpush1.msra.mxu0 0.0
    %3686 = vmatprep.subr.mxu0 0.0
    %3687 = vmatpush1.msra.mxu0 0.0
    %3688 = vmatprep.subr.mxu0 0.0
    %3689 = vmatpush1.msra.mxu0 0.0
    %3690 = vmatprep.subr.mxu0 0.0
    %3691 = vmatpush1.msra.mxu0 0.0
    %3692 = vmatprep.subr.mxu0 0.0
    %3693 = vmatpush1.msra.mxu0 0.0
    %3694 = vmatprep.subr.mxu0 0.0
    %3695 = vmatpush1.msra.mxu0 0.0
    %3696 = vmatprep.subr.mxu0 0.0
    %3697 = vmatpush1.msra.mxu0 0.0
    %3698 = vmatprep.subr.mxu0 0.0
    %3699 = vmatpush1.msra.mxu0 0.0
    %3700 = vmatprep.subr.mxu0 0.0
    %3701 = vmatpush1.msra.mxu0 0.0
    %3702 = vmatprep.subr.mxu0 0.0
    %3703 = vmatpush1.msra.mxu0 0.0
    %3704 = vmatprep.subr.mxu0 0.0
    %3705 = vmatpush1.msra.mxu0 0.0
    %3706 = vmatprep.subr.mxu0 0.0
    %3707 = vmatpush1.msra.mxu0 0.0
    %3708 = vmatprep.subr.mxu0 0.0
    %3709 = vmatpush1.msra.mxu0 0.0
    %3710 = vmatprep.subr.mxu0 0.0
    %3711 = vmatpush1.msra.mxu0 0.0
    %3712 = vmatprep.subr.mxu0 0.0
    %3713 = vmatpush1.msra.mxu0 0.0
    %3714 = vmatprep.mubr.f32.mxu0 0.0
    %3715 = vmatmul.mubr.f32.gmra.mrb[0].mxu0 %v3241
    %v3716 = vpop.f32.mrb[0].mxu0
    %v3717 = vadd.f32 %v3648, %v3716
    %v3718 = vpop.f32.mrb[0].mxu0
    %3719 = vdwg.mxu0
    %v3720 = vmul.f32 %v3399, %v3717
    %v3721 = vadd.f32 %v3636, %v3720
    %v3722 = vtanh.pop %v3721
    %v3723 = vsub.f32 1.0, %v3559
    %v3724 = vmul.f32 %v3723, %v3722
    %v3725 = vmul.f32 %v3559, %v2720
    %v3726 = vadd.f32 %v3724, %v3725
    %s3727 = scalar_lea.vmem [#allocation2], 24
    %3728 = vst.msk [vmem:[%s3727] sm:$0xff] %vm200, %v3726
    %s3729 = scalar_lea.vmem [#allocation7], 32
    %v3730 = vld [vmem:[%s3729] sm:$0xff]
    %v3731 = vld [vmem:[%s5] sm:$0xff]
    %v3732 = vld [vmem:[%s5 + $0x8] sm:$0xff]
    %v3733 = vld [vmem:[%s5 + $0x10] sm:$0x1]
    %v3734 = vld [vmem:[%s6] sm:$0xff]
    %v3735 = vld [vmem:[%s6 + $0x8] sm:$0xff]
    %v3736 = vld [vmem:[%s6 + $0x10] sm:$0xff]
    %v3737 = vld [vmem:[%s6 + $0x18] sm:$0xff]
    %v3739 = vsel %vm200, %v3229, 0
    %3741 = vmatprep.subr.mxu0 0.0
    %3742 = vmatpush1.msra.mxu0 %v3734
    %3743 = vmatprep.subr.mxu0 0.0
    %3744 = vmatpush1.msra.mxu0 %v3735
    %3745 = vmatprep.subr.mxu0 0.0
    %3746 = vmatpush1.msra.mxu0 %v3736
    %3747 = vmatprep.subr.mxu0 0.0
    %3748 = vmatpush1.msra.mxu0 %v3737
    %3749 = vmatprep.subr.mxu0 0.0
    %3750 = vmatpush1.msra.mxu0 0.0
    %3751 = vmatprep.subr.mxu0 0.0
    %3752 = vmatpush1.msra.mxu0 0.0
    %3753 = vmatprep.subr.mxu0 0.0
    %3754 = vmatpush1.msra.mxu0 0.0
    %3755 = vmatprep.subr.mxu0 0.0
    %3756 = vmatpush1.msra.mxu0 0.0
    %3757 = vmatprep.subr.mxu0 0.0
    %3758 = vmatpush1.msra.mxu0 0.0
    %3759 = vmatprep.subr.mxu0 0.0
    %3760 = vmatpush1.msra.mxu0 0.0
    %3761 = vmatprep.subr.mxu0 0.0
    %3762 = vmatpush1.msra.mxu0 0.0
    %3763 = vmatprep.subr.mxu0 0.0
    %3764 = vmatpush1.msra.mxu0 0.0
    %3765 = vmatprep.subr.mxu0 0.0
    %3766 = vmatpush1.msra.mxu0 0.0
    %3767 = vmatprep.subr.mxu0 0.0
    %3768 = vmatpush1.msra.mxu0 0.0
    %3769 = vmatprep.subr.mxu0 0.0
    %3770 = vmatpush1.msra.mxu0 0.0
    %3771 = vmatprep.subr.mxu0 0.0
    %3772 = vmatpush1.msra.mxu0 0.0
    %3773 = vmatprep.subr.mxu0 0.0
    %3774 = vmatpush1.msra.mxu0 0.0
    %3775 = vmatprep.subr.mxu0 0.0
    %3776 = vmatpush1.msra.mxu0 0.0
    %3777 = vmatprep.subr.mxu0 0.0
    %3778 = vmatpush1.msra.mxu0 0.0
    %3779 = vmatprep.subr.mxu0 0.0
    %3780 = vmatpush1.msra.mxu0 0.0
    %3781 = vmatprep.subr.mxu0 0.0
    %3782 = vmatpush1.msra.mxu0 0.0
    %3783 = vmatprep.subr.mxu0 0.0
    %3784 = vmatpush1.msra.mxu0 0.0
    %3785 = vmatprep.subr.mxu0 0.0
    %3786 = vmatpush1.msra.mxu0 0.0
    %3787 = vmatprep.subr.mxu0 0.0
    %3788 = vmatpush1.msra.mxu0 0.0
    %3789 = vmatprep.subr.mxu0 0.0
    %3790 = vmatpush1.msra.mxu0 0.0
    %3791 = vmatprep.subr.mxu0 0.0
    %3792 = vmatpush1.msra.mxu0 0.0
    %3793 = vmatprep.subr.mxu0 0.0
    %3794 = vmatpush1.msra.mxu0 0.0
    %3795 = vmatprep.subr.mxu0 0.0
    %3796 = vmatpush1.msra.mxu0 0.0
    %3797 = vmatprep.subr.mxu0 0.0
    %3798 = vmatpush1.msra.mxu0 0.0
    %3799 = vmatprep.subr.mxu0 0.0
    %3800 = vmatpush1.msra.mxu0 0.0
    %3801 = vmatprep.subr.mxu0 0.0
    %3802 = vmatpush1.msra.mxu0 0.0
    %3803 = vmatprep.subr.mxu0 0.0
    %3804 = vmatpush1.msra.mxu0 0.0
    %3805 = vmatprep.mubr.f32.mxu0 0.0
    %3806 = vmatmul.mubr.f32.gmra.mrb[0].mxu0 %v3739
    %v3807 = vpop.f32.mrb[0].mxu0
    %v3808 = vadd.f32 0.0, %v3807
    %v3809 = vpop.f32.mrb[0].mxu0
    %3810 = vdwg.mxu0
    %v3812 = vsel %vm784, %v3730, 0
    %v3815 = vsel %vm788, %v3733, 0
    %3817 = vmatprep.subr.mxu0 0.0
    %3818 = vmatpush1.msra.mxu0 %v3731
    %3819 = vmatprep.subr.mxu0 0.0
    %3820 = vmatpush1.msra.mxu0 %v3732
    %3821 = vmatprep.subr.mxu0 0.0
    %3822 = vmatpush1.msra.mxu0 %v3815
    %3823 = vmatprep.subr.mxu0 0.0
    %3824 = vmatpush1.msra.mxu0 0.0
    %3825 = vmatprep.subr.mxu0 0.0
    %3826 = vmatpush1.msra.mxu0 0.0
    %3827 = vmatprep.subr.mxu0 0.0
    %3828 = vmatpush1.msra.mxu0 0.0
    %3829 = vmatprep.subr.mxu0 0.0
    %3830 = vmatpush1.msra.mxu0 0.0
    %3831 = vmatprep.subr.mxu0 0.0
    %3832 = vmatpush1.msra.mxu0 0.0
    %3833 = vmatprep.subr.mxu0 0.0
    %3834 = vmatpush1.msra.mxu0 0.0
    %3835 = vmatprep.subr.mxu0 0.0
    %3836 = vmatpush1.msra.mxu0 0.0
    %3837 = vmatprep.subr.mxu0 0.0
    %3838 = vmatpush1.msra.mxu0 0.0
    %3839 = vmatprep.subr.mxu0 0.0
    %3840 = vmatpush1.msra.mxu0 0.0
    %3841 = vmatprep.subr.mxu0 0.0
    %3842 = vmatpush1.msra.mxu0 0.0
    %3843 = vmatprep.subr.mxu0 0.0
    %3844 = vmatpush1.msra.mxu0 0.0
    %3845 = vmatprep.subr.mxu0 0.0
    %3846 = vmatpush1.msra.mxu0 0.0
    %3847 = vmatprep.subr.mxu0 0.0
    %3848 = vmatpush1.msra.mxu0 0.0
    %3849 = vmatprep.subr.mxu0 0.0
    %3850 = vmatpush1.msra.mxu0 0.0
    %3851 = vmatprep.subr.mxu0 0.0
    %3852 = vmatpush1.msra.mxu0 0.0
    %3853 = vmatprep.subr.mxu0 0.0
    %3854 = vmatpush1.msra.mxu0 0.0
    %3855 = vmatprep.subr.mxu0 0.0
    %3856 = vmatpush1.msra.mxu0 0.0
    %3857 = vmatprep.subr.mxu0 0.0
    %3858 = vmatpush1.msra.mxu0 0.0
    %3859 = vmatprep.subr.mxu0 0.0
    %3860 = vmatpush1.msra.mxu0 0.0
    %3861 = vmatprep.subr.mxu0 0.0
    %3862 = vmatpush1.msra.mxu0 0.0
    %3863 = vmatprep.subr.mxu0 0.0
    %3864 = vmatpush1.msra.mxu0 0.0
    %3865 = vmatprep.subr.mxu0 0.0
    %3866 = vmatpush1.msra.mxu0 0.0
    %3867 = vmatprep.subr.mxu0 0.0
    %3868 = vmatpush1.msra.mxu0 0.0
    %3869 = vmatprep.subr.mxu0 0.0
    %3870 = vmatpush1.msra.mxu0 0.0
    %3871 = vmatprep.subr.mxu0 0.0
    %3872 = vmatpush1.msra.mxu0 0.0
    %3873 = vmatprep.subr.mxu0 0.0
    %3874 = vmatpush1.msra.mxu0 0.0
    %3875 = vmatprep.subr.mxu0 0.0
    %3876 = vmatpush1.msra.mxu0 0.0
    %3877 = vmatprep.subr.mxu0 0.0
    %3878 = vmatpush1.msra.mxu0 0.0
    %3879 = vmatprep.subr.mxu0 0.0
    %3880 = vmatpush1.msra.mxu0 0.0
    %3881 = vmatprep.mubr.f32.mxu0 0.0
    %3882 = vmatmul.mubr.f32.gmra.mrb[0].mxu0 %v3812
    %v3883 = vpop.f32.mrb[0].mxu0
    %v3884 = vadd.f32 %v3808, %v3883
    %v3885 = vpop.f32.mrb[0].mxu0
    %3886 = vdwg.mxu0
    %v3887 = vld [vmem:[#allocation10] sm:$0x1]
    %v3889 = vlaneseq
    %v3890 = vshrl.u32 %v3889, 7
    %v3891 = vsub.s32 0, %v3890
    %v3892 = vrot.slane %v3887, %v3891
    %v3894 = vadd.f32 %v3884, %v3892
    %v3895 = vxor.u32 %v3894, 2147483648
    %v3896 = vmul.f32 %v3895, 1.442695
    %v3897 = vpow.pop %v3896
    %v3898 = vadd.f32 %v3897, 1.0
    %v3899 = vrcp.pop %v3898
    %v3900 = vmul.f32 1.0, %v3899
    %v3901 = vld [vmem:[%s876] sm:$0xff]
    %v3902 = vld [vmem:[%s876 + $0x8] sm:$0xff]
    %v3903 = vld [vmem:[%s876 + $0x10] sm:$0x1]
    %v3904 = vld [vmem:[%s880] sm:$0xff]
    %v3905 = vld [vmem:[%s880 + $0x8] sm:$0xff]
    %v3906 = vld [vmem:[%s880 + $0x10] sm:$0xff]
    %v3907 = vld [vmem:[%s880 + $0x18] sm:$0xff]
    %3908 = vmatprep.subr.mxu0 0.0
    %3909 = vmatpush1.msra.mxu0 %v3904
    %3910 = vmatprep.subr.mxu0 0.0
    %3911 = vmatpush1.msra.mxu0 %v3905
    %3912 = vmatprep.subr.mxu0 0.0
    %3913 = vmatpush1.msra.mxu0 %v3906
    %3914 = vmatprep.subr.mxu0 0.0
    %3915 = vmatpush1.msra.mxu0 %v3907
    %3916 = vmatprep.subr.mxu0 0.0
    %3917 = vmatpush1.msra.mxu0 0.0
    %3918 = vmatprep.subr.mxu0 0.0
    %3919 = vmatpush1.msra.mxu0 0.0
    %3920 = vmatprep.subr.mxu0 0.0
    %3921 = vmatpush1.msra.mxu0 0.0
    %3922 = vmatprep.subr.mxu0 0.0
    %3923 = vmatpush1.msra.mxu0 0.0
    %3924 = vmatprep.subr.mxu0 0.0
    %3925 = vmatpush1.msra.mxu0 0.0
    %3926 = vmatprep.subr.mxu0 0.0
    %3927 = vmatpush1.msra.mxu0 0.0
    %3928 = vmatprep.subr.mxu0 0.0
    %3929 = vmatpush1.msra.mxu0 0.0
    %3930 = vmatprep.subr.mxu0 0.0
    %3931 = vmatpush1.msra.mxu0 0.0
    %3932 = vmatprep.subr.mxu0 0.0
    %3933 = vmatpush1.msra.mxu0 0.0
    %3934 = vmatprep.subr.mxu0 0.0
    %3935 = vmatpush1.msra.mxu0 0.0
    %3936 = vmatprep.subr.mxu0 0.0
    %3937 = vmatpush1.msra.mxu0 0.0
    %3938 = vmatprep.subr.mxu0 0.0
    %3939 = vmatpush1.msra.mxu0 0.0
    %3940 = vmatprep.subr.mxu0 0.0
    %3941 = vmatpush1.msra.mxu0 0.0
    %3942 = vmatprep.subr.mxu0 0.0
    %3943 = vmatpush1.msra.mxu0 0.0
    %3944 = vmatprep.subr.mxu0 0.0
    %3945 = vmatpush1.msra.mxu0 0.0
    %3946 = vmatprep.subr.mxu0 0.0
    %3947 = vmatpush1.msra.mxu0 0.0
    %3948 = vmatprep.subr.mxu0 0.0
    %3949 = vmatpush1.msra.mxu0 0.0
    %3950 = vmatprep.subr.mxu0 0.0
    %3951 = vmatpush1.msra.mxu0 0.0
    %3952 = vmatprep.subr.mxu0 0.0
    %3953 = vmatpush1.msra.mxu0 0.0
    %3954 = vmatprep.subr.mxu0 0.0
    %3955 = vmatpush1.msra.mxu0 0.0
    %3956 = vmatprep.subr.mxu0 0.0
    %3957 = vmatpush1.msra.mxu0 0.0
    %3958 = vmatprep.subr.mxu0 0.0
    %3959 = vmatpush1.msra.mxu0 0.0
    %3960 = vmatprep.subr.mxu0 0.0
    %3961 = vmatpush1.msra.mxu0 0.0
    %3962 = vmatprep.subr.mxu0 0.0
    %3963 = vmatpush1.msra.mxu0 0.0
    %3964 = vmatprep.subr.mxu0 0.0
    %3965 = vmatpush1.msra.mxu0 0.0
    %3966 = vmatprep.subr.mxu0 0.0
    %3967 = vmatpush1.msra.mxu0 0.0
    %3968 = vmatprep.subr.mxu0 0.0
    %3969 = vmatpush1.msra.mxu0 0.0
    %3970 = vmatprep.subr.mxu0 0.0
    %3971 = vmatpush1.msra.mxu0 0.0
    %3972 = vmatprep.mubr.f32.mxu0 0.0
    %3973 = vmatmul.mubr.f32.gmra.mrb[0].mxu0 %v3739
    %v3974 = vpop.f32.mrb[0].mxu0
    %v3975 = vadd.f32 0.0, %v3974
    %v3976 = vpop.f32.mrb[0].mxu0
    %3977 = vdwg.mxu0
    %v3979 = vsel %vm788, %v3903, 0
    %3981 = vmatprep.subr.mxu0 0.0
    %3982 = vmatpush1.msra.mxu0 %v3901
    %3983 = vmatprep.subr.mxu0 0.0
    %3984 = vmatpush1.msra.mxu0 %v3902
    %3985 = vmatprep.subr.mxu0 0.0
    %3986 = vmatpush1.msra.mxu0 %v3979
    %3987 = vmatprep.subr.mxu0 0.0
    %3988 = vmatpush1.msra.mxu0 0.0
    %3989 = vmatprep.subr.mxu0 0.0
    %3990 = vmatpush1.msra.mxu0 0.0
    %3991 = vmatprep.subr.mxu0 0.0
    %3992 = vmatpush1.msra.mxu0 0.0
    %3993 = vmatprep.subr.mxu0 0.0
    %3994 = vmatpush1.msra.mxu0 0.0
    %3995 = vmatprep.subr.mxu0 0.0
    %3996 = vmatpush1.msra.mxu0 0.0
    %3997 = vmatprep.subr.mxu0 0.0
    %3998 = vmatpush1.msra.mxu0 0.0
    %3999 = vmatprep.subr.mxu0 0.0
    %4000 = vmatpush1.msra.mxu0 0.0
    %4001 = vmatprep.subr.mxu0 0.0
    %4002 = vmatpush1.msra.mxu0 0.0
    %4003 = vmatprep.subr.mxu0 0.0
    %4004 = vmatpush1.msra.mxu0 0.0
    %4005 = vmatprep.subr.mxu0 0.0
    %4006 = vmatpush1.msra.mxu0 0.0
    %4007 = vmatprep.subr.mxu0 0.0
    %4008 = vmatpush1.msra.mxu0 0.0
    %4009 = vmatprep.subr.mxu0 0.0
    %4010 = vmatpush1.msra.mxu0 0.0
    %4011 = vmatprep.subr.mxu0 0.0
    %4012 = vmatpush1.msra.mxu0 0.0
    %4013 = vmatprep.subr.mxu0 0.0
    %4014 = vmatpush1.msra.mxu0 0.0
    %4015 = vmatprep.subr.mxu0 0.0
    %4016 = vmatpush1.msra.mxu0 0.0
    %4017 = vmatprep.subr.mxu0 0.0
    %4018 = vmatpush1.msra.mxu0 0.0
    %4019 = vmatprep.subr.mxu0 0.0
    %4020 = vmatpush1.msra.mxu0 0.0
    %4021 = vmatprep.subr.mxu0 0.0
    %4022 = vmatpush1.msra.mxu0 0.0
    %4023 = vmatprep.subr.mxu0 0.0
    %4024 = vmatpush1.msra.mxu0 0.0
    %4025 = vmatprep.subr.mxu0 0.0
    %4026 = vmatpush1.msra.mxu0 0.0
    %4027 = vmatprep.subr.mxu0 0.0
    %4028 = vmatpush1.msra.mxu0 0.0
    %4029 = vmatprep.subr.mxu0 0.0
    %4030 = vmatpush1.msra.mxu0 0.0
    %4031 = vmatprep.subr.mxu0 0.0
    %4032 = vmatpush1.msra.mxu0 0.0
    %4033 = vmatprep.subr.mxu0 0.0
    %4034 = vmatpush1.msra.mxu0 0.0
    %4035 = vmatprep.subr.mxu0 0.0
    %4036 = vmatpush1.msra.mxu0 0.0
    %4037 = vmatprep.subr.mxu0 0.0
    %4038 = vmatpush1.msra.mxu0 0.0
    %4039 = vmatprep.subr.mxu0 0.0
    %4040 = vmatpush1.msra.mxu0 0.0
    %4041 = vmatprep.subr.mxu0 0.0
    %4042 = vmatpush1.msra.mxu0 0.0
    %4043 = vmatprep.subr.mxu0 0.0
    %4044 = vmatpush1.msra.mxu0 0.0
    %4045 = vmatprep.mubr.f32.mxu0 0.0
    %4046 = vmatmul.mubr.f32.gmra.mrb[0].mxu0 %v3812
    %v4047 = vpop.f32.mrb[0].mxu0
    %v4048 = vadd.f32 %v3975, %v4047
    %v4049 = vpop.f32.mrb[0].mxu0
    %4050 = vdwg.mxu0
    %v4051 = vld [vmem:[%s1028] sm:$0x1]
    %v4053 = vlaneseq
    %v4054 = vshrl.u32 %v4053, 7
    %v4055 = vsub.s32 0, %v4054
    %v4056 = vrot.slane %v4051, %v4055
    %v4058 = vadd.f32 %v4048, %v4056
    %v4059 = vxor.u32 %v4058, 2147483648
    %v4060 = vmul.f32 %v4059, 1.442695
    %v4061 = vpow.pop %v4060
    %v4062 = vadd.f32 %v4061, 1.0
    %v4063 = vrcp.pop %v4062
    %v4064 = vmul.f32 1.0, %v4063
    %v4065 = vld [vmem:[%s1043] sm:$0xff]
    %v4066 = vld [vmem:[%s1043 + $0x8] sm:$0xff]
    %v4067 = vld [vmem:[%s1043 + $0x10] sm:$0x1]
    %v4068 = vld [vmem:[%s1047] sm:$0x1]
    %v4070 = vlaneseq
    %v4071 = vshrl.u32 %v4070, 7
    %v4072 = vsub.s32 0, %v4071
    %v4073 = vrot.slane %v4068, %v4072
    %v4076 = vsel %vm788, %v4067, 0
    %4078 = vmatprep.subr.mxu0 0.0
    %4079 = vmatpush1.msra.mxu0 %v4065
    %4080 = vmatprep.subr.mxu0 0.0
    %4081 = vmatpush1.msra.mxu0 %v4066
    %4082 = vmatprep.subr.mxu0 0.0
    %4083 = vmatpush1.msra.mxu0 %v4076
    %4084 = vmatprep.subr.mxu0 0.0
    %4085 = vmatpush1.msra.mxu0 0.0
    %4086 = vmatprep.subr.mxu0 0.0
    %4087 = vmatpush1.msra.mxu0 0.0
    %4088 = vmatprep.subr.mxu0 0.0
    %4089 = vmatpush1.msra.mxu0 0.0
    %4090 = vmatprep.subr.mxu0 0.0
    %4091 = vmatpush1.msra.mxu0 0.0
    %4092 = vmatprep.subr.mxu0 0.0
    %4093 = vmatpush1.msra.mxu0 0.0
    %4094 = vmatprep.subr.mxu0 0.0
    %4095 = vmatpush1.msra.mxu0 0.0
    %4096 = vmatprep.subr.mxu0 0.0
    %4097 = vmatpush1.msra.mxu0 0.0
    %4098 = vmatprep.subr.mxu0 0.0
    %4099 = vmatpush1.msra.mxu0 0.0
    %4100 = vmatprep.subr.mxu0 0.0
    %4101 = vmatpush1.msra.mxu0 0.0
    %4102 = vmatprep.subr.mxu0 0.0
    %4103 = vmatpush1.msra.mxu0 0.0
    %4104 = vmatprep.subr.mxu0 0.0
    %4105 = vmatpush1.msra.mxu0 0.0
    %4106 = vmatprep.subr.mxu0 0.0
    %4107 = vmatpush1.msra.mxu0 0.0
    %4108 = vmatprep.subr.mxu0 0.0
    %4109 = vmatpush1.msra.mxu0 0.0
    %4110 = vmatprep.subr.mxu0 0.0
    %4111 = vmatpush1.msra.mxu0 0.0
    %4112 = vmatprep.subr.mxu0 0.0
    %4113 = vmatpush1.msra.mxu0 0.0
    %4114 = vmatprep.subr.mxu0 0.0
    %4115 = vmatpush1.msra.mxu0 0.0
    %4116 = vmatprep.subr.mxu0 0.0
    %4117 = vmatpush1.msra.mxu0 0.0
    %4118 = vmatprep.subr.mxu0 0.0
    %4119 = vmatpush1.msra.mxu0 0.0
    %4120 = vmatprep.subr.mxu0 0.0
    %4121 = vmatpush1.msra.mxu0 0.0
    %4122 = vmatprep.subr.mxu0 0.0
    %4123 = vmatpush1.msra.mxu0 0.0
    %4124 = vmatprep.subr.mxu0 0.0
    %4125 = vmatpush1.msra.mxu0 0.0
    %4126 = vmatprep.subr.mxu0 0.0
    %4127 = vmatpush1.msra.mxu0 0.0
    %4128 = vmatprep.subr.mxu0 0.0
    %4129 = vmatpush1.msra.mxu0 0.0
    %4130 = vmatprep.subr.mxu0 0.0
    %4131 = vmatpush1.msra.mxu0 0.0
    %4132 = vmatprep.subr.mxu0 0.0
    %4133 = vmatpush1.msra.mxu0 0.0
    %4134 = vmatprep.subr.mxu0 0.0
    %4135 = vmatpush1.msra.mxu0 0.0
    %4136 = vmatprep.subr.mxu0 0.0
    %4137 = vmatpush1.msra.mxu0 0.0
    %4138 = vmatprep.subr.mxu0 0.0
    %4139 = vmatpush1.msra.mxu0 0.0
    %4140 = vmatprep.subr.mxu0 0.0
    %4141 = vmatpush1.msra.mxu0 0.0
    %4142 = vmatprep.mubr.f32.mxu0 0.0
    %4143 = vmatmul.mubr.f32.gmra.mrb[0].mxu0 %v3812
    %v4144 = vpop.f32.mrb[0].mxu0
    %v4145 = vadd.f32 %v4073, %v4144
    %v4146 = vpop.f32.mrb[0].mxu0
    %4147 = vdwg.mxu0
    %v4148 = vld [vmem:[%s1128] sm:$0xff]
    %v4149 = vld [vmem:[%s1128 + $0x8] sm:$0xff]
    %v4150 = vld [vmem:[%s1128 + $0x10] sm:$0xff]
    %v4151 = vld [vmem:[%s1128 + $0x18] sm:$0xff]
    %v4152 = vld [vmem:[%s1133] sm:$0x1]
    %v4154 = vlaneseq
    %v4155 = vshrl.u32 %v4154, 7
    %v4156 = vsub.s32 0, %v4155
    %v4157 = vrot.slane %v4152, %v4156
    %4159 = vmatprep.subr.mxu0 0.0
    %4160 = vmatpush1.msra.mxu0 %v4148
    %4161 = vmatprep.subr.mxu0 0.0
    %4162 = vmatpush1.msra.mxu0 %v4149
    %4163 = vmatprep.subr.mxu0 0.0
    %4164 = vmatpush1.msra.mxu0 %v4150
    %4165 = vmatprep.subr.mxu0 0.0
    %4166 = vmatpush1.msra.mxu0 %v4151
    %4167 = vmatprep.subr.mxu0 0.0
    %4168 = vmatpush1.msra.mxu0 0.0
    %4169 = vmatprep.subr.mxu0 0.0
    %4170 = vmatpush1.msra.mxu0 0.0
    %4171 = vmatprep.subr.mxu0 0.0
    %4172 = vmatpush1.msra.mxu0 0.0
    %4173 = vmatprep.subr.mxu0 0.0
    %4174 = vmatpush1.msra.mxu0 0.0
    %4175 = vmatprep.subr.mxu0 0.0
    %4176 = vmatpush1.msra.mxu0 0.0
    %4177 = vmatprep.subr.mxu0 0.0
    %4178 = vmatpush1.msra.mxu0 0.0
    %4179 = vmatprep.subr.mxu0 0.0
    %4180 = vmatpush1.msra.mxu0 0.0
    %4181 = vmatprep.subr.mxu0 0.0
    %4182 = vmatpush1.msra.mxu0 0.0
    %4183 = vmatprep.subr.mxu0 0.0
    %4184 = vmatpush1.msra.mxu0 0.0
    %4185 = vmatprep.subr.mxu0 0.0
    %4186 = vmatpush1.msra.mxu0 0.0
    %4187 = vmatprep.subr.mxu0 0.0
    %4188 = vmatpush1.msra.mxu0 0.0
    %4189 = vmatprep.subr.mxu0 0.0
    %4190 = vmatpush1.msra.mxu0 0.0
    %4191 = vmatprep.subr.mxu0 0.0
    %4192 = vmatpush1.msra.mxu0 0.0
    %4193 = vmatprep.subr.mxu0 0.0
    %4194 = vmatpush1.msra.mxu0 0.0
    %4195 = vmatprep.subr.mxu0 0.0
    %4196 = vmatpush1.msra.mxu0 0.0
    %4197 = vmatprep.subr.mxu0 0.0
    %4198 = vmatpush1.msra.mxu0 0.0
    %4199 = vmatprep.subr.mxu0 0.0
    %4200 = vmatpush1.msra.mxu0 0.0
    %4201 = vmatprep.subr.mxu0 0.0
    %4202 = vmatpush1.msra.mxu0 0.0
    %4203 = vmatprep.subr.mxu0 0.0
    %4204 = vmatpush1.msra.mxu0 0.0
    %4205 = vmatprep.subr.mxu0 0.0
    %4206 = vmatpush1.msra.mxu0 0.0
    %4207 = vmatprep.subr.mxu0 0.0
    %4208 = vmatpush1.msra.mxu0 0.0
    %4209 = vmatprep.subr.mxu0 0.0
    %4210 = vmatpush1.msra.mxu0 0.0
    %4211 = vmatprep.subr.mxu0 0.0
    %4212 = vmatpush1.msra.mxu0 0.0
    %4213 = vmatprep.subr.mxu0 0.0
    %4214 = vmatpush1.msra.mxu0 0.0
    %4215 = vmatprep.subr.mxu0 0.0
    %4216 = vmatpush1.msra.mxu0 0.0
    %4217 = vmatprep.subr.mxu0 0.0
    %4218 = vmatpush1.msra.mxu0 0.0
    %4219 = vmatprep.subr.mxu0 0.0
    %4220 = vmatpush1.msra.mxu0 0.0
    %4221 = vmatprep.subr.mxu0 0.0
    %4222 = vmatpush1.msra.mxu0 0.0
    %4223 = vmatprep.mubr.f32.mxu0 0.0
    %4224 = vmatmul.mubr.f32.gmra.mrb[0].mxu0 %v3739
    %v4225 = vpop.f32.mrb[0].mxu0
    %v4226 = vadd.f32 %v4157, %v4225
    %v4227 = vpop.f32.mrb[0].mxu0
    %4228 = vdwg.mxu0
    %v4229 = vmul.f32 %v3900, %v4226
    %v4230 = vadd.f32 %v4145, %v4229
    %v4231 = vtanh.pop %v4230
    %v4232 = vsub.f32 1.0, %v4064
    %v4233 = vmul.f32 %v4232, %v4231
    %v4234 = vmul.f32 %v4064, %v3229
    %v4235 = vadd.f32 %v4233, %v4234
    %s4236 = scalar_lea.vmem [#allocation3], 32
    %4237 = vst.msk [vmem:[%s4236] sm:$0xff] %vm200, %v4235
    %s4238 = scalar_lea.vmem [#allocation4], 32
    %v4239 = vld [vmem:[%s4238] sm:$0xff]
    %v4240 = vld [vmem:[%s2] sm:$0xff]
    %v4241 = vld [vmem:[%s2 + $0x8] sm:$0xff]
    %v4242 = vld [vmem:[%s3] sm:$0xff]
    %v4243 = vld [vmem:[%s3 + $0x8] sm:$0xff]
    %v4244 = vld [vmem:[%s3 + $0x10] sm:$0xff]
    %v4245 = vld [vmem:[%s3 + $0x18] sm:$0xff]
    %v4247 = vsel %vm200, %v3726, 0
    %4249 = vmatprep.subr.mxu0 0.0
    %4250 = vmatpush1.msra.mxu0 %v4242
    %4251 = vmatprep.subr.mxu0 0.0
    %4252 = vmatpush1.msra.mxu0 %v4243
    %4253 = vmatprep.subr.mxu0 0.0
    %4254 = vmatpush1.msra.mxu0 %v4244
    %4255 = vmatprep.subr.mxu0 0.0
    %4256 = vmatpush1.msra.mxu0 %v4245
    %4257 = vmatprep.subr.mxu0 0.0
    %4258 = vmatpush1.msra.mxu0 0.0
    %4259 = vmatprep.subr.mxu0 0.0
    %4260 = vmatpush1.msra.mxu0 0.0
    %4261 = vmatprep.subr.mxu0 0.0
    %4262 = vmatpush1.msra.mxu0 0.0
    %4263 = vmatprep.subr.mxu0 0.0
    %4264 = vmatpush1.msra.mxu0 0.0
    %4265 = vmatprep.subr.mxu0 0.0
    %4266 = vmatpush1.msra.mxu0 0.0
    %4267 = vmatprep.subr.mxu0 0.0
    %4268 = vmatpush1.msra.mxu0 0.0
    %4269 = vmatprep.subr.mxu0 0.0
    %4270 = vmatpush1.msra.mxu0 0.0
    %4271 = vmatprep.subr.mxu0 0.0
    %4272 = vmatpush1.msra.mxu0 0.0
    %4273 = vmatprep.subr.mxu0 0.0
    %4274 = vmatpush1.msra.mxu0 0.0
    %4275 = vmatprep.subr.mxu0 0.0
    %4276 = vmatpush1.msra.mxu0 0.0
    %4277 = vmatprep.subr.mxu0 0.0
    %4278 = vmatpush1.msra.mxu0 0.0
    %4279 = vmatprep.subr.mxu0 0.0
    %4280 = vmatpush1.msra.mxu0 0.0
    %4281 = vmatprep.subr.mxu0 0.0
    %4282 = vmatpush1.msra.mxu0 0.0
    %4283 = vmatprep.subr.mxu0 0.0
    %4284 = vmatpush1.msra.mxu0 0.0
    %4285 = vmatprep.subr.mxu0 0.0
    %4286 = vmatpush1.msra.mxu0 0.0
    %4287 = vmatprep.subr.mxu0 0.0
    %4288 = vmatpush1.msra.mxu0 0.0
    %4289 = vmatprep.subr.mxu0 0.0
    %4290 = vmatpush1.msra.mxu0 0.0
    %4291 = vmatprep.subr.mxu0 0.0
    %4292 = vmatpush1.msra.mxu0 0.0
    %4293 = vmatprep.subr.mxu0 0.0
    %4294 = vmatpush1.msra.mxu0 0.0
    %4295 = vmatprep.subr.mxu0 0.0
    %4296 = vmatpush1.msra.mxu0 0.0
    %4297 = vmatprep.subr.mxu0 0.0
    %4298 = vmatpush1.msra.mxu0 0.0
    %4299 = vmatprep.subr.mxu0 0.0
    %4300 = vmatpush1.msra.mxu0 0.0
    %4301 = vmatprep.subr.mxu0 0.0
    %4302 = vmatpush1.msra.mxu0 0.0
    %4303 = vmatprep.subr.mxu0 0.0
    %4304 = vmatpush1.msra.mxu0 0.0
    %4305 = vmatprep.subr.mxu0 0.0
    %4306 = vmatpush1.msra.mxu0 0.0
    %4307 = vmatprep.subr.mxu0 0.0
    %4308 = vmatpush1.msra.mxu0 0.0
    %4309 = vmatprep.subr.mxu0 0.0
    %4310 = vmatpush1.msra.mxu0 0.0
    %4311 = vmatprep.subr.mxu0 0.0
    %4312 = vmatpush1.msra.mxu0 0.0
    %4313 = vmatprep.mubr.f32.mxu0 0.0
    %4314 = vmatmul.mubr.f32.gmra.mrb[0].mxu0 %v4247
    %v4315 = vpop.f32.mrb[0].mxu0
    %v4316 = vadd.f32 0.0, %v4315
    %v4317 = vpop.f32.mrb[0].mxu0
    %4318 = vdwg.mxu0
    %v4320 = vsel %vm282, %v4239, 0
    %4322 = vmatprep.subr.mxu0 0.0
    %4323 = vmatpush1.msra.mxu0 %v4240
    %4324 = vmatprep.subr.mxu0 0.0
    %4325 = vmatpush1.msra.mxu0 %v4241
    %4326 = vmatprep.subr.mxu0 0.0
    %4327 = vmatpush1.msra.mxu0 0.0
    %4328 = vmatprep.subr.mxu0 0.0
    %4329 = vmatpush1.msra.mxu0 0.0
    %4330 = vmatprep.subr.mxu0 0.0
    %4331 = vmatpush1.msra.mxu0 0.0
    %4332 = vmatprep.subr.mxu0 0.0
    %4333 = vmatpush1.msra.mxu0 0.0
    %4334 = vmatprep.subr.mxu0 0.0
    %4335 = vmatpush1.msra.mxu0 0.0
    %4336 = vmatprep.subr.mxu0 0.0
    %4337 = vmatpush1.msra.mxu0 0.0
    %4338 = vmatprep.subr.mxu0 0.0
    %4339 = vmatpush1.msra.mxu0 0.0
    %4340 = vmatprep.subr.mxu0 0.0
    %4341 = vmatpush1.msra.mxu0 0.0
    %4342 = vmatprep.subr.mxu0 0.0
    %4343 = vmatpush1.msra.mxu0 0.0
    %4344 = vmatprep.subr.mxu0 0.0
    %4345 = vmatpush1.msra.mxu0 0.0
    %4346 = vmatprep.subr.mxu0 0.0
    %4347 = vmatpush1.msra.mxu0 0.0
    %4348 = vmatprep.subr.mxu0 0.0
    %4349 = vmatpush1.msra.mxu0 0.0
    %4350 = vmatprep.subr.mxu0 0.0
    %4351 = vmatpush1.msra.mxu0 0.0
    %4352 = vmatprep.subr.mxu0 0.0
    %4353 = vmatpush1.msra.mxu0 0.0
    %4354 = vmatprep.subr.mxu0 0.0
    %4355 = vmatpush1.msra.mxu0 0.0
    %4356 = vmatprep.subr.mxu0 0.0
    %4357 = vmatpush1.msra.mxu0 0.0
    %4358 = vmatprep.subr.mxu0 0.0
    %4359 = vmatpush1.msra.mxu0 0.0
    %4360 = vmatprep.subr.mxu0 0.0
    %4361 = vmatpush1.msra.mxu0 0.0
    %4362 = vmatprep.subr.mxu0 0.0
    %4363 = vmatpush1.msra.mxu0 0.0
    %4364 = vmatprep.subr.mxu0 0.0
    %4365 = vmatpush1.msra.mxu0 0.0
    %4366 = vmatprep.subr.mxu0 0.0
    %4367 = vmatpush1.msra.mxu0 0.0
    %4368 = vmatprep.subr.mxu0 0.0
    %4369 = vmatpush1.msra.mxu0 0.0
    %4370 = vmatprep.subr.mxu0 0.0
    %4371 = vmatpush1.msra.mxu0 0.0
    %4372 = vmatprep.subr.mxu0 0.0
    %4373 = vmatpush1.msra.mxu0 0.0
    %4374 = vmatprep.subr.mxu0 0.0
    %4375 = vmatpush1.msra.mxu0 0.0
    %4376 = vmatprep.subr.mxu0 0.0
    %4377 = vmatpush1.msra.mxu0 0.0
    %4378 = vmatprep.subr.mxu0 0.0
    %4379 = vmatpush1.msra.mxu0 0.0
    %4380 = vmatprep.subr.mxu0 0.0
    %4381 = vmatpush1.msra.mxu0 0.0
    %4382 = vmatprep.subr.mxu0 0.0
    %4383 = vmatpush1.msra.mxu0 0.0
    %4384 = vmatprep.subr.mxu0 0.0
    %4385 = vmatpush1.msra.mxu0 0.0
    %4386 = vmatprep.mubr.f32.mxu0 0.0
    %4387 = vmatmul.mubr.f32.gmra.mrb[0].mxu0 %v4320
    %v4388 = vpop.f32.mrb[0].mxu0
    %v4389 = vadd.f32 %v4316, %v4388
    %v4390 = vpop.f32.mrb[0].mxu0
    %4391 = vdwg.mxu0
    %v4392 = vld [vmem:[#allocation9] sm:$0x1]
    %v4394 = vlaneseq
    %v4395 = vshrl.u32 %v4394, 7
    %v4396 = vsub.s32 0, %v4395
    %v4397 = vrot.slane %v4392, %v4396
    %v4399 = vadd.f32 %v4389, %v4397
    %v4400 = vxor.u32 %v4399, 2147483648
    %v4401 = vmul.f32 %v4400, 1.442695
    %v4402 = vpow.pop %v4401
    %v4403 = vadd.f32 %v4402, 1.0
    %v4404 = vrcp.pop %v4403
    %v4405 = vmul.f32 1.0, %v4404
    %v4406 = vld [vmem:[%s370] sm:$0xff]
    %v4407 = vld [vmem:[%s370 + $0x8] sm:$0xff]
    %v4408 = vld [vmem:[%s373] sm:$0xff]
    %v4409 = vld [vmem:[%s373 + $0x8] sm:$0xff]
    %v4410 = vld [vmem:[%s373 + $0x10] sm:$0xff]
    %v4411 = vld [vmem:[%s373 + $0x18] sm:$0xff]
    %4412 = vmatprep.subr.mxu0 0.0
    %4413 = vmatpush1.msra.mxu0 %v4408
    %4414 = vmatprep.subr.mxu0 0.0
    %4415 = vmatpush1.msra.mxu0 %v4409
    %4416 = vmatprep.subr.mxu0 0.0
    %4417 = vmatpush1.msra.mxu0 %v4410
    %4418 = vmatprep.subr.mxu0 0.0
    %4419 = vmatpush1.msra.mxu0 %v4411
    %4420 = vmatprep.subr.mxu0 0.0
    %4421 = vmatpush1.msra.mxu0 0.0
    %4422 = vmatprep.subr.mxu0 0.0
    %4423 = vmatpush1.msra.mxu0 0.0
    %4424 = vmatprep.subr.mxu0 0.0
    %4425 = vmatpush1.msra.mxu0 0.0
    %4426 = vmatprep.subr.mxu0 0.0
    %4427 = vmatpush1.msra.mxu0 0.0
    %4428 = vmatprep.subr.mxu0 0.0
    %4429 = vmatpush1.msra.mxu0 0.0
    %4430 = vmatprep.subr.mxu0 0.0
    %4431 = vmatpush1.msra.mxu0 0.0
    %4432 = vmatprep.subr.mxu0 0.0
    %4433 = vmatpush1.msra.mxu0 0.0
    %4434 = vmatprep.subr.mxu0 0.0
    %4435 = vmatpush1.msra.mxu0 0.0
    %4436 = vmatprep.subr.mxu0 0.0
    %4437 = vmatpush1.msra.mxu0 0.0
    %4438 = vmatprep.subr.mxu0 0.0
    %4439 = vmatpush1.msra.mxu0 0.0
    %4440 = vmatprep.subr.mxu0 0.0
    %4441 = vmatpush1.msra.mxu0 0.0
    %4442 = vmatprep.subr.mxu0 0.0
    %4443 = vmatpush1.msra.mxu0 0.0
    %4444 = vmatprep.subr.mxu0 0.0
    %4445 = vmatpush1.msra.mxu0 0.0
    %4446 = vmatprep.subr.mxu0 0.0
    %4447 = vmatpush1.msra.mxu0 0.0
    %4448 = vmatprep.subr.mxu0 0.0
    %4449 = vmatpush1.msra.mxu0 0.0
    %4450 = vmatprep.subr.mxu0 0.0
    %4451 = vmatpush1.msra.mxu0 0.0
    %4452 = vmatprep.subr.mxu0 0.0
    %4453 = vmatpush1.msra.mxu0 0.0
    %4454 = vmatprep.subr.mxu0 0.0
    %4455 = vmatpush1.msra.mxu0 0.0
    %4456 = vmatprep.subr.mxu0 0.0
    %4457 = vmatpush1.msra.mxu0 0.0
    %4458 = vmatprep.subr.mxu0 0.0
    %4459 = vmatpush1.msra.mxu0 0.0
    %4460 = vmatprep.subr.mxu0 0.0
    %4461 = vmatpush1.msra.mxu0 0.0
    %4462 = vmatprep.subr.mxu0 0.0
    %4463 = vmatpush1.msra.mxu0 0.0
    %4464 = vmatprep.subr.mxu0 0.0
    %4465 = vmatpush1.msra.mxu0 0.0
    %4466 = vmatprep.subr.mxu0 0.0
    %4467 = vmatpush1.msra.mxu0 0.0
    %4468 = vmatprep.subr.mxu0 0.0
    %4469 = vmatpush1.msra.mxu0 0.0
    %4470 = vmatprep.subr.mxu0 0.0
    %4471 = vmatpush1.msra.mxu0 0.0
    %4472 = vmatprep.subr.mxu0 0.0
    %4473 = vmatpush1.msra.mxu0 0.0
    %4474 = vmatprep.subr.mxu0 0.0
    %4475 = vmatpush1.msra.mxu0 0.0
    %4476 = vmatprep.mubr.f32.mxu0 0.0
    %4477 = vmatmul.mubr.f32.gmra.mrb[0].mxu0 %v4247
    %v4478 = vpop.f32.mrb[0].mxu0
    %v4479 = vadd.f32 0.0, %v4478
    %v4480 = vpop.f32.mrb[0].mxu0
    %4481 = vdwg.mxu0
    %4482 = vmatprep.subr.mxu0 0.0
    %4483 = vmatpush1.msra.mxu0 %v4406
    %4484 = vmatprep.subr.mxu0 0.0
    %4485 = vmatpush1.msra.mxu0 %v4407
    %4486 = vmatprep.subr.mxu0 0.0
    %4487 = vmatpush1.msra.mxu0 0.0
    %4488 = vmatprep.subr.mxu0 0.0
    %4489 = vmatpush1.msra.mxu0 0.0
    %4490 = vmatprep.subr.mxu0 0.0
    %4491 = vmatpush1.msra.mxu0 0.0
    %4492 = vmatprep.subr.mxu0 0.0
    %4493 = vmatpush1.msra.mxu0 0.0
    %4494 = vmatprep.subr.mxu0 0.0
    %4495 = vmatpush1.msra.mxu0 0.0
    %4496 = vmatprep.subr.mxu0 0.0
    %4497 = vmatpush1.msra.mxu0 0.0
    %4498 = vmatprep.subr.mxu0 0.0
    %4499 = vmatpush1.msra.mxu0 0.0
    %4500 = vmatprep.subr.mxu0 0.0
    %4501 = vmatpush1.msra.mxu0 0.0
    %4502 = vmatprep.subr.mxu0 0.0
    %4503 = vmatpush1.msra.mxu0 0.0
    %4504 = vmatprep.subr.mxu0 0.0
    %4505 = vmatpush1.msra.mxu0 0.0
    %4506 = vmatprep.subr.mxu0 0.0
    %4507 = vmatpush1.msra.mxu0 0.0
    %4508 = vmatprep.subr.mxu0 0.0
    %4509 = vmatpush1.msra.mxu0 0.0
    %4510 = vmatprep.subr.mxu0 0.0
    %4511 = vmatpush1.msra.mxu0 0.0
    %4512 = vmatprep.subr.mxu0 0.0
    %4513 = vmatpush1.msra.mxu0 0.0
    %4514 = vmatprep.subr.mxu0 0.0
    %4515 = vmatpush1.msra.mxu0 0.0
    %4516 = vmatprep.subr.mxu0 0.0
    %4517 = vmatpush1.msra.mxu0 0.0
    %4518 = vmatprep.subr.mxu0 0.0
    %4519 = vmatpush1.msra.mxu0 0.0
    %4520 = vmatprep.subr.mxu0 0.0
    %4521 = vmatpush1.msra.mxu0 0.0
    %4522 = vmatprep.subr.mxu0 0.0
    %4523 = vmatpush1.msra.mxu0 0.0
    %4524 = vmatprep.subr.mxu0 0.0
    %4525 = vmatpush1.msra.mxu0 0.0
    %4526 = vmatprep.subr.mxu0 0.0
    %4527 = vmatpush1.msra.mxu0 0.0
    %4528 = vmatprep.subr.mxu0 0.0
    %4529 = vmatpush1.msra.mxu0 0.0
    %4530 = vmatprep.subr.mxu0 0.0
    %4531 = vmatpush1.msra.mxu0 0.0
    %4532 = vmatprep.subr.mxu0 0.0
    %4533 = vmatpush1.msra.mxu0 0.0
    %4534 = vmatprep.subr.mxu0 0.0
    %4535 = vmatpush1.msra.mxu0 0.0
    %4536 = vmatprep.subr.mxu0 0.0
    %4537 = vmatpush1.msra.mxu0 0.0
    %4538 = vmatprep.subr.mxu0 0.0
    %4539 = vmatpush1.msra.mxu0 0.0
    %4540 = vmatprep.subr.mxu0 0.0
    %4541 = vmatpush1.msra.mxu0 0.0
    %4542 = vmatprep.subr.mxu0 0.0
    %4543 = vmatpush1.msra.mxu0 0.0
    %4544 = vmatprep.subr.mxu0 0.0
    %4545 = vmatpush1.msra.mxu0 0.0
    %4546 = vmatprep.mubr.f32.mxu0 0.0
    %4547 = vmatmul.mubr.f32.gmra.mrb[0].mxu0 %v4320
    %v4548 = vpop.f32.mrb[0].mxu0
    %v4549 = vadd.f32 %v4479, %v4548
    %v4550 = vpop.f32.mrb[0].mxu0
    %4551 = vdwg.mxu0
    %v4552 = vld [vmem:[%s518] sm:$0x1]
    %v4554 = vlaneseq
    %v4555 = vshrl.u32 %v4554, 7
    %v4556 = vsub.s32 0, %v4555
    %v4557 = vrot.slane %v4552, %v4556
    %v4559 = vadd.f32 %v4549, %v4557
    %v4560 = vxor.u32 %v4559, 2147483648
    %v4561 = vmul.f32 %v4560, 1.442695
    %v4562 = vpow.pop %v4561
    %v4563 = vadd.f32 %v4562, 1.0
    %v4564 = vrcp.pop %v4563
    %v4565 = vmul.f32 1.0, %v4564
    %v4566 = vld [vmem:[%s533] sm:$0xff]
    %v4567 = vld [vmem:[%s533 + $0x8] sm:$0xff]
    %v4568 = vld [vmem:[%s536] sm:$0x1]
    %v4570 = vlaneseq
    %v4571 = vshrl.u32 %v4570, 7
    %v4572 = vsub.s32 0, %v4571
    %v4573 = vrot.slane %v4568, %v4572
    %4575 = vmatprep.subr.mxu0 0.0
    %4576 = vmatpush1.msra.mxu0 %v4566
    %4577 = vmatprep.subr.mxu0 0.0
    %4578 = vmatpush1.msra.mxu0 %v4567
    %4579 = vmatprep.subr.mxu0 0.0
    %4580 = vmatpush1.msra.mxu0 0.0
    %4581 = vmatprep.subr.mxu0 0.0
    %4582 = vmatpush1.msra.mxu0 0.0
    %4583 = vmatprep.subr.mxu0 0.0
    %4584 = vmatpush1.msra.mxu0 0.0
    %4585 = vmatprep.subr.mxu0 0.0
    %4586 = vmatpush1.msra.mxu0 0.0
    %4587 = vmatprep.subr.mxu0 0.0
    %4588 = vmatpush1.msra.mxu0 0.0
    %4589 = vmatprep.subr.mxu0 0.0
    %4590 = vmatpush1.msra.mxu0 0.0
    %4591 = vmatprep.subr.mxu0 0.0
    %4592 = vmatpush1.msra.mxu0 0.0
    %4593 = vmatprep.subr.mxu0 0.0
    %4594 = vmatpush1.msra.mxu0 0.0
    %4595 = vmatprep.subr.mxu0 0.0
    %4596 = vmatpush1.msra.mxu0 0.0
    %4597 = vmatprep.subr.mxu0 0.0
    %4598 = vmatpush1.msra.mxu0 0.0
    %4599 = vmatprep.subr.mxu0 0.0
    %4600 = vmatpush1.msra.mxu0 0.0
    %4601 = vmatprep.subr.mxu0 0.0
    %4602 = vmatpush1.msra.mxu0 0.0
    %4603 = vmatprep.subr.mxu0 0.0
    %4604 = vmatpush1.msra.mxu0 0.0
    %4605 = vmatprep.subr.mxu0 0.0
    %4606 = vmatpush1.msra.mxu0 0.0
    %4607 = vmatprep.subr.mxu0 0.0
    %4608 = vmatpush1.msra.mxu0 0.0
    %4609 = vmatprep.subr.mxu0 0.0
    %4610 = vmatpush1.msra.mxu0 0.0
    %4611 = vmatprep.subr.mxu0 0.0
    %4612 = vmatpush1.msra.mxu0 0.0
    %4613 = vmatprep.subr.mxu0 0.0
    %4614 = vmatpush1.msra.mxu0 0.0
    %4615 = vmatprep.subr.mxu0 0.0
    %4616 = vmatpush1.msra.mxu0 0.0
    %4617 = vmatprep.subr.mxu0 0.0
    %4618 = vmatpush1.msra.mxu0 0.0
    %4619 = vmatprep.subr.mxu0 0.0
    %4620 = vmatpush1.msra.mxu0 0.0
    %4621 = vmatprep.subr.mxu0 0.0
    %4622 = vmatpush1.msra.mxu0 0.0
    %4623 = vmatprep.subr.mxu0 0.0
    %4624 = vmatpush1.msra.mxu0 0.0
    %4625 = vmatprep.subr.mxu0 0.0
    %4626 = vmatpush1.msra.mxu0 0.0
    %4627 = vmatprep.subr.mxu0 0.0
    %4628 = vmatpush1.msra.mxu0 0.0
    %4629 = vmatprep.subr.mxu0 0.0
    %4630 = vmatpush1.msra.mxu0 0.0
    %4631 = vmatprep.subr.mxu0 0.0
    %4632 = vmatpush1.msra.mxu0 0.0
    %4633 = vmatprep.subr.mxu0 0.0
    %4634 = vmatpush1.msra.mxu0 0.0
    %4635 = vmatprep.subr.mxu0 0.0
    %4636 = vmatpush1.msra.mxu0 0.0
    %4637 = vmatprep.subr.mxu0 0.0
    %4638 = vmatpush1.msra.mxu0 0.0
    %4639 = vmatprep.mubr.f32.mxu0 0.0
    %4640 = vmatmul.mubr.f32.gmra.mrb[0].mxu0 %v4320
    %v4641 = vpop.f32.mrb[0].mxu0
    %v4642 = vadd.f32 %v4573, %v4641
    %v4643 = vpop.f32.mrb[0].mxu0
    %4644 = vdwg.mxu0
    %v4645 = vld [vmem:[%s614] sm:$0xff]
    %v4646 = vld [vmem:[%s614 + $0x8] sm:$0xff]
    %v4647 = vld [vmem:[%s614 + $0x10] sm:$0xff]
    %v4648 = vld [vmem:[%s614 + $0x18] sm:$0xff]
    %v4649 = vld [vmem:[%s619] sm:$0x1]
    %v4651 = vlaneseq
    %v4652 = vshrl.u32 %v4651, 7
    %v4653 = vsub.s32 0, %v4652
    %v4654 = vrot.slane %v4649, %v4653
    %4656 = vmatprep.subr.mxu0 0.0
    %4657 = vmatpush1.msra.mxu0 %v4645
    %4658 = vmatprep.subr.mxu0 0.0
    %4659 = vmatpush1.msra.mxu0 %v4646
    %4660 = vmatprep.subr.mxu0 0.0
    %4661 = vmatpush1.msra.mxu0 %v4647
    %4662 = vmatprep.subr.mxu0 0.0
    %4663 = vmatpush1.msra.mxu0 %v4648
    %4664 = vmatprep.subr.mxu0 0.0
    %4665 = vmatpush1.msra.mxu0 0.0
    %4666 = vmatprep.subr.mxu0 0.0
    %4667 = vmatpush1.msra.mxu0 0.0
    %4668 = vmatprep.subr.mxu0 0.0
    %4669 = vmatpush1.msra.mxu0 0.0
    %4670 = vmatprep.subr.mxu0 0.0
    %4671 = vmatpush1.msra.mxu0 0.0
    %4672 = vmatprep.subr.mxu0 0.0
    %4673 = vmatpush1.msra.mxu0 0.0
    %4674 = vmatprep.subr.mxu0 0.0
    %4675 = vmatpush1.msra.mxu0 0.0
    %4676 = vmatprep.subr.mxu0 0.0
    %4677 = vmatpush1.msra.mxu0 0.0
    %4678 = vmatprep.subr.mxu0 0.0
    %4679 = vmatpush1.msra.mxu0 0.0
    %4680 = vmatprep.subr.mxu0 0.0
    %4681 = vmatpush1.msra.mxu0 0.0
    %4682 = vmatprep.subr.mxu0 0.0
    %4683 = vmatpush1.msra.mxu0 0.0
    %4684 = vmatprep.subr.mxu0 0.0
    %4685 = vmatpush1.msra.mxu0 0.0
    %4686 = vmatprep.subr.mxu0 0.0
    %4687 = vmatpush1.msra.mxu0 0.0
    %4688 = vmatprep.subr.mxu0 0.0
    %4689 = vmatpush1.msra.mxu0 0.0
    %4690 = vmatprep.subr.mxu0 0.0
    %4691 = vmatpush1.msra.mxu0 0.0
    %4692 = vmatprep.subr.mxu0 0.0
    %4693 = vmatpush1.msra.mxu0 0.0
    %4694 = vmatprep.subr.mxu0 0.0
    %4695 = vmatpush1.msra.mxu0 0.0
    %4696 = vmatprep.subr.mxu0 0.0
    %4697 = vmatpush1.msra.mxu0 0.0
    %4698 = vmatprep.subr.mxu0 0.0
    %4699 = vmatpush1.msra.mxu0 0.0
    %4700 = vmatprep.subr.mxu0 0.0
    %4701 = vmatpush1.msra.mxu0 0.0
    %4702 = vmatprep.subr.mxu0 0.0
    %4703 = vmatpush1.msra.mxu0 0.0
    %4704 = vmatprep.subr.mxu0 0.0
    %4705 = vmatpush1.msra.mxu0 0.0
    %4706 = vmatprep.subr.mxu0 0.0
    %4707 = vmatpush1.msra.mxu0 0.0
    %4708 = vmatprep.subr.mxu0 0.0
    %4709 = vmatpush1.msra.mxu0 0.0
    %4710 = vmatprep.subr.mxu0 0.0
    %4711 = vmatpush1.msra.mxu0 0.0
    %4712 = vmatprep.subr.mxu0 0.0
    %4713 = vmatpush1.msra.mxu0 0.0
    %4714 = vmatprep.subr.mxu0 0.0
    %4715 = vmatpush1.msra.mxu0 0.0
    %4716 = vmatprep.subr.mxu0 0.0
    %4717 = vmatpush1.msra.mxu0 0.0
    %4718 = vmatprep.subr.mxu0 0.0
    %4719 = vmatpush1.msra.mxu0 0.0
    %4720 = vmatprep.mubr.f32.mxu0 0.0
    %4721 = vmatmul.mubr.f32.gmra.mrb[0].mxu0 %v4247
    %v4722 = vpop.f32.mrb[0].mxu0
    %v4723 = vadd.f32 %v4654, %v4722
    %v4724 = vpop.f32.mrb[0].mxu0
    %4725 = vdwg.mxu0
    %v4726 = vmul.f32 %v4405, %v4723
    %v4727 = vadd.f32 %v4642, %v4726
    %v4728 = vtanh.pop %v4727
    %v4729 = vsub.f32 1.0, %v4565
    %v4730 = vmul.f32 %v4729, %v4728
    %v4731 = vmul.f32 %v4565, %v3726
    %v4732 = vadd.f32 %v4730, %v4731
    %s4733 = scalar_lea.vmem [#allocation2], 32
    %4734 = vst.msk [vmem:[%s4733] sm:$0xff] %vm200, %v4732
    %s4735 = scalar_lea.vmem [#allocation7], 24
    %v4736 = vld [vmem:[%s4735] sm:$0xff]
    %v4737 = vld [vmem:[%s5] sm:$0xff]
    %v4738 = vld [vmem:[%s5 + $0x8] sm:$0xff]
    %v4739 = vld [vmem:[%s5 + $0x10] sm:$0x1]
    %v4740 = vld [vmem:[%s6] sm:$0xff]
    %v4741 = vld [vmem:[%s6 + $0x8] sm:$0xff]
    %v4742 = vld [vmem:[%s6 + $0x10] sm:$0xff]
    %v4743 = vld [vmem:[%s6 + $0x18] sm:$0xff]
    %v4745 = vsel %vm200, %v4235, 0
    %4747 = vmatprep.subr.mxu0 0.0
    %4748 = vmatpush1.msra.mxu0 %v4740
    %4749 = vmatprep.subr.mxu0 0.0
    %4750 = vmatpush1.msra.mxu0 %v4741
    %4751 = vmatprep.subr.mxu0 0.0
    %4752 = vmatpush1.msra.mxu0 %v4742
    %4753 = vmatprep.subr.mxu0 0.0
    %4754 = vmatpush1.msra.mxu0 %v4743
    %4755 = vmatprep.subr.mxu0 0.0
    %4756 = vmatpush1.msra.mxu0 0.0
    %4757 = vmatprep.subr.mxu0 0.0
    %4758 = vmatpush1.msra.mxu0 0.0
    %4759 = vmatprep.subr.mxu0 0.0
    %4760 = vmatpush1.msra.mxu0 0.0
    %4761 = vmatprep.subr.mxu0 0.0
    %4762 = vmatpush1.msra.mxu0 0.0
    %4763 = vmatprep.subr.mxu0 0.0
    %4764 = vmatpush1.msra.mxu0 0.0
    %4765 = vmatprep.subr.mxu0 0.0
    %4766 = vmatpush1.msra.mxu0 0.0
    %4767 = vmatprep.subr.mxu0 0.0
    %4768 = vmatpush1.msra.mxu0 0.0
    %4769 = vmatprep.subr.mxu0 0.0
    %4770 = vmatpush1.msra.mxu0 0.0
    %4771 = vmatprep.subr.mxu0 0.0
    %4772 = vmatpush1.msra.mxu0 0.0
    %4773 = vmatprep.subr.mxu0 0.0
    %4774 = vmatpush1.msra.mxu0 0.0
    %4775 = vmatprep.subr.mxu0 0.0
    %4776 = vmatpush1.msra.mxu0 0.0
    %4777 = vmatprep.subr.mxu0 0.0
    %4778 = vmatpush1.msra.mxu0 0.0
    %4779 = vmatprep.subr.mxu0 0.0
    %4780 = vmatpush1.msra.mxu0 0.0
    %4781 = vmatprep.subr.mxu0 0.0
    %4782 = vmatpush1.msra.mxu0 0.0
    %4783 = vmatprep.subr.mxu0 0.0
    %4784 = vmatpush1.msra.mxu0 0.0
    %4785 = vmatprep.subr.mxu0 0.0
    %4786 = vmatpush1.msra.mxu0 0.0
    %4787 = vmatprep.subr.mxu0 0.0
    %4788 = vmatpush1.msra.mxu0 0.0
    %4789 = vmatprep.subr.mxu0 0.0
    %4790 = vmatpush1.msra.mxu0 0.0
    %4791 = vmatprep.subr.mxu0 0.0
    %4792 = vmatpush1.msra.mxu0 0.0
    %4793 = vmatprep.subr.mxu0 0.0
    %4794 = vmatpush1.msra.mxu0 0.0
    %4795 = vmatprep.subr.mxu0 0.0
    %4796 = vmatpush1.msra.mxu0 0.0
    %4797 = vmatprep.subr.mxu0 0.0
    %4798 = vmatpush1.msra.mxu0 0.0
    %4799 = vmatprep.subr.mxu0 0.0
    %4800 = vmatpush1.msra.mxu0 0.0
    %4801 = vmatprep.subr.mxu0 0.0
    %4802 = vmatpush1.msra.mxu0 0.0
    %4803 = vmatprep.subr.mxu0 0.0
    %4804 = vmatpush1.msra.mxu0 0.0
    %4805 = vmatprep.subr.mxu0 0.0
    %4806 = vmatpush1.msra.mxu0 0.0
    %4807 = vmatprep.subr.mxu0 0.0
    %4808 = vmatpush1.msra.mxu0 0.0
    %4809 = vmatprep.subr.mxu0 0.0
    %4810 = vmatpush1.msra.mxu0 0.0
    %4811 = vmatprep.mubr.f32.mxu0 0.0
    %4812 = vmatmul.mubr.f32.gmra.mrb[0].mxu0 %v4745
    %v4813 = vpop.f32.mrb[0].mxu0
    %v4814 = vadd.f32 0.0, %v4813
    %v4815 = vpop.f32.mrb[0].mxu0
    %4816 = vdwg.mxu0
    %v4818 = vsel %vm784, %v4736, 0
    %v4821 = vsel %vm788, %v4739, 0
    %4823 = vmatprep.subr.mxu0 0.0
    %4824 = vmatpush1.msra.mxu0 %v4737
    %4825 = vmatprep.subr.mxu0 0.0
    %4826 = vmatpush1.msra.mxu0 %v4738
    %4827 = vmatprep.subr.mxu0 0.0
    %4828 = vmatpush1.msra.mxu0 %v4821
    %4829 = vmatprep.subr.mxu0 0.0
    %4830 = vmatpush1.msra.mxu0 0.0
    %4831 = vmatprep.subr.mxu0 0.0
    %4832 = vmatpush1.msra.mxu0 0.0
    %4833 = vmatprep.subr.mxu0 0.0
    %4834 = vmatpush1.msra.mxu0 0.0
    %4835 = vmatprep.subr.mxu0 0.0
    %4836 = vmatpush1.msra.mxu0 0.0
    %4837 = vmatprep.subr.mxu0 0.0
    %4838 = vmatpush1.msra.mxu0 0.0
    %4839 = vmatprep.subr.mxu0 0.0
    %4840 = vmatpush1.msra.mxu0 0.0
    %4841 = vmatprep.subr.mxu0 0.0
    %4842 = vmatpush1.msra.mxu0 0.0
    %4843 = vmatprep.subr.mxu0 0.0
    %4844 = vmatpush1.msra.mxu0 0.0
    %4845 = vmatprep.subr.mxu0 0.0
    %4846 = vmatpush1.msra.mxu0 0.0
    %4847 = vmatprep.subr.mxu0 0.0
    %4848 = vmatpush1.msra.mxu0 0.0
    %4849 = vmatprep.subr.mxu0 0.0
    %4850 = vmatpush1.msra.mxu0 0.0
    %4851 = vmatprep.subr.mxu0 0.0
    %4852 = vmatpush1.msra.mxu0 0.0
    %4853 = vmatprep.subr.mxu0 0.0
    %4854 = vmatpush1.msra.mxu0 0.0
    %4855 = vmatprep.subr.mxu0 0.0
    %4856 = vmatpush1.msra.mxu0 0.0
    %4857 = vmatprep.subr.mxu0 0.0
    %4858 = vmatpush1.msra.mxu0 0.0
    %4859 = vmatprep.subr.mxu0 0.0
    %4860 = vmatpush1.msra.mxu0 0.0
    %4861 = vmatprep.subr.mxu0 0.0
    %4862 = vmatpush1.msra.mxu0 0.0
    %4863 = vmatprep.subr.mxu0 0.0
    %4864 = vmatpush1.msra.mxu0 0.0
    %4865 = vmatprep.subr.mxu0 0.0
    %4866 = vmatpush1.msra.mxu0 0.0
    %4867 = vmatprep.subr.mxu0 0.0
    %4868 = vmatpush1.msra.mxu0 0.0
    %4869 = vmatprep.subr.mxu0 0.0
    %4870 = vmatpush1.msra.mxu0 0.0
    %4871 = vmatprep.subr.mxu0 0.0
    %4872 = vmatpush1.msra.mxu0 0.0
    %4873 = vmatprep.subr.mxu0 0.0
    %4874 = vmatpush1.msra.mxu0 0.0
    %4875 = vmatprep.subr.mxu0 0.0
    %4876 = vmatpush1.msra.mxu0 0.0
    %4877 = vmatprep.subr.mxu0 0.0
    %4878 = vmatpush1.msra.mxu0 0.0
    %4879 = vmatprep.subr.mxu0 0.0
    %4880 = vmatpush1.msra.mxu0 0.0
    %4881 = vmatprep.subr.mxu0 0.0
    %4882 = vmatpush1.msra.mxu0 0.0
    %4883 = vmatprep.subr.mxu0 0.0
    %4884 = vmatpush1.msra.mxu0 0.0
    %4885 = vmatprep.subr.mxu0 0.0
    %4886 = vmatpush1.msra.mxu0 0.0
    %4887 = vmatprep.mubr.f32.mxu0 0.0
    %4888 = vmatmul.mubr.f32.gmra.mrb[0].mxu0 %v4818
    %v4889 = vpop.f32.mrb[0].mxu0
    %v4890 = vadd.f32 %v4814, %v4889
    %v4891 = vpop.f32.mrb[0].mxu0
    %4892 = vdwg.mxu0
    %v4893 = vld [vmem:[#allocation10] sm:$0x1]
    %v4895 = vlaneseq
    %v4896 = vshrl.u32 %v4895, 7
    %v4897 = vsub.s32 0, %v4896
    %v4898 = vrot.slane %v4893, %v4897
    %v4900 = vadd.f32 %v4890, %v4898
    %v4901 = vxor.u32 %v4900, 2147483648
    %v4902 = vmul.f32 %v4901, 1.442695
    %v4903 = vpow.pop %v4902
    %v4904 = vadd.f32 %v4903, 1.0
    %v4905 = vrcp.pop %v4904
    %v4906 = vmul.f32 1.0, %v4905
    %v4907 = vld [vmem:[%s876] sm:$0xff]
    %v4908 = vld [vmem:[%s876 + $0x8] sm:$0xff]
    %v4909 = vld [vmem:[%s876 + $0x10] sm:$0x1]
    %v4910 = vld [vmem:[%s880] sm:$0xff]
    %v4911 = vld [vmem:[%s880 + $0x8] sm:$0xff]
    %v4912 = vld [vmem:[%s880 + $0x10] sm:$0xff]
    %v4913 = vld [vmem:[%s880 + $0x18] sm:$0xff]
    %4914 = vmatprep.subr.mxu0 0.0
    %4915 = vmatpush1.msra.mxu0 %v4910
    %4916 = vmatprep.subr.mxu0 0.0
    %4917 = vmatpush1.msra.mxu0 %v4911
    %4918 = vmatprep.subr.mxu0 0.0
    %4919 = vmatpush1.msra.mxu0 %v4912
    %4920 = vmatprep.subr.mxu0 0.0
    %4921 = vmatpush1.msra.mxu0 %v4913
    %4922 = vmatprep.subr.mxu0 0.0
    %4923 = vmatpush1.msra.mxu0 0.0
    %4924 = vmatprep.subr.mxu0 0.0
    %4925 = vmatpush1.msra.mxu0 0.0
    %4926 = vmatprep.subr.mxu0 0.0
    %4927 = vmatpush1.msra.mxu0 0.0
    %4928 = vmatprep.subr.mxu0 0.0
    %4929 = vmatpush1.msra.mxu0 0.0
    %4930 = vmatprep.subr.mxu0 0.0
    %4931 = vmatpush1.msra.mxu0 0.0
    %4932 = vmatprep.subr.mxu0 0.0
    %4933 = vmatpush1.msra.mxu0 0.0
    %4934 = vmatprep.subr.mxu0 0.0
    %4935 = vmatpush1.msra.mxu0 0.0
    %4936 = vmatprep.subr.mxu0 0.0
    %4937 = vmatpush1.msra.mxu0 0.0
    %4938 = vmatprep.subr.mxu0 0.0
    %4939 = vmatpush1.msra.mxu0 0.0
    %4940 = vmatprep.subr.mxu0 0.0
    %4941 = vmatpush1.msra.mxu0 0.0
    %4942 = vmatprep.subr.mxu0 0.0
    %4943 = vmatpush1.msra.mxu0 0.0
    %4944 = vmatprep.subr.mxu0 0.0
    %4945 = vmatpush1.msra.mxu0 0.0
    %4946 = vmatprep.subr.mxu0 0.0
    %4947 = vmatpush1.msra.mxu0 0.0
    %4948 = vmatprep.subr.mxu0 0.0
    %4949 = vmatpush1.msra.mxu0 0.0
    %4950 = vmatprep.subr.mxu0 0.0
    %4951 = vmatpush1.msra.mxu0 0.0
    %4952 = vmatprep.subr.mxu0 0.0
    %4953 = vmatpush1.msra.mxu0 0.0
    %4954 = vmatprep.subr.mxu0 0.0
    %4955 = vmatpush1.msra.mxu0 0.0
    %4956 = vmatprep.subr.mxu0 0.0
    %4957 = vmatpush1.msra.mxu0 0.0
    %4958 = vmatprep.subr.mxu0 0.0
    %4959 = vmatpush1.msra.mxu0 0.0
    %4960 = vmatprep.subr.mxu0 0.0
    %4961 = vmatpush1.msra.mxu0 0.0
    %4962 = vmatprep.subr.mxu0 0.0
    %4963 = vmatpush1.msra.mxu0 0.0
    %4964 = vmatprep.subr.mxu0 0.0
    %4965 = vmatpush1.msra.mxu0 0.0
    %4966 = vmatprep.subr.mxu0 0.0
    %4967 = vmatpush1.msra.mxu0 0.0
    %4968 = vmatprep.subr.mxu0 0.0
    %4969 = vmatpush1.msra.mxu0 0.0
    %4970 = vmatprep.subr.mxu0 0.0
    %4971 = vmatpush1.msra.mxu0 0.0
    %4972 = vmatprep.subr.mxu0 0.0
    %4973 = vmatpush1.msra.mxu0 0.0
    %4974 = vmatprep.subr.mxu0 0.0
    %4975 = vmatpush1.msra.mxu0 0.0
    %4976 = vmatprep.subr.mxu0 0.0
    %4977 = vmatpush1.msra.mxu0 0.0
    %4978 = vmatprep.mubr.f32.mxu0 0.0
    %4979 = vmatmul.mubr.f32.gmra.mrb[0].mxu0 %v4745
    %v4980 = vpop.f32.mrb[0].mxu0
    %v4981 = vadd.f32 0.0, %v4980
    %v4982 = vpop.f32.mrb[0].mxu0
    %4983 = vdwg.mxu0
    %v4985 = vsel %vm788, %v4909, 0
    %4987 = vmatprep.subr.mxu0 0.0
    %4988 = vmatpush1.msra.mxu0 %v4907
    %4989 = vmatprep.subr.mxu0 0.0
    %4990 = vmatpush1.msra.mxu0 %v4908
    %4991 = vmatprep.subr.mxu0 0.0
    %4992 = vmatpush1.msra.mxu0 %v4985
    %4993 = vmatprep.subr.mxu0 0.0
    %4994 = vmatpush1.msra.mxu0 0.0
    %4995 = vmatprep.subr.mxu0 0.0
    %4996 = vmatpush1.msra.mxu0 0.0
    %4997 = vmatprep.subr.mxu0 0.0
    %4998 = vmatpush1.msra.mxu0 0.0
    %4999 = vmatprep.subr.mxu0 0.0
    %5000 = vmatpush1.msra.mxu0 0.0
    %5001 = vmatprep.subr.mxu0 0.0
    %5002 = vmatpush1.msra.mxu0 0.0
    %5003 = vmatprep.subr.mxu0 0.0
    %5004 = vmatpush1.msra.mxu0 0.0
    %5005 = vmatprep.subr.mxu0 0.0
    %5006 = vmatpush1.msra.mxu0 0.0
    %5007 = vmatprep.subr.mxu0 0.0
    %5008 = vmatpush1.msra.mxu0 0.0
    %5009 = vmatprep.subr.mxu0 0.0
    %5010 = vmatpush1.msra.mxu0 0.0
    %5011 = vmatprep.subr.mxu0 0.0
    %5012 = vmatpush1.msra.mxu0 0.0
    %5013 = vmatprep.subr.mxu0 0.0
    %5014 = vmatpush1.msra.mxu0 0.0
    %5015 = vmatprep.subr.mxu0 0.0
    %5016 = vmatpush1.msra.mxu0 0.0
    %5017 = vmatprep.subr.mxu0 0.0
    %5018 = vmatpush1.msra.mxu0 0.0
    %5019 = vmatprep.subr.mxu0 0.0
    %5020 = vmatpush1.msra.mxu0 0.0
    %5021 = vmatprep.subr.mxu0 0.0
    %5022 = vmatpush1.msra.mxu0 0.0
    %5023 = vmatprep.subr.mxu0 0.0
    %5024 = vmatpush1.msra.mxu0 0.0
    %5025 = vmatprep.subr.mxu0 0.0
    %5026 = vmatpush1.msra.mxu0 0.0
    %5027 = vmatprep.subr.mxu0 0.0
    %5028 = vmatpush1.msra.mxu0 0.0
    %5029 = vmatprep.subr.mxu0 0.0
    %5030 = vmatpush1.msra.mxu0 0.0
    %5031 = vmatprep.subr.mxu0 0.0
    %5032 = vmatpush1.msra.mxu0 0.0
    %5033 = vmatprep.subr.mxu0 0.0
    %5034 = vmatpush1.msra.mxu0 0.0
    %5035 = vmatprep.subr.mxu0 0.0
    %5036 = vmatpush1.msra.mxu0 0.0
    %5037 = vmatprep.subr.mxu0 0.0
    %5038 = vmatpush1.msra.mxu0 0.0
    %5039 = vmatprep.subr.mxu0 0.0
    %5040 = vmatpush1.msra.mxu0 0.0
    %5041 = vmatprep.subr.mxu0 0.0
    %5042 = vmatpush1.msra.mxu0 0.0
    %5043 = vmatprep.subr.mxu0 0.0
    %5044 = vmatpush1.msra.mxu0 0.0
    %5045 = vmatprep.subr.mxu0 0.0
    %5046 = vmatpush1.msra.mxu0 0.0
    %5047 = vmatprep.subr.mxu0 0.0
    %5048 = vmatpush1.msra.mxu0 0.0
    %5049 = vmatprep.subr.mxu0 0.0
    %5050 = vmatpush1.msra.mxu0 0.0
    %5051 = vmatprep.mubr.f32.mxu0 0.0
    %5052 = vmatmul.mubr.f32.gmra.mrb[0].mxu0 %v4818
    %v5053 = vpop.f32.mrb[0].mxu0
    %v5054 = vadd.f32 %v4981, %v5053
    %v5055 = vpop.f32.mrb[0].mxu0
    %5056 = vdwg.mxu0
    %v5057 = vld [vmem:[%s1028] sm:$0x1]
    %v5059 = vlaneseq
    %v5060 = vshrl.u32 %v5059, 7
    %v5061 = vsub.s32 0, %v5060
    %v5062 = vrot.slane %v5057, %v5061
    %v5064 = vadd.f32 %v5054, %v5062
    %v5065 = vxor.u32 %v5064, 2147483648
    %v5066 = vmul.f32 %v5065, 1.442695
    %v5067 = vpow.pop %v5066
    %v5068 = vadd.f32 %v5067, 1.0
    %v5069 = vrcp.pop %v5068
    %v5070 = vmul.f32 1.0, %v5069
    %v5071 = vld [vmem:[%s1043] sm:$0xff]
    %v5072 = vld [vmem:[%s1043 + $0x8] sm:$0xff]
    %v5073 = vld [vmem:[%s1043 + $0x10] sm:$0x1]
    %v5074 = vld [vmem:[%s1047] sm:$0x1]
    %v5076 = vlaneseq
    %v5077 = vshrl.u32 %v5076, 7
    %v5078 = vsub.s32 0, %v5077
    %v5079 = vrot.slane %v5074, %v5078
    %v5082 = vsel %vm788, %v5073, 0
    %5084 = vmatprep.subr.mxu0 0.0
    %5085 = vmatpush1.msra.mxu0 %v5071
    %5086 = vmatprep.subr.mxu0 0.0
    %5087 = vmatpush1.msra.mxu0 %v5072
    %5088 = vmatprep.subr.mxu0 0.0
    %5089 = vmatpush1.msra.mxu0 %v5082
    %5090 = vmatprep.subr.mxu0 0.0
    %5091 = vmatpush1.msra.mxu0 0.0
    %5092 = vmatprep.subr.mxu0 0.0
    %5093 = vmatpush1.msra.mxu0 0.0
    %5094 = vmatprep.subr.mxu0 0.0
    %5095 = vmatpush1.msra.mxu0 0.0
    %5096 = vmatprep.subr.mxu0 0.0
    %5097 = vmatpush1.msra.mxu0 0.0
    %5098 = vmatprep.subr.mxu0 0.0
    %5099 = vmatpush1.msra.mxu0 0.0
    %5100 = vmatprep.subr.mxu0 0.0
    %5101 = vmatpush1.msra.mxu0 0.0
    %5102 = vmatprep.subr.mxu0 0.0
    %5103 = vmatpush1.msra.mxu0 0.0
    %5104 = vmatprep.subr.mxu0 0.0
    %5105 = vmatpush1.msra.mxu0 0.0
    %5106 = vmatprep.subr.mxu0 0.0
    %5107 = vmatpush1.msra.mxu0 0.0
    %5108 = vmatprep.subr.mxu0 0.0
    %5109 = vmatpush1.msra.mxu0 0.0
    %5110 = vmatprep.subr.mxu0 0.0
    %5111 = vmatpush1.msra.mxu0 0.0
    %5112 = vmatprep.subr.mxu0 0.0
    %5113 = vmatpush1.msra.mxu0 0.0
    %5114 = vmatprep.subr.mxu0 0.0
    %5115 = vmatpush1.msra.mxu0 0.0
    %5116 = vmatprep.subr.mxu0 0.0
    %5117 = vmatpush1.msra.mxu0 0.0
    %5118 = vmatprep.subr.mxu0 0.0
    %5119 = vmatpush1.msra.mxu0 0.0
    %5120 = vmatprep.subr.mxu0 0.0
    %5121 = vmatpush1.msra.mxu0 0.0
    %5122 = vmatprep.subr.mxu0 0.0
    %5123 = vmatpush1.msra.mxu0 0.0
    %5124 = vmatprep.subr.mxu0 0.0
    %5125 = vmatpush1.msra.mxu0 0.0
    %5126 = vmatprep.subr.mxu0 0.0
    %5127 = vmatpush1.msra.mxu0 0.0
    %5128 = vmatprep.subr.mxu0 0.0
    %5129 = vmatpush1.msra.mxu0 0.0
    %5130 = vmatprep.subr.mxu0 0.0
    %5131 = vmatpush1.msra.mxu0 0.0
    %5132 = vmatprep.subr.mxu0 0.0
    %5133 = vmatpush1.msra.mxu0 0.0
    %5134 = vmatprep.subr.mxu0 0.0
    %5135 = vmatpush1.msra.mxu0 0.0
    %5136 = vmatprep.subr.mxu0 0.0
    %5137 = vmatpush1.msra.mxu0 0.0
    %5138 = vmatprep.subr.mxu0 0.0
    %5139 = vmatpush1.msra.mxu0 0.0
    %5140 = vmatprep.subr.mxu0 0.0
    %5141 = vmatpush1.msra.mxu0 0.0
    %5142 = vmatprep.subr.mxu0 0.0
    %5143 = vmatpush1.msra.mxu0 0.0
    %5144 = vmatprep.subr.mxu0 0.0
    %5145 = vmatpush1.msra.mxu0 0.0
    %5146 = vmatprep.subr.mxu0 0.0
    %5147 = vmatpush1.msra.mxu0 0.0
    %5148 = vmatprep.mubr.f32.mxu0 0.0
    %5149 = vmatmul.mubr.f32.gmra.mrb[0].mxu0 %v4818
    %v5150 = vpop.f32.mrb[0].mxu0
    %v5151 = vadd.f32 %v5079, %v5150
    %v5152 = vpop.f32.mrb[0].mxu0
    %5153 = vdwg.mxu0
    %v5154 = vld [vmem:[%s1128] sm:$0xff]
    %v5155 = vld [vmem:[%s1128 + $0x8] sm:$0xff]
    %v5156 = vld [vmem:[%s1128 + $0x10] sm:$0xff]
    %v5157 = vld [vmem:[%s1128 + $0x18] sm:$0xff]
    %v5158 = vld [vmem:[%s1133] sm:$0x1]
    %v5160 = vlaneseq
    %v5161 = vshrl.u32 %v5160, 7
    %v5162 = vsub.s32 0, %v5161
    %v5163 = vrot.slane %v5158, %v5162
    %5165 = vmatprep.subr.mxu0 0.0
    %5166 = vmatpush1.msra.mxu0 %v5154
    %5167 = vmatprep.subr.mxu0 0.0
    %5168 = vmatpush1.msra.mxu0 %v5155
    %5169 = vmatprep.subr.mxu0 0.0
    %5170 = vmatpush1.msra.mxu0 %v5156
    %5171 = vmatprep.subr.mxu0 0.0
    %5172 = vmatpush1.msra.mxu0 %v5157
    %5173 = vmatprep.subr.mxu0 0.0
    %5174 = vmatpush1.msra.mxu0 0.0
    %5175 = vmatprep.subr.mxu0 0.0
    %5176 = vmatpush1.msra.mxu0 0.0
    %5177 = vmatprep.subr.mxu0 0.0
    %5178 = vmatpush1.msra.mxu0 0.0
    %5179 = vmatprep.subr.mxu0 0.0
    %5180 = vmatpush1.msra.mxu0 0.0
    %5181 = vmatprep.subr.mxu0 0.0
    %5182 = vmatpush1.msra.mxu0 0.0
    %5183 = vmatprep.subr.mxu0 0.0
    %5184 = vmatpush1.msra.mxu0 0.0
    %5185 = vmatprep.subr.mxu0 0.0
    %5186 = vmatpush1.msra.mxu0 0.0
    %5187 = vmatprep.subr.mxu0 0.0
    %5188 = vmatpush1.msra.mxu0 0.0
    %5189 = vmatprep.subr.mxu0 0.0
    %5190 = vmatpush1.msra.mxu0 0.0
    %5191 = vmatprep.subr.mxu0 0.0
    %5192 = vmatpush1.msra.mxu0 0.0
    %5193 = vmatprep.subr.mxu0 0.0
    %5194 = vmatpush1.msra.mxu0 0.0
    %5195 = vmatprep.subr.mxu0 0.0
    %5196 = vmatpush1.msra.mxu0 0.0
    %5197 = vmatprep.subr.mxu0 0.0
    %5198 = vmatpush1.msra.mxu0 0.0
    %5199 = vmatprep.subr.mxu0 0.0
    %5200 = vmatpush1.msra.mxu0 0.0
    %5201 = vmatprep.subr.mxu0 0.0
    %5202 = vmatpush1.msra.mxu0 0.0
    %5203 = vmatprep.subr.mxu0 0.0
    %5204 = vmatpush1.msra.mxu0 0.0
    %5205 = vmatprep.subr.mxu0 0.0
    %5206 = vmatpush1.msra.mxu0 0.0
    %5207 = vmatprep.subr.mxu0 0.0
    %5208 = vmatpush1.msra.mxu0 0.0
    %5209 = vmatprep.subr.mxu0 0.0
    %5210 = vmatpush1.msra.mxu0 0.0
    %5211 = vmatprep.subr.mxu0 0.0
    %5212 = vmatpush1.msra.mxu0 0.0
    %5213 = vmatprep.subr.mxu0 0.0
    %5214 = vmatpush1.msra.mxu0 0.0
    %5215 = vmatprep.subr.mxu0 0.0
    %5216 = vmatpush1.msra.mxu0 0.0
    %5217 = vmatprep.subr.mxu0 0.0
    %5218 = vmatpush1.msra.mxu0 0.0
    %5219 = vmatprep.subr.mxu0 0.0
    %5220 = vmatpush1.msra.mxu0 0.0
    %5221 = vmatprep.subr.mxu0 0.0
    %5222 = vmatpush1.msra.mxu0 0.0
    %5223 = vmatprep.subr.mxu0 0.0
    %5224 = vmatpush1.msra.mxu0 0.0
    %5225 = vmatprep.subr.mxu0 0.0
    %5226 = vmatpush1.msra.mxu0 0.0
    %5227 = vmatprep.subr.mxu0 0.0
    %5228 = vmatpush1.msra.mxu0 0.0
    %5229 = vmatprep.mubr.f32.mxu0 0.0
    %5230 = vmatmul.mubr.f32.gmra.mrb[0].mxu0 %v4745
    %v5231 = vpop.f32.mrb[0].mxu0
    %v5232 = vadd.f32 %v5163, %v5231
    %v5233 = vpop.f32.mrb[0].mxu0
    %5234 = vdwg.mxu0
    %v5235 = vmul.f32 %v4906, %v5232
    %v5236 = vadd.f32 %v5151, %v5235
    %v5237 = vtanh.pop %v5236
    %v5238 = vsub.f32 1.0, %v5070
    %v5239 = vmul.f32 %v5238, %v5237
    %v5240 = vmul.f32 %v5070, %v4235
    %v5241 = vadd.f32 %v5239, %v5240
    %s5242 = scalar_lea.vmem [#allocation3], 24
    %5243 = vst.msk [vmem:[%s5242] sm:$0xff] %vm200, %v5241
    %s5244 = scalar_lea.vmem [#allocation4], 40
    %v5245 = vld [vmem:[%s5244] sm:$0xff]
    %v5246 = vld [vmem:[%s2] sm:$0xff]
    %v5247 = vld [vmem:[%s2 + $0x8] sm:$0xff]
    %v5248 = vld [vmem:[%s3] sm:$0xff]
    %v5249 = vld [vmem:[%s3 + $0x8] sm:$0xff]
    %v5250 = vld [vmem:[%s3 + $0x10] sm:$0xff]
    %v5251 = vld [vmem:[%s3 + $0x18] sm:$0xff]
    %v5253 = vsel %vm200, %v4732, 0
    %5255 = vmatprep.subr.mxu0 0.0
    %5256 = vmatpush1.msra.mxu0 %v5248
    %5257 = vmatprep.subr.mxu0 0.0
    %5258 = vmatpush1.msra.mxu0 %v5249
    %5259 = vmatprep.subr.mxu0 0.0
    %5260 = vmatpush1.msra.mxu0 %v5250
    %5261 = vmatprep.subr.mxu0 0.0
    %5262 = vmatpush1.msra.mxu0 %v5251
    %5263 = vmatprep.subr.mxu0 0.0
    %5264 = vmatpush1.msra.mxu0 0.0
    %5265 = vmatprep.subr.mxu0 0.0
    %5266 = vmatpush1.msra.mxu0 0.0
    %5267 = vmatprep.subr.mxu0 0.0
    %5268 = vmatpush1.msra.mxu0 0.0
    %5269 = vmatprep.subr.mxu0 0.0
    %5270 = vmatpush1.msra.mxu0 0.0
    %5271 = vmatprep.subr.mxu0 0.0
    %5272 = vmatpush1.msra.mxu0 0.0
    %5273 = vmatprep.subr.mxu0 0.0
    %5274 = vmatpush1.msra.mxu0 0.0
    %5275 = vmatprep.subr.mxu0 0.0
    %5276 = vmatpush1.msra.mxu0 0.0
    %5277 = vmatprep.subr.mxu0 0.0
    %5278 = vmatpush1.msra.mxu0 0.0
    %5279 = vmatprep.subr.mxu0 0.0
    %5280 = vmatpush1.msra.mxu0 0.0
    %5281 = vmatprep.subr.mxu0 0.0
    %5282 = vmatpush1.msra.mxu0 0.0
    %5283 = vmatprep.subr.mxu0 0.0
    %5284 = vmatpush1.msra.mxu0 0.0
    %5285 = vmatprep.subr.mxu0 0.0
    %5286 = vmatpush1.msra.mxu0 0.0
    %5287 = vmatprep.subr.mxu0 0.0
    %5288 = vmatpush1.msra.mxu0 0.0
    %5289 = vmatprep.subr.mxu0 0.0
    %5290 = vmatpush1.msra.mxu0 0.0
    %5291 = vmatprep.subr.mxu0 0.0
    %5292 = vmatpush1.msra.mxu0 0.0
    %5293 = vmatprep.subr.mxu0 0.0
    %5294 = vmatpush1.msra.mxu0 0.0
    %5295 = vmatprep.subr.mxu0 0.0
    %5296 = vmatpush1.msra.mxu0 0.0
    %5297 = vmatprep.subr.mxu0 0.0
    %5298 = vmatpush1.msra.mxu0 0.0
    %5299 = vmatprep.subr.mxu0 0.0
    %5300 = vmatpush1.msra.mxu0 0.0
    %5301 = vmatprep.subr.mxu0 0.0
    %5302 = vmatpush1.msra.mxu0 0.0
    %5303 = vmatprep.subr.mxu0 0.0
    %5304 = vmatpush1.msra.mxu0 0.0
    %5305 = vmatprep.subr.mxu0 0.0
    %5306 = vmatpush1.msra.mxu0 0.0
    %5307 = vmatprep.subr.mxu0 0.0
    %5308 = vmatpush1.msra.mxu0 0.0
    %5309 = vmatprep.subr.mxu0 0.0
    %5310 = vmatpush1.msra.mxu0 0.0
    %5311 = vmatprep.subr.mxu0 0.0
    %5312 = vmatpush1.msra.mxu0 0.0
    %5313 = vmatprep.subr.mxu0 0.0
    %5314 = vmatpush1.msra.mxu0 0.0
    %5315 = vmatprep.subr.mxu0 0.0
    %5316 = vmatpush1.msra.mxu0 0.0
    %5317 = vmatprep.subr.mxu0 0.0
    %5318 = vmatpush1.msra.mxu0 0.0
    %5319 = vmatprep.mubr.f32.mxu0 0.0
    %5320 = vmatmul.mubr.f32.gmra.mrb[0].mxu0 %v5253
    %v5321 = vpop.f32.mrb[0].mxu0
    %v5322 = vadd.f32 0.0, %v5321
    %v5323 = vpop.f32.mrb[0].mxu0
    %5324 = vdwg.mxu0
    %v5326 = vsel %vm282, %v5245, 0
    %5328 = vmatprep.subr.mxu0 0.0
    %5329 = vmatpush1.msra.mxu0 %v5246
    %5330 = vmatprep.subr.mxu0 0.0
    %5331 = vmatpush1.msra.mxu0 %v5247
    %5332 = vmatprep.subr.mxu0 0.0
    %5333 = vmatpush1.msra.mxu0 0.0
    %5334 = vmatprep.subr.mxu0 0.0
    %5335 = vmatpush1.msra.mxu0 0.0
    %5336 = vmatprep.subr.mxu0 0.0
    %5337 = vmatpush1.msra.mxu0 0.0
    %5338 = vmatprep.subr.mxu0 0.0
    %5339 = vmatpush1.msra.mxu0 0.0
    %5340 = vmatprep.subr.mxu0 0.0
    %5341 = vmatpush1.msra.mxu0 0.0
    %5342 = vmatprep.subr.mxu0 0.0
    %5343 = vmatpush1.msra.mxu0 0.0
    %5344 = vmatprep.subr.mxu0 0.0
    %5345 = vmatpush1.msra.mxu0 0.0
    %5346 = vmatprep.subr.mxu0 0.0
    %5347 = vmatpush1.msra.mxu0 0.0
    %5348 = vmatprep.subr.mxu0 0.0
    %5349 = vmatpush1.msra.mxu0 0.0
    %5350 = vmatprep.subr.mxu0 0.0
    %5351 = vmatpush1.msra.mxu0 0.0
    %5352 = vmatprep.subr.mxu0 0.0
    %5353 = vmatpush1.msra.mxu0 0.0
    %5354 = vmatprep.subr.mxu0 0.0
    %5355 = vmatpush1.msra.mxu0 0.0
    %5356 = vmatprep.subr.mxu0 0.0
    %5357 = vmatpush1.msra.mxu0 0.0
    %5358 = vmatprep.subr.mxu0 0.0
    %5359 = vmatpush1.msra.mxu0 0.0
    %5360 = vmatprep.subr.mxu0 0.0
    %5361 = vmatpush1.msra.mxu0 0.0
    %5362 = vmatprep.subr.mxu0 0.0
    %5363 = vmatpush1.msra.mxu0 0.0
    %5364 = vmatprep.subr.mxu0 0.0
    %5365 = vmatpush1.msra.mxu0 0.0
    %5366 = vmatprep.subr.mxu0 0.0
    %5367 = vmatpush1.msra.mxu0 0.0
    %5368 = vmatprep.subr.mxu0 0.0
    %5369 = vmatpush1.msra.mxu0 0.0
    %5370 = vmatprep.subr.mxu0 0.0
    %5371 = vmatpush1.msra.mxu0 0.0
    %5372 = vmatprep.subr.mxu0 0.0
    %5373 = vmatpush1.msra.mxu0 0.0
    %5374 = vmatprep.subr.mxu0 0.0
    %5375 = vmatpush1.msra.mxu0 0.0
    %5376 = vmatprep.subr.mxu0 0.0
    %5377 = vmatpush1.msra.mxu0 0.0
    %5378 = vmatprep.subr.mxu0 0.0
    %5379 = vmatpush1.msra.mxu0 0.0
    %5380 = vmatprep.subr.mxu0 0.0
    %5381 = vmatpush1.msra.mxu0 0.0
    %5382 = vmatprep.subr.mxu0 0.0
    %5383 = vmatpush1.msra.mxu0 0.0
    %5384 = vmatprep.subr.mxu0 0.0
    %5385 = vmatpush1.msra.mxu0 0.0
    %5386 = vmatprep.subr.mxu0 0.0
    %5387 = vmatpush1.msra.mxu0 0.0
    %5388 = vmatprep.subr.mxu0 0.0
    %5389 = vmatpush1.msra.mxu0 0.0
    %5390 = vmatprep.subr.mxu0 0.0
    %5391 = vmatpush1.msra.mxu0 0.0
    %5392 = vmatprep.mubr.f32.mxu0 0.0
    %5393 = vmatmul.mubr.f32.gmra.mrb[0].mxu0 %v5326
    %v5394 = vpop.f32.mrb[0].mxu0
    %v5395 = vadd.f32 %v5322, %v5394
    %v5396 = vpop.f32.mrb[0].mxu0
    %5397 = vdwg.mxu0
    %v5398 = vld [vmem:[#allocation9] sm:$0x1]
    %v5400 = vlaneseq
    %v5401 = vshrl.u32 %v5400, 7
    %v5402 = vsub.s32 0, %v5401
    %v5403 = vrot.slane %v5398, %v5402
    %v5405 = vadd.f32 %v5395, %v5403
    %v5406 = vxor.u32 %v5405, 2147483648
    %v5407 = vmul.f32 %v5406, 1.442695
    %v5408 = vpow.pop %v5407
    %v5409 = vadd.f32 %v5408, 1.0
    %v5410 = vrcp.pop %v5409
    %v5411 = vmul.f32 1.0, %v5410
    %v5412 = vld [vmem:[%s370] sm:$0xff]
    %v5413 = vld [vmem:[%s370 + $0x8] sm:$0xff]
    %v5414 = vld [vmem:[%s373] sm:$0xff]
    %v5415 = vld [vmem:[%s373 + $0x8] sm:$0xff]
    %v5416 = vld [vmem:[%s373 + $0x10] sm:$0xff]
    %v5417 = vld [vmem:[%s373 + $0x18] sm:$0xff]
    %5418 = vmatprep.subr.mxu0 0.0
    %5419 = vmatpush1.msra.mxu0 %v5414
    %5420 = vmatprep.subr.mxu0 0.0
    %5421 = vmatpush1.msra.mxu0 %v5415
    %5422 = vmatprep.subr.mxu0 0.0
    %5423 = vmatpush1.msra.mxu0 %v5416
    %5424 = vmatprep.subr.mxu0 0.0
    %5425 = vmatpush1.msra.mxu0 %v5417
    %5426 = vmatprep.subr.mxu0 0.0
    %5427 = vmatpush1.msra.mxu0 0.0
    %5428 = vmatprep.subr.mxu0 0.0
    %5429 = vmatpush1.msra.mxu0 0.0
    %5430 = vmatprep.subr.mxu0 0.0
    %5431 = vmatpush1.msra.mxu0 0.0
    %5432 = vmatprep.subr.mxu0 0.0
    %5433 = vmatpush1.msra.mxu0 0.0
    %5434 = vmatprep.subr.mxu0 0.0
    %5435 = vmatpush1.msra.mxu0 0.0
    %5436 = vmatprep.subr.mxu0 0.0
    %5437 = vmatpush1.msra.mxu0 0.0
    %5438 = vmatprep.subr.mxu0 0.0
    %5439 = vmatpush1.msra.mxu0 0.0
    %5440 = vmatprep.subr.mxu0 0.0
    %5441 = vmatpush1.msra.mxu0 0.0
    %5442 = vmatprep.subr.mxu0 0.0
    %5443 = vmatpush1.msra.mxu0 0.0
    %5444 = vmatprep.subr.mxu0 0.0
    %5445 = vmatpush1.msra.mxu0 0.0
    %5446 = vmatprep.subr.mxu0 0.0
    %5447 = vmatpush1.msra.mxu0 0.0
    %5448 = vmatprep.subr.mxu0 0.0
    %5449 = vmatpush1.msra.mxu0 0.0
    %5450 = vmatprep.subr.mxu0 0.0
    %5451 = vmatpush1.msra.mxu0 0.0
    %5452 = vmatprep.subr.mxu0 0.0
    %5453 = vmatpush1.msra.mxu0 0.0
    %5454 = vmatprep.subr.mxu0 0.0
    %5455 = vmatpush1.msra.mxu0 0.0
    %5456 = vmatprep.subr.mxu0 0.0
    %5457 = vmatpush1.msra.mxu0 0.0
    %5458 = vmatprep.subr.mxu0 0.0
    %5459 = vmatpush1.msra.mxu0 0.0
    %5460 = vmatprep.subr.mxu0 0.0
    %5461 = vmatpush1.msra.mxu0 0.0
    %5462 = vmatprep.subr.mxu0 0.0
    %5463 = vmatpush1.msra.mxu0 0.0
    %5464 = vmatprep.subr.mxu0 0.0
    %5465 = vmatpush1.msra.mxu0 0.0
    %5466 = vmatprep.subr.mxu0 0.0
    %5467 = vmatpush1.msra.mxu0 0.0
    %5468 = vmatprep.subr.mxu0 0.0
    %5469 = vmatpush1.msra.mxu0 0.0
    %5470 = vmatprep.subr.mxu0 0.0
    %5471 = vmatpush1.msra.mxu0 0.0
    %5472 = vmatprep.subr.mxu0 0.0
    %5473 = vmatpush1.msra.mxu0 0.0
    %5474 = vmatprep.subr.mxu0 0.0
    %5475 = vmatpush1.msra.mxu0 0.0
    %5476 = vmatprep.subr.mxu0 0.0
    %5477 = vmatpush1.msra.mxu0 0.0
    %5478 = vmatprep.subr.mxu0 0.0
    %5479 = vmatpush1.msra.mxu0 0.0
    %5480 = vmatprep.subr.mxu0 0.0
    %5481 = vmatpush1.msra.mxu0 0.0
    %5482 = vmatprep.mubr.f32.mxu0 0.0
    %5483 = vmatmul.mubr.f32.gmra.mrb[0].mxu0 %v5253
    %v5484 = vpop.f32.mrb[0].mxu0
    %v5485 = vadd.f32 0.0, %v5484
    %v5486 = vpop.f32.mrb[0].mxu0
    %5487 = vdwg.mxu0
    %5488 = vmatprep.subr.mxu0 0.0
    %5489 = vmatpush1.msra.mxu0 %v5412
    %5490 = vmatprep.subr.mxu0 0.0
    %5491 = vmatpush1.msra.mxu0 %v5413
    %5492 = vmatprep.subr.mxu0 0.0
    %5493 = vmatpush1.msra.mxu0 0.0
    %5494 = vmatprep.subr.mxu0 0.0
    %5495 = vmatpush1.msra.mxu0 0.0
    %5496 = vmatprep.subr.mxu0 0.0
    %5497 = vmatpush1.msra.mxu0 0.0
    %5498 = vmatprep.subr.mxu0 0.0
    %5499 = vmatpush1.msra.mxu0 0.0
    %5500 = vmatprep.subr.mxu0 0.0
    %5501 = vmatpush1.msra.mxu0 0.0
    %5502 = vmatprep.subr.mxu0 0.0
    %5503 = vmatpush1.msra.mxu0 0.0
    %5504 = vmatprep.subr.mxu0 0.0
    %5505 = vmatpush1.msra.mxu0 0.0
    %5506 = vmatprep.subr.mxu0 0.0
    %5507 = vmatpush1.msra.mxu0 0.0
    %5508 = vmatprep.subr.mxu0 0.0
    %5509 = vmatpush1.msra.mxu0 0.0
    %5510 = vmatprep.subr.mxu0 0.0
    %5511 = vmatpush1.msra.mxu0 0.0
    %5512 = vmatprep.subr.mxu0 0.0
    %5513 = vmatpush1.msra.mxu0 0.0
    %5514 = vmatprep.subr.mxu0 0.0
    %5515 = vmatpush1.msra.mxu0 0.0
    %5516 = vmatprep.subr.mxu0 0.0
    %5517 = vmatpush1.msra.mxu0 0.0
    %5518 = vmatprep.subr.mxu0 0.0
    %5519 = vmatpush1.msra.mxu0 0.0
    %5520 = vmatprep.subr.mxu0 0.0
    %5521 = vmatpush1.msra.mxu0 0.0
    %5522 = vmatprep.subr.mxu0 0.0
    %5523 = vmatpush1.msra.mxu0 0.0
    %5524 = vmatprep.subr.mxu0 0.0
    %5525 = vmatpush1.msra.mxu0 0.0
    %5526 = vmatprep.subr.mxu0 0.0
    %5527 = vmatpush1.msra.mxu0 0.0
    %5528 = vmatprep.subr.mxu0 0.0
    %5529 = vmatpush1.msra.mxu0 0.0
    %5530 = vmatprep.subr.mxu0 0.0
    %5531 = vmatpush1.msra.mxu0 0.0
    %5532 = vmatprep.subr.mxu0 0.0
    %5533 = vmatpush1.msra.mxu0 0.0
    %5534 = vmatprep.subr.mxu0 0.0
    %5535 = vmatpush1.msra.mxu0 0.0
    %5536 = vmatprep.subr.mxu0 0.0
    %5537 = vmatpush1.msra.mxu0 0.0
    %5538 = vmatprep.subr.mxu0 0.0
    %5539 = vmatpush1.msra.mxu0 0.0
    %5540 = vmatprep.subr.mxu0 0.0
    %5541 = vmatpush1.msra.mxu0 0.0
    %5542 = vmatprep.subr.mxu0 0.0
    %5543 = vmatpush1.msra.mxu0 0.0
    %5544 = vmatprep.subr.mxu0 0.0
    %5545 = vmatpush1.msra.mxu0 0.0
    %5546 = vmatprep.subr.mxu0 0.0
    %5547 = vmatpush1.msra.mxu0 0.0
    %5548 = vmatprep.subr.mxu0 0.0
    %5549 = vmatpush1.msra.mxu0 0.0
    %5550 = vmatprep.subr.mxu0 0.0
    %5551 = vmatpush1.msra.mxu0 0.0
    %5552 = vmatprep.mubr.f32.mxu0 0.0
    %5553 = vmatmul.mubr.f32.gmra.mrb[0].mxu0 %v5326
    %v5554 = vpop.f32.mrb[0].mxu0
    %v5555 = vadd.f32 %v5485, %v5554
    %v5556 = vpop.f32.mrb[0].mxu0
    %5557 = vdwg.mxu0
    %v5558 = vld [vmem:[%s518] sm:$0x1]
    %v5560 = vlaneseq
    %v5561 = vshrl.u32 %v5560, 7
    %v5562 = vsub.s32 0, %v5561
    %v5563 = vrot.slane %v5558, %v5562
    %v5565 = vadd.f32 %v5555, %v5563
    %v5566 = vxor.u32 %v5565, 2147483648
    %v5567 = vmul.f32 %v5566, 1.442695
    %v5568 = vpow.pop %v5567
    %v5569 = vadd.f32 %v5568, 1.0
    %v5570 = vrcp.pop %v5569
    %v5571 = vmul.f32 1.0, %v5570
    %v5572 = vld [vmem:[%s533] sm:$0xff]
    %v5573 = vld [vmem:[%s533 + $0x8] sm:$0xff]
    %v5574 = vld [vmem:[%s536] sm:$0x1]
    %v5576 = vlaneseq
    %v5577 = vshrl.u32 %v5576, 7
    %v5578 = vsub.s32 0, %v5577
    %v5579 = vrot.slane %v5574, %v5578
    %5581 = vmatprep.subr.mxu0 0.0
    %5582 = vmatpush1.msra.mxu0 %v5572
    %5583 = vmatprep.subr.mxu0 0.0
    %5584 = vmatpush1.msra.mxu0 %v5573
    %5585 = vmatprep.subr.mxu0 0.0
    %5586 = vmatpush1.msra.mxu0 0.0
    %5587 = vmatprep.subr.mxu0 0.0
    %5588 = vmatpush1.msra.mxu0 0.0
    %5589 = vmatprep.subr.mxu0 0.0
    %5590 = vmatpush1.msra.mxu0 0.0
    %5591 = vmatprep.subr.mxu0 0.0
    %5592 = vmatpush1.msra.mxu0 0.0
    %5593 = vmatprep.subr.mxu0 0.0
    %5594 = vmatpush1.msra.mxu0 0.0
    %5595 = vmatprep.subr.mxu0 0.0
    %5596 = vmatpush1.msra.mxu0 0.0
    %5597 = vmatprep.subr.mxu0 0.0
    %5598 = vmatpush1.msra.mxu0 0.0
    %5599 = vmatprep.subr.mxu0 0.0
    %5600 = vmatpush1.msra.mxu0 0.0
    %5601 = vmatprep.subr.mxu0 0.0
    %5602 = vmatpush1.msra.mxu0 0.0
    %5603 = vmatprep.subr.mxu0 0.0
    %5604 = vmatpush1.msra.mxu0 0.0
    %5605 = vmatprep.subr.mxu0 0.0
    %5606 = vmatpush1.msra.mxu0 0.0
    %5607 = vmatprep.subr.mxu0 0.0
    %5608 = vmatpush1.msra.mxu0 0.0
    %5609 = vmatprep.subr.mxu0 0.0
    %5610 = vmatpush1.msra.mxu0 0.0
    %5611 = vmatprep.subr.mxu0 0.0
    %5612 = vmatpush1.msra.mxu0 0.0
    %5613 = vmatprep.subr.mxu0 0.0
    %5614 = vmatpush1.msra.mxu0 0.0
    %5615 = vmatprep.subr.mxu0 0.0
    %5616 = vmatpush1.msra.mxu0 0.0
    %5617 = vmatprep.subr.mxu0 0.0
    %5618 = vmatpush1.msra.mxu0 0.0
    %5619 = vmatprep.subr.mxu0 0.0
    %5620 = vmatpush1.msra.mxu0 0.0
    %5621 = vmatprep.subr.mxu0 0.0
    %5622 = vmatpush1.msra.mxu0 0.0
    %5623 = vmatprep.subr.mxu0 0.0
    %5624 = vmatpush1.msra.mxu0 0.0
    %5625 = vmatprep.subr.mxu0 0.0
    %5626 = vmatpush1.msra.mxu0 0.0
    %5627 = vmatprep.subr.mxu0 0.0
    %5628 = vmatpush1.msra.mxu0 0.0
    %5629 = vmatprep.subr.mxu0 0.0
    %5630 = vmatpush1.msra.mxu0 0.0
    %5631 = vmatprep.subr.mxu0 0.0
    %5632 = vmatpush1.msra.mxu0 0.0
    %5633 = vmatprep.subr.mxu0 0.0
    %5634 = vmatpush1.msra.mxu0 0.0
    %5635 = vmatprep.subr.mxu0 0.0
    %5636 = vmatpush1.msra.mxu0 0.0
    %5637 = vmatprep.subr.mxu0 0.0
    %5638 = vmatpush1.msra.mxu0 0.0
    %5639 = vmatprep.subr.mxu0 0.0
    %5640 = vmatpush1.msra.mxu0 0.0
    %5641 = vmatprep.subr.mxu0 0.0
    %5642 = vmatpush1.msra.mxu0 0.0
    %5643 = vmatprep.subr.mxu0 0.0
    %5644 = vmatpush1.msra.mxu0 0.0
    %5645 = vmatprep.mubr.f32.mxu0 0.0
    %5646 = vmatmul.mubr.f32.gmra.mrb[0].mxu0 %v5326
    %v5647 = vpop.f32.mrb[0].mxu0
    %v5648 = vadd.f32 %v5579, %v5647
    %v5649 = vpop.f32.mrb[0].mxu0
    %5650 = vdwg.mxu0
    %v5651 = vld [vmem:[%s614] sm:$0xff]
    %v5652 = vld [vmem:[%s614 + $0x8] sm:$0xff]
    %v5653 = vld [vmem:[%s614 + $0x10] sm:$0xff]
    %v5654 = vld [vmem:[%s614 + $0x18] sm:$0xff]
    %v5655 = vld [vmem:[%s619] sm:$0x1]
    %v5657 = vlaneseq
    %v5658 = vshrl.u32 %v5657, 7
    %v5659 = vsub.s32 0, %v5658
    %v5660 = vrot.slane %v5655, %v5659
    %5662 = vmatprep.subr.mxu0 0.0
    %5663 = vmatpush1.msra.mxu0 %v5651
    %5664 = vmatprep.subr.mxu0 0.0
    %5665 = vmatpush1.msra.mxu0 %v5652
    %5666 = vmatprep.subr.mxu0 0.0
    %5667 = vmatpush1.msra.mxu0 %v5653
    %5668 = vmatprep.subr.mxu0 0.0
    %5669 = vmatpush1.msra.mxu0 %v5654
    %5670 = vmatprep.subr.mxu0 0.0
    %5671 = vmatpush1.msra.mxu0 0.0
    %5672 = vmatprep.subr.mxu0 0.0
    %5673 = vmatpush1.msra.mxu0 0.0
    %5674 = vmatprep.subr.mxu0 0.0
    %5675 = vmatpush1.msra.mxu0 0.0
    %5676 = vmatprep.subr.mxu0 0.0
    %5677 = vmatpush1.msra.mxu0 0.0
    %5678 = vmatprep.subr.mxu0 0.0
    %5679 = vmatpush1.msra.mxu0 0.0
    %5680 = vmatprep.subr.mxu0 0.0
    %5681 = vmatpush1.msra.mxu0 0.0
    %5682 = vmatprep.subr.mxu0 0.0
    %5683 = vmatpush1.msra.mxu0 0.0
    %5684 = vmatprep.subr.mxu0 0.0
    %5685 = vmatpush1.msra.mxu0 0.0
    %5686 = vmatprep.subr.mxu0 0.0
    %5687 = vmatpush1.msra.mxu0 0.0
    %5688 = vmatprep.subr.mxu0 0.0
    %5689 = vmatpush1.msra.mxu0 0.0
    %5690 = vmatprep.subr.mxu0 0.0
    %5691 = vmatpush1.msra.mxu0 0.0
    %5692 = vmatprep.subr.mxu0 0.0
    %5693 = vmatpush1.msra.mxu0 0.0
    %5694 = vmatprep.subr.mxu0 0.0
    %5695 = vmatpush1.msra.mxu0 0.0
    %5696 = vmatprep.subr.mxu0 0.0
    %5697 = vmatpush1.msra.mxu0 0.0
    %5698 = vmatprep.subr.mxu0 0.0
    %5699 = vmatpush1.msra.mxu0 0.0
    %5700 = vmatprep.subr.mxu0 0.0
    %5701 = vmatpush1.msra.mxu0 0.0
    %5702 = vmatprep.subr.mxu0 0.0
    %5703 = vmatpush1.msra.mxu0 0.0
    %5704 = vmatprep.subr.mxu0 0.0
    %5705 = vmatpush1.msra.mxu0 0.0
    %5706 = vmatprep.subr.mxu0 0.0
    %5707 = vmatpush1.msra.mxu0 0.0
    %5708 = vmatprep.subr.mxu0 0.0
    %5709 = vmatpush1.msra.mxu0 0.0
    %5710 = vmatprep.subr.mxu0 0.0
    %5711 = vmatpush1.msra.mxu0 0.0
    %5712 = vmatprep.subr.mxu0 0.0
    %5713 = vmatpush1.msra.mxu0 0.0
    %5714 = vmatprep.subr.mxu0 0.0
    %5715 = vmatpush1.msra.mxu0 0.0
    %5716 = vmatprep.subr.mxu0 0.0
    %5717 = vmatpush1.msra.mxu0 0.0
    %5718 = vmatprep.subr.mxu0 0.0
    %5719 = vmatpush1.msra.mxu0 0.0
    %5720 = vmatprep.subr.mxu0 0.0
    %5721 = vmatpush1.msra.mxu0 0.0
    %5722 = vmatprep.subr.mxu0 0.0
    %5723 = vmatpush1.msra.mxu0 0.0
    %5724 = vmatprep.subr.mxu0 0.0
    %5725 = vmatpush1.msra.mxu0 0.0
    %5726 = vmatprep.mubr.f32.mxu0 0.0
    %5727 = vmatmul.mubr.f32.gmra.mrb[0].mxu0 %v5253
    %v5728 = vpop.f32.mrb[0].mxu0
    %v5729 = vadd.f32 %v5660, %v5728
    %v5730 = vpop.f32.mrb[0].mxu0
    %5731 = vdwg.mxu0
    %v5732 = vmul.f32 %v5411, %v5729
    %v5733 = vadd.f32 %v5648, %v5732
    %v5734 = vtanh.pop %v5733
    %v5735 = vsub.f32 1.0, %v5571
    %v5736 = vmul.f32 %v5735, %v5734
    %v5737 = vmul.f32 %v5571, %v4732
    %v5738 = vadd.f32 %v5736, %v5737
    %s5739 = scalar_lea.vmem [#allocation2], 40
    %5740 = vst.msk [vmem:[%s5739] sm:$0xff] %vm200, %v5738
    %s5741 = scalar_lea.vmem [#allocation7], 16
    %v5742 = vld [vmem:[%s5741] sm:$0xff]
    %v5743 = vld [vmem:[%s5] sm:$0xff]
    %v5744 = vld [vmem:[%s5 + $0x8] sm:$0xff]
    %v5745 = vld [vmem:[%s5 + $0x10] sm:$0x1]
    %v5746 = vld [vmem:[%s6] sm:$0xff]
    %v5747 = vld [vmem:[%s6 + $0x8] sm:$0xff]
    %v5748 = vld [vmem:[%s6 + $0x10] sm:$0xff]
    %v5749 = vld [vmem:[%s6 + $0x18] sm:$0xff]
    %v5751 = vsel %vm200, %v5241, 0
    %5753 = vmatprep.subr.mxu0 0.0
    %5754 = vmatpush1.msra.mxu0 %v5746
    %5755 = vmatprep.subr.mxu0 0.0
    %5756 = vmatpush1.msra.mxu0 %v5747
    %5757 = vmatprep.subr.mxu0 0.0
    %5758 = vmatpush1.msra.mxu0 %v5748
    %5759 = vmatprep.subr.mxu0 0.0
    %5760 = vmatpush1.msra.mxu0 %v5749
    %5761 = vmatprep.subr.mxu0 0.0
    %5762 = vmatpush1.msra.mxu0 0.0
    %5763 = vmatprep.subr.mxu0 0.0
    %5764 = vmatpush1.msra.mxu0 0.0
    %5765 = vmatprep.subr.mxu0 0.0
    %5766 = vmatpush1.msra.mxu0 0.0
    %5767 = vmatprep.subr.mxu0 0.0
    %5768 = vmatpush1.msra.mxu0 0.0
    %5769 = vmatprep.subr.mxu0 0.0
    %5770 = vmatpush1.msra.mxu0 0.0
    %5771 = vmatprep.subr.mxu0 0.0
    %5772 = vmatpush1.msra.mxu0 0.0
    %5773 = vmatprep.subr.mxu0 0.0
    %5774 = vmatpush1.msra.mxu0 0.0
    %5775 = vmatprep.subr.mxu0 0.0
    %5776 = vmatpush1.msra.mxu0 0.0
    %5777 = vmatprep.subr.mxu0 0.0
    %5778 = vmatpush1.msra.mxu0 0.0
    %5779 = vmatprep.subr.mxu0 0.0
    %5780 = vmatpush1.msra.mxu0 0.0
    %5781 = vmatprep.subr.mxu0 0.0
    %5782 = vmatpush1.msra.mxu0 0.0
    %5783 = vmatprep.subr.mxu0 0.0
    %5784 = vmatpush1.msra.mxu0 0.0
    %5785 = vmatprep.subr.mxu0 0.0
    %5786 = vmatpush1.msra.mxu0 0.0
    %5787 = vmatprep.subr.mxu0 0.0
    %5788 = vmatpush1.msra.mxu0 0.0
    %5789 = vmatprep.subr.mxu0 0.0
    %5790 = vmatpush1.msra.mxu0 0.0
    %5791 = vmatprep.subr.mxu0 0.0
    %5792 = vmatpush1.msra.mxu0 0.0
    %5793 = vmatprep.subr.mxu0 0.0
    %5794 = vmatpush1.msra.mxu0 0.0
    %5795 = vmatprep.subr.mxu0 0.0
    %5796 = vmatpush1.msra.mxu0 0.0
    %5797 = vmatprep.subr.mxu0 0.0
    %5798 = vmatpush1.msra.mxu0 0.0
    %5799 = vmatprep.subr.mxu0 0.0
    %5800 = vmatpush1.msra.mxu0 0.0
    %5801 = vmatprep.subr.mxu0 0.0
    %5802 = vmatpush1.msra.mxu0 0.0
    %5803 = vmatprep.subr.mxu0 0.0
    %5804 = vmatpush1.msra.mxu0 0.0
    %5805 = vmatprep.subr.mxu0 0.0
    %5806 = vmatpush1.msra.mxu0 0.0
    %5807 = vmatprep.subr.mxu0 0.0
    %5808 = vmatpush1.msra.mxu0 0.0
    %5809 = vmatprep.subr.mxu0 0.0
    %5810 = vmatpush1.msra.mxu0 0.0
    %5811 = vmatprep.subr.mxu0 0.0
    %5812 = vmatpush1.msra.mxu0 0.0
    %5813 = vmatprep.subr.mxu0 0.0
    %5814 = vmatpush1.msra.mxu0 0.0
    %5815 = vmatprep.subr.mxu0 0.0
    %5816 = vmatpush1.msra.mxu0 0.0
    %5817 = vmatprep.mubr.f32.mxu0 0.0
    %5818 = vmatmul.mubr.f32.gmra.mrb[0].mxu0 %v5751
    %v5819 = vpop.f32.mrb[0].mxu0
    %v5820 = vadd.f32 0.0, %v5819
    %v5821 = vpop.f32.mrb[0].mxu0
    %5822 = vdwg.mxu0
    %v5824 = vsel %vm784, %v5742, 0
    %v5827 = vsel %vm788, %v5745, 0
    %5829 = vmatprep.subr.mxu0 0.0
    %5830 = vmatpush1.msra.mxu0 %v5743
    %5831 = vmatprep.subr.mxu0 0.0
    %5832 = vmatpush1.msra.mxu0 %v5744
    %5833 = vmatprep.subr.mxu0 0.0
    %5834 = vmatpush1.msra.mxu0 %v5827
    %5835 = vmatprep.subr.mxu0 0.0
    %5836 = vmatpush1.msra.mxu0 0.0
    %5837 = vmatprep.subr.mxu0 0.0
    %5838 = vmatpush1.msra.mxu0 0.0
    %5839 = vmatprep.subr.mxu0 0.0
    %5840 = vmatpush1.msra.mxu0 0.0
    %5841 = vmatprep.subr.mxu0 0.0
    %5842 = vmatpush1.msra.mxu0 0.0
    %5843 = vmatprep.subr.mxu0 0.0
    %5844 = vmatpush1.msra.mxu0 0.0
    %5845 = vmatprep.subr.mxu0 0.0
    %5846 = vmatpush1.msra.mxu0 0.0
    %5847 = vmatprep.subr.mxu0 0.0
    %5848 = vmatpush1.msra.mxu0 0.0
    %5849 = vmatprep.subr.mxu0 0.0
    %5850 = vmatpush1.msra.mxu0 0.0
    %5851 = vmatprep.subr.mxu0 0.0
    %5852 = vmatpush1.msra.mxu0 0.0
    %5853 = vmatprep.subr.mxu0 0.0
    %5854 = vmatpush1.msra.mxu0 0.0
    %5855 = vmatprep.subr.mxu0 0.0
    %5856 = vmatpush1.msra.mxu0 0.0
    %5857 = vmatprep.subr.mxu0 0.0
    %5858 = vmatpush1.msra.mxu0 0.0
    %5859 = vmatprep.subr.mxu0 0.0
    %5860 = vmatpush1.msra.mxu0 0.0
    %5861 = vmatprep.subr.mxu0 0.0
    %5862 = vmatpush1.msra.mxu0 0.0
    %5863 = vmatprep.subr.mxu0 0.0
    %5864 = vmatpush1.msra.mxu0 0.0
    %5865 = vmatprep.subr.mxu0 0.0
    %5866 = vmatpush1.msra.mxu0 0.0
    %5867 = vmatprep.subr.mxu0 0.0
    %5868 = vmatpush1.msra.mxu0 0.0
    %5869 = vmatprep.subr.mxu0 0.0
    %5870 = vmatpush1.msra.mxu0 0.0
    %5871 = vmatprep.subr.mxu0 0.0
    %5872 = vmatpush1.msra.mxu0 0.0
    %5873 = vmatprep.subr.mxu0 0.0
    %5874 = vmatpush1.msra.mxu0 0.0
    %5875 = vmatprep.subr.mxu0 0.0
    %5876 = vmatpush1.msra.mxu0 0.0
    %5877 = vmatprep.subr.mxu0 0.0
    %5878 = vmatpush1.msra.mxu0 0.0
    %5879 = vmatprep.subr.mxu0 0.0
    %5880 = vmatpush1.msra.mxu0 0.0
    %5881 = vmatprep.subr.mxu0 0.0
    %5882 = vmatpush1.msra.mxu0 0.0
    %5883 = vmatprep.subr.mxu0 0.0
    %5884 = vmatpush1.msra.mxu0 0.0
    %5885 = vmatprep.subr.mxu0 0.0
    %5886 = vmatpush1.msra.mxu0 0.0
    %5887 = vmatprep.subr.mxu0 0.0
    %5888 = vmatpush1.msra.mxu0 0.0
    %5889 = vmatprep.subr.mxu0 0.0
    %5890 = vmatpush1.msra.mxu0 0.0
    %5891 = vmatprep.subr.mxu0 0.0
    %5892 = vmatpush1.msra.mxu0 0.0
    %5893 = vmatprep.mubr.f32.mxu0 0.0
    %5894 = vmatmul.mubr.f32.gmra.mrb[0].mxu0 %v5824
    %v5895 = vpop.f32.mrb[0].mxu0
    %v5896 = vadd.f32 %v5820, %v5895
    %v5897 = vpop.f32.mrb[0].mxu0
    %5898 = vdwg.mxu0
    %v5899 = vld [vmem:[#allocation10] sm:$0x1]
    %v5901 = vlaneseq
    %v5902 = vshrl.u32 %v5901, 7
    %v5903 = vsub.s32 0, %v5902
    %v5904 = vrot.slane %v5899, %v5903
    %v5906 = vadd.f32 %v5896, %v5904
    %v5907 = vxor.u32 %v5906, 2147483648
    %v5908 = vmul.f32 %v5907, 1.442695
    %v5909 = vpow.pop %v5908
    %v5910 = vadd.f32 %v5909, 1.0
    %v5911 = vrcp.pop %v5910
    %v5912 = vmul.f32 1.0, %v5911
    %v5913 = vld [vmem:[%s876] sm:$0xff]
    %v5914 = vld [vmem:[%s876 + $0x8] sm:$0xff]
    %v5915 = vld [vmem:[%s876 + $0x10] sm:$0x1]
    %v5916 = vld [vmem:[%s880] sm:$0xff]
    %v5917 = vld [vmem:[%s880 + $0x8] sm:$0xff]
    %v5918 = vld [vmem:[%s880 + $0x10] sm:$0xff]
    %v5919 = vld [vmem:[%s880 + $0x18] sm:$0xff]
    %5920 = vmatprep.subr.mxu0 0.0
    %5921 = vmatpush1.msra.mxu0 %v5916
    %5922 = vmatprep.subr.mxu0 0.0
    %5923 = vmatpush1.msra.mxu0 %v5917
    %5924 = vmatprep.subr.mxu0 0.0
    %5925 = vmatpush1.msra.mxu0 %v5918
    %5926 = vmatprep.subr.mxu0 0.0
    %5927 = vmatpush1.msra.mxu0 %v5919
    %5928 = vmatprep.subr.mxu0 0.0
    %5929 = vmatpush1.msra.mxu0 0.0
    %5930 = vmatprep.subr.mxu0 0.0
    %5931 = vmatpush1.msra.mxu0 0.0
    %5932 = vmatprep.subr.mxu0 0.0
    %5933 = vmatpush1.msra.mxu0 0.0
    %5934 = vmatprep.subr.mxu0 0.0
    %5935 = vmatpush1.msra.mxu0 0.0
    %5936 = vmatprep.subr.mxu0 0.0
    %5937 = vmatpush1.msra.mxu0 0.0
    %5938 = vmatprep.subr.mxu0 0.0
    %5939 = vmatpush1.msra.mxu0 0.0
    %5940 = vmatprep.subr.mxu0 0.0
    %5941 = vmatpush1.msra.mxu0 0.0
    %5942 = vmatprep.subr.mxu0 0.0
    %5943 = vmatpush1.msra.mxu0 0.0
    %5944 = vmatprep.subr.mxu0 0.0
    %5945 = vmatpush1.msra.mxu0 0.0
    %5946 = vmatprep.subr.mxu0 0.0
    %5947 = vmatpush1.msra.mxu0 0.0
    %5948 = vmatprep.subr.mxu0 0.0
    %5949 = vmatpush1.msra.mxu0 0.0
    %5950 = vmatprep.subr.mxu0 0.0
    %5951 = vmatpush1.msra.mxu0 0.0
    %5952 = vmatprep.subr.mxu0 0.0
    %5953 = vmatpush1.msra.mxu0 0.0
    %5954 = vmatprep.subr.mxu0 0.0
    %5955 = vmatpush1.msra.mxu0 0.0
    %5956 = vmatprep.subr.mxu0 0.0
    %5957 = vmatpush1.msra.mxu0 0.0
    %5958 = vmatprep.subr.mxu0 0.0
    %5959 = vmatpush1.msra.mxu0 0.0
    %5960 = vmatprep.subr.mxu0 0.0
    %5961 = vmatpush1.msra.mxu0 0.0
    %5962 = vmatprep.subr.mxu0 0.0
    %5963 = vmatpush1.msra.mxu0 0.0
    %5964 = vmatprep.subr.mxu0 0.0
    %5965 = vmatpush1.msra.mxu0 0.0
    %5966 = vmatprep.subr.mxu0 0.0
    %5967 = vmatpush1.msra.mxu0 0.0
    %5968 = vmatprep.subr.mxu0 0.0
    %5969 = vmatpush1.msra.mxu0 0.0
    %5970 = vmatprep.subr.mxu0 0.0
    %5971 = vmatpush1.msra.mxu0 0.0
    %5972 = vmatprep.subr.mxu0 0.0
    %5973 = vmatpush1.msra.mxu0 0.0
    %5974 = vmatprep.subr.mxu0 0.0
    %5975 = vmatpush1.msra.mxu0 0.0
    %5976 = vmatprep.subr.mxu0 0.0
    %5977 = vmatpush1.msra.mxu0 0.0
    %5978 = vmatprep.subr.mxu0 0.0
    %5979 = vmatpush1.msra.mxu0 0.0
    %5980 = vmatprep.subr.mxu0 0.0
    %5981 = vmatpush1.msra.mxu0 0.0
    %5982 = vmatprep.subr.mxu0 0.0
    %5983 = vmatpush1.msra.mxu0 0.0
    %5984 = vmatprep.mubr.f32.mxu0 0.0
    %5985 = vmatmul.mubr.f32.gmra.mrb[0].mxu0 %v5751
    %v5986 = vpop.f32.mrb[0].mxu0
    %v5987 = vadd.f32 0.0, %v5986
    %v5988 = vpop.f32.mrb[0].mxu0
    %5989 = vdwg.mxu0
    %v5991 = vsel %vm788, %v5915, 0
    %5993 = vmatprep.subr.mxu0 0.0
    %5994 = vmatpush1.msra.mxu0 %v5913
    %5995 = vmatprep.subr.mxu0 0.0
    %5996 = vmatpush1.msra.mxu0 %v5914
    %5997 = vmatprep.subr.mxu0 0.0
    %5998 = vmatpush1.msra.mxu0 %v5991
    %5999 = vmatprep.subr.mxu0 0.0
    %6000 = vmatpush1.msra.mxu0 0.0
    %6001 = vmatprep.subr.mxu0 0.0
    %6002 = vmatpush1.msra.mxu0 0.0
    %6003 = vmatprep.subr.mxu0 0.0
    %6004 = vmatpush1.msra.mxu0 0.0
    %6005 = vmatprep.subr.mxu0 0.0
    %6006 = vmatpush1.msra.mxu0 0.0
    %6007 = vmatprep.subr.mxu0 0.0
    %6008 = vmatpush1.msra.mxu0 0.0
    %6009 = vmatprep.subr.mxu0 0.0
    %6010 = vmatpush1.msra.mxu0 0.0
    %6011 = vmatprep.subr.mxu0 0.0
    %6012 = vmatpush1.msra.mxu0 0.0
    %6013 = vmatprep.subr.mxu0 0.0
    %6014 = vmatpush1.msra.mxu0 0.0
    %6015 = vmatprep.subr.mxu0 0.0
    %6016 = vmatpush1.msra.mxu0 0.0
    %6017 = vmatprep.subr.mxu0 0.0
    %6018 = vmatpush1.msra.mxu0 0.0
    %6019 = vmatprep.subr.mxu0 0.0
    %6020 = vmatpush1.msra.mxu0 0.0
    %6021 = vmatprep.subr.mxu0 0.0
    %6022 = vmatpush1.msra.mxu0 0.0
    %6023 = vmatprep.subr.mxu0 0.0
    %6024 = vmatpush1.msra.mxu0 0.0
    %6025 = vmatprep.subr.mxu0 0.0
    %6026 = vmatpush1.msra.mxu0 0.0
    %6027 = vmatprep.subr.mxu0 0.0
    %6028 = vmatpush1.msra.mxu0 0.0
    %6029 = vmatprep.subr.mxu0 0.0
    %6030 = vmatpush1.msra.mxu0 0.0
    %6031 = vmatprep.subr.mxu0 0.0
    %6032 = vmatpush1.msra.mxu0 0.0
    %6033 = vmatprep.subr.mxu0 0.0
    %6034 = vmatpush1.msra.mxu0 0.0
    %6035 = vmatprep.subr.mxu0 0.0
    %6036 = vmatpush1.msra.mxu0 0.0
    %6037 = vmatprep.subr.mxu0 0.0
    %6038 = vmatpush1.msra.mxu0 0.0
    %6039 = vmatprep.subr.mxu0 0.0
    %6040 = vmatpush1.msra.mxu0 0.0
    %6041 = vmatprep.subr.mxu0 0.0
    %6042 = vmatpush1.msra.mxu0 0.0
    %6043 = vmatprep.subr.mxu0 0.0
    %6044 = vmatpush1.msra.mxu0 0.0
    %6045 = vmatprep.subr.mxu0 0.0
    %6046 = vmatpush1.msra.mxu0 0.0
    %6047 = vmatprep.subr.mxu0 0.0
    %6048 = vmatpush1.msra.mxu0 0.0
    %6049 = vmatprep.subr.mxu0 0.0
    %6050 = vmatpush1.msra.mxu0 0.0
    %6051 = vmatprep.subr.mxu0 0.0
    %6052 = vmatpush1.msra.mxu0 0.0
    %6053 = vmatprep.subr.mxu0 0.0
    %6054 = vmatpush1.msra.mxu0 0.0
    %6055 = vmatprep.subr.mxu0 0.0
    %6056 = vmatpush1.msra.mxu0 0.0
    %6057 = vmatprep.mubr.f32.mxu0 0.0
    %6058 = vmatmul.mubr.f32.gmra.mrb[0].mxu0 %v5824
    %v6059 = vpop.f32.mrb[0].mxu0
    %v6060 = vadd.f32 %v5987, %v6059
    %v6061 = vpop.f32.mrb[0].mxu0
    %6062 = vdwg.mxu0
    %v6063 = vld [vmem:[%s1028] sm:$0x1]
    %v6065 = vlaneseq
    %v6066 = vshrl.u32 %v6065, 7
    %v6067 = vsub.s32 0, %v6066
    %v6068 = vrot.slane %v6063, %v6067
    %v6070 = vadd.f32 %v6060, %v6068
    %v6071 = vxor.u32 %v6070, 2147483648
    %v6072 = vmul.f32 %v6071, 1.442695
    %v6073 = vpow.pop %v6072
    %v6074 = vadd.f32 %v6073, 1.0
    %v6075 = vrcp.pop %v6074
    %v6076 = vmul.f32 1.0, %v6075
    %v6077 = vld [vmem:[%s1043] sm:$0xff]
    %v6078 = vld [vmem:[%s1043 + $0x8] sm:$0xff]
    %v6079 = vld [vmem:[%s1043 + $0x10] sm:$0x1]
    %v6080 = vld [vmem:[%s1047] sm:$0x1]
    %v6082 = vlaneseq
    %v6083 = vshrl.u32 %v6082, 7
    %v6084 = vsub.s32 0, %v6083
    %v6085 = vrot.slane %v6080, %v6084
    %v6088 = vsel %vm788, %v6079, 0
    %6090 = vmatprep.subr.mxu0 0.0
    %6091 = vmatpush1.msra.mxu0 %v6077
    %6092 = vmatprep.subr.mxu0 0.0
    %6093 = vmatpush1.msra.mxu0 %v6078
    %6094 = vmatprep.subr.mxu0 0.0
    %6095 = vmatpush1.msra.mxu0 %v6088
    %6096 = vmatprep.subr.mxu0 0.0
    %6097 = vmatpush1.msra.mxu0 0.0
    %6098 = vmatprep.subr.mxu0 0.0
    %6099 = vmatpush1.msra.mxu0 0.0
    %6100 = vmatprep.subr.mxu0 0.0
    %6101 = vmatpush1.msra.mxu0 0.0
    %6102 = vmatprep.subr.mxu0 0.0
    %6103 = vmatpush1.msra.mxu0 0.0
    %6104 = vmatprep.subr.mxu0 0.0
    %6105 = vmatpush1.msra.mxu0 0.0
    %6106 = vmatprep.subr.mxu0 0.0
    %6107 = vmatpush1.msra.mxu0 0.0
    %6108 = vmatprep.subr.mxu0 0.0
    %6109 = vmatpush1.msra.mxu0 0.0
    %6110 = vmatprep.subr.mxu0 0.0
    %6111 = vmatpush1.msra.mxu0 0.0
    %6112 = vmatprep.subr.mxu0 0.0
    %6113 = vmatpush1.msra.mxu0 0.0
    %6114 = vmatprep.subr.mxu0 0.0
    %6115 = vmatpush1.msra.mxu0 0.0
    %6116 = vmatprep.subr.mxu0 0.0
    %6117 = vmatpush1.msra.mxu0 0.0
    %6118 = vmatprep.subr.mxu0 0.0
    %6119 = vmatpush1.msra.mxu0 0.0
    %6120 = vmatprep.subr.mxu0 0.0
    %6121 = vmatpush1.msra.mxu0 0.0
    %6122 = vmatprep.subr.mxu0 0.0
    %6123 = vmatpush1.msra.mxu0 0.0
    %6124 = vmatprep.subr.mxu0 0.0
    %6125 = vmatpush1.msra.mxu0 0.0
    %6126 = vmatprep.subr.mxu0 0.0
    %6127 = vmatpush1.msra.mxu0 0.0
    %6128 = vmatprep.subr.mxu0 0.0
    %6129 = vmatpush1.msra.mxu0 0.0
    %6130 = vmatprep.subr.mxu0 0.0
    %6131 = vmatpush1.msra.mxu0 0.0
    %6132 = vmatprep.subr.mxu0 0.0
    %6133 = vmatpush1.msra.mxu0 0.0
    %6134 = vmatprep.subr.mxu0 0.0
    %6135 = vmatpush1.msra.mxu0 0.0
    %6136 = vmatprep.subr.mxu0 0.0
    %6137 = vmatpush1.msra.mxu0 0.0
    %6138 = vmatprep.subr.mxu0 0.0
    %6139 = vmatpush1.msra.mxu0 0.0
    %6140 = vmatprep.subr.mxu0 0.0
    %6141 = vmatpush1.msra.mxu0 0.0
    %6142 = vmatprep.subr.mxu0 0.0
    %6143 = vmatpush1.msra.mxu0 0.0
    %6144 = vmatprep.subr.mxu0 0.0
    %6145 = vmatpush1.msra.mxu0 0.0
    %6146 = vmatprep.subr.mxu0 0.0
    %6147 = vmatpush1.msra.mxu0 0.0
    %6148 = vmatprep.subr.mxu0 0.0
    %6149 = vmatpush1.msra.mxu0 0.0
    %6150 = vmatprep.subr.mxu0 0.0
    %6151 = vmatpush1.msra.mxu0 0.0
    %6152 = vmatprep.subr.mxu0 0.0
    %6153 = vmatpush1.msra.mxu0 0.0
    %6154 = vmatprep.mubr.f32.mxu0 0.0
    %6155 = vmatmul.mubr.f32.gmra.mrb[0].mxu0 %v5824
    %v6156 = vpop.f32.mrb[0].mxu0
    %v6157 = vadd.f32 %v6085, %v6156
    %v6158 = vpop.f32.mrb[0].mxu0
    %6159 = vdwg.mxu0
    %v6160 = vld [vmem:[%s1128] sm:$0xff]
    %v6161 = vld [vmem:[%s1128 + $0x8] sm:$0xff]
    %v6162 = vld [vmem:[%s1128 + $0x10] sm:$0xff]
    %v6163 = vld [vmem:[%s1128 + $0x18] sm:$0xff]
    %v6164 = vld [vmem:[%s1133] sm:$0x1]
    %v6166 = vlaneseq
    %v6167 = vshrl.u32 %v6166, 7
    %v6168 = vsub.s32 0, %v6167
    %v6169 = vrot.slane %v6164, %v6168
    %6171 = vmatprep.subr.mxu0 0.0
    %6172 = vmatpush1.msra.mxu0 %v6160
    %6173 = vmatprep.subr.mxu0 0.0
    %6174 = vmatpush1.msra.mxu0 %v6161
    %6175 = vmatprep.subr.mxu0 0.0
    %6176 = vmatpush1.msra.mxu0 %v6162
    %6177 = vmatprep.subr.mxu0 0.0
    %6178 = vmatpush1.msra.mxu0 %v6163
    %6179 = vmatprep.subr.mxu0 0.0
    %6180 = vmatpush1.msra.mxu0 0.0
    %6181 = vmatprep.subr.mxu0 0.0
    %6182 = vmatpush1.msra.mxu0 0.0
    %6183 = vmatprep.subr.mxu0 0.0
    %6184 = vmatpush1.msra.mxu0 0.0
    %6185 = vmatprep.subr.mxu0 0.0
    %6186 = vmatpush1.msra.mxu0 0.0
    %6187 = vmatprep.subr.mxu0 0.0
    %6188 = vmatpush1.msra.mxu0 0.0
    %6189 = vmatprep.subr.mxu0 0.0
    %6190 = vmatpush1.msra.mxu0 0.0
    %6191 = vmatprep.subr.mxu0 0.0
    %6192 = vmatpush1.msra.mxu0 0.0
    %6193 = vmatprep.subr.mxu0 0.0
    %6194 = vmatpush1.msra.mxu0 0.0
    %6195 = vmatprep.subr.mxu0 0.0
    %6196 = vmatpush1.msra.mxu0 0.0
    %6197 = vmatprep.subr.mxu0 0.0
    %6198 = vmatpush1.msra.mxu0 0.0
    %6199 = vmatprep.subr.mxu0 0.0
    %6200 = vmatpush1.msra.mxu0 0.0
    %6201 = vmatprep.subr.mxu0 0.0
    %6202 = vmatpush1.msra.mxu0 0.0
    %6203 = vmatprep.subr.mxu0 0.0
    %6204 = vmatpush1.msra.mxu0 0.0
    %6205 = vmatprep.subr.mxu0 0.0
    %6206 = vmatpush1.msra.mxu0 0.0
    %6207 = vmatprep.subr.mxu0 0.0
    %6208 = vmatpush1.msra.mxu0 0.0
    %6209 = vmatprep.subr.mxu0 0.0
    %6210 = vmatpush1.msra.mxu0 0.0
    %6211 = vmatprep.subr.mxu0 0.0
    %6212 = vmatpush1.msra.mxu0 0.0
    %6213 = vmatprep.subr.mxu0 0.0
    %6214 = vmatpush1.msra.mxu0 0.0
    %6215 = vmatprep.subr.mxu0 0.0
    %6216 = vmatpush1.msra.mxu0 0.0
    %6217 = vmatprep.subr.mxu0 0.0
    %6218 = vmatpush1.msra.mxu0 0.0
    %6219 = vmatprep.subr.mxu0 0.0
    %6220 = vmatpush1.msra.mxu0 0.0
    %6221 = vmatprep.subr.mxu0 0.0
    %6222 = vmatpush1.msra.mxu0 0.0
    %6223 = vmatprep.subr.mxu0 0.0
    %6224 = vmatpush1.msra.mxu0 0.0
    %6225 = vmatprep.subr.mxu0 0.0
    %6226 = vmatpush1.msra.mxu0 0.0
    %6227 = vmatprep.subr.mxu0 0.0
    %6228 = vmatpush1.msra.mxu0 0.0
    %6229 = vmatprep.subr.mxu0 0.0
    %6230 = vmatpush1.msra.mxu0 0.0
    %6231 = vmatprep.subr.mxu0 0.0
    %6232 = vmatpush1.msra.mxu0 0.0
    %6233 = vmatprep.subr.mxu0 0.0
    %6234 = vmatpush1.msra.mxu0 0.0
    %6235 = vmatprep.mubr.f32.mxu0 0.0
    %6236 = vmatmul.mubr.f32.gmra.mrb[0].mxu0 %v5751
    %v6237 = vpop.f32.mrb[0].mxu0
    %v6238 = vadd.f32 %v6169, %v6237
    %v6239 = vpop.f32.mrb[0].mxu0
    %6240 = vdwg.mxu0
    %v6241 = vmul.f32 %v5912, %v6238
    %v6242 = vadd.f32 %v6157, %v6241
    %v6243 = vtanh.pop %v6242
    %v6244 = vsub.f32 1.0, %v6076
    %v6245 = vmul.f32 %v6244, %v6243
    %v6246 = vmul.f32 %v6076, %v5241
    %v6247 = vadd.f32 %v6245, %v6246
    %s6248 = scalar_lea.vmem [#allocation3], 16
    %6249 = vst.msk [vmem:[%s6248] sm:$0xff] %vm200, %v6247
    %s6250 = scalar_lea.vmem [#allocation4], 48
    %v6251 = vld [vmem:[%s6250] sm:$0xff]
    %v6252 = vld [vmem:[%s2] sm:$0xff]
    %v6253 = vld [vmem:[%s2 + $0x8] sm:$0xff]
    %v6254 = vld [vmem:[%s3] sm:$0xff]
    %v6255 = vld [vmem:[%s3 + $0x8] sm:$0xff]
    %v6256 = vld [vmem:[%s3 + $0x10] sm:$0xff]
    %v6257 = vld [vmem:[%s3 + $0x18] sm:$0xff]
    %v6259 = vsel %vm200, %v5738, 0
    %6261 = vmatprep.subr.mxu0 0.0
    %6262 = vmatpush1.msra.mxu0 %v6254
    %6263 = vmatprep.subr.mxu0 0.0
    %6264 = vmatpush1.msra.mxu0 %v6255
    %6265 = vmatprep.subr.mxu0 0.0
    %6266 = vmatpush1.msra.mxu0 %v6256
    %6267 = vmatprep.subr.mxu0 0.0
    %6268 = vmatpush1.msra.mxu0 %v6257
    %6269 = vmatprep.subr.mxu0 0.0
    %6270 = vmatpush1.msra.mxu0 0.0
    %6271 = vmatprep.subr.mxu0 0.0
    %6272 = vmatpush1.msra.mxu0 0.0
    %6273 = vmatprep.subr.mxu0 0.0
    %6274 = vmatpush1.msra.mxu0 0.0
    %6275 = vmatprep.subr.mxu0 0.0
    %6276 = vmatpush1.msra.mxu0 0.0
    %6277 = vmatprep.subr.mxu0 0.0
    %6278 = vmatpush1.msra.mxu0 0.0
    %6279 = vmatprep.subr.mxu0 0.0
    %6280 = vmatpush1.msra.mxu0 0.0
    %6281 = vmatprep.subr.mxu0 0.0
    %6282 = vmatpush1.msra.mxu0 0.0
    %6283 = vmatprep.subr.mxu0 0.0
    %6284 = vmatpush1.msra.mxu0 0.0
    %6285 = vmatprep.subr.mxu0 0.0
    %6286 = vmatpush1.msra.mxu0 0.0
    %6287 = vmatprep.subr.mxu0 0.0
    %6288 = vmatpush1.msra.mxu0 0.0
    %6289 = vmatprep.subr.mxu0 0.0
    %6290 = vmatpush1.msra.mxu0 0.0
    %6291 = vmatprep.subr.mxu0 0.0
    %6292 = vmatpush1.msra.mxu0 0.0
    %6293 = vmatprep.subr.mxu0 0.0
    %6294 = vmatpush1.msra.mxu0 0.0
    %6295 = vmatprep.subr.mxu0 0.0
    %6296 = vmatpush1.msra.mxu0 0.0
    %6297 = vmatprep.subr.mxu0 0.0
    %6298 = vmatpush1.msra.mxu0 0.0
    %6299 = vmatprep.subr.mxu0 0.0
    %6300 = vmatpush1.msra.mxu0 0.0
    %6301 = vmatprep.subr.mxu0 0.0
    %6302 = vmatpush1.msra.mxu0 0.0
    %6303 = vmatprep.subr.mxu0 0.0
    %6304 = vmatpush1.msra.mxu0 0.0
    %6305 = vmatprep.subr.mxu0 0.0
    %6306 = vmatpush1.msra.mxu0 0.0
    %6307 = vmatprep.subr.mxu0 0.0
    %6308 = vmatpush1.msra.mxu0 0.0
    %6309 = vmatprep.subr.mxu0 0.0
    %6310 = vmatpush1.msra.mxu0 0.0
    %6311 = vmatprep.subr.mxu0 0.0
    %6312 = vmatpush1.msra.mxu0 0.0
    %6313 = vmatprep.subr.mxu0 0.0
    %6314 = vmatpush1.msra.mxu0 0.0
    %6315 = vmatprep.subr.mxu0 0.0
    %6316 = vmatpush1.msra.mxu0 0.0
    %6317 = vmatprep.subr.mxu0 0.0
    %6318 = vmatpush1.msra.mxu0 0.0
    %6319 = vmatprep.subr.mxu0 0.0
    %6320 = vmatpush1.msra.mxu0 0.0
    %6321 = vmatprep.subr.mxu0 0.0
    %6322 = vmatpush1.msra.mxu0 0.0
    %6323 = vmatprep.subr.mxu0 0.0
    %6324 = vmatpush1.msra.mxu0 0.0
    %6325 = vmatprep.mubr.f32.mxu0 0.0
    %6326 = vmatmul.mubr.f32.gmra.mrb[0].mxu0 %v6259
    %v6327 = vpop.f32.mrb[0].mxu0
    %v6328 = vadd.f32 0.0, %v6327
    %v6329 = vpop.f32.mrb[0].mxu0
    %6330 = vdwg.mxu0
    %v6332 = vsel %vm282, %v6251, 0
    %6334 = vmatprep.subr.mxu0 0.0
    %6335 = vmatpush1.msra.mxu0 %v6252
    %6336 = vmatprep.subr.mxu0 0.0
    %6337 = vmatpush1.msra.mxu0 %v6253
    %6338 = vmatprep.subr.mxu0 0.0
    %6339 = vmatpush1.msra.mxu0 0.0
    %6340 = vmatprep.subr.mxu0 0.0
    %6341 = vmatpush1.msra.mxu0 0.0
    %6342 = vmatprep.subr.mxu0 0.0
    %6343 = vmatpush1.msra.mxu0 0.0
    %6344 = vmatprep.subr.mxu0 0.0
    %6345 = vmatpush1.msra.mxu0 0.0
    %6346 = vmatprep.subr.mxu0 0.0
    %6347 = vmatpush1.msra.mxu0 0.0
    %6348 = vmatprep.subr.mxu0 0.0
    %6349 = vmatpush1.msra.mxu0 0.0
    %6350 = vmatprep.subr.mxu0 0.0
    %6351 = vmatpush1.msra.mxu0 0.0
    %6352 = vmatprep.subr.mxu0 0.0
    %6353 = vmatpush1.msra.mxu0 0.0
    %6354 = vmatprep.subr.mxu0 0.0
    %6355 = vmatpush1.msra.mxu0 0.0
    %6356 = vmatprep.subr.mxu0 0.0
    %6357 = vmatpush1.msra.mxu0 0.0
    %6358 = vmatprep.subr.mxu0 0.0
    %6359 = vmatpush1.msra.mxu0 0.0
    %6360 = vmatprep.subr.mxu0 0.0
    %6361 = vmatpush1.msra.mxu0 0.0
    %6362 = vmatprep.subr.mxu0 0.0
    %6363 = vmatpush1.msra.mxu0 0.0
    %6364 = vmatprep.subr.mxu0 0.0
    %6365 = vmatpush1.msra.mxu0 0.0
    %6366 = vmatprep.subr.mxu0 0.0
    %6367 = vmatpush1.msra.mxu0 0.0
    %6368 = vmatprep.subr.mxu0 0.0
    %6369 = vmatpush1.msra.mxu0 0.0
    %6370 = vmatprep.subr.mxu0 0.0
    %6371 = vmatpush1.msra.mxu0 0.0
    %6372 = vmatprep.subr.mxu0 0.0
    %6373 = vmatpush1.msra.mxu0 0.0
    %6374 = vmatprep.subr.mxu0 0.0
    %6375 = vmatpush1.msra.mxu0 0.0
    %6376 = vmatprep.subr.mxu0 0.0
    %6377 = vmatpush1.msra.mxu0 0.0
    %6378 = vmatprep.subr.mxu0 0.0
    %6379 = vmatpush1.msra.mxu0 0.0
    %6380 = vmatprep.subr.mxu0 0.0
    %6381 = vmatpush1.msra.mxu0 0.0
    %6382 = vmatprep.subr.mxu0 0.0
    %6383 = vmatpush1.msra.mxu0 0.0
    %6384 = vmatprep.subr.mxu0 0.0
    %6385 = vmatpush1.msra.mxu0 0.0
    %6386 = vmatprep.subr.mxu0 0.0
    %6387 = vmatpush1.msra.mxu0 0.0
    %6388 = vmatprep.subr.mxu0 0.0
    %6389 = vmatpush1.msra.mxu0 0.0
    %6390 = vmatprep.subr.mxu0 0.0
    %6391 = vmatpush1.msra.mxu0 0.0
    %6392 = vmatprep.subr.mxu0 0.0
    %6393 = vmatpush1.msra.mxu0 0.0
    %6394 = vmatprep.subr.mxu0 0.0
    %6395 = vmatpush1.msra.mxu0 0.0
    %6396 = vmatprep.subr.mxu0 0.0
    %6397 = vmatpush1.msra.mxu0 0.0
    %6398 = vmatprep.mubr.f32.mxu0 0.0
    %6399 = vmatmul.mubr.f32.gmra.mrb[0].mxu0 %v6332
    %v6400 = vpop.f32.mrb[0].mxu0
    %v6401 = vadd.f32 %v6328, %v6400
    %v6402 = vpop.f32.mrb[0].mxu0
    %6403 = vdwg.mxu0
    %v6404 = vld [vmem:[#allocation9] sm:$0x1]
    %v6406 = vlaneseq
    %v6407 = vshrl.u32 %v6406, 7
    %v6408 = vsub.s32 0, %v6407
    %v6409 = vrot.slane %v6404, %v6408
    %v6411 = vadd.f32 %v6401, %v6409
    %v6412 = vxor.u32 %v6411, 2147483648
    %v6413 = vmul.f32 %v6412, 1.442695
    %v6414 = vpow.pop %v6413
    %v6415 = vadd.f32 %v6414, 1.0
    %v6416 = vrcp.pop %v6415
    %v6417 = vmul.f32 1.0, %v6416
    %v6418 = vld [vmem:[%s370] sm:$0xff]
    %v6419 = vld [vmem:[%s370 + $0x8] sm:$0xff]
    %v6420 = vld [vmem:[%s373] sm:$0xff]
    %v6421 = vld [vmem:[%s373 + $0x8] sm:$0xff]
    %v6422 = vld [vmem:[%s373 + $0x10] sm:$0xff]
    %v6423 = vld [vmem:[%s373 + $0x18] sm:$0xff]
    %6424 = vmatprep.subr.mxu0 0.0
    %6425 = vmatpush1.msra.mxu0 %v6420
    %6426 = vmatprep.subr.mxu0 0.0
    %6427 = vmatpush1.msra.mxu0 %v6421
    %6428 = vmatprep.subr.mxu0 0.0
    %6429 = vmatpush1.msra.mxu0 %v6422
    %6430 = vmatprep.subr.mxu0 0.0
    %6431 = vmatpush1.msra.mxu0 %v6423
    %6432 = vmatprep.subr.mxu0 0.0
    %6433 = vmatpush1.msra.mxu0 0.0
    %6434 = vmatprep.subr.mxu0 0.0
    %6435 = vmatpush1.msra.mxu0 0.0
    %6436 = vmatprep.subr.mxu0 0.0
    %6437 = vmatpush1.msra.mxu0 0.0
    %6438 = vmatprep.subr.mxu0 0.0
    %6439 = vmatpush1.msra.mxu0 0.0
    %6440 = vmatprep.subr.mxu0 0.0
    %6441 = vmatpush1.msra.mxu0 0.0
    %6442 = vmatprep.subr.mxu0 0.0
    %6443 = vmatpush1.msra.mxu0 0.0
    %6444 = vmatprep.subr.mxu0 0.0
    %6445 = vmatpush1.msra.mxu0 0.0
    %6446 = vmatprep.subr.mxu0 0.0
    %6447 = vmatpush1.msra.mxu0 0.0
    %6448 = vmatprep.subr.mxu0 0.0
    %6449 = vmatpush1.msra.mxu0 0.0
    %6450 = vmatprep.subr.mxu0 0.0
    %6451 = vmatpush1.msra.mxu0 0.0
    %6452 = vmatprep.subr.mxu0 0.0
    %6453 = vmatpush1.msra.mxu0 0.0
    %6454 = vmatprep.subr.mxu0 0.0
    %6455 = vmatpush1.msra.mxu0 0.0
    %6456 = vmatprep.subr.mxu0 0.0
    %6457 = vmatpush1.msra.mxu0 0.0
    %6458 = vmatprep.subr.mxu0 0.0
    %6459 = vmatpush1.msra.mxu0 0.0
    %6460 = vmatprep.subr.mxu0 0.0
    %6461 = vmatpush1.msra.mxu0 0.0
    %6462 = vmatprep.subr.mxu0 0.0
    %6463 = vmatpush1.msra.mxu0 0.0
    %6464 = vmatprep.subr.mxu0 0.0
    %6465 = vmatpush1.msra.mxu0 0.0
    %6466 = vmatprep.subr.mxu0 0.0
    %6467 = vmatpush1.msra.mxu0 0.0
    %6468 = vmatprep.subr.mxu0 0.0
    %6469 = vmatpush1.msra.mxu0 0.0
    %6470 = vmatprep.subr.mxu0 0.0
    %6471 = vmatpush1.msra.mxu0 0.0
    %6472 = vmatprep.subr.mxu0 0.0
    %6473 = vmatpush1.msra.mxu0 0.0
    %6474 = vmatprep.subr.mxu0 0.0
    %6475 = vmatpush1.msra.mxu0 0.0
    %6476 = vmatprep.subr.mxu0 0.0
    %6477 = vmatpush1.msra.mxu0 0.0
    %6478 = vmatprep.subr.mxu0 0.0
    %6479 = vmatpush1.msra.mxu0 0.0
    %6480 = vmatprep.subr.mxu0 0.0
    %6481 = vmatpush1.msra.mxu0 0.0
    %6482 = vmatprep.subr.mxu0 0.0
    %6483 = vmatpush1.msra.mxu0 0.0
    %6484 = vmatprep.subr.mxu0 0.0
    %6485 = vmatpush1.msra.mxu0 0.0
    %6486 = vmatprep.subr.mxu0 0.0
    %6487 = vmatpush1.msra.mxu0 0.0
    %6488 = vmatprep.mubr.f32.mxu0 0.0
    %6489 = vmatmul.mubr.f32.gmra.mrb[0].mxu0 %v6259
    %v6490 = vpop.f32.mrb[0].mxu0
    %v6491 = vadd.f32 0.0, %v6490
    %v6492 = vpop.f32.mrb[0].mxu0
    %6493 = vdwg.mxu0
    %6494 = vmatprep.subr.mxu0 0.0
    %6495 = vmatpush1.msra.mxu0 %v6418
    %6496 = vmatprep.subr.mxu0 0.0
    %6497 = vmatpush1.msra.mxu0 %v6419
    %6498 = vmatprep.subr.mxu0 0.0
    %6499 = vmatpush1.msra.mxu0 0.0
    %6500 = vmatprep.subr.mxu0 0.0
    %6501 = vmatpush1.msra.mxu0 0.0
    %6502 = vmatprep.subr.mxu0 0.0
    %6503 = vmatpush1.msra.mxu0 0.0
    %6504 = vmatprep.subr.mxu0 0.0
    %6505 = vmatpush1.msra.mxu0 0.0
    %6506 = vmatprep.subr.mxu0 0.0
    %6507 = vmatpush1.msra.mxu0 0.0
    %6508 = vmatprep.subr.mxu0 0.0
    %6509 = vmatpush1.msra.mxu0 0.0
    %6510 = vmatprep.subr.mxu0 0.0
    %6511 = vmatpush1.msra.mxu0 0.0
    %6512 = vmatprep.subr.mxu0 0.0
    %6513 = vmatpush1.msra.mxu0 0.0
    %6514 = vmatprep.subr.mxu0 0.0
    %6515 = vmatpush1.msra.mxu0 0.0
    %6516 = vmatprep.subr.mxu0 0.0
    %6517 = vmatpush1.msra.mxu0 0.0
    %6518 = vmatprep.subr.mxu0 0.0
    %6519 = vmatpush1.msra.mxu0 0.0
    %6520 = vmatprep.subr.mxu0 0.0
    %6521 = vmatpush1.msra.mxu0 0.0
    %6522 = vmatprep.subr.mxu0 0.0
    %6523 = vmatpush1.msra.mxu0 0.0
    %6524 = vmatprep.subr.mxu0 0.0
    %6525 = vmatpush1.msra.mxu0 0.0
    %6526 = vmatprep.subr.mxu0 0.0
    %6527 = vmatpush1.msra.mxu0 0.0
    %6528 = vmatprep.subr.mxu0 0.0
    %6529 = vmatpush1.msra.mxu0 0.0
    %6530 = vmatprep.subr.mxu0 0.0
    %6531 = vmatpush1.msra.mxu0 0.0
    %6532 = vmatprep.subr.mxu0 0.0
    %6533 = vmatpush1.msra.mxu0 0.0
    %6534 = vmatprep.subr.mxu0 0.0
    %6535 = vmatpush1.msra.mxu0 0.0
    %6536 = vmatprep.subr.mxu0 0.0
    %6537 = vmatpush1.msra.mxu0 0.0
    %6538 = vmatprep.subr.mxu0 0.0
    %6539 = vmatpush1.msra.mxu0 0.0
    %6540 = vmatprep.subr.mxu0 0.0
    %6541 = vmatpush1.msra.mxu0 0.0
    %6542 = vmatprep.subr.mxu0 0.0
    %6543 = vmatpush1.msra.mxu0 0.0
    %6544 = vmatprep.subr.mxu0 0.0
    %6545 = vmatpush1.msra.mxu0 0.0
    %6546 = vmatprep.subr.mxu0 0.0
    %6547 = vmatpush1.msra.mxu0 0.0
    %6548 = vmatprep.subr.mxu0 0.0
    %6549 = vmatpush1.msra.mxu0 0.0
    %6550 = vmatprep.subr.mxu0 0.0
    %6551 = vmatpush1.msra.mxu0 0.0
    %6552 = vmatprep.subr.mxu0 0.0
    %6553 = vmatpush1.msra.mxu0 0.0
    %6554 = vmatprep.subr.mxu0 0.0
    %6555 = vmatpush1.msra.mxu0 0.0
    %6556 = vmatprep.subr.mxu0 0.0
    %6557 = vmatpush1.msra.mxu0 0.0
    %6558 = vmatprep.mubr.f32.mxu0 0.0
    %6559 = vmatmul.mubr.f32.gmra.mrb[0].mxu0 %v6332
    %v6560 = vpop.f32.mrb[0].mxu0
    %v6561 = vadd.f32 %v6491, %v6560
    %v6562 = vpop.f32.mrb[0].mxu0
    %6563 = vdwg.mxu0
    %v6564 = vld [vmem:[%s518] sm:$0x1]
    %v6566 = vlaneseq
    %v6567 = vshrl.u32 %v6566, 7
    %v6568 = vsub.s32 0, %v6567
    %v6569 = vrot.slane %v6564, %v6568
    %v6571 = vadd.f32 %v6561, %v6569
    %v6572 = vxor.u32 %v6571, 2147483648
    %v6573 = vmul.f32 %v6572, 1.442695
    %v6574 = vpow.pop %v6573
    %v6575 = vadd.f32 %v6574, 1.0
    %v6576 = vrcp.pop %v6575
    %v6577 = vmul.f32 1.0, %v6576
    %v6578 = vld [vmem:[%s533] sm:$0xff]
    %v6579 = vld [vmem:[%s533 + $0x8] sm:$0xff]
    %v6580 = vld [vmem:[%s536] sm:$0x1]
    %v6582 = vlaneseq
    %v6583 = vshrl.u32 %v6582, 7
    %v6584 = vsub.s32 0, %v6583
    %v6585 = vrot.slane %v6580, %v6584
    %6587 = vmatprep.subr.mxu0 0.0
    %6588 = vmatpush1.msra.mxu0 %v6578
    %6589 = vmatprep.subr.mxu0 0.0
    %6590 = vmatpush1.msra.mxu0 %v6579
    %6591 = vmatprep.subr.mxu0 0.0
    %6592 = vmatpush1.msra.mxu0 0.0
    %6593 = vmatprep.subr.mxu0 0.0
    %6594 = vmatpush1.msra.mxu0 0.0
    %6595 = vmatprep.subr.mxu0 0.0
    %6596 = vmatpush1.msra.mxu0 0.0
    %6597 = vmatprep.subr.mxu0 0.0
    %6598 = vmatpush1.msra.mxu0 0.0
    %6599 = vmatprep.subr.mxu0 0.0
    %6600 = vmatpush1.msra.mxu0 0.0
    %6601 = vmatprep.subr.mxu0 0.0
    %6602 = vmatpush1.msra.mxu0 0.0
    %6603 = vmatprep.subr.mxu0 0.0
    %6604 = vmatpush1.msra.mxu0 0.0
    %6605 = vmatprep.subr.mxu0 0.0
    %6606 = vmatpush1.msra.mxu0 0.0
    %6607 = vmatprep.subr.mxu0 0.0
    %6608 = vmatpush1.msra.mxu0 0.0
    %6609 = vmatprep.subr.mxu0 0.0
    %6610 = vmatpush1.msra.mxu0 0.0
    %6611 = vmatprep.subr.mxu0 0.0
    %6612 = vmatpush1.msra.mxu0 0.0
    %6613 = vmatprep.subr.mxu0 0.0
    %6614 = vmatpush1.msra.mxu0 0.0
    %6615 = vmatprep.subr.mxu0 0.0
    %6616 = vmatpush1.msra.mxu0 0.0
    %6617 = vmatprep.subr.mxu0 0.0
    %6618 = vmatpush1.msra.mxu0 0.0
    %6619 = vmatprep.subr.mxu0 0.0
    %6620 = vmatpush1.msra.mxu0 0.0
    %6621 = vmatprep.subr.mxu0 0.0
    %6622 = vmatpush1.msra.mxu0 0.0
    %6623 = vmatprep.subr.mxu0 0.0
    %6624 = vmatpush1.msra.mxu0 0.0
    %6625 = vmatprep.subr.mxu0 0.0
    %6626 = vmatpush1.msra.mxu0 0.0
    %6627 = vmatprep.subr.mxu0 0.0
    %6628 = vmatpush1.msra.mxu0 0.0
    %6629 = vmatprep.subr.mxu0 0.0
    %6630 = vmatpush1.msra.mxu0 0.0
    %6631 = vmatprep.subr.mxu0 0.0
    %6632 = vmatpush1.msra.mxu0 0.0
    %6633 = vmatprep.subr.mxu0 0.0
    %6634 = vmatpush1.msra.mxu0 0.0
    %6635 = vmatprep.subr.mxu0 0.0
    %6636 = vmatpush1.msra.mxu0 0.0
    %6637 = vmatprep.subr.mxu0 0.0
    %6638 = vmatpush1.msra.mxu0 0.0
    %6639 = vmatprep.subr.mxu0 0.0
    %6640 = vmatpush1.msra.mxu0 0.0
    %6641 = vmatprep.subr.mxu0 0.0
    %6642 = vmatpush1.msra.mxu0 0.0
    %6643 = vmatprep.subr.mxu0 0.0
    %6644 = vmatpush1.msra.mxu0 0.0
    %6645 = vmatprep.subr.mxu0 0.0
    %6646 = vmatpush1.msra.mxu0 0.0
    %6647 = vmatprep.subr.mxu0 0.0
    %6648 = vmatpush1.msra.mxu0 0.0
    %6649 = vmatprep.subr.mxu0 0.0
    %6650 = vmatpush1.msra.mxu0 0.0
    %6651 = vmatprep.mubr.f32.mxu0 0.0
    %6652 = vmatmul.mubr.f32.gmra.mrb[0].mxu0 %v6332
    %v6653 = vpop.f32.mrb[0].mxu0
    %v6654 = vadd.f32 %v6585, %v6653
    %v6655 = vpop.f32.mrb[0].mxu0
    %6656 = vdwg.mxu0
    %v6657 = vld [vmem:[%s614] sm:$0xff]
    %v6658 = vld [vmem:[%s614 + $0x8] sm:$0xff]
    %v6659 = vld [vmem:[%s614 + $0x10] sm:$0xff]
    %v6660 = vld [vmem:[%s614 + $0x18] sm:$0xff]
    %v6661 = vld [vmem:[%s619] sm:$0x1]
    %v6663 = vlaneseq
    %v6664 = vshrl.u32 %v6663, 7
    %v6665 = vsub.s32 0, %v6664
    %v6666 = vrot.slane %v6661, %v6665
    %6668 = vmatprep.subr.mxu0 0.0
    %6669 = vmatpush1.msra.mxu0 %v6657
    %6670 = vmatprep.subr.mxu0 0.0
    %6671 = vmatpush1.msra.mxu0 %v6658
    %6672 = vmatprep.subr.mxu0 0.0
    %6673 = vmatpush1.msra.mxu0 %v6659
    %6674 = vmatprep.subr.mxu0 0.0
    %6675 = vmatpush1.msra.mxu0 %v6660
    %6676 = vmatprep.subr.mxu0 0.0
    %6677 = vmatpush1.msra.mxu0 0.0
    %6678 = vmatprep.subr.mxu0 0.0
    %6679 = vmatpush1.msra.mxu0 0.0
    %6680 = vmatprep.subr.mxu0 0.0
    %6681 = vmatpush1.msra.mxu0 0.0
    %6682 = vmatprep.subr.mxu0 0.0
    %6683 = vmatpush1.msra.mxu0 0.0
    %6684 = vmatprep.subr.mxu0 0.0
    %6685 = vmatpush1.msra.mxu0 0.0
    %6686 = vmatprep.subr.mxu0 0.0
    %6687 = vmatpush1.msra.mxu0 0.0
    %6688 = vmatprep.subr.mxu0 0.0
    %6689 = vmatpush1.msra.mxu0 0.0
    %6690 = vmatprep.subr.mxu0 0.0
    %6691 = vmatpush1.msra.mxu0 0.0
    %6692 = vmatprep.subr.mxu0 0.0
    %6693 = vmatpush1.msra.mxu0 0.0
    %6694 = vmatprep.subr.mxu0 0.0
    %6695 = vmatpush1.msra.mxu0 0.0
    %6696 = vmatprep.subr.mxu0 0.0
    %6697 = vmatpush1.msra.mxu0 0.0
    %6698 = vmatprep.subr.mxu0 0.0
    %6699 = vmatpush1.msra.mxu0 0.0
    %6700 = vmatprep.subr.mxu0 0.0
    %6701 = vmatpush1.msra.mxu0 0.0
    %6702 = vmatprep.subr.mxu0 0.0
    %6703 = vmatpush1.msra.mxu0 0.0
    %6704 = vmatprep.subr.mxu0 0.0
    %6705 = vmatpush1.msra.mxu0 0.0
    %6706 = vmatprep.subr.mxu0 0.0
    %6707 = vmatpush1.msra.mxu0 0.0
    %6708 = vmatprep.subr.mxu0 0.0
    %6709 = vmatpush1.msra.mxu0 0.0
    %6710 = vmatprep.subr.mxu0 0.0
    %6711 = vmatpush1.msra.mxu0 0.0
    %6712 = vmatprep.subr.mxu0 0.0
    %6713 = vmatpush1.msra.mxu0 0.0
    %6714 = vmatprep.subr.mxu0 0.0
    %6715 = vmatpush1.msra.mxu0 0.0
    %6716 = vmatprep.subr.mxu0 0.0
    %6717 = vmatpush1.msra.mxu0 0.0
    %6718 = vmatprep.subr.mxu0 0.0
    %6719 = vmatpush1.msra.mxu0 0.0
    %6720 = vmatprep.subr.mxu0 0.0
    %6721 = vmatpush1.msra.mxu0 0.0
    %6722 = vmatprep.subr.mxu0 0.0
    %6723 = vmatpush1.msra.mxu0 0.0
    %6724 = vmatprep.subr.mxu0 0.0
    %6725 = vmatpush1.msra.mxu0 0.0
    %6726 = vmatprep.subr.mxu0 0.0
    %6727 = vmatpush1.msra.mxu0 0.0
    %6728 = vmatprep.subr.mxu0 0.0
    %6729 = vmatpush1.msra.mxu0 0.0
    %6730 = vmatprep.subr.mxu0 0.0
    %6731 = vmatpush1.msra.mxu0 0.0
    %6732 = vmatprep.mubr.f32.mxu0 0.0
    %6733 = vmatmul.mubr.f32.gmra.mrb[0].mxu0 %v6259
    %v6734 = vpop.f32.mrb[0].mxu0
    %v6735 = vadd.f32 %v6666, %v6734
    %v6736 = vpop.f32.mrb[0].mxu0
    %6737 = vdwg.mxu0
    %v6738 = vmul.f32 %v6417, %v6735
    %v6739 = vadd.f32 %v6654, %v6738
    %v6740 = vtanh.pop %v6739
    %v6741 = vsub.f32 1.0, %v6577
    %v6742 = vmul.f32 %v6741, %v6740
    %v6743 = vmul.f32 %v6577, %v5738
    %v6744 = vadd.f32 %v6742, %v6743
    %s6745 = scalar_lea.vmem [#allocation2], 48
    %6746 = vst.msk [vmem:[%s6745] sm:$0xff] %vm200, %v6744
    %s6747 = scalar_lea.vmem [#allocation7], 8
    %v6748 = vld [vmem:[%s6747] sm:$0xff]
    %v6749 = vld [vmem:[%s5] sm:$0xff]
    %v6750 = vld [vmem:[%s5 + $0x8] sm:$0xff]
    %v6751 = vld [vmem:[%s5 + $0x10] sm:$0x1]
    %v6752 = vld [vmem:[%s6] sm:$0xff]
    %v6753 = vld [vmem:[%s6 + $0x8] sm:$0xff]
    %v6754 = vld [vmem:[%s6 + $0x10] sm:$0xff]
    %v6755 = vld [vmem:[%s6 + $0x18] sm:$0xff]
    %v6757 = vsel %vm200, %v6247, 0
    %6759 = vmatprep.subr.mxu0 0.0
    %6760 = vmatpush1.msra.mxu0 %v6752
    %6761 = vmatprep.subr.mxu0 0.0
    %6762 = vmatpush1.msra.mxu0 %v6753
    %6763 = vmatprep.subr.mxu0 0.0
    %6764 = vmatpush1.msra.mxu0 %v6754
    %6765 = vmatprep.subr.mxu0 0.0
    %6766 = vmatpush1.msra.mxu0 %v6755
    %6767 = vmatprep.subr.mxu0 0.0
    %6768 = vmatpush1.msra.mxu0 0.0
    %6769 = vmatprep.subr.mxu0 0.0
    %6770 = vmatpush1.msra.mxu0 0.0
    %6771 = vmatprep.subr.mxu0 0.0
    %6772 = vmatpush1.msra.mxu0 0.0
    %6773 = vmatprep.subr.mxu0 0.0
    %6774 = vmatpush1.msra.mxu0 0.0
    %6775 = vmatprep.subr.mxu0 0.0
    %6776 = vmatpush1.msra.mxu0 0.0
    %6777 = vmatprep.subr.mxu0 0.0
    %6778 = vmatpush1.msra.mxu0 0.0
    %6779 = vmatprep.subr.mxu0 0.0
    %6780 = vmatpush1.msra.mxu0 0.0
    %6781 = vmatprep.subr.mxu0 0.0
    %6782 = vmatpush1.msra.mxu0 0.0
    %6783 = vmatprep.subr.mxu0 0.0
    %6784 = vmatpush1.msra.mxu0 0.0
    %6785 = vmatprep.subr.mxu0 0.0
    %6786 = vmatpush1.msra.mxu0 0.0
    %6787 = vmatprep.subr.mxu0 0.0
    %6788 = vmatpush1.msra.mxu0 0.0
    %6789 = vmatprep.subr.mxu0 0.0
    %6790 = vmatpush1.msra.mxu0 0.0
    %6791 = vmatprep.subr.mxu0 0.0
    %6792 = vmatpush1.msra.mxu0 0.0
    %6793 = vmatprep.subr.mxu0 0.0
    %6794 = vmatpush1.msra.mxu0 0.0
    %6795 = vmatprep.subr.mxu0 0.0
    %6796 = vmatpush1.msra.mxu0 0.0
    %6797 = vmatprep.subr.mxu0 0.0
    %6798 = vmatpush1.msra.mxu0 0.0
    %6799 = vmatprep.subr.mxu0 0.0
    %6800 = vmatpush1.msra.mxu0 0.0
    %6801 = vmatprep.subr.mxu0 0.0
    %6802 = vmatpush1.msra.mxu0 0.0
    %6803 = vmatprep.subr.mxu0 0.0
    %6804 = vmatpush1.msra.mxu0 0.0
    %6805 = vmatprep.subr.mxu0 0.0
    %6806 = vmatpush1.msra.mxu0 0.0
    %6807 = vmatprep.subr.mxu0 0.0
    %6808 = vmatpush1.msra.mxu0 0.0
    %6809 = vmatprep.subr.mxu0 0.0
    %6810 = vmatpush1.msra.mxu0 0.0
    %6811 = vmatprep.subr.mxu0 0.0
    %6812 = vmatpush1.msra.mxu0 0.0
    %6813 = vmatprep.subr.mxu0 0.0
    %6814 = vmatpush1.msra.mxu0 0.0
    %6815 = vmatprep.subr.mxu0 0.0
    %6816 = vmatpush1.msra.mxu0 0.0
    %6817 = vmatprep.subr.mxu0 0.0
    %6818 = vmatpush1.msra.mxu0 0.0
    %6819 = vmatprep.subr.mxu0 0.0
    %6820 = vmatpush1.msra.mxu0 0.0
    %6821 = vmatprep.subr.mxu0 0.0
    %6822 = vmatpush1.msra.mxu0 0.0
    %6823 = vmatprep.mubr.f32.mxu0 0.0
    %6824 = vmatmul.mubr.f32.gmra.mrb[0].mxu0 %v6757
    %v6825 = vpop.f32.mrb[0].mxu0
    %v6826 = vadd.f32 0.0, %v6825
    %v6827 = vpop.f32.mrb[0].mxu0
    %6828 = vdwg.mxu0
    %v6830 = vsel %vm784, %v6748, 0
    %v6833 = vsel %vm788, %v6751, 0
    %6835 = vmatprep.subr.mxu0 0.0
    %6836 = vmatpush1.msra.mxu0 %v6749
    %6837 = vmatprep.subr.mxu0 0.0
    %6838 = vmatpush1.msra.mxu0 %v6750
    %6839 = vmatprep.subr.mxu0 0.0
    %6840 = vmatpush1.msra.mxu0 %v6833
    %6841 = vmatprep.subr.mxu0 0.0
    %6842 = vmatpush1.msra.mxu0 0.0
    %6843 = vmatprep.subr.mxu0 0.0
    %6844 = vmatpush1.msra.mxu0 0.0
    %6845 = vmatprep.subr.mxu0 0.0
    %6846 = vmatpush1.msra.mxu0 0.0
    %6847 = vmatprep.subr.mxu0 0.0
    %6848 = vmatpush1.msra.mxu0 0.0
    %6849 = vmatprep.subr.mxu0 0.0
    %6850 = vmatpush1.msra.mxu0 0.0
    %6851 = vmatprep.subr.mxu0 0.0
    %6852 = vmatpush1.msra.mxu0 0.0
    %6853 = vmatprep.subr.mxu0 0.0
    %6854 = vmatpush1.msra.mxu0 0.0
    %6855 = vmatprep.subr.mxu0 0.0
    %6856 = vmatpush1.msra.mxu0 0.0
    %6857 = vmatprep.subr.mxu0 0.0
    %6858 = vmatpush1.msra.mxu0 0.0
    %6859 = vmatprep.subr.mxu0 0.0
    %6860 = vmatpush1.msra.mxu0 0.0
    %6861 = vmatprep.subr.mxu0 0.0
    %6862 = vmatpush1.msra.mxu0 0.0
    %6863 = vmatprep.subr.mxu0 0.0
    %6864 = vmatpush1.msra.mxu0 0.0
    %6865 = vmatprep.subr.mxu0 0.0
    %6866 = vmatpush1.msra.mxu0 0.0
    %6867 = vmatprep.subr.mxu0 0.0
    %6868 = vmatpush1.msra.mxu0 0.0
    %6869 = vmatprep.subr.mxu0 0.0
    %6870 = vmatpush1.msra.mxu0 0.0
    %6871 = vmatprep.subr.mxu0 0.0
    %6872 = vmatpush1.msra.mxu0 0.0
    %6873 = vmatprep.subr.mxu0 0.0
    %6874 = vmatpush1.msra.mxu0 0.0
    %6875 = vmatprep.subr.mxu0 0.0
    %6876 = vmatpush1.msra.mxu0 0.0
    %6877 = vmatprep.subr.mxu0 0.0
    %6878 = vmatpush1.msra.mxu0 0.0
    %6879 = vmatprep.subr.mxu0 0.0
    %6880 = vmatpush1.msra.mxu0 0.0
    %6881 = vmatprep.subr.mxu0 0.0
    %6882 = vmatpush1.msra.mxu0 0.0
    %6883 = vmatprep.subr.mxu0 0.0
    %6884 = vmatpush1.msra.mxu0 0.0
    %6885 = vmatprep.subr.mxu0 0.0
    %6886 = vmatpush1.msra.mxu0 0.0
    %6887 = vmatprep.subr.mxu0 0.0
    %6888 = vmatpush1.msra.mxu0 0.0
    %6889 = vmatprep.subr.mxu0 0.0
    %6890 = vmatpush1.msra.mxu0 0.0
    %6891 = vmatprep.subr.mxu0 0.0
    %6892 = vmatpush1.msra.mxu0 0.0
    %6893 = vmatprep.subr.mxu0 0.0
    %6894 = vmatpush1.msra.mxu0 0.0
    %6895 = vmatprep.subr.mxu0 0.0
    %6896 = vmatpush1.msra.mxu0 0.0
    %6897 = vmatprep.subr.mxu0 0.0
    %6898 = vmatpush1.msra.mxu0 0.0
    %6899 = vmatprep.mubr.f32.mxu0 0.0
    %6900 = vmatmul.mubr.f32.gmra.mrb[0].mxu0 %v6830
    %v6901 = vpop.f32.mrb[0].mxu0
    %v6902 = vadd.f32 %v6826, %v6901
    %v6903 = vpop.f32.mrb[0].mxu0
    %6904 = vdwg.mxu0
    %v6905 = vld [vmem:[#allocation10] sm:$0x1]
    %v6907 = vlaneseq
    %v6908 = vshrl.u32 %v6907, 7
    %v6909 = vsub.s32 0, %v6908
    %v6910 = vrot.slane %v6905, %v6909
    %v6912 = vadd.f32 %v6902, %v6910
    %v6913 = vxor.u32 %v6912, 2147483648
    %v6914 = vmul.f32 %v6913, 1.442695
    %v6915 = vpow.pop %v6914
    %v6916 = vadd.f32 %v6915, 1.0
    %v6917 = vrcp.pop %v6916
    %v6918 = vmul.f32 1.0, %v6917
    %v6919 = vld [vmem:[%s876] sm:$0xff]
    %v6920 = vld [vmem:[%s876 + $0x8] sm:$0xff]
    %v6921 = vld [vmem:[%s876 + $0x10] sm:$0x1]
    %v6922 = vld [vmem:[%s880] sm:$0xff]
    %v6923 = vld [vmem:[%s880 + $0x8] sm:$0xff]
    %v6924 = vld [vmem:[%s880 + $0x10] sm:$0xff]
    %v6925 = vld [vmem:[%s880 + $0x18] sm:$0xff]
    %6926 = vmatprep.subr.mxu0 0.0
    %6927 = vmatpush1.msra.mxu0 %v6922
    %6928 = vmatprep.subr.mxu0 0.0
    %6929 = vmatpush1.msra.mxu0 %v6923
    %6930 = vmatprep.subr.mxu0 0.0
    %6931 = vmatpush1.msra.mxu0 %v6924
    %6932 = vmatprep.subr.mxu0 0.0
    %6933 = vmatpush1.msra.mxu0 %v6925
    %6934 = vmatprep.subr.mxu0 0.0
    %6935 = vmatpush1.msra.mxu0 0.0
    %6936 = vmatprep.subr.mxu0 0.0
    %6937 = vmatpush1.msra.mxu0 0.0
    %6938 = vmatprep.subr.mxu0 0.0
    %6939 = vmatpush1.msra.mxu0 0.0
    %6940 = vmatprep.subr.mxu0 0.0
    %6941 = vmatpush1.msra.mxu0 0.0
    %6942 = vmatprep.subr.mxu0 0.0
    %6943 = vmatpush1.msra.mxu0 0.0
    %6944 = vmatprep.subr.mxu0 0.0
    %6945 = vmatpush1.msra.mxu0 0.0
    %6946 = vmatprep.subr.mxu0 0.0
    %6947 = vmatpush1.msra.mxu0 0.0
    %6948 = vmatprep.subr.mxu0 0.0
    %6949 = vmatpush1.msra.mxu0 0.0
    %6950 = vmatprep.subr.mxu0 0.0
    %6951 = vmatpush1.msra.mxu0 0.0
    %6952 = vmatprep.subr.mxu0 0.0
    %6953 = vmatpush1.msra.mxu0 0.0
    %6954 = vmatprep.subr.mxu0 0.0
    %6955 = vmatpush1.msra.mxu0 0.0
    %6956 = vmatprep.subr.mxu0 0.0
    %6957 = vmatpush1.msra.mxu0 0.0
    %6958 = vmatprep.subr.mxu0 0.0
    %6959 = vmatpush1.msra.mxu0 0.0
    %6960 = vmatprep.subr.mxu0 0.0
    %6961 = vmatpush1.msra.mxu0 0.0
    %6962 = vmatprep.subr.mxu0 0.0
    %6963 = vmatpush1.msra.mxu0 0.0
    %6964 = vmatprep.subr.mxu0 0.0
    %6965 = vmatpush1.msra.mxu0 0.0
    %6966 = vmatprep.subr.mxu0 0.0
    %6967 = vmatpush1.msra.mxu0 0.0
    %6968 = vmatprep.subr.mxu0 0.0
    %6969 = vmatpush1.msra.mxu0 0.0
    %6970 = vmatprep.subr.mxu0 0.0
    %6971 = vmatpush1.msra.mxu0 0.0
    %6972 = vmatprep.subr.mxu0 0.0
    %6973 = vmatpush1.msra.mxu0 0.0
    %6974 = vmatprep.subr.mxu0 0.0
    %6975 = vmatpush1.msra.mxu0 0.0
    %6976 = vmatprep.subr.mxu0 0.0
    %6977 = vmatpush1.msra.mxu0 0.0
    %6978 = vmatprep.subr.mxu0 0.0
    %6979 = vmatpush1.msra.mxu0 0.0
    %6980 = vmatprep.subr.mxu0 0.0
    %6981 = vmatpush1.msra.mxu0 0.0
    %6982 = vmatprep.subr.mxu0 0.0
    %6983 = vmatpush1.msra.mxu0 0.0
    %6984 = vmatprep.subr.mxu0 0.0
    %6985 = vmatpush1.msra.mxu0 0.0
    %6986 = vmatprep.subr.mxu0 0.0
    %6987 = vmatpush1.msra.mxu0 0.0
    %6988 = vmatprep.subr.mxu0 0.0
    %6989 = vmatpush1.msra.mxu0 0.0
    %6990 = vmatprep.mubr.f32.mxu0 0.0
    %6991 = vmatmul.mubr.f32.gmra.mrb[0].mxu0 %v6757
    %v6992 = vpop.f32.mrb[0].mxu0
    %v6993 = vadd.f32 0.0, %v6992
    %v6994 = vpop.f32.mrb[0].mxu0
    %6995 = vdwg.mxu0
    %v6997 = vsel %vm788, %v6921, 0
    %6999 = vmatprep.subr.mxu0 0.0
    %7000 = vmatpush1.msra.mxu0 %v6919
    %7001 = vmatprep.subr.mxu0 0.0
    %7002 = vmatpush1.msra.mxu0 %v6920
    %7003 = vmatprep.subr.mxu0 0.0
    %7004 = vmatpush1.msra.mxu0 %v6997
    %7005 = vmatprep.subr.mxu0 0.0
    %7006 = vmatpush1.msra.mxu0 0.0
    %7007 = vmatprep.subr.mxu0 0.0
    %7008 = vmatpush1.msra.mxu0 0.0
    %7009 = vmatprep.subr.mxu0 0.0
    %7010 = vmatpush1.msra.mxu0 0.0
    %7011 = vmatprep.subr.mxu0 0.0
    %7012 = vmatpush1.msra.mxu0 0.0
    %7013 = vmatprep.subr.mxu0 0.0
    %7014 = vmatpush1.msra.mxu0 0.0
    %7015 = vmatprep.subr.mxu0 0.0
    %7016 = vmatpush1.msra.mxu0 0.0
    %7017 = vmatprep.subr.mxu0 0.0
    %7018 = vmatpush1.msra.mxu0 0.0
    %7019 = vmatprep.subr.mxu0 0.0
    %7020 = vmatpush1.msra.mxu0 0.0
    %7021 = vmatprep.subr.mxu0 0.0
    %7022 = vmatpush1.msra.mxu0 0.0
    %7023 = vmatprep.subr.mxu0 0.0
    %7024 = vmatpush1.msra.mxu0 0.0
    %7025 = vmatprep.subr.mxu0 0.0
    %7026 = vmatpush1.msra.mxu0 0.0
    %7027 = vmatprep.subr.mxu0 0.0
    %7028 = vmatpush1.msra.mxu0 0.0
    %7029 = vmatprep.subr.mxu0 0.0
    %7030 = vmatpush1.msra.mxu0 0.0
    %7031 = vmatprep.subr.mxu0 0.0
    %7032 = vmatpush1.msra.mxu0 0.0
    %7033 = vmatprep.subr.mxu0 0.0
    %7034 = vmatpush1.msra.mxu0 0.0
    %7035 = vmatprep.subr.mxu0 0.0
    %7036 = vmatpush1.msra.mxu0 0.0
    %7037 = vmatprep.subr.mxu0 0.0
    %7038 = vmatpush1.msra.mxu0 0.0
    %7039 = vmatprep.subr.mxu0 0.0
    %7040 = vmatpush1.msra.mxu0 0.0
    %7041 = vmatprep.subr.mxu0 0.0
    %7042 = vmatpush1.msra.mxu0 0.0
    %7043 = vmatprep.subr.mxu0 0.0
    %7044 = vmatpush1.msra.mxu0 0.0
    %7045 = vmatprep.subr.mxu0 0.0
    %7046 = vmatpush1.msra.mxu0 0.0
    %7047 = vmatprep.subr.mxu0 0.0
    %7048 = vmatpush1.msra.mxu0 0.0
    %7049 = vmatprep.subr.mxu0 0.0
    %7050 = vmatpush1.msra.mxu0 0.0
    %7051 = vmatprep.subr.mxu0 0.0
    %7052 = vmatpush1.msra.mxu0 0.0
    %7053 = vmatprep.subr.mxu0 0.0
    %7054 = vmatpush1.msra.mxu0 0.0
    %7055 = vmatprep.subr.mxu0 0.0
    %7056 = vmatpush1.msra.mxu0 0.0
    %7057 = vmatprep.subr.mxu0 0.0
    %7058 = vmatpush1.msra.mxu0 0.0
    %7059 = vmatprep.subr.mxu0 0.0
    %7060 = vmatpush1.msra.mxu0 0.0
    %7061 = vmatprep.subr.mxu0 0.0
    %7062 = vmatpush1.msra.mxu0 0.0
    %7063 = vmatprep.mubr.f32.mxu0 0.0
    %7064 = vmatmul.mubr.f32.gmra.mrb[0].mxu0 %v6830
    %v7065 = vpop.f32.mrb[0].mxu0
    %v7066 = vadd.f32 %v6993, %v7065
    %v7067 = vpop.f32.mrb[0].mxu0
    %7068 = vdwg.mxu0
    %v7069 = vld [vmem:[%s1028] sm:$0x1]
    %v7071 = vlaneseq
    %v7072 = vshrl.u32 %v7071, 7
    %v7073 = vsub.s32 0, %v7072
    %v7074 = vrot.slane %v7069, %v7073
    %v7076 = vadd.f32 %v7066, %v7074
    %v7077 = vxor.u32 %v7076, 2147483648
    %v7078 = vmul.f32 %v7077, 1.442695
    %v7079 = vpow.pop %v7078
    %v7080 = vadd.f32 %v7079, 1.0
    %v7081 = vrcp.pop %v7080
    %v7082 = vmul.f32 1.0, %v7081
    %v7083 = vld [vmem:[%s1043] sm:$0xff]
    %v7084 = vld [vmem:[%s1043 + $0x8] sm:$0xff]
    %v7085 = vld [vmem:[%s1043 + $0x10] sm:$0x1]
    %v7086 = vld [vmem:[%s1047] sm:$0x1]
    %v7088 = vlaneseq
    %v7089 = vshrl.u32 %v7088, 7
    %v7090 = vsub.s32 0, %v7089
    %v7091 = vrot.slane %v7086, %v7090
    %v7094 = vsel %vm788, %v7085, 0
    %7096 = vmatprep.subr.mxu0 0.0
    %7097 = vmatpush1.msra.mxu0 %v7083
    %7098 = vmatprep.subr.mxu0 0.0
    %7099 = vmatpush1.msra.mxu0 %v7084
    %7100 = vmatprep.subr.mxu0 0.0
    %7101 = vmatpush1.msra.mxu0 %v7094
    %7102 = vmatprep.subr.mxu0 0.0
    %7103 = vmatpush1.msra.mxu0 0.0
    %7104 = vmatprep.subr.mxu0 0.0
    %7105 = vmatpush1.msra.mxu0 0.0
    %7106 = vmatprep.subr.mxu0 0.0
    %7107 = vmatpush1.msra.mxu0 0.0
    %7108 = vmatprep.subr.mxu0 0.0
    %7109 = vmatpush1.msra.mxu0 0.0
    %7110 = vmatprep.subr.mxu0 0.0
    %7111 = vmatpush1.msra.mxu0 0.0
    %7112 = vmatprep.subr.mxu0 0.0
    %7113 = vmatpush1.msra.mxu0 0.0
    %7114 = vmatprep.subr.mxu0 0.0
    %7115 = vmatpush1.msra.mxu0 0.0
    %7116 = vmatprep.subr.mxu0 0.0
    %7117 = vmatpush1.msra.mxu0 0.0
    %7118 = vmatprep.subr.mxu0 0.0
    %7119 = vmatpush1.msra.mxu0 0.0
    %7120 = vmatprep.subr.mxu0 0.0
    %7121 = vmatpush1.msra.mxu0 0.0
    %7122 = vmatprep.subr.mxu0 0.0
    %7123 = vmatpush1.msra.mxu0 0.0
    %7124 = vmatprep.subr.mxu0 0.0
    %7125 = vmatpush1.msra.mxu0 0.0
    %7126 = vmatprep.subr.mxu0 0.0
    %7127 = vmatpush1.msra.mxu0 0.0
    %7128 = vmatprep.subr.mxu0 0.0
    %7129 = vmatpush1.msra.mxu0 0.0
    %7130 = vmatprep.subr.mxu0 0.0
    %7131 = vmatpush1.msra.mxu0 0.0
    %7132 = vmatprep.subr.mxu0 0.0
    %7133 = vmatpush1.msra.mxu0 0.0
    %7134 = vmatprep.subr.mxu0 0.0
    %7135 = vmatpush1.msra.mxu0 0.0
    %7136 = vmatprep.subr.mxu0 0.0
    %7137 = vmatpush1.msra.mxu0 0.0
    %7138 = vmatprep.subr.mxu0 0.0
    %7139 = vmatpush1.msra.mxu0 0.0
    %7140 = vmatprep.subr.mxu0 0.0
    %7141 = vmatpush1.msra.mxu0 0.0
    %7142 = vmatprep.subr.mxu0 0.0
    %7143 = vmatpush1.msra.mxu0 0.0
    %7144 = vmatprep.subr.mxu0 0.0
    %7145 = vmatpush1.msra.mxu0 0.0
    %7146 = vmatprep.subr.mxu0 0.0
    %7147 = vmatpush1.msra.mxu0 0.0
    %7148 = vmatprep.subr.mxu0 0.0
    %7149 = vmatpush1.msra.mxu0 0.0
    %7150 = vmatprep.subr.mxu0 0.0
    %7151 = vmatpush1.msra.mxu0 0.0
    %7152 = vmatprep.subr.mxu0 0.0
    %7153 = vmatpush1.msra.mxu0 0.0
    %7154 = vmatprep.subr.mxu0 0.0
    %7155 = vmatpush1.msra.mxu0 0.0
    %7156 = vmatprep.subr.mxu0 0.0
    %7157 = vmatpush1.msra.mxu0 0.0
    %7158 = vmatprep.subr.mxu0 0.0
    %7159 = vmatpush1.msra.mxu0 0.0
    %7160 = vmatprep.mubr.f32.mxu0 0.0
    %7161 = vmatmul.mubr.f32.gmra.mrb[0].mxu0 %v6830
    %v7162 = vpop.f32.mrb[0].mxu0
    %v7163 = vadd.f32 %v7091, %v7162
    %v7164 = vpop.f32.mrb[0].mxu0
    %7165 = vdwg.mxu0
    %v7166 = vld [vmem:[%s1128] sm:$0xff]
    %v7167 = vld [vmem:[%s1128 + $0x8] sm:$0xff]
    %v7168 = vld [vmem:[%s1128 + $0x10] sm:$0xff]
    %v7169 = vld [vmem:[%s1128 + $0x18] sm:$0xff]
    %v7170 = vld [vmem:[%s1133] sm:$0x1]
    %v7172 = vlaneseq
    %v7173 = vshrl.u32 %v7172, 7
    %v7174 = vsub.s32 0, %v7173
    %v7175 = vrot.slane %v7170, %v7174
    %7177 = vmatprep.subr.mxu0 0.0
    %7178 = vmatpush1.msra.mxu0 %v7166
    %7179 = vmatprep.subr.mxu0 0.0
    %7180 = vmatpush1.msra.mxu0 %v7167
    %7181 = vmatprep.subr.mxu0 0.0
    %7182 = vmatpush1.msra.mxu0 %v7168
    %7183 = vmatprep.subr.mxu0 0.0
    %7184 = vmatpush1.msra.mxu0 %v7169
    %7185 = vmatprep.subr.mxu0 0.0
    %7186 = vmatpush1.msra.mxu0 0.0
    %7187 = vmatprep.subr.mxu0 0.0
    %7188 = vmatpush1.msra.mxu0 0.0
    %7189 = vmatprep.subr.mxu0 0.0
    %7190 = vmatpush1.msra.mxu0 0.0
    %7191 = vmatprep.subr.mxu0 0.0
    %7192 = vmatpush1.msra.mxu0 0.0
    %7193 = vmatprep.subr.mxu0 0.0
    %7194 = vmatpush1.msra.mxu0 0.0
    %7195 = vmatprep.subr.mxu0 0.0
    %7196 = vmatpush1.msra.mxu0 0.0
    %7197 = vmatprep.subr.mxu0 0.0
    %7198 = vmatpush1.msra.mxu0 0.0
    %7199 = vmatprep.subr.mxu0 0.0
    %7200 = vmatpush1.msra.mxu0 0.0
    %7201 = vmatprep.subr.mxu0 0.0
    %7202 = vmatpush1.msra.mxu0 0.0
    %7203 = vmatprep.subr.mxu0 0.0
    %7204 = vmatpush1.msra.mxu0 0.0
    %7205 = vmatprep.subr.mxu0 0.0
    %7206 = vmatpush1.msra.mxu0 0.0
    %7207 = vmatprep.subr.mxu0 0.0
    %7208 = vmatpush1.msra.mxu0 0.0
    %7209 = vmatprep.subr.mxu0 0.0
    %7210 = vmatpush1.msra.mxu0 0.0
    %7211 = vmatprep.subr.mxu0 0.0
    %7212 = vmatpush1.msra.mxu0 0.0
    %7213 = vmatprep.subr.mxu0 0.0
    %7214 = vmatpush1.msra.mxu0 0.0
    %7215 = vmatprep.subr.mxu0 0.0
    %7216 = vmatpush1.msra.mxu0 0.0
    %7217 = vmatprep.subr.mxu0 0.0
    %7218 = vmatpush1.msra.mxu0 0.0
    %7219 = vmatprep.subr.mxu0 0.0
    %7220 = vmatpush1.msra.mxu0 0.0
    %7221 = vmatprep.subr.mxu0 0.0
    %7222 = vmatpush1.msra.mxu0 0.0
    %7223 = vmatprep.subr.mxu0 0.0
    %7224 = vmatpush1.msra.mxu0 0.0
    %7225 = vmatprep.subr.mxu0 0.0
    %7226 = vmatpush1.msra.mxu0 0.0
    %7227 = vmatprep.subr.mxu0 0.0
    %7228 = vmatpush1.msra.mxu0 0.0
    %7229 = vmatprep.subr.mxu0 0.0
    %7230 = vmatpush1.msra.mxu0 0.0
    %7231 = vmatprep.subr.mxu0 0.0
    %7232 = vmatpush1.msra.mxu0 0.0
    %7233 = vmatprep.subr.mxu0 0.0
    %7234 = vmatpush1.msra.mxu0 0.0
    %7235 = vmatprep.subr.mxu0 0.0
    %7236 = vmatpush1.msra.mxu0 0.0
    %7237 = vmatprep.subr.mxu0 0.0
    %7238 = vmatpush1.msra.mxu0 0.0
    %7239 = vmatprep.subr.mxu0 0.0
    %7240 = vmatpush1.msra.mxu0 0.0
    %7241 = vmatprep.mubr.f32.mxu0 0.0
    %7242 = vmatmul.mubr.f32.gmra.mrb[0].mxu0 %v6757
    %v7243 = vpop.f32.mrb[0].mxu0
    %v7244 = vadd.f32 %v7175, %v7243
    %v7245 = vpop.f32.mrb[0].mxu0
    %7246 = vdwg.mxu0
    %v7247 = vmul.f32 %v6918, %v7244
    %v7248 = vadd.f32 %v7163, %v7247
    %v7249 = vtanh.pop %v7248
    %v7250 = vsub.f32 1.0, %v7082
    %v7251 = vmul.f32 %v7250, %v7249
    %v7252 = vmul.f32 %v7082, %v6247
    %v7253 = vadd.f32 %v7251, %v7252
    %s7254 = scalar_lea.vmem [#allocation3], 8
    %7255 = vst.msk [vmem:[%s7254] sm:$0xff] %vm200, %v7253
    %v7256 = vld [vmem:[%s18] sm:$0x1]
    %v7257 = vld [vmem:[%s19] sm:$0xff]
    %v7258 = vld [vmem:[%s19 + $0x8] sm:$0xff]
    %v7259 = vld [vmem:[#allocation12] sm:$0xff]
    %v7260 = vld [vmem:[#allocation12 + $0x8] sm:$0xff]
    %v7261 = vld [vmem:[#allocation12 + $0x10] sm:$0xff]
    %v7262 = vld [vmem:[#allocation12 + $0x18] sm:$0xff]
    %v7263 = vld [vmem:[%s9] sm:$0xff]
    %v7264 = vld [vmem:[%s9 + $0x8] sm:$0xff]
    %v7265 = vld [vmem:[%s9 + $0x10] sm:$0xff]
    %v7266 = vld [vmem:[%s9 + $0x18] sm:$0xff]
    %v7267 = vld [vmem:[#allocation13] sm:$0x1]
    %v7268 = vld [vmem:[%s11] sm:$0xff]
    %v7269 = vld [vmem:[%s11 + $0x8] sm:$0xff]
    %v7270 = vld [vmem:[%s11 + $0x10] sm:$0xff]
    %v7271 = vld [vmem:[%s11 + $0x18] sm:$0xff]
    %v7272 = vld [vmem:[%s11 + $0x20] sm:$0xff]
    %v7273 = vld [vmem:[%s11 + $0x28] sm:$0xff]
    %v7274 = vld [vmem:[#allocation15] sm:$0x1]
    %v7275 = vld [vmem:[#allocation2] sm:$0xff]
    %v7276 = vld [vmem:[#allocation2 + $0x8] sm:$0xff]
    %v7277 = vld [vmem:[#allocation2 + $0x10] sm:$0xff]
    %v7278 = vld [vmem:[#allocation2 + $0x18] sm:$0xff]
    %v7279 = vld [vmem:[#allocation2 + $0x20] sm:$0xff]
    %v7280 = vld [vmem:[#allocation2 + $0x28] sm:$0xff]
    %v7281 = vld [vmem:[#allocation2 + $0x30] sm:$0xff]
    %v7282 = vld [vmem:[%s6248] sm:$0xff]
    %v7283 = vld [vmem:[%s6248 + $0x8] sm:$0xff]
    %v7284 = vld [vmem:[%s6248 + $0x10] sm:$0xff]
    %v7285 = vld [vmem:[%s6248 + $0x18] sm:$0xff]
    %v7286 = vld [vmem:[%s6248 + $0x20] sm:$0xff]
    %v7287 = vld [vmem:[%s6248 + $0x28] sm:$0xff]
    %v7288 = vld [vmem:[%s6248 + $0x30] sm:$0xff]
    %v7289 = vld [vmem:[%s1220] sm:$0xff]
    %v7290 = vld [vmem:[%s1220 + $0x8] sm:$0xff]
    %v7291 = vld [vmem:[%s1220 + $0x10] sm:$0xff]
    %v7292 = vld [vmem:[%s1220 + $0x18] sm:$0xff]
    %v7293 = vld [vmem:[%s1220 + $0x20] sm:$0xff]
    %v7294 = vld [vmem:[%s1220 + $0x28] sm:$0xff]
    %v7295 = vld [vmem:[%s1220 + $0x30] sm:$0xff]
    %v7297 = vsel %vm200, %v7282, 0
    %v7300 = vsel %vm200, %v7283, 0
    %v7303 = vsel %vm200, %v7284, 0
    %v7306 = vsel %vm200, %v7285, 0
    %v7309 = vsel %vm200, %v7286, 0
    %v7312 = vsel %vm200, %v7287, 0
    %v7315 = vsel %vm200, %v7288, 0
    %7317 = vmatprep.subr.mxu0 0.0
    %7318 = vmatpush1.msra.mxu0 %v7263
    %7319 = vmatprep.subr.mxu0 0.0
    %7320 = vmatpush1.msra.mxu0 %v7264
    %7321 = vmatprep.subr.mxu0 0.0
    %7322 = vmatpush1.msra.mxu0 %v7265
    %7323 = vmatprep.subr.mxu0 0.0
    %7324 = vmatpush1.msra.mxu0 %v7266
    %7325 = vmatprep.subr.mxu0 0.0
    %7326 = vmatpush1.msra.mxu0 0.0
    %7327 = vmatprep.subr.mxu0 0.0
    %7328 = vmatpush1.msra.mxu0 0.0
    %7329 = vmatprep.subr.mxu0 0.0
    %7330 = vmatpush1.msra.mxu0 0.0
    %7331 = vmatprep.subr.mxu0 0.0
    %7332 = vmatpush1.msra.mxu0 0.0
    %7333 = vmatprep.subr.mxu0 0.0
    %7334 = vmatpush1.msra.mxu0 0.0
    %7335 = vmatprep.subr.mxu0 0.0
    %7336 = vmatpush1.msra.mxu0 0.0
    %7337 = vmatprep.subr.mxu0 0.0
    %7338 = vmatpush1.msra.mxu0 0.0
    %7339 = vmatprep.subr.mxu0 0.0
    %7340 = vmatpush1.msra.mxu0 0.0
    %7341 = vmatprep.subr.mxu0 0.0
    %7342 = vmatpush1.msra.mxu0 0.0
    %7343 = vmatprep.subr.mxu0 0.0
    %7344 = vmatpush1.msra.mxu0 0.0
    %7345 = vmatprep.subr.mxu0 0.0
    %7346 = vmatpush1.msra.mxu0 0.0
    %7347 = vmatprep.subr.mxu0 0.0
    %7348 = vmatpush1.msra.mxu0 0.0
    %7349 = vmatprep.subr.mxu0 0.0
    %7350 = vmatpush1.msra.mxu0 0.0
    %7351 = vmatprep.subr.mxu0 0.0
    %7352 = vmatpush1.msra.mxu0 0.0
    %7353 = vmatprep.subr.mxu0 0.0
    %7354 = vmatpush1.msra.mxu0 0.0
    %7355 = vmatprep.subr.mxu0 0.0
    %7356 = vmatpush1.msra.mxu0 0.0
    %7357 = vmatprep.subr.mxu0 0.0
    %7358 = vmatpush1.msra.mxu0 0.0
    %7359 = vmatprep.subr.mxu0 0.0
    %7360 = vmatpush1.msra.mxu0 0.0
    %7361 = vmatprep.subr.mxu0 0.0
    %7362 = vmatpush1.msra.mxu0 0.0
    %7363 = vmatprep.subr.mxu0 0.0
    %7364 = vmatpush1.msra.mxu0 0.0
    %7365 = vmatprep.subr.mxu0 0.0
    %7366 = vmatpush1.msra.mxu0 0.0
    %7367 = vmatprep.subr.mxu0 0.0
    %7368 = vmatpush1.msra.mxu0 0.0
    %7369 = vmatprep.subr.mxu0 0.0
    %7370 = vmatpush1.msra.mxu0 0.0
    %7371 = vmatprep.subr.mxu0 0.0
    %7372 = vmatpush1.msra.mxu0 0.0
    %7373 = vmatprep.subr.mxu0 0.0
    %7374 = vmatpush1.msra.mxu0 0.0
    %7375 = vmatprep.subr.mxu0 0.0
    %7376 = vmatpush1.msra.mxu0 0.0
    %7377 = vmatprep.subr.mxu0 0.0
    %7378 = vmatpush1.msra.mxu0 0.0
    %7379 = vmatprep.subr.mxu0 0.0
    %7380 = vmatpush1.msra.mxu0 0.0
    %7381 = vmatprep.mubr.f32.mxu0 0.0
    %7382 = vmatmul.mubr.f32.gmra.mrb[0].mxu0 %v7297
    %v7383 = vpop.f32.mrb[0].mxu0
    %v7384 = vadd.f32 0.0, %v7383
    %v7385 = vpop.f32.mrb[0].mxu0
    %7386 = vmatprep.mubr.f32.mxu0 0.0
    %7387 = vmatmul.mubr.f32.gmra.mrb[0].mxu0 %v7300
    %v7388 = vpop.f32.mrb[0].mxu0
    %v7389 = vadd.f32 0.0, %v7388
    %v7390 = vpop.f32.mrb[0].mxu0
    %7391 = vmatprep.mubr.f32.mxu0 0.0
    %7392 = vmatmul.mubr.f32.gmra.mrb[0].mxu0 %v7303
    %v7393 = vpop.f32.mrb[0].mxu0
    %v7394 = vadd.f32 0.0, %v7393
    %v7395 = vpop.f32.mrb[0].mxu0
    %7396 = vmatprep.mubr.f32.mxu0 0.0
    %7397 = vmatmul.mubr.f32.gmra.mrb[0].mxu0 %v7306
    %v7398 = vpop.f32.mrb[0].mxu0
    %v7399 = vadd.f32 0.0, %v7398
    %v7400 = vpop.f32.mrb[0].mxu0
    %7401 = vmatprep.mubr.f32.mxu0 0.0
    %7402 = vmatmul.mubr.f32.gmra.mrb[0].mxu0 %v7309
    %v7403 = vpop.f32.mrb[0].mxu0
    %v7404 = vadd.f32 0.0, %v7403
    %v7405 = vpop.f32.mrb[0].mxu0
    %7406 = vmatprep.mubr.f32.mxu0 0.0
    %7407 = vmatmul.mubr.f32.gmra.mrb[0].mxu0 %v7312
    %v7408 = vpop.f32.mrb[0].mxu0
    %v7409 = vadd.f32 0.0, %v7408
    %v7410 = vpop.f32.mrb[0].mxu0
    %7411 = vmatprep.mubr.f32.mxu0 0.0
    %7412 = vmatmul.mubr.f32.gmra.mrb[0].mxu0 %v7315
    %v7413 = vpop.f32.mrb[0].mxu0
    %v7414 = vadd.f32 0.0, %v7413
    %v7415 = vpop.f32.mrb[0].mxu0
    %7416 = vdwg.mxu0
    %v7418 = vsel %vm200, %v7275, 0
    %v7421 = vsel %vm200, %v7276, 0
    %v7424 = vsel %vm200, %v7277, 0
    %v7427 = vsel %vm200, %v7278, 0
    %v7430 = vsel %vm200, %v7279, 0
    %v7433 = vsel %vm200, %v7280, 0
    %v7436 = vsel %vm200, %v7281, 0
    %7438 = vmatprep.subr.mxu0 0.0
    %7439 = vmatpush1.msra.mxu0 %v7259
    %7440 = vmatprep.subr.mxu0 0.0
    %7441 = vmatpush1.msra.mxu0 %v7260
    %7442 = vmatprep.subr.mxu0 0.0
    %7443 = vmatpush1.msra.mxu0 %v7261
    %7444 = vmatprep.subr.mxu0 0.0
    %7445 = vmatpush1.msra.mxu0 %v7262
    %7446 = vmatprep.subr.mxu0 0.0
    %7447 = vmatpush1.msra.mxu0 0.0
    %7448 = vmatprep.subr.mxu0 0.0
    %7449 = vmatpush1.msra.mxu0 0.0
    %7450 = vmatprep.subr.mxu0 0.0
    %7451 = vmatpush1.msra.mxu0 0.0
    %7452 = vmatprep.subr.mxu0 0.0
    %7453 = vmatpush1.msra.mxu0 0.0
    %7454 = vmatprep.subr.mxu0 0.0
    %7455 = vmatpush1.msra.mxu0 0.0
    %7456 = vmatprep.subr.mxu0 0.0
    %7457 = vmatpush1.msra.mxu0 0.0
    %7458 = vmatprep.subr.mxu0 0.0
    %7459 = vmatpush1.msra.mxu0 0.0
    %7460 = vmatprep.subr.mxu0 0.0
    %7461 = vmatpush1.msra.mxu0 0.0
    %7462 = vmatprep.subr.mxu0 0.0
    %7463 = vmatpush1.msra.mxu0 0.0
    %7464 = vmatprep.subr.mxu0 0.0
    %7465 = vmatpush1.msra.mxu0 0.0
    %7466 = vmatprep.subr.mxu0 0.0
    %7467 = vmatpush1.msra.mxu0 0.0
    %7468 = vmatprep.subr.mxu0 0.0
    %7469 = vmatpush1.msra.mxu0 0.0
    %7470 = vmatprep.subr.mxu0 0.0
    %7471 = vmatpush1.msra.mxu0 0.0
    %7472 = vmatprep.subr.mxu0 0.0
    %7473 = vmatpush1.msra.mxu0 0.0
    %7474 = vmatprep.subr.mxu0 0.0
    %7475 = vmatpush1.msra.mxu0 0.0
    %7476 = vmatprep.subr.mxu0 0.0
    %7477 = vmatpush1.msra.mxu0 0.0
    %7478 = vmatprep.subr.mxu0 0.0
    %7479 = vmatpush1.msra.mxu0 0.0
    %7480 = vmatprep.subr.mxu0 0.0
    %7481 = vmatpush1.msra.mxu0 0.0
    %7482 = vmatprep.subr.mxu0 0.0
    %7483 = vmatpush1.msra.mxu0 0.0
    %7484 = vmatprep.subr.mxu0 0.0
    %7485 = vmatpush1.msra.mxu0 0.0
    %7486 = vmatprep.subr.mxu0 0.0
    %7487 = vmatpush1.msra.mxu0 0.0
    %7488 = vmatprep.subr.mxu0 0.0
    %7489 = vmatpush1.msra.mxu0 0.0
    %7490 = vmatprep.subr.mxu0 0.0
    %7491 = vmatpush1.msra.mxu0 0.0
    %7492 = vmatprep.subr.mxu0 0.0
    %7493 = vmatpush1.msra.mxu0 0.0
    %7494 = vmatprep.subr.mxu0 0.0
    %7495 = vmatpush1.msra.mxu0 0.0
    %7496 = vmatprep.subr.mxu0 0.0
    %7497 = vmatpush1.msra.mxu0 0.0
    %7498 = vmatprep.subr.mxu0 0.0
    %7499 = vmatpush1.msra.mxu0 0.0
    %7500 = vmatprep.subr.mxu0 0.0
    %7501 = vmatpush1.msra.mxu0 0.0
    %7502 = vmatprep.mubr.f32.mxu0 0.0
    %7503 = vmatmul.mubr.f32.gmra.mrb[0].mxu0 %v7418
    %v7504 = vpop.f32.mrb[0].mxu0
    %v7505 = vadd.f32 %v7384, %v7504
    %v7506 = vpop.f32.mrb[0].mxu0
    %7507 = vmatprep.mubr.f32.mxu0 0.0
    %7508 = vmatmul.mubr.f32.gmra.mrb[0].mxu0 %v7421
    %v7509 = vpop.f32.mrb[0].mxu0
    %v7510 = vadd.f32 %v7389, %v7509
    %v7511 = vpop.f32.mrb[0].mxu0
    %7512 = vmatprep.mubr.f32.mxu0 0.0
    %7513 = vmatmul.mubr.f32.gmra.mrb[0].mxu0 %v7424
    %v7514 = vpop.f32.mrb[0].mxu0
    %v7515 = vadd.f32 %v7394, %v7514
    %v7516 = vpop.f32.mrb[0].mxu0
    %7517 = vmatprep.mubr.f32.mxu0 0.0
    %7518 = vmatmul.mubr.f32.gmra.mrb[0].mxu0 %v7427
    %v7519 = vpop.f32.mrb[0].mxu0
    %v7520 = vadd.f32 %v7399, %v7519
    %v7521 = vpop.f32.mrb[0].mxu0
    %7522 = vmatprep.mubr.f32.mxu0 0.0
    %7523 = vmatmul.mubr.f32.gmra.mrb[0].mxu0 %v7430
    %v7524 = vpop.f32.mrb[0].mxu0
    %v7525 = vadd.f32 %v7404, %v7524
    %v7526 = vpop.f32.mrb[0].mxu0
    %7527 = vmatprep.mubr.f32.mxu0 0.0
    %7528 = vmatmul.mubr.f32.gmra.mrb[0].mxu0 %v7433
    %v7529 = vpop.f32.mrb[0].mxu0
    %v7530 = vadd.f32 %v7409, %v7529
    %v7531 = vpop.f32.mrb[0].mxu0
    %7532 = vmatprep.mubr.f32.mxu0 0.0
    %7533 = vmatmul.mubr.f32.gmra.mrb[0].mxu0 %v7436
    %v7534 = vpop.f32.mrb[0].mxu0
    %v7535 = vadd.f32 %v7414, %v7534
    %v7536 = vpop.f32.mrb[0].mxu0
    %7537 = vdwg.mxu0
    %v7539 = vlaneseq
    %v7540 = vshrl.u32 %v7539, 7
    %v7541 = vsub.s32 0, %v7540
    %v7542 = vrot.slane %v7267, %v7541
    %v7544 = vadd.f32 %v7505, %v7542
    %v7545 = vadd.f32 %v7510, %v7542
    %v7546 = vadd.f32 %v7515, %v7542
    %v7547 = vadd.f32 %v7520, %v7542
    %v7548 = vadd.f32 %v7525, %v7542
    %v7549 = vadd.f32 %v7530, %v7542
    %v7550 = vadd.f32 %v7535, %v7542
    %v7551 = vmax.f32 %v7544, 0.0
    %v7552 = vmax.f32 %v7545, 0.0
    %v7553 = vmax.f32 %v7546, 0.0
    %v7554 = vmax.f32 %v7547, 0.0
    %v7555 = vmax.f32 %v7548, 0.0
    %v7556 = vmax.f32 %v7549, 0.0
    %v7557 = vmax.f32 %v7550, 0.0
    %v7559 = vlaneseq
    %v7560 = vshrl.u32 %v7559, 7
    %v7561 = vsub.s32 0, %v7560
    %v7562 = vrot.slane %v7274, %v7561
    %vm7564 = vcmask 392192
    %v7566 = vsel %vm7564, %v7551, 0
    %v7569 = vsel %vm7564, %v7552, 0
    %v7572 = vsel %vm7564, %v7553, 0
    %v7575 = vsel %vm7564, %v7554, 0
    %v7578 = vsel %vm7564, %v7555, 0
    %v7581 = vsel %vm7564, %v7556, 0
    %v7584 = vsel %vm7564, %v7557, 0
    %7586 = vmatprep.subr.mxu0 0.0
    %7587 = vmatpush1.msra.mxu0 %v7268
    %7588 = vmatprep.subr.mxu0 0.0
    %7589 = vmatpush1.msra.mxu0 %v7269
    %7590 = vmatprep.subr.mxu0 0.0
    %7591 = vmatpush1.msra.mxu0 %v7270
    %7592 = vmatprep.subr.mxu0 0.0
    %7593 = vmatpush1.msra.mxu0 %v7271
    %7594 = vmatprep.subr.mxu0 0.0
    %7595 = vmatpush1.msra.mxu0 %v7272
    %7596 = vmatprep.subr.mxu0 0.0
    %7597 = vmatpush1.msra.mxu0 %v7273
    %7598 = vmatprep.subr.mxu0 0.0
    %7599 = vmatpush1.msra.mxu0 0.0
    %7600 = vmatprep.subr.mxu0 0.0
    %7601 = vmatpush1.msra.mxu0 0.0
    %7602 = vmatprep.subr.mxu0 0.0
    %7603 = vmatpush1.msra.mxu0 0.0
    %7604 = vmatprep.subr.mxu0 0.0
    %7605 = vmatpush1.msra.mxu0 0.0
    %7606 = vmatprep.subr.mxu0 0.0
    %7607 = vmatpush1.msra.mxu0 0.0
    %7608 = vmatprep.subr.mxu0 0.0
    %7609 = vmatpush1.msra.mxu0 0.0
    %7610 = vmatprep.subr.mxu0 0.0
    %7611 = vmatpush1.msra.mxu0 0.0
    %7612 = vmatprep.subr.mxu0 0.0
    %7613 = vmatpush1.msra.mxu0 0.0
    %7614 = vmatprep.subr.mxu0 0.0
    %7615 = vmatpush1.msra.mxu0 0.0
    %7616 = vmatprep.subr.mxu0 0.0
    %7617 = vmatpush1.msra.mxu0 0.0
    %7618 = vmatprep.subr.mxu0 0.0
    %7619 = vmatpush1.msra.mxu0 0.0
    %7620 = vmatprep.subr.mxu0 0.0
    %7621 = vmatpush1.msra.mxu0 0.0
    %7622 = vmatprep.subr.mxu0 0.0
    %7623 = vmatpush1.msra.mxu0 0.0
    %7624 = vmatprep.subr.mxu0 0.0
    %7625 = vmatpush1.msra.mxu0 0.0
    %7626 = vmatprep.subr.mxu0 0.0
    %7627 = vmatpush1.msra.mxu0 0.0
    %7628 = vmatprep.subr.mxu0 0.0
    %7629 = vmatpush1.msra.mxu0 0.0
    %7630 = vmatprep.subr.mxu0 0.0
    %7631 = vmatpush1.msra.mxu0 0.0
    %7632 = vmatprep.subr.mxu0 0.0
    %7633 = vmatpush1.msra.mxu0 0.0
    %7634 = vmatprep.subr.mxu0 0.0
    %7635 = vmatpush1.msra.mxu0 0.0
    %7636 = vmatprep.subr.mxu0 0.0
    %7637 = vmatpush1.msra.mxu0 0.0
    %7638 = vmatprep.subr.mxu0 0.0
    %7639 = vmatpush1.msra.mxu0 0.0
    %7640 = vmatprep.subr.mxu0 0.0
    %7641 = vmatpush1.msra.mxu0 0.0
    %7642 = vmatprep.subr.mxu0 0.0
    %7643 = vmatpush1.msra.mxu0 0.0
    %7644 = vmatprep.subr.mxu0 0.0
    %7645 = vmatpush1.msra.mxu0 0.0
    %7646 = vmatprep.subr.mxu0 0.0
    %7647 = vmatpush1.msra.mxu0 0.0
    %7648 = vmatprep.subr.mxu0 0.0
    %7649 = vmatpush1.msra.mxu0 0.0
    %7650 = vmatprep.mubr.f32.mxu0 0.0
    %7651 = vmatmul.mubr.f32.gmra.mrb[0].mxu0 %v7566
    %v7652 = vpop.f32.mrb[0].mxu0
    %v7653 = vadd.f32 %v7562, %v7652
    %v7654 = vpop.f32.mrb[0].mxu0
    %7655 = vmatprep.mubr.f32.mxu0 0.0
    %7656 = vmatmul.mubr.f32.gmra.mrb[0].mxu0 %v7569
    %v7657 = vpop.f32.mrb[0].mxu0
    %v7658 = vadd.f32 %v7562, %v7657
    %v7659 = vpop.f32.mrb[0].mxu0
    %7660 = vmatprep.mubr.f32.mxu0 0.0
    %7661 = vmatmul.mubr.f32.gmra.mrb[0].mxu0 %v7572
    %v7662 = vpop.f32.mrb[0].mxu0
    %v7663 = vadd.f32 %v7562, %v7662
    %v7664 = vpop.f32.mrb[0].mxu0
    %7665 = vmatprep.mubr.f32.mxu0 0.0
    %7666 = vmatmul.mubr.f32.gmra.mrb[0].mxu0 %v7575
    %v7667 = vpop.f32.mrb[0].mxu0
    %v7668 = vadd.f32 %v7562, %v7667
    %v7669 = vpop.f32.mrb[0].mxu0
    %7670 = vmatprep.mubr.f32.mxu0 0.0
    %7671 = vmatmul.mubr.f32.gmra.mrb[0].mxu0 %v7578
    %v7672 = vpop.f32.mrb[0].mxu0
    %v7673 = vadd.f32 %v7562, %v7672
    %v7674 = vpop.f32.mrb[0].mxu0
    %7675 = vmatprep.mubr.f32.mxu0 0.0
    %7676 = vmatmul.mubr.f32.gmra.mrb[0].mxu0 %v7581
    %v7677 = vpop.f32.mrb[0].mxu0
    %v7678 = vadd.f32 %v7562, %v7677
    %v7679 = vpop.f32.mrb[0].mxu0
    %7680 = vmatprep.mubr.f32.mxu0 0.0
    %7681 = vmatmul.mubr.f32.gmra.mrb[0].mxu0 %v7584
    %v7682 = vpop.f32.mrb[0].mxu0
    %v7683 = vadd.f32 %v7562, %v7682
    %v7684 = vpop.f32.mrb[0].mxu0
    %7685 = vdwg.mxu0
    %v7686 = vsub.f32 %v7653, %v7289
    %v7687 = vsub.f32 %v7658, %v7290
    %v7688 = vsub.f32 %v7663, %v7291
    %v7689 = vsub.f32 %v7668, %v7292
    %v7690 = vsub.f32 %v7673, %v7293
    %v7691 = vsub.f32 %v7678, %v7294
    %v7692 = vsub.f32 %v7683, %v7295
    %v7693 = vand.u32 2147483647, %v7686
    %v7694 = vand.u32 2147483647, %v7687
    %v7695 = vand.u32 2147483647, %v7688
    %v7696 = vand.u32 2147483647, %v7689
    %v7697 = vand.u32 2147483647, %v7690
    %v7698 = vand.u32 2147483647, %v7691
    %v7699 = vand.u32 2147483647, %v7692
    %v7700 = vsel %vm282, %v7693, 0.0
    %v7701 = vsel %vm282, %v7694, 0.0
    %v7702 = vadd.f32 %v7700, %v7701
    %v7703 = vsel %vm282, %v7695, 0.0
    %v7704 = vadd.f32 %v7702, %v7703
    %v7705 = vsel %vm282, %v7696, 0.0
    %v7706 = vadd.f32 %v7704, %v7705
    %v7707 = vsel %vm282, %v7697, 0.0
    %v7708 = vadd.f32 %v7706, %v7707
    %v7709 = vsel %vm282, %v7698, 0.0
    %v7710 = vadd.f32 %v7708, %v7709
    %v7711 = vsel %vm282, %v7699, 0.0
    %v7712 = vadd.f32 %v7710, %v7711
    %7713 = vadd.xlane.f32.xlu0 %v7712
    %v7714 = vpop.xlane.xlu0 %7713
    %v7715 = vrot.slane %v7714, 4
    %v7716 = vadd.f32 %v7714, %v7715
    %v7717 = vrot.slane %v7716, 2
    %v7718 = vadd.f32 %v7716, %v7717
    %v7719 = vrot.slane %v7718, 1
    %v7720 = vadd.f32 %v7718, %v7719
    %s7721 = vtos %v7720
    %v7722 = vrcp.pop 128.0
    %s7723 = vtos %v7722
    %s7724 = smul.f32 %s7721, %s7723
    %s7725 = sadd.f32 %s7724, 0.0
    %v7727 = vlaneseq
    %v7728 = vshrl.u32 %v7727, 7
    %v7729 = vsub.s32 0, %v7728
    %v7730 = vrot.slane %v7256, %v7729
    %v7732 = vmul.f32 %v7686, %v7730
    %v7733 = vmul.f32 %v7687, %v7730
    %v7734 = vmul.f32 %v7688, %v7730
    %v7735 = vmul.f32 %v7689, %v7730
    %v7736 = vmul.f32 %v7690, %v7730
    %v7737 = vmul.f32 %v7691, %v7730
    %v7738 = vmul.f32 %v7692, %v7730
    %v7739 = vmul.f32 %v7732, %v7732
    %v7740 = vmul.f32 %v7733, %v7733
    %v7741 = vmul.f32 %v7734, %v7734
    %v7742 = vmul.f32 %v7735, %v7735
    %v7743 = vmul.f32 %v7736, %v7736
    %v7744 = vmul.f32 %v7737, %v7737
    %v7745 = vmul.f32 %v7738, %v7738
    %v7747 = vsel %vm282, %v7739, 0
    %v7750 = vsel %vm282, %v7740, 0
    %v7753 = vsel %vm282, %v7741, 0
    %v7756 = vsel %vm282, %v7742, 0
    %v7759 = vsel %vm282, %v7743, 0
    %v7762 = vsel %vm282, %v7744, 0
    %v7765 = vsel %vm282, %v7745, 0
    %7767 = vmatprep.subr.mxu0 0.0
    %7768 = vmatpush1.msra.mxu0 %v7257
    %7769 = vmatprep.subr.mxu0 0.0
    %7770 = vmatpush1.msra.mxu0 %v7258
    %7771 = vmatprep.subr.mxu0 0.0
    %7772 = vmatpush1.msra.mxu0 0.0
    %7773 = vmatprep.subr.mxu0 0.0
    %7774 = vmatpush1.msra.mxu0 0.0
    %7775 = vmatprep.subr.mxu0 0.0
    %7776 = vmatpush1.msra.mxu0 0.0
    %7777 = vmatprep.subr.mxu0 0.0
    %7778 = vmatpush1.msra.mxu0 0.0
    %7779 = vmatprep.subr.mxu0 0.0
    %7780 = vmatpush1.msra.mxu0 0.0
    %7781 = vmatprep.subr.mxu0 0.0
    %7782 = vmatpush1.msra.mxu0 0.0
    %7783 = vmatprep.subr.mxu0 0.0
    %7784 = vmatpush1.msra.mxu0 0.0
    %7785 = vmatprep.subr.mxu0 0.0
    %7786 = vmatpush1.msra.mxu0 0.0
    %7787 = vmatprep.subr.mxu0 0.0
    %7788 = vmatpush1.msra.mxu0 0.0
    %7789 = vmatprep.subr.mxu0 0.0
    %7790 = vmatpush1.msra.mxu0 0.0
    %7791 = vmatprep.subr.mxu0 0.0
    %7792 = vmatpush1.msra.mxu0 0.0
    %7793 = vmatprep.subr.mxu0 0.0
    %7794 = vmatpush1.msra.mxu0 0.0
    %7795 = vmatprep.subr.mxu0 0.0
    %7796 = vmatpush1.msra.mxu0 0.0
    %7797 = vmatprep.subr.mxu0 0.0
    %7798 = vmatpush1.msra.mxu0 0.0
    %7799 = vmatprep.subr.mxu0 0.0
    %7800 = vmatpush1.msra.mxu0 0.0
    %7801 = vmatprep.subr.mxu0 0.0
    %7802 = vmatpush1.msra.mxu0 0.0
    %7803 = vmatprep.subr.mxu0 0.0
    %7804 = vmatpush1.msra.mxu0 0.0
    %7805 = vmatprep.subr.mxu0 0.0
    %7806 = vmatpush1.msra.mxu0 0.0
    %7807 = vmatprep.subr.mxu0 0.0
    %7808 = vmatpush1.msra.mxu0 0.0
    %7809 = vmatprep.subr.mxu0 0.0
    %7810 = vmatpush1.msra.mxu0 0.0
    %7811 = vmatprep.subr.mxu0 0.0
    %7812 = vmatpush1.msra.mxu0 0.0
    %7813 = vmatprep.subr.mxu0 0.0
    %7814 = vmatpush1.msra.mxu0 0.0
    %7815 = vmatprep.subr.mxu0 0.0
    %7816 = vmatpush1.msra.mxu0 0.0
    %7817 = vmatprep.subr.mxu0 0.0
    %7818 = vmatpush1.msra.mxu0 0.0
    %7819 = vmatprep.subr.mxu0 0.0
    %7820 = vmatpush1.msra.mxu0 0.0
    %7821 = vmatprep.subr.mxu0 0.0
    %7822 = vmatpush1.msra.mxu0 0.0
    %7823 = vmatprep.subr.mxu0 0.0
    %7824 = vmatpush1.msra.mxu0 0.0
    %7825 = vmatprep.subr.mxu0 0.0
    %7826 = vmatpush1.msra.mxu0 0.0
    %7827 = vmatprep.subr.mxu0 0.0
    %7828 = vmatpush1.msra.mxu0 0.0
    %7829 = vmatprep.subr.mxu0 0.0
    %7830 = vmatpush1.msra.mxu0 0.0
    %7831 = vmatprep.mubr.f32.mxu0 0.0
    %7832 = vmatmul.mubr.f32.gmra.mrb[0].mxu0 %v7747
    %v7833 = vpop.f32.mrb[0].mxu0
    %v7834 = vadd.f32 0.0, %v7833
    %v7835 = vpop.f32.mrb[0].mxu0
    %7836 = vmatprep.mubr.f32.mxu0 0.0
    %7837 = vmatmul.mubr.f32.gmra.mrb[0].mxu0 %v7750
    %v7838 = vpop.f32.mrb[0].mxu0
    %v7839 = vadd.f32 0.0, %v7838
    %v7840 = vpop.f32.mrb[0].mxu0
    %7841 = vmatprep.mubr.f32.mxu0 0.0
    %7842 = vmatmul.mubr.f32.gmra.mrb[0].mxu0 %v7753
    %v7843 = vpop.f32.mrb[0].mxu0
    %v7844 = vadd.f32 0.0, %v7843
    %v7845 = vpop.f32.mrb[0].mxu0
    %7846 = vmatprep.mubr.f32.mxu0 0.0
    %7847 = vmatmul.mubr.f32.gmra.mrb[0].mxu0 %v7756
    %v7848 = vpop.f32.mrb[0].mxu0
    %v7849 = vadd.f32 0.0, %v7848
    %v7850 = vpop.f32.mrb[0].mxu0
    %7851 = vmatprep.mubr.f32.mxu0 0.0
    %7852 = vmatmul.mubr.f32.gmra.mrb[0].mxu0 %v7759
    %v7853 = vpop.f32.mrb[0].mxu0
    %v7854 = vadd.f32 0.0, %v7853
    %v7855 = vpop.f32.mrb[0].mxu0
    %7856 = vmatprep.mubr.f32.mxu0 0.0
    %7857 = vmatmul.mubr.f32.gmra.mrb[0].mxu0 %v7762
    %v7858 = vpop.f32.mrb[0].mxu0
    %v7859 = vadd.f32 0.0, %v7858
    %v7860 = vpop.f32.mrb[0].mxu0
    %7861 = vmatprep.mubr.f32.mxu0 0.0
    %7862 = vmatmul.mubr.f32.gmra.mrb[0].mxu0 %v7765
    %v7863 = vpop.f32.mrb[0].mxu0
    %v7864 = vadd.f32 0.0, %v7863
    %v7865 = vpop.f32.mrb[0].mxu0
    %7866 = vdwg.mxu0
    %v7867 = vrsqrt.pop %v7834
    %v7868 = vmul.f32 %v7834, %v7867
    %vm7869 = vcmp.eq.f32.partialorder %v7834, inf
    %v7870 = vsel %vm7869, %v7834, %v7868
    %vm7871 = vcmp.eq.f32.partialorder %v7834, 0.0
    %v7872 = vand.u32 %v7834, 2147483648
    %v7873 = vsel %vm7871, %v7872, %v7870
    %v7874 = vrsqrt.pop %v7839
    %v7875 = vmul.f32 %v7839, %v7874
    %vm7876 = vcmp.eq.f32.partialorder %v7839, inf
    %v7877 = vsel %vm7876, %v7839, %v7875
    %vm7878 = vcmp.eq.f32.partialorder %v7839, 0.0
    %v7879 = vand.u32 %v7839, 2147483648
    %v7880 = vsel %vm7878, %v7879, %v7877
    %v7881 = vrsqrt.pop %v7844
    %v7882 = vmul.f32 %v7844, %v7881
    %vm7883 = vcmp.eq.f32.partialorder %v7844, inf
    %v7884 = vsel %vm7883, %v7844, %v7882
    %vm7885 = vcmp.eq.f32.partialorder %v7844, 0.0
    %v7886 = vand.u32 %v7844, 2147483648
    %v7887 = vsel %vm7885, %v7886, %v7884
    %v7888 = vrsqrt.pop %v7849
    %v7889 = vmul.f32 %v7849, %v7888
    %vm7890 = vcmp.eq.f32.partialorder %v7849, inf
    %v7891 = vsel %vm7890, %v7849, %v7889
    %vm7892 = vcmp.eq.f32.partialorder %v7849, 0.0
    %v7893 = vand.u32 %v7849, 2147483648
    %v7894 = vsel %vm7892, %v7893, %v7891
    %v7895 = vrsqrt.pop %v7854
    %v7896 = vmul.f32 %v7854, %v7895
    %vm7897 = vcmp.eq.f32.partialorder %v7854, inf
    %v7898 = vsel %vm7897, %v7854, %v7896
    %vm7899 = vcmp.eq.f32.partialorder %v7854, 0.0
    %v7900 = vand.u32 %v7854, 2147483648
    %v7901 = vsel %vm7899, %v7900, %v7898
    %v7902 = vrsqrt.pop %v7859
    %v7903 = vmul.f32 %v7859, %v7902
    %vm7904 = vcmp.eq.f32.partialorder %v7859, inf
    %v7905 = vsel %vm7904, %v7859, %v7903
    %vm7906 = vcmp.eq.f32.partialorder %v7859, 0.0
    %v7907 = vand.u32 %v7859, 2147483648
    %v7908 = vsel %vm7906, %v7907, %v7905
    %v7909 = vrsqrt.pop %v7864
    %v7910 = vmul.f32 %v7864, %v7909
    %vm7911 = vcmp.eq.f32.partialorder %v7864, inf
    %v7912 = vsel %vm7911, %v7864, %v7910
    %vm7913 = vcmp.eq.f32.partialorder %v7864, 0.0
    %v7914 = vand.u32 %v7864, 2147483648
    %v7915 = vsel %vm7913, %v7914, %v7912
    %vm7916 = vcmask 64512
    %v7917 = vsel %vm7916, %v7873, 0.0
    %v7918 = vsel %vm7916, %v7880, 0.0
    %v7919 = vadd.f32 %v7917, %v7918
    %v7920 = vsel %vm7916, %v7887, 0.0
    %v7921 = vadd.f32 %v7919, %v7920
    %v7922 = vsel %vm7916, %v7894, 0.0
    %v7923 = vadd.f32 %v7921, %v7922
    %v7924 = vsel %vm7916, %v7901, 0.0
    %v7925 = vadd.f32 %v7923, %v7924
    %v7926 = vsel %vm7916, %v7908, 0.0
    %v7927 = vadd.f32 %v7925, %v7926
    %v7928 = vsel %vm7916, %v7915, 0.0
    %v7929 = vadd.f32 %v7927, %v7928
    %7930 = vadd.xlane.f32.xlu0 %v7929
    %v7931 = vpop.xlane.xlu0 %7930
    %v7932 = vrot.slane %v7931, 4
    %v7933 = vadd.f32 %v7931, %v7932
    %v7934 = vrot.slane %v7933, 2
    %v7935 = vadd.f32 %v7933, %v7934
    %v7936 = vrot.slane %v7935, 1
    %v7937 = vadd.f32 %v7935, %v7936
    %s7938 = vtos %v7937
    %v7939 = vrcp.pop 64.0
    %s7940 = vtos %v7939
    %s7941 = smul.f32 %s7938, %s7940
    %s7942 = sadd.f32 %s7941, 0.0
    %v7943 = vld [vmem:[#allocation16] sm:$0xff]
    %v7944 = vld [vmem:[#allocation16 + $0x8] sm:$0xff]
    %v7945 = vld [vmem:[#allocation16 + $0x10] sm:$0xff]
    %v7946 = vld [vmem:[#allocation16 + $0x18] sm:$0xff]
    %v7947 = vld [vmem:[#allocation18] sm:$0xff]
    %v7948 = vld [vmem:[#allocation18 + $0x8] sm:$0xff]
    %v7949 = vld [vmem:[#allocation18 + $0x10] sm:$0xff]
    %v7950 = vld [vmem:[#allocation18 + $0x18] sm:$0xff]
    %v7951 = vld [vmem:[#allocation19] sm:$0x1]
    %v7952 = vld [vmem:[%s16] sm:$0xff]
    %v7953 = vld [vmem:[%s16 + $0x8] sm:$0xff]
    %v7954 = vld [vmem:[%s16 + $0x10] sm:$0xff]
    %v7955 = vld [vmem:[%s16 + $0x18] sm:$0xff]
    %v7956 = vld [vmem:[%s16 + $0x20] sm:$0xff]
    %v7957 = vld [vmem:[%s16 + $0x28] sm:$0xff]
    %v7958 = vld [vmem:[%s16 + $0x30] sm:$0xff]
    %v7959 = vld [vmem:[%s16 + $0x38] sm:$0xff]
    %v7960 = vld [vmem:[%s17] sm:$0x1]
    %v7961 = vld [vmem:[#allocation2] sm:$0xff]
    %v7962 = vld [vmem:[#allocation2 + $0x8] sm:$0xff]
    %v7963 = vld [vmem:[#allocation2 + $0x10] sm:$0xff]
    %v7964 = vld [vmem:[#allocation2 + $0x18] sm:$0xff]
    %v7965 = vld [vmem:[#allocation2 + $0x20] sm:$0xff]
    %v7966 = vld [vmem:[%s4236] sm:$0xff]
    %v7967 = vld [vmem:[%s4236 + $0x8] sm:$0xff]
    %v7968 = vld [vmem:[%s4236 + $0x10] sm:$0xff]
    %v7969 = vld [vmem:[%s4236 + $0x18] sm:$0xff]
    %v7970 = vld [vmem:[%s4236 + $0x20] sm:$0xff]
    %v7971 = vld [vmem:[%s2226] sm:$0xff]
    %v7972 = vld [vmem:[%s2226 + $0x8] sm:$0xff]
    %v7973 = vld [vmem:[%s2226 + $0x10] sm:$0xff]
    %v7974 = vld [vmem:[%s2226 + $0x18] sm:$0xff]
    %v7975 = vld [vmem:[%s2226 + $0x20] sm:$0xff]
    %v7977 = vsel %vm200, %v7966, 0
    %v7980 = vsel %vm200, %v7967, 0
    %v7983 = vsel %vm200, %v7968, 0
    %v7986 = vsel %vm200, %v7969, 0
    %v7989 = vsel %vm200, %v7970, 0
    %7991 = vmatprep.subr.mxu0 0.0
    %7992 = vmatpush1.msra.mxu0 %v7947
    %7993 = vmatprep.subr.mxu0 0.0
    %7994 = vmatpush1.msra.mxu0 %v7948
    %7995 = vmatprep.subr.mxu0 0.0
    %7996 = vmatpush1.msra.mxu0 %v7949
    %7997 = vmatprep.subr.mxu0 0.0
    %7998 = vmatpush1.msra.mxu0 %v7950
    %7999 = vmatprep.subr.mxu0 0.0
    %8000 = vmatpush1.msra.mxu0 0.0
    %8001 = vmatprep.subr.mxu0 0.0
    %8002 = vmatpush1.msra.mxu0 0.0
    %8003 = vmatprep.subr.mxu0 0.0
    %8004 = vmatpush1.msra.mxu0 0.0
    %8005 = vmatprep.subr.mxu0 0.0
    %8006 = vmatpush1.msra.mxu0 0.0
    %8007 = vmatprep.subr.mxu0 0.0
    %8008 = vmatpush1.msra.mxu0 0.0
    %8009 = vmatprep.subr.mxu0 0.0
    %8010 = vmatpush1.msra.mxu0 0.0
    %8011 = vmatprep.subr.mxu0 0.0
    %8012 = vmatpush1.msra.mxu0 0.0
    %8013 = vmatprep.subr.mxu0 0.0
    %8014 = vmatpush1.msra.mxu0 0.0
    %8015 = vmatprep.subr.mxu0 0.0
    %8016 = vmatpush1.msra.mxu0 0.0
    %8017 = vmatprep.subr.mxu0 0.0
    %8018 = vmatpush1.msra.mxu0 0.0
    %8019 = vmatprep.subr.mxu0 0.0
    %8020 = vmatpush1.msra.mxu0 0.0
    %8021 = vmatprep.subr.mxu0 0.0
    %8022 = vmatpush1.msra.mxu0 0.0
    %8023 = vmatprep.subr.mxu0 0.0
    %8024 = vmatpush1.msra.mxu0 0.0
    %8025 = vmatprep.subr.mxu0 0.0
    %8026 = vmatpush1.msra.mxu0 0.0
    %8027 = vmatprep.subr.mxu0 0.0
    %8028 = vmatpush1.msra.mxu0 0.0
    %8029 = vmatprep.subr.mxu0 0.0
    %8030 = vmatpush1.msra.mxu0 0.0
    %8031 = vmatprep.subr.mxu0 0.0
    %8032 = vmatpush1.msra.mxu0 0.0
    %8033 = vmatprep.subr.mxu0 0.0
    %8034 = vmatpush1.msra.mxu0 0.0
    %8035 = vmatprep.subr.mxu0 0.0
    %8036 = vmatpush1.msra.mxu0 0.0
    %8037 = vmatprep.subr.mxu0 0.0
    %8038 = vmatpush1.msra.mxu0 0.0
    %8039 = vmatprep.subr.mxu0 0.0
    %8040 = vmatpush1.msra.mxu0 0.0
    %8041 = vmatprep.subr.mxu0 0.0
    %8042 = vmatpush1.msra.mxu0 0.0
    %8043 = vmatprep.subr.mxu0 0.0
    %8044 = vmatpush1.msra.mxu0 0.0
    %8045 = vmatprep.subr.mxu0 0.0
    %8046 = vmatpush1.msra.mxu0 0.0
    %8047 = vmatprep.subr.mxu0 0.0
    %8048 = vmatpush1.msra.mxu0 0.0
    %8049 = vmatprep.subr.mxu0 0.0
    %8050 = vmatpush1.msra.mxu0 0.0
    %8051 = vmatprep.subr.mxu0 0.0
    %8052 = vmatpush1.msra.mxu0 0.0
    %8053 = vmatprep.subr.mxu0 0.0
    %8054 = vmatpush1.msra.mxu0 0.0
    %8055 = vmatprep.mubr.f32.mxu0 0.0
    %8056 = vmatmul.mubr.f32.gmra.mrb[0].mxu0 %v7977
    %v8057 = vpop.f32.mrb[0].mxu0
    %v8058 = vadd.f32 0.0, %v8057
    %v8059 = vpop.f32.mrb[0].mxu0
    %8060 = vmatprep.mubr.f32.mxu0 0.0
    %8061 = vmatmul.mubr.f32.gmra.mrb[0].mxu0 %v7980
    %v8062 = vpop.f32.mrb[0].mxu0
    %v8063 = vadd.f32 0.0, %v8062
    %v8064 = vpop.f32.mrb[0].mxu0
    %8065 = vmatprep.mubr.f32.mxu0 0.0
    %8066 = vmatmul.mubr.f32.gmra.mrb[0].mxu0 %v7983
    %v8067 = vpop.f32.mrb[0].mxu0
    %v8068 = vadd.f32 0.0, %v8067
    %v8069 = vpop.f32.mrb[0].mxu0
    %8070 = vmatprep.mubr.f32.mxu0 0.0
    %8071 = vmatmul.mubr.f32.gmra.mrb[0].mxu0 %v7986
    %v8072 = vpop.f32.mrb[0].mxu0
    %v8073 = vadd.f32 0.0, %v8072
    %v8074 = vpop.f32.mrb[0].mxu0
    %8075 = vmatprep.mubr.f32.mxu0 0.0
    %8076 = vmatmul.mubr.f32.gmra.mrb[0].mxu0 %v7989
    %v8077 = vpop.f32.mrb[0].mxu0
    %v8078 = vadd.f32 0.0, %v8077
    %v8079 = vpop.f32.mrb[0].mxu0
    %8080 = vdwg.mxu0
    %v8082 = vsel %vm200, %v7961, 0
    %v8085 = vsel %vm200, %v7962, 0
    %v8088 = vsel %vm200, %v7963, 0
    %v8091 = vsel %vm200, %v7964, 0
    %v8094 = vsel %vm200, %v7965, 0
    %8096 = vmatprep.subr.mxu0 0.0
    %8097 = vmatpush1.msra.mxu0 %v7943
    %8098 = vmatprep.subr.mxu0 0.0
    %8099 = vmatpush1.msra.mxu0 %v7944
    %8100 = vmatprep.subr.mxu0 0.0
    %8101 = vmatpush1.msra.mxu0 %v7945
    %8102 = vmatprep.subr.mxu0 0.0
    %8103 = vmatpush1.msra.mxu0 %v7946
    %8104 = vmatprep.subr.mxu0 0.0
    %8105 = vmatpush1.msra.mxu0 0.0
    %8106 = vmatprep.subr.mxu0 0.0
    %8107 = vmatpush1.msra.mxu0 0.0
    %8108 = vmatprep.subr.mxu0 0.0
    %8109 = vmatpush1.msra.mxu0 0.0
    %8110 = vmatprep.subr.mxu0 0.0
    %8111 = vmatpush1.msra.mxu0 0.0
    %8112 = vmatprep.subr.mxu0 0.0
    %8113 = vmatpush1.msra.mxu0 0.0
    %8114 = vmatprep.subr.mxu0 0.0
    %8115 = vmatpush1.msra.mxu0 0.0
    %8116 = vmatprep.subr.mxu0 0.0
    %8117 = vmatpush1.msra.mxu0 0.0
    %8118 = vmatprep.subr.mxu0 0.0
    %8119 = vmatpush1.msra.mxu0 0.0
    %8120 = vmatprep.subr.mxu0 0.0
    %8121 = vmatpush1.msra.mxu0 0.0
    %8122 = vmatprep.subr.mxu0 0.0
    %8123 = vmatpush1.msra.mxu0 0.0
    %8124 = vmatprep.subr.mxu0 0.0
    %8125 = vmatpush1.msra.mxu0 0.0
    %8126 = vmatprep.subr.mxu0 0.0
    %8127 = vmatpush1.msra.mxu0 0.0
    %8128 = vmatprep.subr.mxu0 0.0
    %8129 = vmatpush1.msra.mxu0 0.0
    %8130 = vmatprep.subr.mxu0 0.0
    %8131 = vmatpush1.msra.mxu0 0.0
    %8132 = vmatprep.subr.mxu0 0.0
    %8133 = vmatpush1.msra.mxu0 0.0
    %8134 = vmatprep.subr.mxu0 0.0
    %8135 = vmatpush1.msra.mxu0 0.0
    %8136 = vmatprep.subr.mxu0 0.0
    %8137 = vmatpush1.msra.mxu0 0.0
    %8138 = vmatprep.subr.mxu0 0.0
    %8139 = vmatpush1.msra.mxu0 0.0
    %8140 = vmatprep.subr.mxu0 0.0
    %8141 = vmatpush1.msra.mxu0 0.0
    %8142 = vmatprep.subr.mxu0 0.0
    %8143 = vmatpush1.msra.mxu0 0.0
    %8144 = vmatprep.subr.mxu0 0.0
    %8145 = vmatpush1.msra.mxu0 0.0
    %8146 = vmatprep.subr.mxu0 0.0
    %8147 = vmatpush1.msra.mxu0 0.0
    %8148 = vmatprep.subr.mxu0 0.0
    %8149 = vmatpush1.msra.mxu0 0.0
    %8150 = vmatprep.subr.mxu0 0.0
    %8151 = vmatpush1.msra.mxu0 0.0
    %8152 = vmatprep.subr.mxu0 0.0
    %8153 = vmatpush1.msra.mxu0 0.0
    %8154 = vmatprep.subr.mxu0 0.0
    %8155 = vmatpush1.msra.mxu0 0.0
    %8156 = vmatprep.subr.mxu0 0.0
    %8157 = vmatpush1.msra.mxu0 0.0
    %8158 = vmatprep.subr.mxu0 0.0
    %8159 = vmatpush1.msra.mxu0 0.0
    %8160 = vmatprep.mubr.f32.mxu0 0.0
    %8161 = vmatmul.mubr.f32.gmra.mrb[0].mxu0 %v8082
    %v8162 = vpop.f32.mrb[0].mxu0
    %v8163 = vadd.f32 %v8058, %v8162
    %v8164 = vpop.f32.mrb[0].mxu0
    %8165 = vmatprep.mubr.f32.mxu0 0.0
    %8166 = vmatmul.mubr.f32.gmra.mrb[0].mxu0 %v8085
    %v8167 = vpop.f32.mrb[0].mxu0
    %v8168 = vadd.f32 %v8063, %v8167
    %v8169 = vpop.f32.mrb[0].mxu0
    %8170 = vmatprep.mubr.f32.mxu0 0.0
    %8171 = vmatmul.mubr.f32.gmra.mrb[0].mxu0 %v8088
    %v8172 = vpop.f32.mrb[0].mxu0
    %v8173 = vadd.f32 %v8068, %v8172
    %v8174 = vpop.f32.mrb[0].mxu0
    %8175 = vmatprep.mubr.f32.mxu0 0.0
    %8176 = vmatmul.mubr.f32.gmra.mrb[0].mxu0 %v8091
    %v8177 = vpop.f32.mrb[0].mxu0
    %v8178 = vadd.f32 %v8073, %v8177
    %v8179 = vpop.f32.mrb[0].mxu0
    %8180 = vmatprep.mubr.f32.mxu0 0.0
    %8181 = vmatmul.mubr.f32.gmra.mrb[0].mxu0 %v8094
    %v8182 = vpop.f32.mrb[0].mxu0
    %v8183 = vadd.f32 %v8078, %v8182
    %v8184 = vpop.f32.mrb[0].mxu0
    %8185 = vdwg.mxu0
    %v8187 = vlaneseq
    %v8188 = vshrl.u32 %v8187, 7
    %v8189 = vsub.s32 0, %v8188
    %v8190 = vrot.slane %v7951, %v8189
    %v8192 = vadd.f32 %v8163, %v8190
    %v8193 = vadd.f32 %v8168, %v8190
    %v8194 = vadd.f32 %v8173, %v8190
    %v8195 = vadd.f32 %v8178, %v8190
    %v8196 = vadd.f32 %v8183, %v8190
    %v8197 = vmax.f32 %v8192, 0.0
    %v8198 = vmax.f32 %v8193, 0.0
    %v8199 = vmax.f32 %v8194, 0.0
    %v8200 = vmax.f32 %v8195, 0.0
    %v8201 = vmax.f32 %v8196, 0.0
    %v8203 = vlaneseq
    %v8204 = vshrl.u32 %v8203, 7
    %v8205 = vsub.s32 0, %v8204
    %v8206 = vrot.slane %v7960, %v8205
    %vm8208 = vcmask 523264
    %v8210 = vsel %vm8208, %v8197, 0
    %v8213 = vsel %vm8208, %v8198, 0
    %v8216 = vsel %vm8208, %v8199, 0
    %v8219 = vsel %vm8208, %v8200, 0
    %v8222 = vsel %vm8208, %v8201, 0
    %8224 = vmatprep.subr.mxu0 0.0
    %8225 = vmatpush1.msra.mxu0 %v7952
    %8226 = vmatprep.subr.mxu0 0.0
    %8227 = vmatpush1.msra.mxu0 %v7953
    %8228 = vmatprep.subr.mxu0 0.0
    %8229 = vmatpush1.msra.mxu0 %v7954
    %8230 = vmatprep.subr.mxu0 0.0
    %8231 = vmatpush1.msra.mxu0 %v7955
    %8232 = vmatprep.subr.mxu0 0.0
    %8233 = vmatpush1.msra.mxu0 %v7956
    %8234 = vmatprep.subr.mxu0 0.0
    %8235 = vmatpush1.msra.mxu0 %v7957
    %8236 = vmatprep.subr.mxu0 0.0
    %8237 = vmatpush1.msra.mxu0 %v7958
    %8238 = vmatprep.subr.mxu0 0.0
    %8239 = vmatpush1.msra.mxu0 %v7959
    %8240 = vmatprep.subr.mxu0 0.0
    %8241 = vmatpush1.msra.mxu0 0.0
    %8242 = vmatprep.subr.mxu0 0.0
    %8243 = vmatpush1.msra.mxu0 0.0
    %8244 = vmatprep.subr.mxu0 0.0
    %8245 = vmatpush1.msra.mxu0 0.0
    %8246 = vmatprep.subr.mxu0 0.0
    %8247 = vmatpush1.msra.mxu0 0.0
    %8248 = vmatprep.subr.mxu0 0.0
    %8249 = vmatpush1.msra.mxu0 0.0
    %8250 = vmatprep.subr.mxu0 0.0
    %8251 = vmatpush1.msra.mxu0 0.0
    %8252 = vmatprep.subr.mxu0 0.0
    %8253 = vmatpush1.msra.mxu0 0.0
    %8254 = vmatprep.subr.mxu0 0.0
    %8255 = vmatpush1.msra.mxu0 0.0
    %8256 = vmatprep.subr.mxu0 0.0
    %8257 = vmatpush1.msra.mxu0 0.0
    %8258 = vmatprep.subr.mxu0 0.0
    %8259 = vmatpush1.msra.mxu0 0.0
    %8260 = vmatprep.subr.mxu0 0.0
    %8261 = vmatpush1.msra.mxu0 0.0
    %8262 = vmatprep.subr.mxu0 0.0
    %8263 = vmatpush1.msra.mxu0 0.0
    %8264 = vmatprep.subr.mxu0 0.0
    %8265 = vmatpush1.msra.mxu0 0.0
    %8266 = vmatprep.subr.mxu0 0.0
    %8267 = vmatpush1.msra.mxu0 0.0
    %8268 = vmatprep.subr.mxu0 0.0
    %8269 = vmatpush1.msra.mxu0 0.0
    %8270 = vmatprep.subr.mxu0 0.0
    %8271 = vmatpush1.msra.mxu0 0.0
    %8272 = vmatprep.subr.mxu0 0.0
    %8273 = vmatpush1.msra.mxu0 0.0
    %8274 = vmatprep.subr.mxu0 0.0
    %8275 = vmatpush1.msra.mxu0 0.0
    %8276 = vmatprep.subr.mxu0 0.0
    %8277 = vmatpush1.msra.mxu0 0.0
    %8278 = vmatprep.subr.mxu0 0.0
    %8279 = vmatpush1.msra.mxu0 0.0
    %8280 = vmatprep.subr.mxu0 0.0
    %8281 = vmatpush1.msra.mxu0 0.0
    %8282 = vmatprep.subr.mxu0 0.0
    %8283 = vmatpush1.msra.mxu0 0.0
    %8284 = vmatprep.subr.mxu0 0.0
    %8285 = vmatpush1.msra.mxu0 0.0
    %8286 = vmatprep.subr.mxu0 0.0
    %8287 = vmatpush1.msra.mxu0 0.0
    %8288 = vmatprep.mubr.f32.mxu0 0.0
    %8289 = vmatmul.mubr.f32.gmra.mrb[0].mxu0 %v8210
    %v8290 = vpop.f32.mrb[0].mxu0
    %v8291 = vadd.f32 %v8206, %v8290
    %v8292 = vpop.f32.mrb[0].mxu0
    %8293 = vmatprep.mubr.f32.mxu0 0.0
    %8294 = vmatmul.mubr.f32.gmra.mrb[0].mxu0 %v8213
    %v8295 = vpop.f32.mrb[0].mxu0
    %v8296 = vadd.f32 %v8206, %v8295
    %v8297 = vpop.f32.mrb[0].mxu0
    %8298 = vmatprep.mubr.f32.mxu0 0.0
    %8299 = vmatmul.mubr.f32.gmra.mrb[0].mxu0 %v8216
    %v8300 = vpop.f32.mrb[0].mxu0
    %v8301 = vadd.f32 %v8206, %v8300
    %v8302 = vpop.f32.mrb[0].mxu0
    %8303 = vmatprep.mubr.f32.mxu0 0.0
    %8304 = vmatmul.mubr.f32.gmra.mrb[0].mxu0 %v8219
    %v8305 = vpop.f32.mrb[0].mxu0
    %v8306 = vadd.f32 %v8206, %v8305
    %v8307 = vpop.f32.mrb[0].mxu0
    %8308 = vmatprep.mubr.f32.mxu0 0.0
    %8309 = vmatmul.mubr.f32.gmra.mrb[0].mxu0 %v8222
    %v8310 = vpop.f32.mrb[0].mxu0
    %v8311 = vadd.f32 %v8206, %v8310
    %v8312 = vpop.f32.mrb[0].mxu0
    %8313 = vdwg.mxu0
    %v8314 = vsub.f32 %v8291, %v7971
    %v8315 = vsub.f32 %v8296, %v7972
    %v8316 = vsub.f32 %v8301, %v7973
    %v8317 = vsub.f32 %v8306, %v7974
    %v8318 = vsub.f32 %v8311, %v7975
    %v8319 = vand.u32 2147483647, %v8314
    %v8320 = vand.u32 2147483647, %v8315
    %v8321 = vand.u32 2147483647, %v8316
    %v8322 = vand.u32 2147483647, %v8317
    %v8323 = vand.u32 2147483647, %v8318
    %v8324 = vsel %vm282, %v8319, 0.0
    %v8325 = vsel %vm282, %v8320, 0.0
    %v8326 = vadd.f32 %v8324, %v8325
    %v8327 = vsel %vm282, %v8321, 0.0
    %v8328 = vadd.f32 %v8326, %v8327
    %v8329 = vsel %vm282, %v8322, 0.0
    %v8330 = vadd.f32 %v8328, %v8329
    %v8331 = vsel %vm282, %v8323, 0.0
    %v8332 = vadd.f32 %v8330, %v8331
    %8333 = vadd.xlane.f32.xlu0 %v8332
    %v8334 = vpop.xlane.xlu0 %8333
    %v8335 = vrot.slane %v8334, 4
    %v8336 = vadd.f32 %v8334, %v8335
    %v8337 = vrot.slane %v8336, 2
    %v8338 = vadd.f32 %v8336, %v8337
    %v8339 = vrot.slane %v8338, 1
    %v8340 = vadd.f32 %v8338, %v8339
    %s8341 = vtos %v8340
    %v8342 = vrcp.pop 128.0
    %s8343 = vtos %v8342
    %s8344 = smul.f32 %s8341, %s8343
    %s8345 = sadd.f32 %s7725, %s8344
    %v8346 = vmul.f32 %v8314, %v7730
    %v8347 = vmul.f32 %v8315, %v7730
    %v8348 = vmul.f32 %v8316, %v7730
    %v8349 = vmul.f32 %v8317, %v7730
    %v8350 = vmul.f32 %v8318, %v7730
    %v8351 = vmul.f32 %v8346, %v8346
    %v8352 = vmul.f32 %v8347, %v8347
    %v8353 = vmul.f32 %v8348, %v8348
    %v8354 = vmul.f32 %v8349, %v8349
    %v8355 = vmul.f32 %v8350, %v8350
    %v8357 = vsel %vm282, %v8351, 0
    %v8360 = vsel %vm282, %v8352, 0
    %v8363 = vsel %vm282, %v8353, 0
    %v8366 = vsel %vm282, %v8354, 0
    %v8369 = vsel %vm282, %v8355, 0
    %8371 = vmatprep.subr.mxu0 0.0
    %8372 = vmatpush1.msra.mxu0 %v7257
    %8373 = vmatprep.subr.mxu0 0.0
    %8374 = vmatpush1.msra.mxu0 %v7258
    %8375 = vmatprep.subr.mxu0 0.0
    %8376 = vmatpush1.msra.mxu0 0.0
    %8377 = vmatprep.subr.mxu0 0.0
    %8378 = vmatpush1.msra.mxu0 0.0
    %8379 = vmatprep.subr.mxu0 0.0
    %8380 = vmatpush1.msra.mxu0 0.0
    %8381 = vmatprep.subr.mxu0 0.0
    %8382 = vmatpush1.msra.mxu0 0.0
    %8383 = vmatprep.subr.mxu0 0.0
    %8384 = vmatpush1.msra.mxu0 0.0
    %8385 = vmatprep.subr.mxu0 0.0
    %8386 = vmatpush1.msra.mxu0 0.0
    %8387 = vmatprep.subr.mxu0 0.0
    %8388 = vmatpush1.msra.mxu0 0.0
    %8389 = vmatprep.subr.mxu0 0.0
    %8390 = vmatpush1.msra.mxu0 0.0
    %8391 = vmatprep.subr.mxu0 0.0
    %8392 = vmatpush1.msra.mxu0 0.0
    %8393 = vmatprep.subr.mxu0 0.0
    %8394 = vmatpush1.msra.mxu0 0.0
    %8395 = vmatprep.subr.mxu0 0.0
    %8396 = vmatpush1.msra.mxu0 0.0
    %8397 = vmatprep.subr.mxu0 0.0
    %8398 = vmatpush1.msra.mxu0 0.0
    %8399 = vmatprep.subr.mxu0 0.0
    %8400 = vmatpush1.msra.mxu0 0.0
    %8401 = vmatprep.subr.mxu0 0.0
    %8402 = vmatpush1.msra.mxu0 0.0
    %8403 = vmatprep.subr.mxu0 0.0
    %8404 = vmatpush1.msra.mxu0 0.0
    %8405 = vmatprep.subr.mxu0 0.0
    %8406 = vmatpush1.msra.mxu0 0.0
    %8407 = vmatprep.subr.mxu0 0.0
    %8408 = vmatpush1.msra.mxu0 0.0
    %8409 = vmatprep.subr.mxu0 0.0
    %8410 = vmatpush1.msra.mxu0 0.0
    %8411 = vmatprep.subr.mxu0 0.0
    %8412 = vmatpush1.msra.mxu0 0.0
    %8413 = vmatprep.subr.mxu0 0.0
    %8414 = vmatpush1.msra.mxu0 0.0
    %8415 = vmatprep.subr.mxu0 0.0
    %8416 = vmatpush1.msra.mxu0 0.0
    %8417 = vmatprep.subr.mxu0 0.0
    %8418 = vmatpush1.msra.mxu0 0.0
    %8419 = vmatprep.subr.mxu0 0.0
    %8420 = vmatpush1.msra.mxu0 0.0
    %8421 = vmatprep.subr.mxu0 0.0
    %8422 = vmatpush1.msra.mxu0 0.0
    %8423 = vmatprep.subr.mxu0 0.0
    %8424 = vmatpush1.msra.mxu0 0.0
    %8425 = vmatprep.subr.mxu0 0.0
    %8426 = vmatpush1.msra.mxu0 0.0
    %8427 = vmatprep.subr.mxu0 0.0
    %8428 = vmatpush1.msra.mxu0 0.0
    %8429 = vmatprep.subr.mxu0 0.0
    %8430 = vmatpush1.msra.mxu0 0.0
    %8431 = vmatprep.subr.mxu0 0.0
    %8432 = vmatpush1.msra.mxu0 0.0
    %8433 = vmatprep.subr.mxu0 0.0
    %8434 = vmatpush1.msra.mxu0 0.0
    %8435 = vmatprep.mubr.f32.mxu0 0.0
    %8436 = vmatmul.mubr.f32.gmra.mrb[0].mxu0 %v8357
    %v8437 = vpop.f32.mrb[0].mxu0
    %v8438 = vadd.f32 0.0, %v8437
    %v8439 = vpop.f32.mrb[0].mxu0
    %8440 = vmatprep.mubr.f32.mxu0 0.0
    %8441 = vmatmul.mubr.f32.gmra.mrb[0].mxu0 %v8360
    %v8442 = vpop.f32.mrb[0].mxu0
    %v8443 = vadd.f32 0.0, %v8442
    %v8444 = vpop.f32.mrb[0].mxu0
    %8445 = vmatprep.mubr.f32.mxu0 0.0
    %8446 = vmatmul.mubr.f32.gmra.mrb[0].mxu0 %v8363
    %v8447 = vpop.f32.mrb[0].mxu0
    %v8448 = vadd.f32 0.0, %v8447
    %v8449 = vpop.f32.mrb[0].mxu0
    %8450 = vmatprep.mubr.f32.mxu0 0.0
    %8451 = vmatmul.mubr.f32.gmra.mrb[0].mxu0 %v8366
    %v8452 = vpop.f32.mrb[0].mxu0
    %v8453 = vadd.f32 0.0, %v8452
    %v8454 = vpop.f32.mrb[0].mxu0
    %8455 = vmatprep.mubr.f32.mxu0 0.0
    %8456 = vmatmul.mubr.f32.gmra.mrb[0].mxu0 %v8369
    %v8457 = vpop.f32.mrb[0].mxu0
    %v8458 = vadd.f32 0.0, %v8457
    %v8459 = vpop.f32.mrb[0].mxu0
    %8460 = vdwg.mxu0
    %v8461 = vrsqrt.pop %v8438
    %v8462 = vmul.f32 %v8438, %v8461
    %vm8463 = vcmp.eq.f32.partialorder %v8438, inf
    %v8464 = vsel %vm8463, %v8438, %v8462
    %vm8465 = vcmp.eq.f32.partialorder %v8438, 0.0
    %v8466 = vand.u32 %v8438, 2147483648
    %v8467 = vsel %vm8465, %v8466, %v8464
    %v8468 = vrsqrt.pop %v8443
    %v8469 = vmul.f32 %v8443, %v8468
    %vm8470 = vcmp.eq.f32.partialorder %v8443, inf
    %v8471 = vsel %vm8470, %v8443, %v8469
    %vm8472 = vcmp.eq.f32.partialorder %v8443, 0.0
    %v8473 = vand.u32 %v8443, 2147483648
    %v8474 = vsel %vm8472, %v8473, %v8471
    %v8475 = vrsqrt.pop %v8448
    %v8476 = vmul.f32 %v8448, %v8475
    %vm8477 = vcmp.eq.f32.partialorder %v8448, inf
    %v8478 = vsel %vm8477, %v8448, %v8476
    %vm8479 = vcmp.eq.f32.partialorder %v8448, 0.0
    %v8480 = vand.u32 %v8448, 2147483648
    %v8481 = vsel %vm8479, %v8480, %v8478
    %v8482 = vrsqrt.pop %v8453
    %v8483 = vmul.f32 %v8453, %v8482
    %vm8484 = vcmp.eq.f32.partialorder %v8453, inf
    %v8485 = vsel %vm8484, %v8453, %v8483
    %vm8486 = vcmp.eq.f32.partialorder %v8453, 0.0
    %v8487 = vand.u32 %v8453, 2147483648
    %v8488 = vsel %vm8486, %v8487, %v8485
    %v8489 = vrsqrt.pop %v8458
    %v8490 = vmul.f32 %v8458, %v8489
    %vm8491 = vcmp.eq.f32.partialorder %v8458, inf
    %v8492 = vsel %vm8491, %v8458, %v8490
    %vm8493 = vcmp.eq.f32.partialorder %v8458, 0.0
    %v8494 = vand.u32 %v8458, 2147483648
    %v8495 = vsel %vm8493, %v8494, %v8492
    %v8496 = vsel %vm7916, %v8467, 0.0
    %v8497 = vsel %vm7916, %v8474, 0.0
    %v8498 = vadd.f32 %v8496, %v8497
    %v8499 = vsel %vm7916, %v8481, 0.0
    %v8500 = vadd.f32 %v8498, %v8499
    %v8501 = vsel %vm7916, %v8488, 0.0
    %v8502 = vadd.f32 %v8500, %v8501
    %v8503 = vsel %vm7916, %v8495, 0.0
    %v8504 = vadd.f32 %v8502, %v8503
    %8505 = vadd.xlane.f32.xlu0 %v8504
    %v8506 = vpop.xlane.xlu0 %8505
    %v8507 = vrot.slane %v8506, 4
    %v8508 = vadd.f32 %v8506, %v8507
    %v8509 = vrot.slane %v8508, 2
    %v8510 = vadd.f32 %v8508, %v8509
    %v8511 = vrot.slane %v8510, 1
    %v8512 = vadd.f32 %v8510, %v8511
    %s8513 = vtos %v8512
    %v8514 = vrcp.pop 64.0
    %s8515 = vtos %v8514
    %s8516 = smul.f32 %s8513, %s8515
    %s8517 = sadd.f32 %s7942, %s8516
    %v8518 = vrcp.pop 64.0
    %s8519 = vtos %v8518
    %s8520 = smul.f32 %s8345, %s8519
    %s8521 = scalar_lea.smem [#allocation21], 0
    %8522 = sst [smem:[%s8521]] %s8520
    %v8523 = vrcp.pop 12.0
    %s8524 = vtos %v8523
    %s8525 = smul.f32 %s8517, %s8524
    %s8526 = scalar_lea.smem [#allocation22], 0
    %8527 = sst [smem:[%s8526]] %s8525
    // Predicated region
    $region122: #{tpu_custom_call.1} parent=1 // pred_check
      _
    $region123: #{tpu_custom_call.1} parent=1 // pred_check_branch
      %8529 = sbr.rel (0) target = $region125
    $region124: #{tpu_custom_call.1} parent=1 // pred_region
      %s8531 = ssub.s32 16, 16
      %8532 = vsyncadd [#allocation6], %s8531
      %8535 = dma.smem_to_hbm [#allocation21], 16, %s20, [#allocation6]
    $region125: #{tpu_custom_call.1} parent=1 // pred_fallthru
      _
    // Predicated region
    $region126: #{tpu_custom_call.1} parent=1 // pred_check
      _
    $region127: #{tpu_custom_call.1} parent=1 // pred_check_branch
      %8537 = sbr.rel (0) target = $region129
    $region128: #{tpu_custom_call.1} parent=1 // pred_region
      %s8539 = ssub.s32 16, 16
      %8540 = vsyncadd [#allocation23], %s8539
      %8543 = dma.smem_to_hbm [#allocation22], 16, %s21, [#allocation23]
    $region129: #{tpu_custom_call.1} parent=1 // pred_fallthru
      _
    // Predicated region
    $region130: #{tpu_custom_call.1} parent=1 // pred_check
      _
    $region131: #{tpu_custom_call.1} parent=1 // pred_check_branch
      %8545 = sbr.rel (0) target = $region133
    $region132: #{tpu_custom_call.1} parent=1 // pred_region
      %8546 = dma.done [#allocation6], 16
    $region133: #{tpu_custom_call.1} parent=1 // pred_fallthru
      _
    // Predicated region
    $region134: #{tpu_custom_call.1} parent=1 // pred_check
      _
    $region135: #{tpu_custom_call.1} parent=1 // pred_check_branch
      %8548 = sbr.rel (0) target = $region137
    $region136: #{tpu_custom_call.1} parent=1 // pred_region
      %8549 = dma.done [#allocation23], 16
    $region137: #{tpu_custom_call.1} parent=1 // pred_fallthru
      _
    %8550 = sfence
    %8551 = vsyncpa [#allocation5], 1
    %8552 = vsyncpa [#allocation8], 1
    %8553 = vsyncpa [#allocation11], 1
    %8554 = vsyncpa [#allocation14], 1
    %8555 = vsyncpa [#allocation17], 1
    %8556 = vsyncpa [#allocation20], 1
    %8557 = vsyncpa [#allocation6], 1
    %8558 = vsyncpa [#allocation23], 1

</llo_original>
